<compile_context>
chip_gen: v6e
topology: v6e:2x2x1
jax: 0.10.0
libtpu: 0.0.40
codegen_flags: <defaults>
</compile_context>

<pallas_src>
import jax
import jax.numpy as jnp
from jax.experimental import pallas as pl
from jax.experimental.pallas import tpu as pltpu


# ----------------------------- host-side weight prep -----------------------------

def _prep_gru(w_ih, w_hh, b_ih, b_hh, H):
    """Pre-transpose GRU weights and fold biases.

    Returns (W_ih^T (F,3H), W_hh^T (H,3H), b_main (1,3H), b_hn (1,H)) where
    b_main = b_ih + [b_hr, b_hz, 0]  (b_hn stays separate: n = tanh(gi_n + r*(gh_n+b_hn)))
    """
    b_main = b_ih + jnp.concatenate([b_hh[:2 * H], jnp.zeros((H,), jnp.float32)])
    return (w_ih.T.astype(jnp.float32),
            w_hh.T.astype(jnp.float32),
            b_main.reshape(1, 3 * H).astype(jnp.float32),
            b_hh[2 * H:].reshape(1, H).astype(jnp.float32))


def _prep_bilstm(p_fwd, p_rev, H):
    """Build direction-batched LSTM weights.

    Gate slabs in the combined 8H columns: [i_f i_r f_f f_r g_f g_r o_f o_r].
    Returns:
      wih_wide_f (F,8H)  fwd input weights in fwd slabs, zeros elsewhere
      wih_wide_r (F,8H)  rev input weights in rev slabs, zeros elsewhere
      whh_blk   (2H,8H)  block-diagonal recurrent weights ([:H]=h_f rows, [H:]=h_r rows)
      b_wide    (1,8H)   b_ih + b_hh per gate/direction
    """
    wih_f, whh_f, bih_f, bhh_f = p_fwd
    wih_r, whh_r, bih_r, bhh_r = p_rev
    F = wih_f.shape[1]
    wih_wide_f = jnp.zeros((F, 8 * H), jnp.float32)
    wih_wide_r = jnp.zeros((F, 8 * H), jnp.float32)
    whh_blk = jnp.zeros((2 * H, 8 * H), jnp.float32)
    b_wide = jnp.zeros((1, 8 * H), jnp.float32)
    for g in range(4):                                   # PyTorch gate order i, f, g, o
        cf = slice(2 * g * H, (2 * g + 1) * H)           # fwd slab columns
        cr = slice((2 * g + 1) * H, (2 * g + 2) * H)     # rev slab columns
        rg = slice(g * H, (g + 1) * H)                   # rows of this gate in (4H, .)
        wih_wide_f = wih_wide_f.at[:, cf].set(wih_f[rg].T)
        wih_wide_r = wih_wide_r.at[:, cr].set(wih_r[rg].T)
        whh_blk = whh_blk.at[:H, cf].set(whh_f[rg].T)
        whh_blk = whh_blk.at[H:, cr].set(whh_r[rg].T)
        b_wide = b_wide.at[0, cf].set(bih_f[rg] + bhh_f[rg])
        b_wide = b_wide.at[0, cr].set(bih_r[rg] + bhh_r[rg])
    return (wih_wide_f.astype(jnp.float32), wih_wide_r.astype(jnp.float32),
            whh_blk.astype(jnp.float32), b_wide.astype(jnp.float32))


# ----------------------------- fused forward kernel ------------------------------

def _make_kernel(Bp, T, Tn, V, E, H, N):
    f32 = jnp.float32

    def kernel(ids_ref, emb_ref, xn_ref,
               wg0_ih_ref, wg0_hh_ref, bg0_ref, bg0hn_ref,
               wg1_ih_ref, wg1_hh_ref, bg1_ref, bg1hn_ref,
               wl0_wf_ref, wl0_wr_ref, wl0_hh_ref, bl0_ref,
               wl1_wf_ref, wl1_wr_ref, wl1_hh_ref, bl1_ref,
               wnum_ref, bnum_ref, w1_ref, b1_ref, w2_ref, b2_ref,
               w3_ref, b3_ref, out_ref,
               x1_scr, xf_scr, xr_scr):

        def mm(a, b):
            return jnp.dot(a, b, preferred_element_type=f32)

        # ---- hoist every weight load (loops below are fully unrolled) ----
        emb = emb_ref[...]
        wg0_ih, wg0_hh, bg0, bg0hn = wg0_ih_ref[...], wg0_hh_ref[...], bg0_ref[...], bg0hn_ref[...]
        wg1_ih, wg1_hh, bg1, bg1hn = wg1_ih_ref[...], wg1_hh_ref[...], bg1_ref[...], bg1hn_ref[...]
        wl0_wf, wl0_wr, wl0_hh, bl0 = wl0_wf_ref[...], wl0_wr_ref[...], wl0_hh_ref[...], bl0_ref[...]
        wl1_wf, wl1_wr, wl1_hh, bl1 = wl1_wf_ref[...], wl1_wr_ref[...], wl1_hh_ref[...], bl1_ref[...]
        wnum, bnum = wnum_ref[...], bnum_ref[...]
        w1, b1 = w1_ref[...], b1_ref[...]
        w2, b2 = w2_ref[...], b2_ref[...]
        w3, b3 = w3_ref[...], b3_ref[...]

        # ---- embedding lookup as a one-hot matmul (no gather) ----
        ids = ids_ref[...]                                               # (T*Bp, 1) int32, time-major
        iota = jax.lax.broadcasted_iota(jnp.int32, (T * Bp, V), 1)
        onehot = jnp.where(iota == ids, 1.0, 0.0).astype(f32)            # (T*Bp, V)
        embed = mm(onehot, emb)                                          # (T*Bp, E), row t*Bp+b

        # ---- 2-layer GRU (input projection hoisted out of the recurrence) ----
        def gru(GI, whh, b_hn, out_scr):
            h = jnp.zeros((Bp, H), f32)
            for t in range(T):                                           # unrolled
                gi = GI[t * Bp:(t + 1) * Bp]                             # (Bp, 3H), aligned static slice
                gh = mm(h, whh)                                          # (Bp, 3H)
                r = jax.nn.sigmoid(gi[:, :H] + gh[:, :H])
                z = jax.nn.sigmoid(gi[:, H:2 * H] + gh[:, H:2 * H])
                n = jnp.tanh(gi[:, 2 * H:] + r * (gh[:, 2 * H:] + b_hn))
                h = (1.0 - z) * n + z * h
                if out_scr is not None:
                    out_scr[pl.ds(t * Bp, Bp), :] = h                    # aligned scratch store
            return h

        GI0 = mm(embed, wg0_ih) + bg0                                    # (T*Bp, 3H)
        gru(GI0, wg0_hh, bg0hn, x1_scr)                                  # fills x1_scr (T*Bp, H)
        GI1 = mm(x1_scr[...], wg1_ih) + bg1
        text_out = gru(GI1, wg1_hh, bg1hn, None)                         # (Bp, H) == gru_out[:, -1, :]

        # ---- 2-layer bidirectional LSTM, both directions batched in one recurrence ----
        # state (Bp, 2H) = [h_fwd | h_rev]; gates (Bp, 8H) = [i_f i_r f_f f_r g_f g_r o_f o_r]
        def bilstm(GIf, GIr, whh_blk, fwd_scr, rev_scr):
            h = jnp.zeros((Bp, 2 * H), f32)
            c = jnp.zeros((Bp, 2 * H), f32)
            fwd, rev = [], []
            for t in range(Tn):                                          # unrolled
                gi = GIf[t * Bp:(t + 1) * Bp] + GIr[(Tn - 1 - t) * Bp:(Tn - t) * Bp]
                g = gi + mm(h, whh_blk)                                  # (Bp, 8H)
                i = jax.nn.sigmoid(g[:, :2 * H])
                f = jax.nn.sigmoid(g[:, 2 * H:4 * H])
                gg = jnp.tanh(g[:, 4 * H:6 * H])
                o = jax.nn.sigmoid(g[:, 6 * H:8 * H])
                c = f * c + i * gg
                h = o * jnp.tanh(c)
                if fwd_scr is not None:
                    # position-ordered aligned scratch stores:
                    #   fwd state after step t == fwd output at position t
                    #   rev state after step t == rev output at position Tn-1-t
                    fwd_scr[pl.ds(t * Bp, Bp), :] = h[:, :H]
                    rev_scr[pl.ds((Tn - 1 - t) * Bp, Bp), :] = h[:, H:]
                else:
                    fwd.append(h[:, :H])
                    rev.append(h[:, H:])
            return fwd, rev

        xn = xn_ref[...]                                                 # (Tn*Bp, N), time-major
        GI0f = mm(xn, wl0_wf) + bl0                                      # (Tn*Bp, 8H)
        GI0r = mm(xn, wl0_wr)
        bilstm(GI0f, GI0r, wl0_hh, xf_scr, xr_scr)                       # fills xf_scr / xr_scr

        Xf = xf_scr[...]                                                 # (Tn*Bp, H), position-ordered
        Xr = xr_scr[...]                                                 # (Tn*Bp, H), position-ordered
        GI1f = mm(Xf, wl1_wf[:H]) + mm(Xr, wl1_wf[H:]) + bl1
        GI1r = mm(Xf, wl1_wr[:H]) + mm(Xr, wl1_wr[H:])
        fwd1, rev1 = bilstm(GI1f, GI1r, wl1_hh, None, None)              # step-ordered lists

        # numeric_fc over flattened (B, Tn*2H) bi-LSTM output, expressed as a sum of
        # small matmuls against statically sliced weight rows (no lane concat).
        # position p: fwd output = fwd1[p], rev output = rev1[Tn-1-p]
        numeric = jnp.zeros((Bp, H), f32) + bnum
        for p in range(Tn):
            numeric = numeric + mm(fwd1[p], wnum[2 * p * H:(2 * p + 1) * H])
            numeric = numeric + mm(rev1[Tn - 1 - p], wnum[(2 * p + 1) * H:(2 * p + 2) * H])

        # ---- MLP head; concat([text, numeric]) avoided by splitting w1 ----
        h1 = jnp.tanh(mm(text_out, w1[:H]) + mm(numeric, w1[H:]) + b1)
        # Dropout(0.5): eval-mode identity
        h2 = jnp.tanh(mm(h1, w2) + b2)
        out_ref[...] = mm(h2, w3) + b3

    return kernel


# --------------------------------- wrapper ---------------------------------------

def build_forward(params, B, T, Tn):
    V, E = params["embedding"].shape
    H = params["gru0"][1].shape[1]
    N = params["lstm0_f"][0].shape[1]
    Bp = ((B + 7) // 8) * 8            # pad batch to a sublane multiple for aligned tiles

    # one-time host-side weight preparation (transposes / bias folds / direction packing)
    g0 = _prep_gru(*params["gru0"], H)
    g1 = _prep_gru(*params["gru1"], H)
    l0 = _prep_bilstm(params["lstm0_f"], params["lstm0_r"], H)
    l1 = _prep_bilstm(params["lstm1_f"], params["lstm1_r"], H)
    wnum, bnum, w1, b1, w2, b2, w3, b3 = params["head"]
    head = (wnum.T.astype(jnp.float32), bnum.reshape(1, -1).astype(jnp.float32),
            w1.T.astype(jnp.float32), b1.reshape(1, -1).astype(jnp.float32),
            w2.T.astype(jnp.float32), b2.reshape(1, -1).astype(jnp.float32),
            w3.T.astype(jnp.float32), b3.reshape(1, -1).astype(jnp.float32))
    emb = params["embedding"].astype(jnp.float32)

    kernel = _make_kernel(Bp, T, Tn, V, E, H, N)
    call = pl.pallas_call(                               # single fused launch, no grid:
        kernel,                                          # everything is VMEM-resident
        out_shape=jax.ShapeDtypeStruct((Bp, 1), jnp.float32),
        scratch_shapes=[pltpu.VMEM((T * Bp, H), jnp.float32),    # GRU layer-0 outputs
                        pltpu.VMEM((Tn * Bp, H), jnp.float32),   # bi-LSTM layer-0 fwd outputs
                        pltpu.VMEM((Tn * Bp, H), jnp.float32)],  # bi-LSTM layer-0 rev outputs
    )

    def fwd(headline, numeric):
        # tiny layout glue only: pad batch to Bp and flatten inputs time-major
        hpad = jnp.zeros((Bp, T), jnp.int32).at[:B].set(headline.astype(jnp.int32))
        npad = jnp.zeros((Bp, Tn, N), jnp.float32).at[:B].set(numeric.astype(jnp.float32))
        ids_tm = hpad.T.reshape(T * Bp, 1)                                 # (T*Bp, 1)
        xn_tm = jnp.transpose(npad, (1, 0, 2)).reshape(Tn * Bp, N)         # (Tn*Bp, N)
        out = call(ids_tm, emb, xn_tm, *g0, *g1, *l0, *l1, *head)
        return out[:B]

    return jax.jit(fwd)


# ------------------------------ parameter init ------------------------------------

def init_params(key, vocab_size, E, H, N):
    ks = iter(jax.random.split(key, 40))   # 33 needed; keep headroom

    def w(shape, scale=0.1):
        return (scale * jax.random.normal(next(ks), shape)).astype(jnp.float32)

    return {
        "embedding": w((vocab_size, E)),
        # GRU layer 0 / 1: W_ih (3H, in), W_hh (3H, H), b_ih (3H,), b_hh (3H,)
        "gru0": (w((3 * H, E)), w((3 * H, H)), w((3 * H,)), w((3 * H,))),
        "gru1": (w((3 * H, H)), w((3 * H, H)), w((3 * H,)), w((3 * H,))),
        # LSTM layer 0 fwd/rev: W_ih (4H, N), W_hh (4H, H)
        "lstm0_f": (w((4 * H, N)), w((4 * H, H)), w((4 * H,)), w((4 * H,))),
        "lstm0_r": (w((4 * H, N)), w((4 * H, H)), w((4 * H,)), w((4 * H,))),
        # LSTM layer 1 fwd/rev: input is 2H
        "lstm1_f": (w((4 * H, 2 * H)), w((4 * H, H)), w((4 * H,)), w((4 * H,))),
        "lstm1_r": (w((4 * H, 2 * H)), w((4 * H, H)), w((4 * H,)), w((4 * H,))),
        # head: numeric_fc (H, 10H) + MLP (64, 2H), (32, 64), (1, 32)
        "head": (w((H, 10 * H)), w((H,)),
                 w((64, 2 * H)), w((64,)),
                 w((32, 64)), w((32,)),
                 w((1, 32)), w((1,))),
    }


# ----------------------------------- main ------------------------------------------

if __name__ == "__main__":
    vocab_size, E, H, N = 50, 16, 32, 8
    B, T, Tn = 2, 8, 5      # Tn must be 5 so that flatten gives 10*H features

    key = jax.random.PRNGKey(0)
    k_par, k_head, k_num = jax.random.split(key, 3)

    params = init_params(k_par, vocab_size, E, H, N)
    headline = jax.random.randint(k_head, (B, T), 0, vocab_size, dtype=jnp.int32)
    numeric = jax.random.normal(k_num, (B, Tn, N), dtype=jnp.float32)

    forward = build_forward(params, B, T, Tn)
    out = jax.block_until_ready(forward(headline, numeric))

    assert out.shape == (B, 1)
    assert bool(jnp.all(jnp.isfinite(out)))
    print("KERNEL_OK")
</pallas_src>

<mosaic_0001>
module attributes {stable_mosaic.version = 11 : i64} {
  func.func @kernel(%arg0: memref<64x1xi32, #tpu.memory_space<vmem>>, %arg1: memref<50x16xf32, #tpu.memory_space<vmem>>, %arg2: memref<40x8xf32, #tpu.memory_space<vmem>>, %arg3: memref<16x96xf32, #tpu.memory_space<vmem>>, %arg4: memref<32x96xf32, #tpu.memory_space<vmem>>, %arg5: memref<1x96xf32, #tpu.memory_space<vmem>>, %arg6: memref<1x32xf32, #tpu.memory_space<vmem>>, %arg7: memref<32x96xf32, #tpu.memory_space<vmem>>, %arg8: memref<32x96xf32, #tpu.memory_space<vmem>>, %arg9: memref<1x96xf32, #tpu.memory_space<vmem>>, %arg10: memref<1x32xf32, #tpu.memory_space<vmem>>, %arg11: memref<8x256xf32, #tpu.memory_space<vmem>>, %arg12: memref<8x256xf32, #tpu.memory_space<vmem>>, %arg13: memref<64x256xf32, #tpu.memory_space<vmem>>, %arg14: memref<1x256xf32, #tpu.memory_space<vmem>>, %arg15: memref<64x256xf32, #tpu.memory_space<vmem>>, %arg16: memref<64x256xf32, #tpu.memory_space<vmem>>, %arg17: memref<64x256xf32, #tpu.memory_space<vmem>>, %arg18: memref<1x256xf32, #tpu.memory_space<vmem>>, %arg19: memref<320x32xf32, #tpu.memory_space<vmem>>, %arg20: memref<1x32xf32, #tpu.memory_space<vmem>>, %arg21: memref<64x64xf32, #tpu.memory_space<vmem>>, %arg22: memref<1x64xf32, #tpu.memory_space<vmem>>, %arg23: memref<64x32xf32, #tpu.memory_space<vmem>>, %arg24: memref<1x32xf32, #tpu.memory_space<vmem>>, %arg25: memref<32x1xf32, #tpu.memory_space<vmem>>, %arg26: memref<1x1xf32, #tpu.memory_space<vmem>>, %arg27: memref<8x1xf32, #tpu.memory_space<vmem>>, %arg28: memref<64x32xf32, #tpu.memory_space<vmem>>, %arg29: memref<40x32xf32, #tpu.memory_space<vmem>>, %arg30: memref<40x32xf32, #tpu.memory_space<vmem>>) attributes {dimension_semantics = [], scalar_prefetch = 0 : i64, scratch_operands = 3 : i64, tpu.core_type = #tpu.core_type<tc>} {
    %c0 = arith.constant 0 : index
    %c0_0 = arith.constant 0 : index
    %0 = vector.load %arg1[%c0, %c0_0] : memref<50x16xf32, #tpu.memory_space<vmem>>, vector<50x16xf32>
    %c0_1 = arith.constant 0 : index
    %c0_2 = arith.constant 0 : index
    %1 = vector.load %arg3[%c0_1, %c0_2] : memref<16x96xf32, #tpu.memory_space<vmem>>, vector<16x96xf32>
    %c0_3 = arith.constant 0 : index
    %c0_4 = arith.constant 0 : index
    %2 = vector.load %arg4[%c0_3, %c0_4] : memref<32x96xf32, #tpu.memory_space<vmem>>, vector<32x96xf32>
    %c0_5 = arith.constant 0 : index
    %c0_6 = arith.constant 0 : index
    %3 = vector.load %arg5[%c0_5, %c0_6] : memref<1x96xf32, #tpu.memory_space<vmem>>, vector<1x96xf32>
    %c0_7 = arith.constant 0 : index
    %c0_8 = arith.constant 0 : index
    %4 = vector.load %arg6[%c0_7, %c0_8] : memref<1x32xf32, #tpu.memory_space<vmem>>, vector<1x32xf32>
    %c0_9 = arith.constant 0 : index
    %c0_10 = arith.constant 0 : index
    %5 = vector.load %arg7[%c0_9, %c0_10] : memref<32x96xf32, #tpu.memory_space<vmem>>, vector<32x96xf32>
    %c0_11 = arith.constant 0 : index
    %c0_12 = arith.constant 0 : index
    %6 = vector.load %arg8[%c0_11, %c0_12] : memref<32x96xf32, #tpu.memory_space<vmem>>, vector<32x96xf32>
    %c0_13 = arith.constant 0 : index
    %c0_14 = arith.constant 0 : index
    %7 = vector.load %arg9[%c0_13, %c0_14] : memref<1x96xf32, #tpu.memory_space<vmem>>, vector<1x96xf32>
    %c0_15 = arith.constant 0 : index
    %c0_16 = arith.constant 0 : index
    %8 = vector.load %arg10[%c0_15, %c0_16] : memref<1x32xf32, #tpu.memory_space<vmem>>, vector<1x32xf32>
    %c0_17 = arith.constant 0 : index
    %c0_18 = arith.constant 0 : index
    %9 = vector.load %arg11[%c0_17, %c0_18] : memref<8x256xf32, #tpu.memory_space<vmem>>, vector<8x256xf32>
    %c0_19 = arith.constant 0 : index
    %c0_20 = arith.constant 0 : index
    %10 = vector.load %arg12[%c0_19, %c0_20] : memref<8x256xf32, #tpu.memory_space<vmem>>, vector<8x256xf32>
    %c0_21 = arith.constant 0 : index
    %c0_22 = arith.constant 0 : index
    %11 = vector.load %arg13[%c0_21, %c0_22] : memref<64x256xf32, #tpu.memory_space<vmem>>, vector<64x256xf32>
    %c0_23 = arith.constant 0 : index
    %c0_24 = arith.constant 0 : index
    %12 = vector.load %arg14[%c0_23, %c0_24] : memref<1x256xf32, #tpu.memory_space<vmem>>, vector<1x256xf32>
    %c0_25 = arith.constant 0 : index
    %c0_26 = arith.constant 0 : index
    %13 = vector.load %arg15[%c0_25, %c0_26] : memref<64x256xf32, #tpu.memory_space<vmem>>, vector<64x256xf32>
    %c0_27 = arith.constant 0 : index
    %c0_28 = arith.constant 0 : index
    %14 = vector.load %arg16[%c0_27, %c0_28] : memref<64x256xf32, #tpu.memory_space<vmem>>, vector<64x256xf32>
    %c0_29 = arith.constant 0 : index
    %c0_30 = arith.constant 0 : index
    %15 = vector.load %arg17[%c0_29, %c0_30] : memref<64x256xf32, #tpu.memory_space<vmem>>, vector<64x256xf32>
    %c0_31 = arith.constant 0 : index
    %c0_32 = arith.constant 0 : index
    %16 = vector.load %arg18[%c0_31, %c0_32] : memref<1x256xf32, #tpu.memory_space<vmem>>, vector<1x256xf32>
    %c0_33 = arith.constant 0 : index
    %c0_34 = arith.constant 0 : index
    %17 = vector.load %arg19[%c0_33, %c0_34] : memref<320x32xf32, #tpu.memory_space<vmem>>, vector<320x32xf32>
    %c0_35 = arith.constant 0 : index
    %c0_36 = arith.constant 0 : index
    %18 = vector.load %arg20[%c0_35, %c0_36] : memref<1x32xf32, #tpu.memory_space<vmem>>, vector<1x32xf32>
    %c0_37 = arith.constant 0 : index
    %c0_38 = arith.constant 0 : index
    %19 = vector.load %arg21[%c0_37, %c0_38] : memref<64x64xf32, #tpu.memory_space<vmem>>, vector<64x64xf32>
    %c0_39 = arith.constant 0 : index
    %c0_40 = arith.constant 0 : index
    %20 = vector.load %arg22[%c0_39, %c0_40] : memref<1x64xf32, #tpu.memory_space<vmem>>, vector<1x64xf32>
    %c0_41 = arith.constant 0 : index
    %c0_42 = arith.constant 0 : index
    %21 = vector.load %arg23[%c0_41, %c0_42] : memref<64x32xf32, #tpu.memory_space<vmem>>, vector<64x32xf32>
    %c0_43 = arith.constant 0 : index
    %c0_44 = arith.constant 0 : index
    %22 = vector.load %arg24[%c0_43, %c0_44] : memref<1x32xf32, #tpu.memory_space<vmem>>, vector<1x32xf32>
    %c0_45 = arith.constant 0 : index
    %c0_46 = arith.constant 0 : index
    %23 = vector.load %arg25[%c0_45, %c0_46] : memref<32x1xf32, #tpu.memory_space<vmem>>, vector<32x1xf32>
    %c0_47 = arith.constant 0 : index
    %c0_48 = arith.constant 0 : index
    %24 = vector.load %arg26[%c0_47, %c0_48] : memref<1x1xf32, #tpu.memory_space<vmem>>, vector<1x1xf32>
    %c0_49 = arith.constant 0 : index
    %c0_50 = arith.constant 0 : index
    %25 = vector.load %arg0[%c0_49, %c0_50] : memref<64x1xi32, #tpu.memory_space<vmem>>, vector<64x1xi32>
    %26 = tpu.iota {dimensions = array<i32: 1>} : vector<64x50xi32>
    %27 = vector.broadcast %25 : vector<64x1xi32> to vector<64x50xi32>
    %28 = arith.cmpi eq, %26, %27 : vector<64x50xi32>
    %cst = arith.constant 1.000000e+00 : f32
    %cst_51 = arith.constant 0.000000e+00 : f32
    %29 = vector.broadcast %cst : f32 to vector<64x50xf32>
    %30 = vector.broadcast %cst_51 : f32 to vector<64x50xf32>
    %31 = arith.select %28, %29, %30 : vector<64x50xi1>, vector<64x50xf32>
    %cst_52 = arith.constant dense<0.000000e+00> : vector<64x16xf32>
    %32 = tpu.matmul %31, %0, %cst_52 {dimension_numbers = #tpu.dot_dimension_numbers<[1], [0], [0], [1], [0, 0, 1, 1], [], []>} : vector<64x50xf32>, vector<50x16xf32>, vector<64x16xf32> -> vector<64x16xf32>
    %cst_53 = arith.constant dense<0.000000e+00> : vector<64x96xf32>
    %33 = tpu.matmul %32, %1, %cst_53 {dimension_numbers = #tpu.dot_dimension_numbers<[1], [0], [0], [1], [0, 0, 1, 1], [], []>} : vector<64x16xf32>, vector<16x96xf32>, vector<64x96xf32> -> vector<64x96xf32>
    %34 = vector.broadcast %3 : vector<1x96xf32> to vector<64x96xf32>
    %35 = arith.addf %33, %34 : vector<64x96xf32>
    %cst_54 = arith.constant 0.000000e+00 : f32
    %36 = vector.broadcast %cst_54 : f32 to vector<8x32xf32>
    %37 = vector.extract_strided_slice %35 {offsets = [0, 0], sizes = [8, 96], strides = [1, 1]} : vector<64x96xf32> to vector<8x96xf32>
    %cst_55 = arith.constant dense<0.000000e+00> : vector<8x96xf32>
    %38 = tpu.matmul %36, %2, %cst_55 {dimension_numbers = #tpu.dot_dimension_numbers<[1], [0], [0], [1], [0, 0, 1, 1], [], []>} : vector<8x32xf32>, vector<32x96xf32>, vector<8x96xf32> -> vector<8x96xf32>
    %39 = vector.extract_strided_slice %37 {offsets = [0, 0], sizes = [8, 32], strides = [1, 1]} : vector<8x96xf32> to vector<8x32xf32>
    %40 = vector.extract_strided_slice %38 {offsets = [0, 0], sizes = [8, 32], strides = [1, 1]} : vector<8x96xf32> to vector<8x32xf32>
    %41 = arith.addf %39, %40 : vector<8x32xf32>
    %42 = arith.negf %41 : vector<8x32xf32>
    %43 = math.exp %42 : vector<8x32xf32>
    %cst_56 = arith.constant 1.000000e+00 : f32
    %44 = vector.broadcast %cst_56 : f32 to vector<8x32xf32>
    %45 = arith.addf %44, %43 : vector<8x32xf32>
    %46 = arith.divf %44, %45 : vector<8x32xf32>
    %47 = vector.extract_strided_slice %37 {offsets = [0, 32], sizes = [8, 32], strides = [1, 1]} : vector<8x96xf32> to vector<8x32xf32>
    %48 = vector.extract_strided_slice %38 {offsets = [0, 32], sizes = [8, 32], strides = [1, 1]} : vector<8x96xf32> to vector<8x32xf32>
    %49 = arith.addf %47, %48 : vector<8x32xf32>
    %50 = arith.negf %49 : vector<8x32xf32>
    %51 = math.exp %50 : vector<8x32xf32>
    %cst_57 = arith.constant 1.000000e+00 : f32
    %52 = vector.broadcast %cst_57 : f32 to vector<8x32xf32>
    %53 = arith.addf %52, %51 : vector<8x32xf32>
    %54 = arith.divf %52, %53 : vector<8x32xf32>
    %55 = vector.extract_strided_slice %37 {offsets = [0, 64], sizes = [8, 32], strides = [1, 1]} : vector<8x96xf32> to vector<8x32xf32>
    %56 = vector.extract_strided_slice %38 {offsets = [0, 64], sizes = [8, 32], strides = [1, 1]} : vector<8x96xf32> to vector<8x32xf32>
    %57 = vector.broadcast %4 : vector<1x32xf32> to vector<8x32xf32>
    %58 = arith.addf %56, %57 : vector<8x32xf32>
    %59 = arith.mulf %46, %58 : vector<8x32xf32>
    %60 = arith.addf %55, %59 : vector<8x32xf32>
    %61 = math.tanh %60 : vector<8x32xf32>
    %cst_58 = arith.constant 1.000000e+00 : f32
    %62 = vector.broadcast %cst_58 : f32 to vector<8x32xf32>
    %63 = arith.subf %62, %54 : vector<8x32xf32>
    %64 = arith.mulf %63, %61 : vector<8x32xf32>
    %65 = arith.mulf %54, %36 : vector<8x32xf32>
    %66 = arith.addf %64, %65 : vector<8x32xf32>
    %c0_59 = arith.constant 0 : index
    %c0_60 = arith.constant 0 : index
    %67 = vector.load %arg28[%c0_59, %c0_60] : memref<64x32xf32, #tpu.memory_space<vmem>>, vector<8x32xf32>
    tpu.vector_store %arg28[%c0_59, %c0_60], %66 {strides = array<i32>} : memref<64x32xf32, #tpu.memory_space<vmem>>, vector<8x32xf32>,
    %68 = vector.extract_strided_slice %35 {offsets = [8, 0], sizes = [8, 96], strides = [1, 1]} : vector<64x96xf32> to vector<8x96xf32>
    %cst_61 = arith.constant dense<0.000000e+00> : vector<8x96xf32>
    %69 = tpu.matmul %66, %2, %cst_61 {dimension_numbers = #tpu.dot_dimension_numbers<[1], [0], [0], [1], [0, 0, 1, 1], [], []>} : vector<8x32xf32>, vector<32x96xf32>, vector<8x96xf32> -> vector<8x96xf32>
    %70 = vector.extract_strided_slice %68 {offsets = [0, 0], sizes = [8, 32], strides = [1, 1]} : vector<8x96xf32> to vector<8x32xf32>
    %71 = vector.extract_strided_slice %69 {offsets = [0, 0], sizes = [8, 32], strides = [1, 1]} : vector<8x96xf32> to vector<8x32xf32>
    %72 = arith.addf %70, %71 : vector<8x32xf32>
    %73 = arith.negf %72 : vector<8x32xf32>
    %74 = math.exp %73 : vector<8x32xf32>
    %cst_62 = arith.constant 1.000000e+00 : f32
    %75 = vector.broadcast %cst_62 : f32 to vector<8x32xf32>
    %76 = arith.addf %75, %74 : vector<8x32xf32>
    %77 = arith.divf %75, %76 : vector<8x32xf32>
    %78 = vector.extract_strided_slice %68 {offsets = [0, 32], sizes = [8, 32], strides = [1, 1]} : vector<8x96xf32> to vector<8x32xf32>
    %79 = vector.extract_strided_slice %69 {offsets = [0, 32], sizes = [8, 32], strides = [1, 1]} : vector<8x96xf32> to vector<8x32xf32>
    %80 = arith.addf %78, %79 : vector<8x32xf32>
    %81 = arith.negf %80 : vector<8x32xf32>
    %82 = math.exp %81 : vector<8x32xf32>
    %cst_63 = arith.constant 1.000000e+00 : f32
    %83 = vector.broadcast %cst_63 : f32 to vector<8x32xf32>
    %84 = arith.addf %83, %82 : vector<8x32xf32>
    %85 = arith.divf %83, %84 : vector<8x32xf32>
    %86 = vector.extract_strided_slice %68 {offsets = [0, 64], sizes = [8, 32], strides = [1, 1]} : vector<8x96xf32> to vector<8x32xf32>
    %87 = vector.extract_strided_slice %69 {offsets = [0, 64], sizes = [8, 32], strides = [1, 1]} : vector<8x96xf32> to vector<8x32xf32>
    %88 = vector.broadcast %4 : vector<1x32xf32> to vector<8x32xf32>
    %89 = arith.addf %87, %88 : vector<8x32xf32>
    %90 = arith.mulf %77, %89 : vector<8x32xf32>
    %91 = arith.addf %86, %90 : vector<8x32xf32>
    %92 = math.tanh %91 : vector<8x32xf32>
    %cst_64 = arith.constant 1.000000e+00 : f32
    %93 = vector.broadcast %cst_64 : f32 to vector<8x32xf32>
    %94 = arith.subf %93, %85 : vector<8x32xf32>
    %95 = arith.mulf %94, %92 : vector<8x32xf32>
    %96 = arith.mulf %85, %66 : vector<8x32xf32>
    %97 = arith.addf %95, %96 : vector<8x32xf32>
    %c8 = arith.constant 8 : index
    %c0_65 = arith.constant 0 : index
    %98 = vector.load %arg28[%c8, %c0_65] : memref<64x32xf32, #tpu.memory_space<vmem>>, vector<8x32xf32>
    tpu.vector_store %arg28[%c8, %c0_65], %97 {strides = array<i32>} : memref<64x32xf32, #tpu.memory_space<vmem>>, vector<8x32xf32>,
    %99 = vector.extract_strided_slice %35 {offsets = [16, 0], sizes = [8, 96], strides = [1, 1]} : vector<64x96xf32> to vector<8x96xf32>
    %cst_66 = arith.constant dense<0.000000e+00> : vector<8x96xf32>
    %100 = tpu.matmul %97, %2, %cst_66 {dimension_numbers = #tpu.dot_dimension_numbers<[1], [0], [0], [1], [0, 0, 1, 1], [], []>} : vector<8x32xf32>, vector<32x96xf32>, vector<8x96xf32> -> vector<8x96xf32>
    %101 = vector.extract_strided_slice %99 {offsets = [0, 0], sizes = [8, 32], strides = [1, 1]} : vector<8x96xf32> to vector<8x32xf32>
    %102 = vector.extract_strided_slice %100 {offsets = [0, 0], sizes = [8, 32], strides = [1, 1]} : vector<8x96xf32> to vector<8x32xf32>
    %103 = arith.addf %101, %102 : vector<8x32xf32>
    %104 = arith.negf %103 : vector<8x32xf32>
    %105 = math.exp %104 : vector<8x32xf32>
    %cst_67 = arith.constant 1.000000e+00 : f32
    %106 = vector.broadcast %cst_67 : f32 to vector<8x32xf32>
    %107 = arith.addf %106, %105 : vector<8x32xf32>
    %108 = arith.divf %106, %107 : vector<8x32xf32>
    %109 = vector.extract_strided_slice %99 {offsets = [0, 32], sizes = [8, 32], strides = [1, 1]} : vector<8x96xf32> to vector<8x32xf32>
    %110 = vector.extract_strided_slice %100 {offsets = [0, 32], sizes = [8, 32], strides = [1, 1]} : vector<8x96xf32> to vector<8x32xf32>
    %111 = arith.addf %109, %110 : vector<8x32xf32>
    %112 = arith.negf %111 : vector<8x32xf32>
    %113 = math.exp %112 : vector<8x32xf32>
    %cst_68 = arith.constant 1.000000e+00 : f32
    %114 = vector.broadcast %cst_68 : f32 to vector<8x32xf32>
    %115 = arith.addf %114, %113 : vector<8x32xf32>
    %116 = arith.divf %114, %115 : vector<8x32xf32>
    %117 = vector.extract_strided_slice %99 {offsets = [0, 64], sizes = [8, 32], strides = [1, 1]} : vector<8x96xf32> to vector<8x32xf32>
    %118 = vector.extract_strided_slice %100 {offsets = [0, 64], sizes = [8, 32], strides = [1, 1]} : vector<8x96xf32> to vector<8x32xf32>
    %119 = vector.broadcast %4 : vector<1x32xf32> to vector<8x32xf32>
    %120 = arith.addf %118, %119 : vector<8x32xf32>
    %121 = arith.mulf %108, %120 : vector<8x32xf32>
    %122 = arith.addf %117, %121 : vector<8x32xf32>
    %123 = math.tanh %122 : vector<8x32xf32>
    %cst_69 = arith.constant 1.000000e+00 : f32
    %124 = vector.broadcast %cst_69 : f32 to vector<8x32xf32>
    %125 = arith.subf %124, %116 : vector<8x32xf32>
    %126 = arith.mulf %125, %123 : vector<8x32xf32>
    %127 = arith.mulf %116, %97 : vector<8x32xf32>
    %128 = arith.addf %126, %127 : vector<8x32xf32>
    %c16 = arith.constant 16 : index
    %c0_70 = arith.constant 0 : index
    %129 = vector.load %arg28[%c16, %c0_70] : memref<64x32xf32, #tpu.memory_space<vmem>>, vector<8x32xf32>
    tpu.vector_store %arg28[%c16, %c0_70], %128 {strides = array<i32>} : memref<64x32xf32, #tpu.memory_space<vmem>>, vector<8x32xf32>,
    %130 = vector.extract_strided_slice %35 {offsets = [24, 0], sizes = [8, 96], strides = [1, 1]} : vector<64x96xf32> to vector<8x96xf32>
    %cst_71 = arith.constant dense<0.000000e+00> : vector<8x96xf32>
    %131 = tpu.matmul %128, %2, %cst_71 {dimension_numbers = #tpu.dot_dimension_numbers<[1], [0], [0], [1], [0, 0, 1, 1], [], []>} : vector<8x32xf32>, vector<32x96xf32>, vector<8x96xf32> -> vector<8x96xf32>
    %132 = vector.extract_strided_slice %130 {offsets = [0, 0], sizes = [8, 32], strides = [1, 1]} : vector<8x96xf32> to vector<8x32xf32>
    %133 = vector.extract_strided_slice %131 {offsets = [0, 0], sizes = [8, 32], strides = [1, 1]} : vector<8x96xf32> to vector<8x32xf32>
    %134 = arith.addf %132, %133 : vector<8x32xf32>
    %135 = arith.negf %134 : vector<8x32xf32>
    %136 = math.exp %135 : vector<8x32xf32>
    %cst_72 = arith.constant 1.000000e+00 : f32
    %137 = vector.broadcast %cst_72 : f32 to vector<8x32xf32>
    %138 = arith.addf %137, %136 : vector<8x32xf32>
    %139 = arith.divf %137, %138 : vector<8x32xf32>
    %140 = vector.extract_strided_slice %130 {offsets = [0, 32], sizes = [8, 32], strides = [1, 1]} : vector<8x96xf32> to vector<8x32xf32>
    %141 = vector.extract_strided_slice %131 {offsets = [0, 32], sizes = [8, 32], strides = [1, 1]} : vector<8x96xf32> to vector<8x32xf32>
    %142 = arith.addf %140, %141 : vector<8x32xf32>
    %143 = arith.negf %142 : vector<8x32xf32>
    %144 = math.exp %143 : vector<8x32xf32>
    %cst_73 = arith.constant 1.000000e+00 : f32
    %145 = vector.broadcast %cst_73 : f32 to vector<8x32xf32>
    %146 = arith.addf %145, %144 : vector<8x32xf32>
    %147 = arith.divf %145, %146 : vector<8x32xf32>
    %148 = vector.extract_strided_slice %130 {offsets = [0, 64], sizes = [8, 32], strides = [1, 1]} : vector<8x96xf32> to vector<8x32xf32>
    %149 = vector.extract_strided_slice %131 {offsets = [0, 64], sizes = [8, 32], strides = [1, 1]} : vector<8x96xf32> to vector<8x32xf32>
    %150 = vector.broadcast %4 : vector<1x32xf32> to vector<8x32xf32>
    %151 = arith.addf %149, %150 : vector<8x32xf32>
    %152 = arith.mulf %139, %151 : vector<8x32xf32>
    %153 = arith.addf %148, %152 : vector<8x32xf32>
    %154 = math.tanh %153 : vector<8x32xf32>
    %cst_74 = arith.constant 1.000000e+00 : f32
    %155 = vector.broadcast %cst_74 : f32 to vector<8x32xf32>
    %156 = arith.subf %155, %147 : vector<8x32xf32>
    %157 = arith.mulf %156, %154 : vector<8x32xf32>
    %158 = arith.mulf %147, %128 : vector<8x32xf32>
    %159 = arith.addf %157, %158 : vector<8x32xf32>
    %c24 = arith.constant 24 : index
    %c0_75 = arith.constant 0 : index
    %160 = vector.load %arg28[%c24, %c0_75] : memref<64x32xf32, #tpu.memory_space<vmem>>, vector<8x32xf32>
    tpu.vector_store %arg28[%c24, %c0_75], %159 {strides = array<i32>} : memref<64x32xf32, #tpu.memory_space<vmem>>, vector<8x32xf32>,
    %161 = vector.extract_strided_slice %35 {offsets = [32, 0], sizes = [8, 96], strides = [1, 1]} : vector<64x96xf32> to vector<8x96xf32>
    %cst_76 = arith.constant dense<0.000000e+00> : vector<8x96xf32>
    %162 = tpu.matmul %159, %2, %cst_76 {dimension_numbers = #tpu.dot_dimension_numbers<[1], [0], [0], [1], [0, 0, 1, 1], [], []>} : vector<8x32xf32>, vector<32x96xf32>, vector<8x96xf32> -> vector<8x96xf32>
    %163 = vector.extract_strided_slice %161 {offsets = [0, 0], sizes = [8, 32], strides = [1, 1]} : vector<8x96xf32> to vector<8x32xf32>
    %164 = vector.extract_strided_slice %162 {offsets = [0, 0], sizes = [8, 32], strides = [1, 1]} : vector<8x96xf32> to vector<8x32xf32>
    %165 = arith.addf %163, %164 : vector<8x32xf32>
    %166 = arith.negf %165 : vector<8x32xf32>
    %167 = math.exp %166 : vector<8x32xf32>
    %cst_77 = arith.constant 1.000000e+00 : f32
    %168 = vector.broadcast %cst_77 : f32 to vector<8x32xf32>
    %169 = arith.addf %168, %167 : vector<8x32xf32>
    %170 = arith.divf %168, %169 : vector<8x32xf32>
    %171 = vector.extract_strided_slice %161 {offsets = [0, 32], sizes = [8, 32], strides = [1, 1]} : vector<8x96xf32> to vector<8x32xf32>
    %172 = vector.extract_strided_slice %162 {offsets = [0, 32], sizes = [8, 32], strides = [1, 1]} : vector<8x96xf32> to vector<8x32xf32>
    %173 = arith.addf %171, %172 : vector<8x32xf32>
    %174 = arith.negf %173 : vector<8x32xf32>
    %175 = math.exp %174 : vector<8x32xf32>
    %cst_78 = arith.constant 1.000000e+00 : f32
    %176 = vector.broadcast %cst_78 : f32 to vector<8x32xf32>
    %177 = arith.addf %176, %175 : vector<8x32xf32>
    %178 = arith.divf %176, %177 : vector<8x32xf32>
    %179 = vector.extract_strided_slice %161 {offsets = [0, 64], sizes = [8, 32], strides = [1, 1]} : vector<8x96xf32> to vector<8x32xf32>
    %180 = vector.extract_strided_slice %162 {offsets = [0, 64], sizes = [8, 32], strides = [1, 1]} : vector<8x96xf32> to vector<8x32xf32>
    %181 = vector.broadcast %4 : vector<1x32xf32> to vector<8x32xf32>
    %182 = arith.addf %180, %181 : vector<8x32xf32>
    %183 = arith.mulf %170, %182 : vector<8x32xf32>
    %184 = arith.addf %179, %183 : vector<8x32xf32>
    %185 = math.tanh %184 : vector<8x32xf32>
    %cst_79 = arith.constant 1.000000e+00 : f32
    %186 = vector.broadcast %cst_79 : f32 to vector<8x32xf32>
    %187 = arith.subf %186, %178 : vector<8x32xf32>
    %188 = arith.mulf %187, %185 : vector<8x32xf32>
    %189 = arith.mulf %178, %159 : vector<8x32xf32>
    %190 = arith.addf %188, %189 : vector<8x32xf32>
    %c32 = arith.constant 32 : index
    %c0_80 = arith.constant 0 : index
    %191 = vector.load %arg28[%c32, %c0_80] : memref<64x32xf32, #tpu.memory_space<vmem>>, vector<8x32xf32>
    tpu.vector_store %arg28[%c32, %c0_80], %190 {strides = array<i32>} : memref<64x32xf32, #tpu.memory_space<vmem>>, vector<8x32xf32>,
    %192 = vector.extract_strided_slice %35 {offsets = [40, 0], sizes = [8, 96], strides = [1, 1]} : vector<64x96xf32> to vector<8x96xf32>
    %cst_81 = arith.constant dense<0.000000e+00> : vector<8x96xf32>
    %193 = tpu.matmul %190, %2, %cst_81 {dimension_numbers = #tpu.dot_dimension_numbers<[1], [0], [0], [1], [0, 0, 1, 1], [], []>} : vector<8x32xf32>, vector<32x96xf32>, vector<8x96xf32> -> vector<8x96xf32>
    %194 = vector.extract_strided_slice %192 {offsets = [0, 0], sizes = [8, 32], strides = [1, 1]} : vector<8x96xf32> to vector<8x32xf32>
    %195 = vector.extract_strided_slice %193 {offsets = [0, 0], sizes = [8, 32], strides = [1, 1]} : vector<8x96xf32> to vector<8x32xf32>
    %196 = arith.addf %194, %195 : vector<8x32xf32>
    %197 = arith.negf %196 : vector<8x32xf32>
    %198 = math.exp %197 : vector<8x32xf32>
    %cst_82 = arith.constant 1.000000e+00 : f32
    %199 = vector.broadcast %cst_82 : f32 to vector<8x32xf32>
    %200 = arith.addf %199, %198 : vector<8x32xf32>
    %201 = arith.divf %199, %200 : vector<8x32xf32>
    %202 = vector.extract_strided_slice %192 {offsets = [0, 32], sizes = [8, 32], strides = [1, 1]} : vector<8x96xf32> to vector<8x32xf32>
    %203 = vector.extract_strided_slice %193 {offsets = [0, 32], sizes = [8, 32], strides = [1, 1]} : vector<8x96xf32> to vector<8x32xf32>
    %204 = arith.addf %202, %203 : vector<8x32xf32>
    %205 = arith.negf %204 : vector<8x32xf32>
    %206 = math.exp %205 : vector<8x32xf32>
    %cst_83 = arith.constant 1.000000e+00 : f32
    %207 = vector.broadcast %cst_83 : f32 to vector<8x32xf32>
    %208 = arith.addf %207, %206 : vector<8x32xf32>
    %209 = arith.divf %207, %208 : vector<8x32xf32>
    %210 = vector.extract_strided_slice %192 {offsets = [0, 64], sizes = [8, 32], strides = [1, 1]} : vector<8x96xf32> to vector<8x32xf32>
    %211 = vector.extract_strided_slice %193 {offsets = [0, 64], sizes = [8, 32], strides = [1, 1]} : vector<8x96xf32> to vector<8x32xf32>
    %212 = vector.broadcast %4 : vector<1x32xf32> to vector<8x32xf32>
    %213 = arith.addf %211, %212 : vector<8x32xf32>
    %214 = arith.mulf %201, %213 : vector<8x32xf32>
    %215 = arith.addf %210, %214 : vector<8x32xf32>
    %216 = math.tanh %215 : vector<8x32xf32>
    %cst_84 = arith.constant 1.000000e+00 : f32
    %217 = vector.broadcast %cst_84 : f32 to vector<8x32xf32>
    %218 = arith.subf %217, %209 : vector<8x32xf32>
    %219 = arith.mulf %218, %216 : vector<8x32xf32>
    %220 = arith.mulf %209, %190 : vector<8x32xf32>
    %221 = arith.addf %219, %220 : vector<8x32xf32>
    %c40 = arith.constant 40 : index
    %c0_85 = arith.constant 0 : index
    %222 = vector.load %arg28[%c40, %c0_85] : memref<64x32xf32, #tpu.memory_space<vmem>>, vector<8x32xf32>
    tpu.vector_store %arg28[%c40, %c0_85], %221 {strides = array<i32>} : memref<64x32xf32, #tpu.memory_space<vmem>>, vector<8x32xf32>,
    %223 = vector.extract_strided_slice %35 {offsets = [48, 0], sizes = [8, 96], strides = [1, 1]} : vector<64x96xf32> to vector<8x96xf32>
    %cst_86 = arith.constant dense<0.000000e+00> : vector<8x96xf32>
    %224 = tpu.matmul %221, %2, %cst_86 {dimension_numbers = #tpu.dot_dimension_numbers<[1], [0], [0], [1], [0, 0, 1, 1], [], []>} : vector<8x32xf32>, vector<32x96xf32>, vector<8x96xf32> -> vector<8x96xf32>
    %225 = vector.extract_strided_slice %223 {offsets = [0, 0], sizes = [8, 32], strides = [1, 1]} : vector<8x96xf32> to vector<8x32xf32>
    %226 = vector.extract_strided_slice %224 {offsets = [0, 0], sizes = [8, 32], strides = [1, 1]} : vector<8x96xf32> to vector<8x32xf32>
    %227 = arith.addf %225, %226 : vector<8x32xf32>
    %228 = arith.negf %227 : vector<8x32xf32>
    %229 = math.exp %228 : vector<8x32xf32>
    %cst_87 = arith.constant 1.000000e+00 : f32
    %230 = vector.broadcast %cst_87 : f32 to vector<8x32xf32>
    %231 = arith.addf %230, %229 : vector<8x32xf32>
    %232 = arith.divf %230, %231 : vector<8x32xf32>
    %233 = vector.extract_strided_slice %223 {offsets = [0, 32], sizes = [8, 32], strides = [1, 1]} : vector<8x96xf32> to vector<8x32xf32>
    %234 = vector.extract_strided_slice %224 {offsets = [0, 32], sizes = [8, 32], strides = [1, 1]} : vector<8x96xf32> to vector<8x32xf32>
    %235 = arith.addf %233, %234 : vector<8x32xf32>
    %236 = arith.negf %235 : vector<8x32xf32>
    %237 = math.exp %236 : vector<8x32xf32>
    %cst_88 = arith.constant 1.000000e+00 : f32
    %238 = vector.broadcast %cst_88 : f32 to vector<8x32xf32>
    %239 = arith.addf %238, %237 : vector<8x32xf32>
    %240 = arith.divf %238, %239 : vector<8x32xf32>
    %241 = vector.extract_strided_slice %223 {offsets = [0, 64], sizes = [8, 32], strides = [1, 1]} : vector<8x96xf32> to vector<8x32xf32>
    %242 = vector.extract_strided_slice %224 {offsets = [0, 64], sizes = [8, 32], strides = [1, 1]} : vector<8x96xf32> to vector<8x32xf32>
    %243 = vector.broadcast %4 : vector<1x32xf32> to vector<8x32xf32>
    %244 = arith.addf %242, %243 : vector<8x32xf32>
    %245 = arith.mulf %232, %244 : vector<8x32xf32>
    %246 = arith.addf %241, %245 : vector<8x32xf32>
    %247 = math.tanh %246 : vector<8x32xf32>
    %cst_89 = arith.constant 1.000000e+00 : f32
    %248 = vector.broadcast %cst_89 : f32 to vector<8x32xf32>
    %249 = arith.subf %248, %240 : vector<8x32xf32>
    %250 = arith.mulf %249, %247 : vector<8x32xf32>
    %251 = arith.mulf %240, %221 : vector<8x32xf32>
    %252 = arith.addf %250, %251 : vector<8x32xf32>
    %c48 = arith.constant 48 : index
    %c0_90 = arith.constant 0 : index
    %253 = vector.load %arg28[%c48, %c0_90] : memref<64x32xf32, #tpu.memory_space<vmem>>, vector<8x32xf32>
    tpu.vector_store %arg28[%c48, %c0_90], %252 {strides = array<i32>} : memref<64x32xf32, #tpu.memory_space<vmem>>, vector<8x32xf32>,
    %254 = vector.extract_strided_slice %35 {offsets = [56, 0], sizes = [8, 96], strides = [1, 1]} : vector<64x96xf32> to vector<8x96xf32>
    %cst_91 = arith.constant dense<0.000000e+00> : vector<8x96xf32>
    %255 = tpu.matmul %252, %2, %cst_91 {dimension_numbers = #tpu.dot_dimension_numbers<[1], [0], [0], [1], [0, 0, 1, 1], [], []>} : vector<8x32xf32>, vector<32x96xf32>, vector<8x96xf32> -> vector<8x96xf32>
    %256 = vector.extract_strided_slice %254 {offsets = [0, 0], sizes = [8, 32], strides = [1, 1]} : vector<8x96xf32> to vector<8x32xf32>
    %257 = vector.extract_strided_slice %255 {offsets = [0, 0], sizes = [8, 32], strides = [1, 1]} : vector<8x96xf32> to vector<8x32xf32>
    %258 = arith.addf %256, %257 : vector<8x32xf32>
    %259 = arith.negf %258 : vector<8x32xf32>
    %260 = math.exp %259 : vector<8x32xf32>
    %cst_92 = arith.constant 1.000000e+00 : f32
    %261 = vector.broadcast %cst_92 : f32 to vector<8x32xf32>
    %262 = arith.addf %261, %260 : vector<8x32xf32>
    %263 = arith.divf %261, %262 : vector<8x32xf32>
    %264 = vector.extract_strided_slice %254 {offsets = [0, 32], sizes = [8, 32], strides = [1, 1]} : vector<8x96xf32> to vector<8x32xf32>
    %265 = vector.extract_strided_slice %255 {offsets = [0, 32], sizes = [8, 32], strides = [1, 1]} : vector<8x96xf32> to vector<8x32xf32>
    %266 = arith.addf %264, %265 : vector<8x32xf32>
    %267 = arith.negf %266 : vector<8x32xf32>
    %268 = math.exp %267 : vector<8x32xf32>
    %cst_93 = arith.constant 1.000000e+00 : f32
    %269 = vector.broadcast %cst_93 : f32 to vector<8x32xf32>
    %270 = arith.addf %269, %268 : vector<8x32xf32>
    %271 = arith.divf %269, %270 : vector<8x32xf32>
    %272 = vector.extract_strided_slice %254 {offsets = [0, 64], sizes = [8, 32], strides = [1, 1]} : vector<8x96xf32> to vector<8x32xf32>
    %273 = vector.extract_strided_slice %255 {offsets = [0, 64], sizes = [8, 32], strides = [1, 1]} : vector<8x96xf32> to vector<8x32xf32>
    %274 = vector.broadcast %4 : vector<1x32xf32> to vector<8x32xf32>
    %275 = arith.addf %273, %274 : vector<8x32xf32>
    %276 = arith.mulf %263, %275 : vector<8x32xf32>
    %277 = arith.addf %272, %276 : vector<8x32xf32>
    %278 = math.tanh %277 : vector<8x32xf32>
    %cst_94 = arith.constant 1.000000e+00 : f32
    %279 = vector.broadcast %cst_94 : f32 to vector<8x32xf32>
    %280 = arith.subf %279, %271 : vector<8x32xf32>
    %281 = arith.mulf %280, %278 : vector<8x32xf32>
    %282 = arith.mulf %271, %252 : vector<8x32xf32>
    %283 = arith.addf %281, %282 : vector<8x32xf32>
    %c56 = arith.constant 56 : index
    %c0_95 = arith.constant 0 : index
    %284 = vector.load %arg28[%c56, %c0_95] : memref<64x32xf32, #tpu.memory_space<vmem>>, vector<8x32xf32>
    tpu.vector_store %arg28[%c56, %c0_95], %283 {strides = array<i32>} : memref<64x32xf32, #tpu.memory_space<vmem>>, vector<8x32xf32>,
    %c0_96 = arith.constant 0 : index
    %c0_97 = arith.constant 0 : index
    %285 = vector.load %arg28[%c0_96, %c0_97] : memref<64x32xf32, #tpu.memory_space<vmem>>, vector<64x32xf32>
    %cst_98 = arith.constant dense<0.000000e+00> : vector<64x96xf32>
    %286 = tpu.matmul %285, %5, %cst_98 {dimension_numbers = #tpu.dot_dimension_numbers<[1], [0], [0], [1], [0, 0, 1, 1], [], []>} : vector<64x32xf32>, vector<32x96xf32>, vector<64x96xf32> -> vector<64x96xf32>
    %287 = vector.broadcast %7 : vector<1x96xf32> to vector<64x96xf32>
    %288 = arith.addf %286, %287 : vector<64x96xf32>
    %cst_99 = arith.constant 0.000000e+00 : f32
    %289 = vector.broadcast %cst_99 : f32 to vector<8x32xf32>
    %290 = vector.extract_strided_slice %288 {offsets = [0, 0], sizes = [8, 96], strides = [1, 1]} : vector<64x96xf32> to vector<8x96xf32>
    %cst_100 = arith.constant dense<0.000000e+00> : vector<8x96xf32>
    %291 = tpu.matmul %289, %6, %cst_100 {dimension_numbers = #tpu.dot_dimension_numbers<[1], [0], [0], [1], [0, 0, 1, 1], [], []>} : vector<8x32xf32>, vector<32x96xf32>, vector<8x96xf32> -> vector<8x96xf32>
    %292 = vector.extract_strided_slice %290 {offsets = [0, 0], sizes = [8, 32], strides = [1, 1]} : vector<8x96xf32> to vector<8x32xf32>
    %293 = vector.extract_strided_slice %291 {offsets = [0, 0], sizes = [8, 32], strides = [1, 1]} : vector<8x96xf32> to vector<8x32xf32>
    %294 = arith.addf %292, %293 : vector<8x32xf32>
    %295 = arith.negf %294 : vector<8x32xf32>
    %296 = math.exp %295 : vector<8x32xf32>
    %cst_101 = arith.constant 1.000000e+00 : f32
    %297 = vector.broadcast %cst_101 : f32 to vector<8x32xf32>
    %298 = arith.addf %297, %296 : vector<8x32xf32>
    %299 = arith.divf %297, %298 : vector<8x32xf32>
    %300 = vector.extract_strided_slice %290 {offsets = [0, 32], sizes = [8, 32], strides = [1, 1]} : vector<8x96xf32> to vector<8x32xf32>
    %301 = vector.extract_strided_slice %291 {offsets = [0, 32], sizes = [8, 32], strides = [1, 1]} : vector<8x96xf32> to vector<8x32xf32>
    %302 = arith.addf %300, %301 : vector<8x32xf32>
    %303 = arith.negf %302 : vector<8x32xf32>
    %304 = math.exp %303 : vector<8x32xf32>
    %cst_102 = arith.constant 1.000000e+00 : f32
    %305 = vector.broadcast %cst_102 : f32 to vector<8x32xf32>
    %306 = arith.addf %305, %304 : vector<8x32xf32>
    %307 = arith.divf %305, %306 : vector<8x32xf32>
    %308 = vector.extract_strided_slice %290 {offsets = [0, 64], sizes = [8, 32], strides = [1, 1]} : vector<8x96xf32> to vector<8x32xf32>
    %309 = vector.extract_strided_slice %291 {offsets = [0, 64], sizes = [8, 32], strides = [1, 1]} : vector<8x96xf32> to vector<8x32xf32>
    %310 = vector.broadcast %8 : vector<1x32xf32> to vector<8x32xf32>
    %311 = arith.addf %309, %310 : vector<8x32xf32>
    %312 = arith.mulf %299, %311 : vector<8x32xf32>
    %313 = arith.addf %308, %312 : vector<8x32xf32>
    %314 = math.tanh %313 : vector<8x32xf32>
    %cst_103 = arith.constant 1.000000e+00 : f32
    %315 = vector.broadcast %cst_103 : f32 to vector<8x32xf32>
    %316 = arith.subf %315, %307 : vector<8x32xf32>
    %317 = arith.mulf %316, %314 : vector<8x32xf32>
    %318 = arith.mulf %307, %289 : vector<8x32xf32>
    %319 = arith.addf %317, %318 : vector<8x32xf32>
    %320 = vector.extract_strided_slice %288 {offsets = [8, 0], sizes = [8, 96], strides = [1, 1]} : vector<64x96xf32> to vector<8x96xf32>
    %cst_104 = arith.constant dense<0.000000e+00> : vector<8x96xf32>
    %321 = tpu.matmul %319, %6, %cst_104 {dimension_numbers = #tpu.dot_dimension_numbers<[1], [0], [0], [1], [0, 0, 1, 1], [], []>} : vector<8x32xf32>, vector<32x96xf32>, vector<8x96xf32> -> vector<8x96xf32>
    %322 = vector.extract_strided_slice %320 {offsets = [0, 0], sizes = [8, 32], strides = [1, 1]} : vector<8x96xf32> to vector<8x32xf32>
    %323 = vector.extract_strided_slice %321 {offsets = [0, 0], sizes = [8, 32], strides = [1, 1]} : vector<8x96xf32> to vector<8x32xf32>
    %324 = arith.addf %322, %323 : vector<8x32xf32>
    %325 = arith.negf %324 : vector<8x32xf32>
    %326 = math.exp %325 : vector<8x32xf32>
    %cst_105 = arith.constant 1.000000e+00 : f32
    %327 = vector.broadcast %cst_105 : f32 to vector<8x32xf32>
    %328 = arith.addf %327, %326 : vector<8x32xf32>
    %329 = arith.divf %327, %328 : vector<8x32xf32>
    %330 = vector.extract_strided_slice %320 {offsets = [0, 32], sizes = [8, 32], strides = [1, 1]} : vector<8x96xf32> to vector<8x32xf32>
    %331 = vector.extract_strided_slice %321 {offsets = [0, 32], sizes = [8, 32], strides = [1, 1]} : vector<8x96xf32> to vector<8x32xf32>
    %332 = arith.addf %330, %331 : vector<8x32xf32>
    %333 = arith.negf %332 : vector<8x32xf32>
    %334 = math.exp %333 : vector<8x32xf32>
    %cst_106 = arith.constant 1.000000e+00 : f32
    %335 = vector.broadcast %cst_106 : f32 to vector<8x32xf32>
    %336 = arith.addf %335, %334 : vector<8x32xf32>
    %337 = arith.divf %335, %336 : vector<8x32xf32>
    %338 = vector.extract_strided_slice %320 {offsets = [0, 64], sizes = [8, 32], strides = [1, 1]} : vector<8x96xf32> to vector<8x32xf32>
    %339 = vector.extract_strided_slice %321 {offsets = [0, 64], sizes = [8, 32], strides = [1, 1]} : vector<8x96xf32> to vector<8x32xf32>
    %340 = vector.broadcast %8 : vector<1x32xf32> to vector<8x32xf32>
    %341 = arith.addf %339, %340 : vector<8x32xf32>
    %342 = arith.mulf %329, %341 : vector<8x32xf32>
    %343 = arith.addf %338, %342 : vector<8x32xf32>
    %344 = math.tanh %343 : vector<8x32xf32>
    %cst_107 = arith.constant 1.000000e+00 : f32
    %345 = vector.broadcast %cst_107 : f32 to vector<8x32xf32>
    %346 = arith.subf %345, %337 : vector<8x32xf32>
    %347 = arith.mulf %346, %344 : vector<8x32xf32>
    %348 = arith.mulf %337, %319 : vector<8x32xf32>
    %349 = arith.addf %347, %348 : vector<8x32xf32>
    %350 = vector.extract_strided_slice %288 {offsets = [16, 0], sizes = [8, 96], strides = [1, 1]} : vector<64x96xf32> to vector<8x96xf32>
    %cst_108 = arith.constant dense<0.000000e+00> : vector<8x96xf32>
    %351 = tpu.matmul %349, %6, %cst_108 {dimension_numbers = #tpu.dot_dimension_numbers<[1], [0], [0], [1], [0, 0, 1, 1], [], []>} : vector<8x32xf32>, vector<32x96xf32>, vector<8x96xf32> -> vector<8x96xf32>
    %352 = vector.extract_strided_slice %350 {offsets = [0, 0], sizes = [8, 32], strides = [1, 1]} : vector<8x96xf32> to vector<8x32xf32>
    %353 = vector.extract_strided_slice %351 {offsets = [0, 0], sizes = [8, 32], strides = [1, 1]} : vector<8x96xf32> to vector<8x32xf32>
    %354 = arith.addf %352, %353 : vector<8x32xf32>
    %355 = arith.negf %354 : vector<8x32xf32>
    %356 = math.exp %355 : vector<8x32xf32>
    %cst_109 = arith.constant 1.000000e+00 : f32
    %357 = vector.broadcast %cst_109 : f32 to vector<8x32xf32>
    %358 = arith.addf %357, %356 : vector<8x32xf32>
    %359 = arith.divf %357, %358 : vector<8x32xf32>
    %360 = vector.extract_strided_slice %350 {offsets = [0, 32], sizes = [8, 32], strides = [1, 1]} : vector<8x96xf32> to vector<8x32xf32>
    %361 = vector.extract_strided_slice %351 {offsets = [0, 32], sizes = [8, 32], strides = [1, 1]} : vector<8x96xf32> to vector<8x32xf32>
    %362 = arith.addf %360, %361 : vector<8x32xf32>
    %363 = arith.negf %362 : vector<8x32xf32>
    %364 = math.exp %363 : vector<8x32xf32>
    %cst_110 = arith.constant 1.000000e+00 : f32
    %365 = vector.broadcast %cst_110 : f32 to vector<8x32xf32>
    %366 = arith.addf %365, %364 : vector<8x32xf32>
    %367 = arith.divf %365, %366 : vector<8x32xf32>
    %368 = vector.extract_strided_slice %350 {offsets = [0, 64], sizes = [8, 32], strides = [1, 1]} : vector<8x96xf32> to vector<8x32xf32>
    %369 = vector.extract_strided_slice %351 {offsets = [0, 64], sizes = [8, 32], strides = [1, 1]} : vector<8x96xf32> to vector<8x32xf32>
    %370 = vector.broadcast %8 : vector<1x32xf32> to vector<8x32xf32>
    %371 = arith.addf %369, %370 : vector<8x32xf32>
    %372 = arith.mulf %359, %371 : vector<8x32xf32>
    %373 = arith.addf %368, %372 : vector<8x32xf32>
    %374 = math.tanh %373 : vector<8x32xf32>
    %cst_111 = arith.constant 1.000000e+00 : f32
    %375 = vector.broadcast %cst_111 : f32 to vector<8x32xf32>
    %376 = arith.subf %375, %367 : vector<8x32xf32>
    %377 = arith.mulf %376, %374 : vector<8x32xf32>
    %378 = arith.mulf %367, %349 : vector<8x32xf32>
    %379 = arith.addf %377, %378 : vector<8x32xf32>
    %380 = vector.extract_strided_slice %288 {offsets = [24, 0], sizes = [8, 96], strides = [1, 1]} : vector<64x96xf32> to vector<8x96xf32>
    %cst_112 = arith.constant dense<0.000000e+00> : vector<8x96xf32>
    %381 = tpu.matmul %379, %6, %cst_112 {dimension_numbers = #tpu.dot_dimension_numbers<[1], [0], [0], [1], [0, 0, 1, 1], [], []>} : vector<8x32xf32>, vector<32x96xf32>, vector<8x96xf32> -> vector<8x96xf32>
    %382 = vector.extract_strided_slice %380 {offsets = [0, 0], sizes = [8, 32], strides = [1, 1]} : vector<8x96xf32> to vector<8x32xf32>
    %383 = vector.extract_strided_slice %381 {offsets = [0, 0], sizes = [8, 32], strides = [1, 1]} : vector<8x96xf32> to vector<8x32xf32>
    %384 = arith.addf %382, %383 : vector<8x32xf32>
    %385 = arith.negf %384 : vector<8x32xf32>
    %386 = math.exp %385 : vector<8x32xf32>
    %cst_113 = arith.constant 1.000000e+00 : f32
    %387 = vector.broadcast %cst_113 : f32 to vector<8x32xf32>
    %388 = arith.addf %387, %386 : vector<8x32xf32>
    %389 = arith.divf %387, %388 : vector<8x32xf32>
    %390 = vector.extract_strided_slice %380 {offsets = [0, 32], sizes = [8, 32], strides = [1, 1]} : vector<8x96xf32> to vector<8x32xf32>
    %391 = vector.extract_strided_slice %381 {offsets = [0, 32], sizes = [8, 32], strides = [1, 1]} : vector<8x96xf32> to vector<8x32xf32>
    %392 = arith.addf %390, %391 : vector<8x32xf32>
    %393 = arith.negf %392 : vector<8x32xf32>
    %394 = math.exp %393 : vector<8x32xf32>
    %cst_114 = arith.constant 1.000000e+00 : f32
    %395 = vector.broadcast %cst_114 : f32 to vector<8x32xf32>
    %396 = arith.addf %395, %394 : vector<8x32xf32>
    %397 = arith.divf %395, %396 : vector<8x32xf32>
    %398 = vector.extract_strided_slice %380 {offsets = [0, 64], sizes = [8, 32], strides = [1, 1]} : vector<8x96xf32> to vector<8x32xf32>
    %399 = vector.extract_strided_slice %381 {offsets = [0, 64], sizes = [8, 32], strides = [1, 1]} : vector<8x96xf32> to vector<8x32xf32>
    %400 = vector.broadcast %8 : vector<1x32xf32> to vector<8x32xf32>
    %401 = arith.addf %399, %400 : vector<8x32xf32>
    %402 = arith.mulf %389, %401 : vector<8x32xf32>
    %403 = arith.addf %398, %402 : vector<8x32xf32>
    %404 = math.tanh %403 : vector<8x32xf32>
    %cst_115 = arith.constant 1.000000e+00 : f32
    %405 = vector.broadcast %cst_115 : f32 to vector<8x32xf32>
    %406 = arith.subf %405, %397 : vector<8x32xf32>
    %407 = arith.mulf %406, %404 : vector<8x32xf32>
    %408 = arith.mulf %397, %379 : vector<8x32xf32>
    %409 = arith.addf %407, %408 : vector<8x32xf32>
    %410 = vector.extract_strided_slice %288 {offsets = [32, 0], sizes = [8, 96], strides = [1, 1]} : vector<64x96xf32> to vector<8x96xf32>
    %cst_116 = arith.constant dense<0.000000e+00> : vector<8x96xf32>
    %411 = tpu.matmul %409, %6, %cst_116 {dimension_numbers = #tpu.dot_dimension_numbers<[1], [0], [0], [1], [0, 0, 1, 1], [], []>} : vector<8x32xf32>, vector<32x96xf32>, vector<8x96xf32> -> vector<8x96xf32>
    %412 = vector.extract_strided_slice %410 {offsets = [0, 0], sizes = [8, 32], strides = [1, 1]} : vector<8x96xf32> to vector<8x32xf32>
    %413 = vector.extract_strided_slice %411 {offsets = [0, 0], sizes = [8, 32], strides = [1, 1]} : vector<8x96xf32> to vector<8x32xf32>
    %414 = arith.addf %412, %413 : vector<8x32xf32>
    %415 = arith.negf %414 : vector<8x32xf32>
    %416 = math.exp %415 : vector<8x32xf32>
    %cst_117 = arith.constant 1.000000e+00 : f32
    %417 = vector.broadcast %cst_117 : f32 to vector<8x32xf32>
    %418 = arith.addf %417, %416 : vector<8x32xf32>
    %419 = arith.divf %417, %418 : vector<8x32xf32>
    %420 = vector.extract_strided_slice %410 {offsets = [0, 32], sizes = [8, 32], strides = [1, 1]} : vector<8x96xf32> to vector<8x32xf32>
    %421 = vector.extract_strided_slice %411 {offsets = [0, 32], sizes = [8, 32], strides = [1, 1]} : vector<8x96xf32> to vector<8x32xf32>
    %422 = arith.addf %420, %421 : vector<8x32xf32>
    %423 = arith.negf %422 : vector<8x32xf32>
    %424 = math.exp %423 : vector<8x32xf32>
    %cst_118 = arith.constant 1.000000e+00 : f32
    %425 = vector.broadcast %cst_118 : f32 to vector<8x32xf32>
    %426 = arith.addf %425, %424 : vector<8x32xf32>
    %427 = arith.divf %425, %426 : vector<8x32xf32>
    %428 = vector.extract_strided_slice %410 {offsets = [0, 64], sizes = [8, 32], strides = [1, 1]} : vector<8x96xf32> to vector<8x32xf32>
    %429 = vector.extract_strided_slice %411 {offsets = [0, 64], sizes = [8, 32], strides = [1, 1]} : vector<8x96xf32> to vector<8x32xf32>
    %430 = vector.broadcast %8 : vector<1x32xf32> to vector<8x32xf32>
    %431 = arith.addf %429, %430 : vector<8x32xf32>
    %432 = arith.mulf %419, %431 : vector<8x32xf32>
    %433 = arith.addf %428, %432 : vector<8x32xf32>
    %434 = math.tanh %433 : vector<8x32xf32>
    %cst_119 = arith.constant 1.000000e+00 : f32
    %435 = vector.broadcast %cst_119 : f32 to vector<8x32xf32>
    %436 = arith.subf %435, %427 : vector<8x32xf32>
    %437 = arith.mulf %436, %434 : vector<8x32xf32>
    %438 = arith.mulf %427, %409 : vector<8x32xf32>
    %439 = arith.addf %437, %438 : vector<8x32xf32>
    %440 = vector.extract_strided_slice %288 {offsets = [40, 0], sizes = [8, 96], strides = [1, 1]} : vector<64x96xf32> to vector<8x96xf32>
    %cst_120 = arith.constant dense<0.000000e+00> : vector<8x96xf32>
    %441 = tpu.matmul %439, %6, %cst_120 {dimension_numbers = #tpu.dot_dimension_numbers<[1], [0], [0], [1], [0, 0, 1, 1], [], []>} : vector<8x32xf32>, vector<32x96xf32>, vector<8x96xf32> -> vector<8x96xf32>
    %442 = vector.extract_strided_slice %440 {offsets = [0, 0], sizes = [8, 32], strides = [1, 1]} : vector<8x96xf32> to vector<8x32xf32>
    %443 = vector.extract_strided_slice %441 {offsets = [0, 0], sizes = [8, 32], strides = [1, 1]} : vector<8x96xf32> to vector<8x32xf32>
    %444 = arith.addf %442, %443 : vector<8x32xf32>
    %445 = arith.negf %444 : vector<8x32xf32>
    %446 = math.exp %445 : vector<8x32xf32>
    %cst_121 = arith.constant 1.000000e+00 : f32
    %447 = vector.broadcast %cst_121 : f32 to vector<8x32xf32>
    %448 = arith.addf %447, %446 : vector<8x32xf32>
    %449 = arith.divf %447, %448 : vector<8x32xf32>
    %450 = vector.extract_strided_slice %440 {offsets = [0, 32], sizes = [8, 32], strides = [1, 1]} : vector<8x96xf32> to vector<8x32xf32>
    %451 = vector.extract_strided_slice %441 {offsets = [0, 32], sizes = [8, 32], strides = [1, 1]} : vector<8x96xf32> to vector<8x32xf32>
    %452 = arith.addf %450, %451 : vector<8x32xf32>
    %453 = arith.negf %452 : vector<8x32xf32>
    %454 = math.exp %453 : vector<8x32xf32>
    %cst_122 = arith.constant 1.000000e+00 : f32
    %455 = vector.broadcast %cst_122 : f32 to vector<8x32xf32>
    %456 = arith.addf %455, %454 : vector<8x32xf32>
    %457 = arith.divf %455, %456 : vector<8x32xf32>
    %458 = vector.extract_strided_slice %440 {offsets = [0, 64], sizes = [8, 32], strides = [1, 1]} : vector<8x96xf32> to vector<8x32xf32>
    %459 = vector.extract_strided_slice %441 {offsets = [0, 64], sizes = [8, 32], strides = [1, 1]} : vector<8x96xf32> to vector<8x32xf32>
    %460 = vector.broadcast %8 : vector<1x32xf32> to vector<8x32xf32>
    %461 = arith.addf %459, %460 : vector<8x32xf32>
    %462 = arith.mulf %449, %461 : vector<8x32xf32>
    %463 = arith.addf %458, %462 : vector<8x32xf32>
    %464 = math.tanh %463 : vector<8x32xf32>
    %cst_123 = arith.constant 1.000000e+00 : f32
    %465 = vector.broadcast %cst_123 : f32 to vector<8x32xf32>
    %466 = arith.subf %465, %457 : vector<8x32xf32>
    %467 = arith.mulf %466, %464 : vector<8x32xf32>
    %468 = arith.mulf %457, %439 : vector<8x32xf32>
    %469 = arith.addf %467, %468 : vector<8x32xf32>
    %470 = vector.extract_strided_slice %288 {offsets = [48, 0], sizes = [8, 96], strides = [1, 1]} : vector<64x96xf32> to vector<8x96xf32>
    %cst_124 = arith.constant dense<0.000000e+00> : vector<8x96xf32>
    %471 = tpu.matmul %469, %6, %cst_124 {dimension_numbers = #tpu.dot_dimension_numbers<[1], [0], [0], [1], [0, 0, 1, 1], [], []>} : vector<8x32xf32>, vector<32x96xf32>, vector<8x96xf32> -> vector<8x96xf32>
    %472 = vector.extract_strided_slice %470 {offsets = [0, 0], sizes = [8, 32], strides = [1, 1]} : vector<8x96xf32> to vector<8x32xf32>
    %473 = vector.extract_strided_slice %471 {offsets = [0, 0], sizes = [8, 32], strides = [1, 1]} : vector<8x96xf32> to vector<8x32xf32>
    %474 = arith.addf %472, %473 : vector<8x32xf32>
    %475 = arith.negf %474 : vector<8x32xf32>
    %476 = math.exp %475 : vector<8x32xf32>
    %cst_125 = arith.constant 1.000000e+00 : f32
    %477 = vector.broadcast %cst_125 : f32 to vector<8x32xf32>
    %478 = arith.addf %477, %476 : vector<8x32xf32>
    %479 = arith.divf %477, %478 : vector<8x32xf32>
    %480 = vector.extract_strided_slice %470 {offsets = [0, 32], sizes = [8, 32], strides = [1, 1]} : vector<8x96xf32> to vector<8x32xf32>
    %481 = vector.extract_strided_slice %471 {offsets = [0, 32], sizes = [8, 32], strides = [1, 1]} : vector<8x96xf32> to vector<8x32xf32>
    %482 = arith.addf %480, %481 : vector<8x32xf32>
    %483 = arith.negf %482 : vector<8x32xf32>
    %484 = math.exp %483 : vector<8x32xf32>
    %cst_126 = arith.constant 1.000000e+00 : f32
    %485 = vector.broadcast %cst_126 : f32 to vector<8x32xf32>
    %486 = arith.addf %485, %484 : vector<8x32xf32>
    %487 = arith.divf %485, %486 : vector<8x32xf32>
    %488 = vector.extract_strided_slice %470 {offsets = [0, 64], sizes = [8, 32], strides = [1, 1]} : vector<8x96xf32> to vector<8x32xf32>
    %489 = vector.extract_strided_slice %471 {offsets = [0, 64], sizes = [8, 32], strides = [1, 1]} : vector<8x96xf32> to vector<8x32xf32>
    %490 = vector.broadcast %8 : vector<1x32xf32> to vector<8x32xf32>
    %491 = arith.addf %489, %490 : vector<8x32xf32>
    %492 = arith.mulf %479, %491 : vector<8x32xf32>
    %493 = arith.addf %488, %492 : vector<8x32xf32>
    %494 = math.tanh %493 : vector<8x32xf32>
    %cst_127 = arith.constant 1.000000e+00 : f32
    %495 = vector.broadcast %cst_127 : f32 to vector<8x32xf32>
    %496 = arith.subf %495, %487 : vector<8x32xf32>
    %497 = arith.mulf %496, %494 : vector<8x32xf32>
    %498 = arith.mulf %487, %469 : vector<8x32xf32>
    %499 = arith.addf %497, %498 : vector<8x32xf32>
    %500 = vector.extract_strided_slice %288 {offsets = [56, 0], sizes = [8, 96], strides = [1, 1]} : vector<64x96xf32> to vector<8x96xf32>
    %cst_128 = arith.constant dense<0.000000e+00> : vector<8x96xf32>
    %501 = tpu.matmul %499, %6, %cst_128 {dimension_numbers = #tpu.dot_dimension_numbers<[1], [0], [0], [1], [0, 0, 1, 1], [], []>} : vector<8x32xf32>, vector<32x96xf32>, vector<8x96xf32> -> vector<8x96xf32>
    %502 = vector.extract_strided_slice %500 {offsets = [0, 0], sizes = [8, 32], strides = [1, 1]} : vector<8x96xf32> to vector<8x32xf32>
    %503 = vector.extract_strided_slice %501 {offsets = [0, 0], sizes = [8, 32], strides = [1, 1]} : vector<8x96xf32> to vector<8x32xf32>
    %504 = arith.addf %502, %503 : vector<8x32xf32>
    %505 = arith.negf %504 : vector<8x32xf32>
    %506 = math.exp %505 : vector<8x32xf32>
    %cst_129 = arith.constant 1.000000e+00 : f32
    %507 = vector.broadcast %cst_129 : f32 to vector<8x32xf32>
    %508 = arith.addf %507, %506 : vector<8x32xf32>
    %509 = arith.divf %507, %508 : vector<8x32xf32>
    %510 = vector.extract_strided_slice %500 {offsets = [0, 32], sizes = [8, 32], strides = [1, 1]} : vector<8x96xf32> to vector<8x32xf32>
    %511 = vector.extract_strided_slice %501 {offsets = [0, 32], sizes = [8, 32], strides = [1, 1]} : vector<8x96xf32> to vector<8x32xf32>
    %512 = arith.addf %510, %511 : vector<8x32xf32>
    %513 = arith.negf %512 : vector<8x32xf32>
    %514 = math.exp %513 : vector<8x32xf32>
    %cst_130 = arith.constant 1.000000e+00 : f32
    %515 = vector.broadcast %cst_130 : f32 to vector<8x32xf32>
    %516 = arith.addf %515, %514 : vector<8x32xf32>
    %517 = arith.divf %515, %516 : vector<8x32xf32>
    %518 = vector.extract_strided_slice %500 {offsets = [0, 64], sizes = [8, 32], strides = [1, 1]} : vector<8x96xf32> to vector<8x32xf32>
    %519 = vector.extract_strided_slice %501 {offsets = [0, 64], sizes = [8, 32], strides = [1, 1]} : vector<8x96xf32> to vector<8x32xf32>
    %520 = vector.broadcast %8 : vector<1x32xf32> to vector<8x32xf32>
    %521 = arith.addf %519, %520 : vector<8x32xf32>
    %522 = arith.mulf %509, %521 : vector<8x32xf32>
    %523 = arith.addf %518, %522 : vector<8x32xf32>
    %524 = math.tanh %523 : vector<8x32xf32>
    %cst_131 = arith.constant 1.000000e+00 : f32
    %525 = vector.broadcast %cst_131 : f32 to vector<8x32xf32>
    %526 = arith.subf %525, %517 : vector<8x32xf32>
    %527 = arith.mulf %526, %524 : vector<8x32xf32>
    %528 = arith.mulf %517, %499 : vector<8x32xf32>
    %529 = arith.addf %527, %528 : vector<8x32xf32>
    %c0_132 = arith.constant 0 : index
    %c0_133 = arith.constant 0 : index
    %530 = vector.load %arg2[%c0_132, %c0_133] : memref<40x8xf32, #tpu.memory_space<vmem>>, vector<40x8xf32>
    %cst_134 = arith.constant dense<0.000000e+00> : vector<40x256xf32>
    %531 = tpu.matmul %530, %9, %cst_134 {dimension_numbers = #tpu.dot_dimension_numbers<[1], [0], [0], [1], [0, 0, 1, 1], [], []>} : vector<40x8xf32>, vector<8x256xf32>, vector<40x256xf32> -> vector<40x256xf32>
    %532 = vector.broadcast %12 : vector<1x256xf32> to vector<40x256xf32>
    %533 = arith.addf %531, %532 : vector<40x256xf32>
    %cst_135 = arith.constant dense<0.000000e+00> : vector<40x256xf32>
    %534 = tpu.matmul %530, %10, %cst_135 {dimension_numbers = #tpu.dot_dimension_numbers<[1], [0], [0], [1], [0, 0, 1, 1], [], []>} : vector<40x8xf32>, vector<8x256xf32>, vector<40x256xf32> -> vector<40x256xf32>
    %cst_136 = arith.constant 0.000000e+00 : f32
    %535 = vector.broadcast %cst_136 : f32 to vector<8x64xf32>
    %cst_137 = arith.constant 0.000000e+00 : f32
    %536 = vector.broadcast %cst_137 : f32 to vector<8x64xf32>
    %537 = vector.extract_strided_slice %533 {offsets = [0, 0], sizes = [8, 256], strides = [1, 1]} : vector<40x256xf32> to vector<8x256xf32>
    %538 = vector.extract_strided_slice %534 {offsets = [32, 0], sizes = [8, 256], strides = [1, 1]} : vector<40x256xf32> to vector<8x256xf32>
    %539 = arith.addf %537, %538 : vector<8x256xf32>
    %cst_138 = arith.constant dense<0.000000e+00> : vector<8x256xf32>
    %540 = tpu.matmul %535, %11, %cst_138 {dimension_numbers = #tpu.dot_dimension_numbers<[1], [0], [0], [1], [0, 0, 1, 1], [], []>} : vector<8x64xf32>, vector<64x256xf32>, vector<8x256xf32> -> vector<8x256xf32>
    %541 = arith.addf %539, %540 : vector<8x256xf32>
    %542 = vector.extract_strided_slice %541 {offsets = [0, 0], sizes = [8, 64], strides = [1, 1]} : vector<8x256xf32> to vector<8x64xf32>
    %543 = arith.negf %542 : vector<8x64xf32>
    %544 = math.exp %543 : vector<8x64xf32>
    %cst_139 = arith.constant 1.000000e+00 : f32
    %545 = vector.broadcast %cst_139 : f32 to vector<8x64xf32>
    %546 = arith.addf %545, %544 : vector<8x64xf32>
    %547 = arith.divf %545, %546 : vector<8x64xf32>
    %548 = vector.extract_strided_slice %541 {offsets = [0, 64], sizes = [8, 64], strides = [1, 1]} : vector<8x256xf32> to vector<8x64xf32>
    %549 = arith.negf %548 : vector<8x64xf32>
    %550 = math.exp %549 : vector<8x64xf32>
    %cst_140 = arith.constant 1.000000e+00 : f32
    %551 = vector.broadcast %cst_140 : f32 to vector<8x64xf32>
    %552 = arith.addf %551, %550 : vector<8x64xf32>
    %553 = arith.divf %551, %552 : vector<8x64xf32>
    %554 = vector.extract_strided_slice %541 {offsets = [0, 128], sizes = [8, 64], strides = [1, 1]} : vector<8x256xf32> to vector<8x64xf32>
    %555 = math.tanh %554 : vector<8x64xf32>
    %556 = vector.extract_strided_slice %541 {offsets = [0, 192], sizes = [8, 64], strides = [1, 1]} : vector<8x256xf32> to vector<8x64xf32>
    %557 = arith.negf %556 : vector<8x64xf32>
    %558 = math.exp %557 : vector<8x64xf32>
    %cst_141 = arith.constant 1.000000e+00 : f32
    %559 = vector.broadcast %cst_141 : f32 to vector<8x64xf32>
    %560 = arith.addf %559, %558 : vector<8x64xf32>
    %561 = arith.divf %559, %560 : vector<8x64xf32>
    %562 = arith.mulf %553, %536 : vector<8x64xf32>
    %563 = arith.mulf %547, %555 : vector<8x64xf32>
    %564 = arith.addf %562, %563 : vector<8x64xf32>
    %565 = math.tanh %564 : vector<8x64xf32>
    %566 = arith.mulf %561, %565 : vector<8x64xf32>
    %567 = vector.extract_strided_slice %566 {offsets = [0, 0], sizes = [8, 32], strides = [1, 1]} : vector<8x64xf32> to vector<8x32xf32>
    %c0_142 = arith.constant 0 : index
    %c0_143 = arith.constant 0 : index
    %568 = vector.load %arg29[%c0_142, %c0_143] : memref<40x32xf32, #tpu.memory_space<vmem>>, vector<8x32xf32>
    tpu.vector_store %arg29[%c0_142, %c0_143], %567 {strides = array<i32>} : memref<40x32xf32, #tpu.memory_space<vmem>>, vector<8x32xf32>,
    %569 = vector.extract_strided_slice %566 {offsets = [0, 32], sizes = [8, 32], strides = [1, 1]} : vector<8x64xf32> to vector<8x32xf32>
    %c32_144 = arith.constant 32 : index
    %c0_145 = arith.constant 0 : index
    %570 = vector.load %arg30[%c32_144, %c0_145] : memref<40x32xf32, #tpu.memory_space<vmem>>, vector<8x32xf32>
    tpu.vector_store %arg30[%c32_144, %c0_145], %569 {strides = array<i32>} : memref<40x32xf32, #tpu.memory_space<vmem>>, vector<8x32xf32>,
    %571 = vector.extract_strided_slice %533 {offsets = [8, 0], sizes = [8, 256], strides = [1, 1]} : vector<40x256xf32> to vector<8x256xf32>
    %572 = vector.extract_strided_slice %534 {offsets = [24, 0], sizes = [8, 256], strides = [1, 1]} : vector<40x256xf32> to vector<8x256xf32>
    %573 = arith.addf %571, %572 : vector<8x256xf32>
    %cst_146 = arith.constant dense<0.000000e+00> : vector<8x256xf32>
    %574 = tpu.matmul %566, %11, %cst_146 {dimension_numbers = #tpu.dot_dimension_numbers<[1], [0], [0], [1], [0, 0, 1, 1], [], []>} : vector<8x64xf32>, vector<64x256xf32>, vector<8x256xf32> -> vector<8x256xf32>
    %575 = arith.addf %573, %574 : vector<8x256xf32>
    %576 = vector.extract_strided_slice %575 {offsets = [0, 0], sizes = [8, 64], strides = [1, 1]} : vector<8x256xf32> to vector<8x64xf32>
    %577 = arith.negf %576 : vector<8x64xf32>
    %578 = math.exp %577 : vector<8x64xf32>
    %cst_147 = arith.constant 1.000000e+00 : f32
    %579 = vector.broadcast %cst_147 : f32 to vector<8x64xf32>
    %580 = arith.addf %579, %578 : vector<8x64xf32>
    %581 = arith.divf %579, %580 : vector<8x64xf32>
    %582 = vector.extract_strided_slice %575 {offsets = [0, 64], sizes = [8, 64], strides = [1, 1]} : vector<8x256xf32> to vector<8x64xf32>
    %583 = arith.negf %582 : vector<8x64xf32>
    %584 = math.exp %583 : vector<8x64xf32>
    %cst_148 = arith.constant 1.000000e+00 : f32
    %585 = vector.broadcast %cst_148 : f32 to vector<8x64xf32>
    %586 = arith.addf %585, %584 : vector<8x64xf32>
    %587 = arith.divf %585, %586 : vector<8x64xf32>
    %588 = vector.extract_strided_slice %575 {offsets = [0, 128], sizes = [8, 64], strides = [1, 1]} : vector<8x256xf32> to vector<8x64xf32>
    %589 = math.tanh %588 : vector<8x64xf32>
    %590 = vector.extract_strided_slice %575 {offsets = [0, 192], sizes = [8, 64], strides = [1, 1]} : vector<8x256xf32> to vector<8x64xf32>
    %591 = arith.negf %590 : vector<8x64xf32>
    %592 = math.exp %591 : vector<8x64xf32>
    %cst_149 = arith.constant 1.000000e+00 : f32
    %593 = vector.broadcast %cst_149 : f32 to vector<8x64xf32>
    %594 = arith.addf %593, %592 : vector<8x64xf32>
    %595 = arith.divf %593, %594 : vector<8x64xf32>
    %596 = arith.mulf %587, %564 : vector<8x64xf32>
    %597 = arith.mulf %581, %589 : vector<8x64xf32>
    %598 = arith.addf %596, %597 : vector<8x64xf32>
    %599 = math.tanh %598 : vector<8x64xf32>
    %600 = arith.mulf %595, %599 : vector<8x64xf32>
    %601 = vector.extract_strided_slice %600 {offsets = [0, 0], sizes = [8, 32], strides = [1, 1]} : vector<8x64xf32> to vector<8x32xf32>
    %c8_150 = arith.constant 8 : index
    %c0_151 = arith.constant 0 : index
    %602 = vector.load %arg29[%c8_150, %c0_151] : memref<40x32xf32, #tpu.memory_space<vmem>>, vector<8x32xf32>
    tpu.vector_store %arg29[%c8_150, %c0_151], %601 {strides = array<i32>} : memref<40x32xf32, #tpu.memory_space<vmem>>, vector<8x32xf32>,
    %603 = vector.extract_strided_slice %600 {offsets = [0, 32], sizes = [8, 32], strides = [1, 1]} : vector<8x64xf32> to vector<8x32xf32>
    %c24_152 = arith.constant 24 : index
    %c0_153 = arith.constant 0 : index
    %604 = vector.load %arg30[%c24_152, %c0_153] : memref<40x32xf32, #tpu.memory_space<vmem>>, vector<8x32xf32>
    tpu.vector_store %arg30[%c24_152, %c0_153], %603 {strides = array<i32>} : memref<40x32xf32, #tpu.memory_space<vmem>>, vector<8x32xf32>,
    %605 = vector.extract_strided_slice %533 {offsets = [16, 0], sizes = [8, 256], strides = [1, 1]} : vector<40x256xf32> to vector<8x256xf32>
    %606 = vector.extract_strided_slice %534 {offsets = [16, 0], sizes = [8, 256], strides = [1, 1]} : vector<40x256xf32> to vector<8x256xf32>
    %607 = arith.addf %605, %606 : vector<8x256xf32>
    %cst_154 = arith.constant dense<0.000000e+00> : vector<8x256xf32>
    %608 = tpu.matmul %600, %11, %cst_154 {dimension_numbers = #tpu.dot_dimension_numbers<[1], [0], [0], [1], [0, 0, 1, 1], [], []>} : vector<8x64xf32>, vector<64x256xf32>, vector<8x256xf32> -> vector<8x256xf32>
    %609 = arith.addf %607, %608 : vector<8x256xf32>
    %610 = vector.extract_strided_slice %609 {offsets = [0, 0], sizes = [8, 64], strides = [1, 1]} : vector<8x256xf32> to vector<8x64xf32>
    %611 = arith.negf %610 : vector<8x64xf32>
    %612 = math.exp %611 : vector<8x64xf32>
    %cst_155 = arith.constant 1.000000e+00 : f32
    %613 = vector.broadcast %cst_155 : f32 to vector<8x64xf32>
    %614 = arith.addf %613, %612 : vector<8x64xf32>
    %615 = arith.divf %613, %614 : vector<8x64xf32>
    %616 = vector.extract_strided_slice %609 {offsets = [0, 64], sizes = [8, 64], strides = [1, 1]} : vector<8x256xf32> to vector<8x64xf32>
    %617 = arith.negf %616 : vector<8x64xf32>
    %618 = math.exp %617 : vector<8x64xf32>
    %cst_156 = arith.constant 1.000000e+00 : f32
    %619 = vector.broadcast %cst_156 : f32 to vector<8x64xf32>
    %620 = arith.addf %619, %618 : vector<8x64xf32>
    %621 = arith.divf %619, %620 : vector<8x64xf32>
    %622 = vector.extract_strided_slice %609 {offsets = [0, 128], sizes = [8, 64], strides = [1, 1]} : vector<8x256xf32> to vector<8x64xf32>
    %623 = math.tanh %622 : vector<8x64xf32>
    %624 = vector.extract_strided_slice %609 {offsets = [0, 192], sizes = [8, 64], strides = [1, 1]} : vector<8x256xf32> to vector<8x64xf32>
    %625 = arith.negf %624 : vector<8x64xf32>
    %626 = math.exp %625 : vector<8x64xf32>
    %cst_157 = arith.constant 1.000000e+00 : f32
    %627 = vector.broadcast %cst_157 : f32 to vector<8x64xf32>
    %628 = arith.addf %627, %626 : vector<8x64xf32>
    %629 = arith.divf %627, %628 : vector<8x64xf32>
    %630 = arith.mulf %621, %598 : vector<8x64xf32>
    %631 = arith.mulf %615, %623 : vector<8x64xf32>
    %632 = arith.addf %630, %631 : vector<8x64xf32>
    %633 = math.tanh %632 : vector<8x64xf32>
    %634 = arith.mulf %629, %633 : vector<8x64xf32>
    %635 = vector.extract_strided_slice %634 {offsets = [0, 0], sizes = [8, 32], strides = [1, 1]} : vector<8x64xf32> to vector<8x32xf32>
    %c16_158 = arith.constant 16 : index
    %c0_159 = arith.constant 0 : index
    %636 = vector.load %arg29[%c16_158, %c0_159] : memref<40x32xf32, #tpu.memory_space<vmem>>, vector<8x32xf32>
    tpu.vector_store %arg29[%c16_158, %c0_159], %635 {strides = array<i32>} : memref<40x32xf32, #tpu.memory_space<vmem>>, vector<8x32xf32>,
    %637 = vector.extract_strided_slice %634 {offsets = [0, 32], sizes = [8, 32], strides = [1, 1]} : vector<8x64xf32> to vector<8x32xf32>
    %c16_160 = arith.constant 16 : index
    %c0_161 = arith.constant 0 : index
    %638 = vector.load %arg30[%c16_160, %c0_161] : memref<40x32xf32, #tpu.memory_space<vmem>>, vector<8x32xf32>
    tpu.vector_store %arg30[%c16_160, %c0_161], %637 {strides = array<i32>} : memref<40x32xf32, #tpu.memory_space<vmem>>, vector<8x32xf32>,
    %639 = vector.extract_strided_slice %533 {offsets = [24, 0], sizes = [8, 256], strides = [1, 1]} : vector<40x256xf32> to vector<8x256xf32>
    %640 = vector.extract_strided_slice %534 {offsets = [8, 0], sizes = [8, 256], strides = [1, 1]} : vector<40x256xf32> to vector<8x256xf32>
    %641 = arith.addf %639, %640 : vector<8x256xf32>
    %cst_162 = arith.constant dense<0.000000e+00> : vector<8x256xf32>
    %642 = tpu.matmul %634, %11, %cst_162 {dimension_numbers = #tpu.dot_dimension_numbers<[1], [0], [0], [1], [0, 0, 1, 1], [], []>} : vector<8x64xf32>, vector<64x256xf32>, vector<8x256xf32> -> vector<8x256xf32>
    %643 = arith.addf %641, %642 : vector<8x256xf32>
    %644 = vector.extract_strided_slice %643 {offsets = [0, 0], sizes = [8, 64], strides = [1, 1]} : vector<8x256xf32> to vector<8x64xf32>
    %645 = arith.negf %644 : vector<8x64xf32>
    %646 = math.exp %645 : vector<8x64xf32>
    %cst_163 = arith.constant 1.000000e+00 : f32
    %647 = vector.broadcast %cst_163 : f32 to vector<8x64xf32>
    %648 = arith.addf %647, %646 : vector<8x64xf32>
    %649 = arith.divf %647, %648 : vector<8x64xf32>
    %650 = vector.extract_strided_slice %643 {offsets = [0, 64], sizes = [8, 64], strides = [1, 1]} : vector<8x256xf32> to vector<8x64xf32>
    %651 = arith.negf %650 : vector<8x64xf32>
    %652 = math.exp %651 : vector<8x64xf32>
    %cst_164 = arith.constant 1.000000e+00 : f32
    %653 = vector.broadcast %cst_164 : f32 to vector<8x64xf32>
    %654 = arith.addf %653, %652 : vector<8x64xf32>
    %655 = arith.divf %653, %654 : vector<8x64xf32>
    %656 = vector.extract_strided_slice %643 {offsets = [0, 128], sizes = [8, 64], strides = [1, 1]} : vector<8x256xf32> to vector<8x64xf32>
    %657 = math.tanh %656 : vector<8x64xf32>
    %658 = vector.extract_strided_slice %643 {offsets = [0, 192], sizes = [8, 64], strides = [1, 1]} : vector<8x256xf32> to vector<8x64xf32>
    %659 = arith.negf %658 : vector<8x64xf32>
    %660 = math.exp %659 : vector<8x64xf32>
    %cst_165 = arith.constant 1.000000e+00 : f32
    %661 = vector.broadcast %cst_165 : f32 to vector<8x64xf32>
    %662 = arith.addf %661, %660 : vector<8x64xf32>
    %663 = arith.divf %661, %662 : vector<8x64xf32>
    %664 = arith.mulf %655, %632 : vector<8x64xf32>
    %665 = arith.mulf %649, %657 : vector<8x64xf32>
    %666 = arith.addf %664, %665 : vector<8x64xf32>
    %667 = math.tanh %666 : vector<8x64xf32>
    %668 = arith.mulf %663, %667 : vector<8x64xf32>
    %669 = vector.extract_strided_slice %668 {offsets = [0, 0], sizes = [8, 32], strides = [1, 1]} : vector<8x64xf32> to vector<8x32xf32>
    %c24_166 = arith.constant 24 : index
    %c0_167 = arith.constant 0 : index
    %670 = vector.load %arg29[%c24_166, %c0_167] : memref<40x32xf32, #tpu.memory_space<vmem>>, vector<8x32xf32>
    tpu.vector_store %arg29[%c24_166, %c0_167], %669 {strides = array<i32>} : memref<40x32xf32, #tpu.memory_space<vmem>>, vector<8x32xf32>,
    %671 = vector.extract_strided_slice %668 {offsets = [0, 32], sizes = [8, 32], strides = [1, 1]} : vector<8x64xf32> to vector<8x32xf32>
    %c8_168 = arith.constant 8 : index
    %c0_169 = arith.constant 0 : index
    %672 = vector.load %arg30[%c8_168, %c0_169] : memref<40x32xf32, #tpu.memory_space<vmem>>, vector<8x32xf32>
    tpu.vector_store %arg30[%c8_168, %c0_169], %671 {strides = array<i32>} : memref<40x32xf32, #tpu.memory_space<vmem>>, vector<8x32xf32>,
    %673 = vector.extract_strided_slice %533 {offsets = [32, 0], sizes = [8, 256], strides = [1, 1]} : vector<40x256xf32> to vector<8x256xf32>
    %674 = vector.extract_strided_slice %534 {offsets = [0, 0], sizes = [8, 256], strides = [1, 1]} : vector<40x256xf32> to vector<8x256xf32>
    %675 = arith.addf %673, %674 : vector<8x256xf32>
    %cst_170 = arith.constant dense<0.000000e+00> : vector<8x256xf32>
    %676 = tpu.matmul %668, %11, %cst_170 {dimension_numbers = #tpu.dot_dimension_numbers<[1], [0], [0], [1], [0, 0, 1, 1], [], []>} : vector<8x64xf32>, vector<64x256xf32>, vector<8x256xf32> -> vector<8x256xf32>
    %677 = arith.addf %675, %676 : vector<8x256xf32>
    %678 = vector.extract_strided_slice %677 {offsets = [0, 0], sizes = [8, 64], strides = [1, 1]} : vector<8x256xf32> to vector<8x64xf32>
    %679 = arith.negf %678 : vector<8x64xf32>
    %680 = math.exp %679 : vector<8x64xf32>
    %cst_171 = arith.constant 1.000000e+00 : f32
    %681 = vector.broadcast %cst_171 : f32 to vector<8x64xf32>
    %682 = arith.addf %681, %680 : vector<8x64xf32>
    %683 = arith.divf %681, %682 : vector<8x64xf32>
    %684 = vector.extract_strided_slice %677 {offsets = [0, 64], sizes = [8, 64], strides = [1, 1]} : vector<8x256xf32> to vector<8x64xf32>
    %685 = arith.negf %684 : vector<8x64xf32>
    %686 = math.exp %685 : vector<8x64xf32>
    %cst_172 = arith.constant 1.000000e+00 : f32
    %687 = vector.broadcast %cst_172 : f32 to vector<8x64xf32>
    %688 = arith.addf %687, %686 : vector<8x64xf32>
    %689 = arith.divf %687, %688 : vector<8x64xf32>
    %690 = vector.extract_strided_slice %677 {offsets = [0, 128], sizes = [8, 64], strides = [1, 1]} : vector<8x256xf32> to vector<8x64xf32>
    %691 = math.tanh %690 : vector<8x64xf32>
    %692 = vector.extract_strided_slice %677 {offsets = [0, 192], sizes = [8, 64], strides = [1, 1]} : vector<8x256xf32> to vector<8x64xf32>
    %693 = arith.negf %692 : vector<8x64xf32>
    %694 = math.exp %693 : vector<8x64xf32>
    %cst_173 = arith.constant 1.000000e+00 : f32
    %695 = vector.broadcast %cst_173 : f32 to vector<8x64xf32>
    %696 = arith.addf %695, %694 : vector<8x64xf32>
    %697 = arith.divf %695, %696 : vector<8x64xf32>
    %698 = arith.mulf %689, %666 : vector<8x64xf32>
    %699 = arith.mulf %683, %691 : vector<8x64xf32>
    %700 = arith.addf %698, %699 : vector<8x64xf32>
    %701 = math.tanh %700 : vector<8x64xf32>
    %702 = arith.mulf %697, %701 : vector<8x64xf32>
    %703 = vector.extract_strided_slice %702 {offsets = [0, 0], sizes = [8, 32], strides = [1, 1]} : vector<8x64xf32> to vector<8x32xf32>
    %c32_174 = arith.constant 32 : index
    %c0_175 = arith.constant 0 : index
    %704 = vector.load %arg29[%c32_174, %c0_175] : memref<40x32xf32, #tpu.memory_space<vmem>>, vector<8x32xf32>
    tpu.vector_store %arg29[%c32_174, %c0_175], %703 {strides = array<i32>} : memref<40x32xf32, #tpu.memory_space<vmem>>, vector<8x32xf32>,
    %705 = vector.extract_strided_slice %702 {offsets = [0, 32], sizes = [8, 32], strides = [1, 1]} : vector<8x64xf32> to vector<8x32xf32>
    %c0_176 = arith.constant 0 : index
    %c0_177 = arith.constant 0 : index
    %706 = vector.load %arg30[%c0_176, %c0_177] : memref<40x32xf32, #tpu.memory_space<vmem>>, vector<8x32xf32>
    tpu.vector_store %arg30[%c0_176, %c0_177], %705 {strides = array<i32>} : memref<40x32xf32, #tpu.memory_space<vmem>>, vector<8x32xf32>,
    %c0_178 = arith.constant 0 : index
    %c0_179 = arith.constant 0 : index
    %707 = vector.load %arg29[%c0_178, %c0_179] : memref<40x32xf32, #tpu.memory_space<vmem>>, vector<40x32xf32>
    %c0_180 = arith.constant 0 : index
    %c0_181 = arith.constant 0 : index
    %708 = vector.load %arg30[%c0_180, %c0_181] : memref<40x32xf32, #tpu.memory_space<vmem>>, vector<40x32xf32>
    %709 = vector.extract_strided_slice %13 {offsets = [0, 0], sizes = [32, 256], strides = [1, 1]} : vector<64x256xf32> to vector<32x256xf32>
    %cst_182 = arith.constant dense<0.000000e+00> : vector<40x256xf32>
    %710 = tpu.matmul %707, %709, %cst_182 {dimension_numbers = #tpu.dot_dimension_numbers<[1], [0], [0], [1], [0, 0, 1, 1], [], []>} : vector<40x32xf32>, vector<32x256xf32>, vector<40x256xf32> -> vector<40x256xf32>
    %711 = vector.extract_strided_slice %13 {offsets = [32, 0], sizes = [32, 256], strides = [1, 1]} : vector<64x256xf32> to vector<32x256xf32>
    %cst_183 = arith.constant dense<0.000000e+00> : vector<40x256xf32>
    %712 = tpu.matmul %708, %711, %cst_183 {dimension_numbers = #tpu.dot_dimension_numbers<[1], [0], [0], [1], [0, 0, 1, 1], [], []>} : vector<40x32xf32>, vector<32x256xf32>, vector<40x256xf32> -> vector<40x256xf32>
    %713 = arith.addf %710, %712 : vector<40x256xf32>
    %714 = vector.broadcast %16 : vector<1x256xf32> to vector<40x256xf32>
    %715 = arith.addf %713, %714 : vector<40x256xf32>
    %716 = vector.extract_strided_slice %14 {offsets = [0, 0], sizes = [32, 256], strides = [1, 1]} : vector<64x256xf32> to vector<32x256xf32>
    %cst_184 = arith.constant dense<0.000000e+00> : vector<40x256xf32>
    %717 = tpu.matmul %707, %716, %cst_184 {dimension_numbers = #tpu.dot_dimension_numbers<[1], [0], [0], [1], [0, 0, 1, 1], [], []>} : vector<40x32xf32>, vector<32x256xf32>, vector<40x256xf32> -> vector<40x256xf32>
    %718 = vector.extract_strided_slice %14 {offsets = [32, 0], sizes = [32, 256], strides = [1, 1]} : vector<64x256xf32> to vector<32x256xf32>
    %cst_185 = arith.constant dense<0.000000e+00> : vector<40x256xf32>
    %719 = tpu.matmul %708, %718, %cst_185 {dimension_numbers = #tpu.dot_dimension_numbers<[1], [0], [0], [1], [0, 0, 1, 1], [], []>} : vector<40x32xf32>, vector<32x256xf32>, vector<40x256xf32> -> vector<40x256xf32>
    %720 = arith.addf %717, %719 : vector<40x256xf32>
    %cst_186 = arith.constant 0.000000e+00 : f32
    %721 = vector.broadcast %cst_186 : f32 to vector<8x64xf32>
    %cst_187 = arith.constant 0.000000e+00 : f32
    %722 = vector.broadcast %cst_187 : f32 to vector<8x64xf32>
    %723 = vector.extract_strided_slice %715 {offsets = [0, 0], sizes = [8, 256], strides = [1, 1]} : vector<40x256xf32> to vector<8x256xf32>
    %724 = vector.extract_strided_slice %720 {offsets = [32, 0], sizes = [8, 256], strides = [1, 1]} : vector<40x256xf32> to vector<8x256xf32>
    %725 = arith.addf %723, %724 : vector<8x256xf32>
    %cst_188 = arith.constant dense<0.000000e+00> : vector<8x256xf32>
    %726 = tpu.matmul %721, %15, %cst_188 {dimension_numbers = #tpu.dot_dimension_numbers<[1], [0], [0], [1], [0, 0, 1, 1], [], []>} : vector<8x64xf32>, vector<64x256xf32>, vector<8x256xf32> -> vector<8x256xf32>
    %727 = arith.addf %725, %726 : vector<8x256xf32>
    %728 = vector.extract_strided_slice %727 {offsets = [0, 0], sizes = [8, 64], strides = [1, 1]} : vector<8x256xf32> to vector<8x64xf32>
    %729 = arith.negf %728 : vector<8x64xf32>
    %730 = math.exp %729 : vector<8x64xf32>
    %cst_189 = arith.constant 1.000000e+00 : f32
    %731 = vector.broadcast %cst_189 : f32 to vector<8x64xf32>
    %732 = arith.addf %731, %730 : vector<8x64xf32>
    %733 = arith.divf %731, %732 : vector<8x64xf32>
    %734 = vector.extract_strided_slice %727 {offsets = [0, 64], sizes = [8, 64], strides = [1, 1]} : vector<8x256xf32> to vector<8x64xf32>
    %735 = arith.negf %734 : vector<8x64xf32>
    %736 = math.exp %735 : vector<8x64xf32>
    %cst_190 = arith.constant 1.000000e+00 : f32
    %737 = vector.broadcast %cst_190 : f32 to vector<8x64xf32>
    %738 = arith.addf %737, %736 : vector<8x64xf32>
    %739 = arith.divf %737, %738 : vector<8x64xf32>
    %740 = vector.extract_strided_slice %727 {offsets = [0, 128], sizes = [8, 64], strides = [1, 1]} : vector<8x256xf32> to vector<8x64xf32>
    %741 = math.tanh %740 : vector<8x64xf32>
    %742 = vector.extract_strided_slice %727 {offsets = [0, 192], sizes = [8, 64], strides = [1, 1]} : vector<8x256xf32> to vector<8x64xf32>
    %743 = arith.negf %742 : vector<8x64xf32>
    %744 = math.exp %743 : vector<8x64xf32>
    %cst_191 = arith.constant 1.000000e+00 : f32
    %745 = vector.broadcast %cst_191 : f32 to vector<8x64xf32>
    %746 = arith.addf %745, %744 : vector<8x64xf32>
    %747 = arith.divf %745, %746 : vector<8x64xf32>
    %748 = arith.mulf %739, %722 : vector<8x64xf32>
    %749 = arith.mulf %733, %741 : vector<8x64xf32>
    %750 = arith.addf %748, %749 : vector<8x64xf32>
    %751 = math.tanh %750 : vector<8x64xf32>
    %752 = arith.mulf %747, %751 : vector<8x64xf32>
    %753 = vector.extract_strided_slice %752 {offsets = [0, 0], sizes = [8, 32], strides = [1, 1]} : vector<8x64xf32> to vector<8x32xf32>
    %754 = vector.extract_strided_slice %752 {offsets = [0, 32], sizes = [8, 32], strides = [1, 1]} : vector<8x64xf32> to vector<8x32xf32>
    %755 = vector.extract_strided_slice %715 {offsets = [8, 0], sizes = [8, 256], strides = [1, 1]} : vector<40x256xf32> to vector<8x256xf32>
    %756 = vector.extract_strided_slice %720 {offsets = [24, 0], sizes = [8, 256], strides = [1, 1]} : vector<40x256xf32> to vector<8x256xf32>
    %757 = arith.addf %755, %756 : vector<8x256xf32>
    %cst_192 = arith.constant dense<0.000000e+00> : vector<8x256xf32>
    %758 = tpu.matmul %752, %15, %cst_192 {dimension_numbers = #tpu.dot_dimension_numbers<[1], [0], [0], [1], [0, 0, 1, 1], [], []>} : vector<8x64xf32>, vector<64x256xf32>, vector<8x256xf32> -> vector<8x256xf32>
    %759 = arith.addf %757, %758 : vector<8x256xf32>
    %760 = vector.extract_strided_slice %759 {offsets = [0, 0], sizes = [8, 64], strides = [1, 1]} : vector<8x256xf32> to vector<8x64xf32>
    %761 = arith.negf %760 : vector<8x64xf32>
    %762 = math.exp %761 : vector<8x64xf32>
    %cst_193 = arith.constant 1.000000e+00 : f32
    %763 = vector.broadcast %cst_193 : f32 to vector<8x64xf32>
    %764 = arith.addf %763, %762 : vector<8x64xf32>
    %765 = arith.divf %763, %764 : vector<8x64xf32>
    %766 = vector.extract_strided_slice %759 {offsets = [0, 64], sizes = [8, 64], strides = [1, 1]} : vector<8x256xf32> to vector<8x64xf32>
    %767 = arith.negf %766 : vector<8x64xf32>
    %768 = math.exp %767 : vector<8x64xf32>
    %cst_194 = arith.constant 1.000000e+00 : f32
    %769 = vector.broadcast %cst_194 : f32 to vector<8x64xf32>
    %770 = arith.addf %769, %768 : vector<8x64xf32>
    %771 = arith.divf %769, %770 : vector<8x64xf32>
    %772 = vector.extract_strided_slice %759 {offsets = [0, 128], sizes = [8, 64], strides = [1, 1]} : vector<8x256xf32> to vector<8x64xf32>
    %773 = math.tanh %772 : vector<8x64xf32>
    %774 = vector.extract_strided_slice %759 {offsets = [0, 192], sizes = [8, 64], strides = [1, 1]} : vector<8x256xf32> to vector<8x64xf32>
    %775 = arith.negf %774 : vector<8x64xf32>
    %776 = math.exp %775 : vector<8x64xf32>
    %cst_195 = arith.constant 1.000000e+00 : f32
    %777 = vector.broadcast %cst_195 : f32 to vector<8x64xf32>
    %778 = arith.addf %777, %776 : vector<8x64xf32>
    %779 = arith.divf %777, %778 : vector<8x64xf32>
    %780 = arith.mulf %771, %750 : vector<8x64xf32>
    %781 = arith.mulf %765, %773 : vector<8x64xf32>
    %782 = arith.addf %780, %781 : vector<8x64xf32>
    %783 = math.tanh %782 : vector<8x64xf32>
    %784 = arith.mulf %779, %783 : vector<8x64xf32>
    %785 = vector.extract_strided_slice %784 {offsets = [0, 0], sizes = [8, 32], strides = [1, 1]} : vector<8x64xf32> to vector<8x32xf32>
    %786 = vector.extract_strided_slice %784 {offsets = [0, 32], sizes = [8, 32], strides = [1, 1]} : vector<8x64xf32> to vector<8x32xf32>
    %787 = vector.extract_strided_slice %715 {offsets = [16, 0], sizes = [8, 256], strides = [1, 1]} : vector<40x256xf32> to vector<8x256xf32>
    %788 = vector.extract_strided_slice %720 {offsets = [16, 0], sizes = [8, 256], strides = [1, 1]} : vector<40x256xf32> to vector<8x256xf32>
    %789 = arith.addf %787, %788 : vector<8x256xf32>
    %cst_196 = arith.constant dense<0.000000e+00> : vector<8x256xf32>
    %790 = tpu.matmul %784, %15, %cst_196 {dimension_numbers = #tpu.dot_dimension_numbers<[1], [0], [0], [1], [0, 0, 1, 1], [], []>} : vector<8x64xf32>, vector<64x256xf32>, vector<8x256xf32> -> vector<8x256xf32>
    %791 = arith.addf %789, %790 : vector<8x256xf32>
    %792 = vector.extract_strided_slice %791 {offsets = [0, 0], sizes = [8, 64], strides = [1, 1]} : vector<8x256xf32> to vector<8x64xf32>
    %793 = arith.negf %792 : vector<8x64xf32>
    %794 = math.exp %793 : vector<8x64xf32>
    %cst_197 = arith.constant 1.000000e+00 : f32
    %795 = vector.broadcast %cst_197 : f32 to vector<8x64xf32>
    %796 = arith.addf %795, %794 : vector<8x64xf32>
    %797 = arith.divf %795, %796 : vector<8x64xf32>
    %798 = vector.extract_strided_slice %791 {offsets = [0, 64], sizes = [8, 64], strides = [1, 1]} : vector<8x256xf32> to vector<8x64xf32>
    %799 = arith.negf %798 : vector<8x64xf32>
    %800 = math.exp %799 : vector<8x64xf32>
    %cst_198 = arith.constant 1.000000e+00 : f32
    %801 = vector.broadcast %cst_198 : f32 to vector<8x64xf32>
    %802 = arith.addf %801, %800 : vector<8x64xf32>
    %803 = arith.divf %801, %802 : vector<8x64xf32>
    %804 = vector.extract_strided_slice %791 {offsets = [0, 128], sizes = [8, 64], strides = [1, 1]} : vector<8x256xf32> to vector<8x64xf32>
    %805 = math.tanh %804 : vector<8x64xf32>
    %806 = vector.extract_strided_slice %791 {offsets = [0, 192], sizes = [8, 64], strides = [1, 1]} : vector<8x256xf32> to vector<8x64xf32>
    %807 = arith.negf %806 : vector<8x64xf32>
    %808 = math.exp %807 : vector<8x64xf32>
    %cst_199 = arith.constant 1.000000e+00 : f32
    %809 = vector.broadcast %cst_199 : f32 to vector<8x64xf32>
    %810 = arith.addf %809, %808 : vector<8x64xf32>
    %811 = arith.divf %809, %810 : vector<8x64xf32>
    %812 = arith.mulf %803, %782 : vector<8x64xf32>
    %813 = arith.mulf %797, %805 : vector<8x64xf32>
    %814 = arith.addf %812, %813 : vector<8x64xf32>
    %815 = math.tanh %814 : vector<8x64xf32>
    %816 = arith.mulf %811, %815 : vector<8x64xf32>
    %817 = vector.extract_strided_slice %816 {offsets = [0, 0], sizes = [8, 32], strides = [1, 1]} : vector<8x64xf32> to vector<8x32xf32>
    %818 = vector.extract_strided_slice %816 {offsets = [0, 32], sizes = [8, 32], strides = [1, 1]} : vector<8x64xf32> to vector<8x32xf32>
    %819 = vector.extract_strided_slice %715 {offsets = [24, 0], sizes = [8, 256], strides = [1, 1]} : vector<40x256xf32> to vector<8x256xf32>
    %820 = vector.extract_strided_slice %720 {offsets = [8, 0], sizes = [8, 256], strides = [1, 1]} : vector<40x256xf32> to vector<8x256xf32>
    %821 = arith.addf %819, %820 : vector<8x256xf32>
    %cst_200 = arith.constant dense<0.000000e+00> : vector<8x256xf32>
    %822 = tpu.matmul %816, %15, %cst_200 {dimension_numbers = #tpu.dot_dimension_numbers<[1], [0], [0], [1], [0, 0, 1, 1], [], []>} : vector<8x64xf32>, vector<64x256xf32>, vector<8x256xf32> -> vector<8x256xf32>
    %823 = arith.addf %821, %822 : vector<8x256xf32>
    %824 = vector.extract_strided_slice %823 {offsets = [0, 0], sizes = [8, 64], strides = [1, 1]} : vector<8x256xf32> to vector<8x64xf32>
    %825 = arith.negf %824 : vector<8x64xf32>
    %826 = math.exp %825 : vector<8x64xf32>
    %cst_201 = arith.constant 1.000000e+00 : f32
    %827 = vector.broadcast %cst_201 : f32 to vector<8x64xf32>
    %828 = arith.addf %827, %826 : vector<8x64xf32>
    %829 = arith.divf %827, %828 : vector<8x64xf32>
    %830 = vector.extract_strided_slice %823 {offsets = [0, 64], sizes = [8, 64], strides = [1, 1]} : vector<8x256xf32> to vector<8x64xf32>
    %831 = arith.negf %830 : vector<8x64xf32>
    %832 = math.exp %831 : vector<8x64xf32>
    %cst_202 = arith.constant 1.000000e+00 : f32
    %833 = vector.broadcast %cst_202 : f32 to vector<8x64xf32>
    %834 = arith.addf %833, %832 : vector<8x64xf32>
    %835 = arith.divf %833, %834 : vector<8x64xf32>
    %836 = vector.extract_strided_slice %823 {offsets = [0, 128], sizes = [8, 64], strides = [1, 1]} : vector<8x256xf32> to vector<8x64xf32>
    %837 = math.tanh %836 : vector<8x64xf32>
    %838 = vector.extract_strided_slice %823 {offsets = [0, 192], sizes = [8, 64], strides = [1, 1]} : vector<8x256xf32> to vector<8x64xf32>
    %839 = arith.negf %838 : vector<8x64xf32>
    %840 = math.exp %839 : vector<8x64xf32>
    %cst_203 = arith.constant 1.000000e+00 : f32
    %841 = vector.broadcast %cst_203 : f32 to vector<8x64xf32>
    %842 = arith.addf %841, %840 : vector<8x64xf32>
    %843 = arith.divf %841, %842 : vector<8x64xf32>
    %844 = arith.mulf %835, %814 : vector<8x64xf32>
    %845 = arith.mulf %829, %837 : vector<8x64xf32>
    %846 = arith.addf %844, %845 : vector<8x64xf32>
    %847 = math.tanh %846 : vector<8x64xf32>
    %848 = arith.mulf %843, %847 : vector<8x64xf32>
    %849 = vector.extract_strided_slice %848 {offsets = [0, 0], sizes = [8, 32], strides = [1, 1]} : vector<8x64xf32> to vector<8x32xf32>
    %850 = vector.extract_strided_slice %848 {offsets = [0, 32], sizes = [8, 32], strides = [1, 1]} : vector<8x64xf32> to vector<8x32xf32>
    %851 = vector.extract_strided_slice %715 {offsets = [32, 0], sizes = [8, 256], strides = [1, 1]} : vector<40x256xf32> to vector<8x256xf32>
    %852 = vector.extract_strided_slice %720 {offsets = [0, 0], sizes = [8, 256], strides = [1, 1]} : vector<40x256xf32> to vector<8x256xf32>
    %853 = arith.addf %851, %852 : vector<8x256xf32>
    %cst_204 = arith.constant dense<0.000000e+00> : vector<8x256xf32>
    %854 = tpu.matmul %848, %15, %cst_204 {dimension_numbers = #tpu.dot_dimension_numbers<[1], [0], [0], [1], [0, 0, 1, 1], [], []>} : vector<8x64xf32>, vector<64x256xf32>, vector<8x256xf32> -> vector<8x256xf32>
    %855 = arith.addf %853, %854 : vector<8x256xf32>
    %856 = vector.extract_strided_slice %855 {offsets = [0, 0], sizes = [8, 64], strides = [1, 1]} : vector<8x256xf32> to vector<8x64xf32>
    %857 = arith.negf %856 : vector<8x64xf32>
    %858 = math.exp %857 : vector<8x64xf32>
    %cst_205 = arith.constant 1.000000e+00 : f32
    %859 = vector.broadcast %cst_205 : f32 to vector<8x64xf32>
    %860 = arith.addf %859, %858 : vector<8x64xf32>
    %861 = arith.divf %859, %860 : vector<8x64xf32>
    %862 = vector.extract_strided_slice %855 {offsets = [0, 64], sizes = [8, 64], strides = [1, 1]} : vector<8x256xf32> to vector<8x64xf32>
    %863 = arith.negf %862 : vector<8x64xf32>
    %864 = math.exp %863 : vector<8x64xf32>
    %cst_206 = arith.constant 1.000000e+00 : f32
    %865 = vector.broadcast %cst_206 : f32 to vector<8x64xf32>
    %866 = arith.addf %865, %864 : vector<8x64xf32>
    %867 = arith.divf %865, %866 : vector<8x64xf32>
    %868 = vector.extract_strided_slice %855 {offsets = [0, 128], sizes = [8, 64], strides = [1, 1]} : vector<8x256xf32> to vector<8x64xf32>
    %869 = math.tanh %868 : vector<8x64xf32>
    %870 = vector.extract_strided_slice %855 {offsets = [0, 192], sizes = [8, 64], strides = [1, 1]} : vector<8x256xf32> to vector<8x64xf32>
    %871 = arith.negf %870 : vector<8x64xf32>
    %872 = math.exp %871 : vector<8x64xf32>
    %cst_207 = arith.constant 1.000000e+00 : f32
    %873 = vector.broadcast %cst_207 : f32 to vector<8x64xf32>
    %874 = arith.addf %873, %872 : vector<8x64xf32>
    %875 = arith.divf %873, %874 : vector<8x64xf32>
    %876 = arith.mulf %867, %846 : vector<8x64xf32>
    %877 = arith.mulf %861, %869 : vector<8x64xf32>
    %878 = arith.addf %876, %877 : vector<8x64xf32>
    %879 = math.tanh %878 : vector<8x64xf32>
    %880 = arith.mulf %875, %879 : vector<8x64xf32>
    %881 = vector.extract_strided_slice %880 {offsets = [0, 0], sizes = [8, 32], strides = [1, 1]} : vector<8x64xf32> to vector<8x32xf32>
    %882 = vector.extract_strided_slice %880 {offsets = [0, 32], sizes = [8, 32], strides = [1, 1]} : vector<8x64xf32> to vector<8x32xf32>
    %cst_208 = arith.constant 0.000000e+00 : f32
    %883 = vector.broadcast %cst_208 : f32 to vector<8x32xf32>
    %884 = vector.broadcast %18 : vector<1x32xf32> to vector<8x32xf32>
    %885 = arith.addf %883, %884 : vector<8x32xf32>
    %886 = vector.extract_strided_slice %17 {offsets = [0, 0], sizes = [32, 32], strides = [1, 1]} : vector<320x32xf32> to vector<32x32xf32>
    %cst_209 = arith.constant dense<0.000000e+00> : vector<8x32xf32>
    %887 = tpu.matmul %753, %886, %cst_209 {dimension_numbers = #tpu.dot_dimension_numbers<[1], [0], [0], [1], [0, 0, 1, 1], [], []>} : vector<8x32xf32>, vector<32x32xf32>, vector<8x32xf32> -> vector<8x32xf32>
    %888 = arith.addf %885, %887 : vector<8x32xf32>
    %889 = vector.extract_strided_slice %17 {offsets = [32, 0], sizes = [32, 32], strides = [1, 1]} : vector<320x32xf32> to vector<32x32xf32>
    %cst_210 = arith.constant dense<0.000000e+00> : vector<8x32xf32>
    %890 = tpu.matmul %882, %889, %cst_210 {dimension_numbers = #tpu.dot_dimension_numbers<[1], [0], [0], [1], [0, 0, 1, 1], [], []>} : vector<8x32xf32>, vector<32x32xf32>, vector<8x32xf32> -> vector<8x32xf32>
    %891 = arith.addf %888, %890 : vector<8x32xf32>
    %892 = vector.extract_strided_slice %17 {offsets = [64, 0], sizes = [32, 32], strides = [1, 1]} : vector<320x32xf32> to vector<32x32xf32>
    %cst_211 = arith.constant dense<0.000000e+00> : vector<8x32xf32>
    %893 = tpu.matmul %785, %892, %cst_211 {dimension_numbers = #tpu.dot_dimension_numbers<[1], [0], [0], [1], [0, 0, 1, 1], [], []>} : vector<8x32xf32>, vector<32x32xf32>, vector<8x32xf32> -> vector<8x32xf32>
    %894 = arith.addf %891, %893 : vector<8x32xf32>
    %895 = vector.extract_strided_slice %17 {offsets = [96, 0], sizes = [32, 32], strides = [1, 1]} : vector<320x32xf32> to vector<32x32xf32>
    %cst_212 = arith.constant dense<0.000000e+00> : vector<8x32xf32>
    %896 = tpu.matmul %850, %895, %cst_212 {dimension_numbers = #tpu.dot_dimension_numbers<[1], [0], [0], [1], [0, 0, 1, 1], [], []>} : vector<8x32xf32>, vector<32x32xf32>, vector<8x32xf32> -> vector<8x32xf32>
    %897 = arith.addf %894, %896 : vector<8x32xf32>
    %898 = vector.extract_strided_slice %17 {offsets = [128, 0], sizes = [32, 32], strides = [1, 1]} : vector<320x32xf32> to vector<32x32xf32>
    %cst_213 = arith.constant dense<0.000000e+00> : vector<8x32xf32>
    %899 = tpu.matmul %817, %898, %cst_213 {dimension_numbers = #tpu.dot_dimension_numbers<[1], [0], [0], [1], [0, 0, 1, 1], [], []>} : vector<8x32xf32>, vector<32x32xf32>, vector<8x32xf32> -> vector<8x32xf32>
    %900 = arith.addf %897, %899 : vector<8x32xf32>
    %901 = vector.extract_strided_slice %17 {offsets = [160, 0], sizes = [32, 32], strides = [1, 1]} : vector<320x32xf32> to vector<32x32xf32>
    %cst_214 = arith.constant dense<0.000000e+00> : vector<8x32xf32>
    %902 = tpu.matmul %818, %901, %cst_214 {dimension_numbers = #tpu.dot_dimension_numbers<[1], [0], [0], [1], [0, 0, 1, 1], [], []>} : vector<8x32xf32>, vector<32x32xf32>, vector<8x32xf32> -> vector<8x32xf32>
    %903 = arith.addf %900, %902 : vector<8x32xf32>
    %904 = vector.extract_strided_slice %17 {offsets = [192, 0], sizes = [32, 32], strides = [1, 1]} : vector<320x32xf32> to vector<32x32xf32>
    %cst_215 = arith.constant dense<0.000000e+00> : vector<8x32xf32>
    %905 = tpu.matmul %849, %904, %cst_215 {dimension_numbers = #tpu.dot_dimension_numbers<[1], [0], [0], [1], [0, 0, 1, 1], [], []>} : vector<8x32xf32>, vector<32x32xf32>, vector<8x32xf32> -> vector<8x32xf32>
    %906 = arith.addf %903, %905 : vector<8x32xf32>
    %907 = vector.extract_strided_slice %17 {offsets = [224, 0], sizes = [32, 32], strides = [1, 1]} : vector<320x32xf32> to vector<32x32xf32>
    %cst_216 = arith.constant dense<0.000000e+00> : vector<8x32xf32>
    %908 = tpu.matmul %786, %907, %cst_216 {dimension_numbers = #tpu.dot_dimension_numbers<[1], [0], [0], [1], [0, 0, 1, 1], [], []>} : vector<8x32xf32>, vector<32x32xf32>, vector<8x32xf32> -> vector<8x32xf32>
    %909 = arith.addf %906, %908 : vector<8x32xf32>
    %910 = vector.extract_strided_slice %17 {offsets = [256, 0], sizes = [32, 32], strides = [1, 1]} : vector<320x32xf32> to vector<32x32xf32>
    %cst_217 = arith.constant dense<0.000000e+00> : vector<8x32xf32>
    %911 = tpu.matmul %881, %910, %cst_217 {dimension_numbers = #tpu.dot_dimension_numbers<[1], [0], [0], [1], [0, 0, 1, 1], [], []>} : vector<8x32xf32>, vector<32x32xf32>, vector<8x32xf32> -> vector<8x32xf32>
    %912 = arith.addf %909, %911 : vector<8x32xf32>
    %913 = vector.extract_strided_slice %17 {offsets = [288, 0], sizes = [32, 32], strides = [1, 1]} : vector<320x32xf32> to vector<32x32xf32>
    %cst_218 = arith.constant dense<0.000000e+00> : vector<8x32xf32>
    %914 = tpu.matmul %754, %913, %cst_218 {dimension_numbers = #tpu.dot_dimension_numbers<[1], [0], [0], [1], [0, 0, 1, 1], [], []>} : vector<8x32xf32>, vector<32x32xf32>, vector<8x32xf32> -> vector<8x32xf32>
    %915 = arith.addf %912, %914 : vector<8x32xf32>
    %916 = vector.extract_strided_slice %19 {offsets = [0, 0], sizes = [32, 64], strides = [1, 1]} : vector<64x64xf32> to vector<32x64xf32>
    %cst_219 = arith.constant dense<0.000000e+00> : vector<8x64xf32>
    %917 = tpu.matmul %529, %916, %cst_219 {dimension_numbers = #tpu.dot_dimension_numbers<[1], [0], [0], [1], [0, 0, 1, 1], [], []>} : vector<8x32xf32>, vector<32x64xf32>, vector<8x64xf32> -> vector<8x64xf32>
    %918 = vector.extract_strided_slice %19 {offsets = [32, 0], sizes = [32, 64], strides = [1, 1]} : vector<64x64xf32> to vector<32x64xf32>
    %cst_220 = arith.constant dense<0.000000e+00> : vector<8x64xf32>
    %919 = tpu.matmul %915, %918, %cst_220 {dimension_numbers = #tpu.dot_dimension_numbers<[1], [0], [0], [1], [0, 0, 1, 1], [], []>} : vector<8x32xf32>, vector<32x64xf32>, vector<8x64xf32> -> vector<8x64xf32>
    %920 = arith.addf %917, %919 : vector<8x64xf32>
    %921 = vector.broadcast %20 : vector<1x64xf32> to vector<8x64xf32>
    %922 = arith.addf %920, %921 : vector<8x64xf32>
    %923 = math.tanh %922 : vector<8x64xf32>
    %cst_221 = arith.constant dense<0.000000e+00> : vector<8x32xf32>
    %924 = tpu.matmul %923, %21, %cst_221 {dimension_numbers = #tpu.dot_dimension_numbers<[1], [0], [0], [1], [0, 0, 1, 1], [], []>} : vector<8x64xf32>, vector<64x32xf32>, vector<8x32xf32> -> vector<8x32xf32>
    %925 = vector.broadcast %22 : vector<1x32xf32> to vector<8x32xf32>
    %926 = arith.addf %924, %925 : vector<8x32xf32>
    %927 = math.tanh %926 : vector<8x32xf32>
    %cst_222 = arith.constant dense<0.000000e+00> : vector<8x1xf32>
    %928 = tpu.matmul %927, %23, %cst_222 {dimension_numbers = #tpu.dot_dimension_numbers<[1], [0], [0], [1], [0, 0, 1, 1], [], []>} : vector<8x32xf32>, vector<32x1xf32>, vector<8x1xf32> -> vector<8x1xf32>
    %929 = vector.broadcast %24 : vector<1x1xf32> to vector<8x1xf32>
    %930 = arith.addf %928, %929 : vector<8x1xf32>
    %c0_223 = arith.constant 0 : index
    %c0_224 = arith.constant 0 : index
    %931 = vector.load %arg27[%c0_223, %c0_224] : memref<8x1xf32, #tpu.memory_space<vmem>>, vector<8x1xf32>
    tpu.vector_store %arg27[%c0_223, %c0_224], %930 {strides = array<i32>} : memref<8x1xf32, #tpu.memory_space<vmem>>, vector<8x1xf32>,
    return
  }
}

</mosaic_0001>

<llo_original>
// kernel: fwd.1
$region0: #{fwd.1}
  #allocation0 [shape = 'u32[]', space=smem, size = 0x4, offset = 0x4, fixed_abs, tag = 'smem constant byte address 0x4 - core index']
  #allocation1 [shape = 'u32[144,128]{1,0:T(1,128)}', space=vmem, size = 0x12000, scoped, tag = 'internal scratch']
  #allocation2 [shape = 'f32[64,32]{1,0:T(8,128)}', space=vmem, size = 0x8000, scoped, tag = 'scratch operand']
  #allocation3 [shape = 'f32[40,32]{1,0:T(8,128)}', space=vmem, size = 0x5000, scoped, tag = 'scratch operand']
  #allocation4 [shape = 'f32[40,32]{1,0:T(8,128)}', space=vmem, size = 0x5000, scoped, tag = 'scratch operand']
  #allocation5 [shape = 'f32[1,1]{1,0:T(1,128)S(1)}', space=vmem, size = 0x200, scoped, tag = 'scoped memory for fwd.1']
  %s0 = inlined_call_operand.vmem [shape: s32[64,1], index: 0, kind: input, shape index: {}]
  %s1 = inlined_call_operand.hbm [shape: f32[50,16], index: 1, kind: input, shape index: {}]
  %s2 = inlined_call_operand.vmem [shape: f32[40,8], index: 2, kind: input, shape index: {}]
  %s3 = inlined_call_operand.hbm [shape: f32[16,96], index: 3, kind: input, shape index: {}]
  %s4 = inlined_call_operand.hbm [shape: f32[32,96], index: 4, kind: input, shape index: {}]
  %s5 = inlined_call_operand.hbm [shape: f32[1,96], index: 5, kind: input, shape index: {}]
  %s6 = inlined_call_operand.hbm [shape: f32[1,32], index: 6, kind: input, shape index: {}]
  %s7 = inlined_call_operand.hbm [shape: f32[32,96], index: 7, kind: input, shape index: {}]
  %s8 = inlined_call_operand.hbm [shape: f32[32,96], index: 8, kind: input, shape index: {}]
  %s9 = inlined_call_operand.hbm [shape: f32[1,96], index: 9, kind: input, shape index: {}]
  %s10 = inlined_call_operand.hbm [shape: f32[1,32], index: 10, kind: input, shape index: {}]
  %s11 = inlined_call_operand.hbm [shape: f32[8,256], index: 11, kind: input, shape index: {}]
  %s12 = inlined_call_operand.vmem [shape: f32[8,256], index: 12, kind: input, shape index: {}]
  %s13 = inlined_call_operand.hbm [shape: f32[64,256], index: 13, kind: input, shape index: {}]
  %s14 = inlined_call_operand.hbm [shape: f32[1,256], index: 14, kind: input, shape index: {}]
  %s15 = inlined_call_operand.hbm [shape: f32[64,256], index: 15, kind: input, shape index: {}]
  %s16 = inlined_call_operand.hbm [shape: f32[64,256], index: 16, kind: input, shape index: {}]
  %s17 = inlined_call_operand.vmem [shape: f32[64,256], index: 17, kind: input, shape index: {}]
  %s18 = inlined_call_operand.vmem [shape: f32[1,256], index: 18, kind: input, shape index: {}]
  %s19 = inlined_call_operand.hbm [shape: f32[320,32], index: 19, kind: input, shape index: {}]
  %s20 = inlined_call_operand.vmem [shape: f32[1,32], index: 20, kind: input, shape index: {}]
  %s21 = inlined_call_operand.hbm [shape: f32[64,64], index: 21, kind: input, shape index: {}]
  %s22 = inlined_call_operand.vmem [shape: f32[1,64], index: 22, kind: input, shape index: {}]
  %s23 = inlined_call_operand.hbm [shape: f32[64,32], index: 23, kind: input, shape index: {}]
  %s24 = inlined_call_operand.vmem [shape: f32[1,32], index: 24, kind: input, shape index: {}]
  %s25 = inlined_call_operand.vmem [shape: f32[32,1], index: 25, kind: input, shape index: {}]
  %s26 = inlined_call_operand.<no memory space> [shape: f32[1,1], index: 26, kind: input, shape index: {}]
  %s27 = inlined_call_operand.vmem [shape: f32[8,1], index: 27, kind: output, shape index: {}]
  %s28 = sld [smem:[#allocation0]]
  $region186: #{fwd.1} parent=0
    _
  %s30 = ssub.s32 1, %s28
  %s31 = scalar_select 0, %s30, %s28
  %v32 = vstv %s26
  %33 = vst [vmem:[#allocation5] sm:$0x1] %v32
  $region1: #{fwd.1} parent=0
    #allocation6 [shape = 'u8[28672]{0}', space=vmem, size = 0x7000, scoped, tag = 'input window, operand 1, single buffered']
    #allocation7 [shape = 's32[1]{0}', space=sflag, size = 0x4, scoped, tag = 'scoped memory for fwd.1']
    #allocation8 [shape = 'u8[8192]{0}', space=vmem, size = 0x2000, scoped, tag = 'input window, operand 3, single buffered']
    #allocation9 [shape = 's32[1]{0}', space=sflag, size = 0x4, scoped, tag = 'scoped memory for fwd.1']
    #allocation10 [shape = 'u8[16384]{0}', space=vmem, size = 0x4000, scoped, tag = 'input window, operand 4, single buffered']
    #allocation11 [shape = 'u8[512]{0}', space=vmem, size = 0x400, scoped, tag = 'input window, operand 5, single buffered']
    #allocation12 [shape = 's32[1]{0}', space=sflag, size = 0x4, scoped, tag = 'scoped memory for fwd.1']
    #allocation13 [shape = 'u8[512]{0}', space=vmem, size = 0x400, scoped, tag = 'input window, operand 6, single buffered']
    #allocation14 [shape = 'u8[16384]{0}', space=vmem, size = 0x4000, scoped, tag = 'input window, operand 7, single buffered']
    #allocation15 [shape = 's32[1]{0}', space=sflag, size = 0x4, scoped, tag = 'scoped memory for fwd.1']
    #allocation16 [shape = 'u8[16384]{0}', space=vmem, size = 0x4000, scoped, tag = 'input window, operand 8, single buffered']
    #allocation17 [shape = 'u8[512]{0}', space=vmem, size = 0x400, scoped, tag = 'input window, operand 9, single buffered']
    #allocation18 [shape = 's32[1]{0}', space=sflag, size = 0x4, scoped, tag = 'scoped memory for fwd.1']
    #allocation19 [shape = 'u8[512]{0}', space=vmem, size = 0x400, scoped, tag = 'input window, operand 10, single buffered']
    #allocation20 [shape = 'u8[8192]{0}', space=vmem, size = 0x2000, scoped, tag = 'input window, operand 11, single buffered']
    #allocation21 [shape = 's32[1]{0}', space=sflag, size = 0x4, scoped, tag = 'scoped memory for fwd.1']
    #allocation22 [shape = 'u8[65536]{0}', space=vmem, size = 0x10000, scoped, tag = 'input window, operand 13, single buffered']
    #allocation23 [shape = 'u8[1024]{0}', space=vmem, size = 0x400, scoped, tag = 'input window, operand 14, single buffered']
    #allocation24 [shape = 's32[1]{0}', space=sflag, size = 0x4, scoped, tag = 'scoped memory for fwd.1']
    #allocation25 [shape = 'u8[65536]{0}', space=vmem, size = 0x10000, scoped, tag = 'input window, operand 15, single buffered']
    #allocation26 [shape = 'u8[65536]{0}', space=vmem, size = 0x10000, scoped, tag = 'input window, operand 16, single buffered']
    #allocation27 [shape = 's32[1]{0}', space=sflag, size = 0x4, scoped, tag = 'scoped memory for fwd.1']
    #allocation28 [shape = 'u8[163840]{0}', space=vmem, size = 0x28000, scoped, tag = 'input window, operand 19, single buffered']
    #allocation29 [shape = 'u8[32768]{0}', space=vmem, size = 0x8000, scoped, tag = 'input window, operand 21, single buffered']
    #allocation30 [shape = 's32[1]{0}', space=sflag, size = 0x4, scoped, tag = 'scoped memory for fwd.1']
    #allocation31 [shape = 'u8[32768]{0}', space=vmem, size = 0x8000, scoped, tag = 'input window, operand 23, single buffered']
    %34 = vsyncpa [#allocation7], 0
    %35 = vsyncpa [#allocation9], 0
    %36 = vsyncpa [#allocation12], 0
    %37 = vsyncpa [#allocation15], 0
    %38 = vsyncpa [#allocation18], 0
    %39 = vsyncpa [#allocation21], 0
    %40 = vsyncpa [#allocation24], 0
    %41 = vsyncpa [#allocation27], 0
    %42 = vsyncpa [#allocation30], 0
    // Predicated region
    $region2: #{fwd.1} parent=1 // pred_check
      _
    $region3: #{fwd.1} parent=1 // pred_check_branch
      %44 = sbr.rel (0) target = $region5
    $region4: #{fwd.1} parent=1 // pred_region
      _
    $region5: #{fwd.1} parent=1 // pred_fallthru
      _
    // Predicated region
    $region6: #{fwd.1} parent=1 // pred_check
      _
    $region7: #{fwd.1} parent=1 // pred_check_branch
      %46 = sbr.rel (0) target = $region9
    $region8: #{fwd.1} parent=1 // pred_region
      %s48 = ssub.s32 896, 896
      %49 = vsyncadd [#allocation7], %s48
      %s50 = sshll.u32 [#allocation6], 4
      %s51 = int_to_ptr.vmem [resolvable:$true] %s50
      %56 = dma.hbm_to_vmem [thread:$0]  %s1, 896, %s51, [#allocation7], 128, 128, 8
    $region9: #{fwd.1} parent=1 // pred_fallthru
      _
    // Predicated region
    $region10: #{fwd.1} parent=1 // pred_check
      _
    $region11: #{fwd.1} parent=1 // pred_check_branch
      %58 = sbr.rel (0) target = $region13
    $region12: #{fwd.1} parent=1 // pred_region
      _
    $region13: #{fwd.1} parent=1 // pred_fallthru
      _
    // Predicated region
    $region14: #{fwd.1} parent=1 // pred_check
      _
    $region15: #{fwd.1} parent=1 // pred_check_branch
      %60 = sbr.rel (0) target = $region17
    $region16: #{fwd.1} parent=1 // pred_region
      %s62 = ssub.s32 256, 256
      %63 = vsyncadd [#allocation9], %s62
      %s64 = sshll.u32 [#allocation8], 4
      %s65 = int_to_ptr.vmem [resolvable:$true] %s64
      %70 = dma.hbm_to_vmem [thread:$0]  %s3, 256, %s65, [#allocation9], 128, 128, 8
    $region17: #{fwd.1} parent=1 // pred_fallthru
      _
    // Predicated region
    $region18: #{fwd.1} parent=1 // pred_check
      _
    $region19: #{fwd.1} parent=1 // pred_check_branch
      %72 = sbr.rel (0) target = $region21
    $region20: #{fwd.1} parent=1 // pred_region
      %s74 = ssub.s32 512, 512
      %75 = vsyncadd [#allocation9], %s74
      %s76 = sshll.u32 [#allocation10], 4
      %s77 = int_to_ptr.vmem [resolvable:$true] %s76
      %82 = dma.hbm_to_vmem [thread:$0]  %s4, 512, %s77, [#allocation9], 128, 128, 8
    $region21: #{fwd.1} parent=1 // pred_fallthru
      _
    // Predicated region
    $region22: #{fwd.1} parent=1 // pred_check
      _
    $region23: #{fwd.1} parent=1 // pred_check_branch
      %84 = sbr.rel (0) target = $region25
    $region24: #{fwd.1} parent=1 // pred_region
      %s86 = ssub.s32 16, 16
      %87 = vsyncadd [#allocation12], %s86
      %s89 = sshll.u32 [#allocation11], 4
      %s90 = int_to_ptr.vmem [resolvable:$true] %s89
      %92 = dma.hbm_to_vmem [thread:$0]  %s5, 16, %s90, [#allocation12]
    $region25: #{fwd.1} parent=1 // pred_fallthru
      _
    // Predicated region
    $region26: #{fwd.1} parent=1 // pred_check
      _
    $region27: #{fwd.1} parent=1 // pred_check_branch
      %94 = sbr.rel (0) target = $region29
    $region28: #{fwd.1} parent=1 // pred_region
      %s96 = ssub.s32 16, 16
      %97 = vsyncadd [#allocation12], %s96
      %s99 = sshll.u32 [#allocation13], 4
      %s100 = int_to_ptr.vmem [resolvable:$true] %s99
      %102 = dma.hbm_to_vmem [thread:$0]  %s6, 16, %s100, [#allocation12]
    $region29: #{fwd.1} parent=1 // pred_fallthru
      _
    // Predicated region
    $region30: #{fwd.1} parent=1 // pred_check
      _
    $region31: #{fwd.1} parent=1 // pred_check_branch
      %104 = sbr.rel (0) target = $region33
    $region32: #{fwd.1} parent=1 // pred_region
      %s106 = ssub.s32 512, 512
      %107 = vsyncadd [#allocation15], %s106
      %s108 = sshll.u32 [#allocation14], 4
      %s109 = int_to_ptr.vmem [resolvable:$true] %s108
      %114 = dma.hbm_to_vmem [thread:$0]  %s7, 512, %s109, [#allocation15], 128, 128, 8
    $region33: #{fwd.1} parent=1 // pred_fallthru
      _
    // Predicated region
    $region34: #{fwd.1} parent=1 // pred_check
      _
    $region35: #{fwd.1} parent=1 // pred_check_branch
      %116 = sbr.rel (0) target = $region37
    $region36: #{fwd.1} parent=1 // pred_region
      %s118 = ssub.s32 512, 512
      %119 = vsyncadd [#allocation15], %s118
      %s120 = sshll.u32 [#allocation16], 4
      %s121 = int_to_ptr.vmem [resolvable:$true] %s120
      %126 = dma.hbm_to_vmem [thread:$0]  %s8, 512, %s121, [#allocation15], 128, 128, 8
    $region37: #{fwd.1} parent=1 // pred_fallthru
      _
    // Predicated region
    $region38: #{fwd.1} parent=1 // pred_check
      _
    $region39: #{fwd.1} parent=1 // pred_check_branch
      %128 = sbr.rel (0) target = $region41
    $region40: #{fwd.1} parent=1 // pred_region
      %s130 = ssub.s32 16, 16
      %131 = vsyncadd [#allocation18], %s130
      %s133 = sshll.u32 [#allocation17], 4
      %s134 = int_to_ptr.vmem [resolvable:$true] %s133
      %136 = dma.hbm_to_vmem [thread:$0]  %s9, 16, %s134, [#allocation18]
    $region41: #{fwd.1} parent=1 // pred_fallthru
      _
    // Predicated region
    $region42: #{fwd.1} parent=1 // pred_check
      _
    $region43: #{fwd.1} parent=1 // pred_check_branch
      %138 = sbr.rel (0) target = $region45
    $region44: #{fwd.1} parent=1 // pred_region
      %s140 = ssub.s32 16, 16
      %141 = vsyncadd [#allocation18], %s140
      %s143 = sshll.u32 [#allocation19], 4
      %s144 = int_to_ptr.vmem [resolvable:$true] %s143
      %146 = dma.hbm_to_vmem [thread:$0]  %s10, 16, %s144, [#allocation18]
    $region45: #{fwd.1} parent=1 // pred_fallthru
      _
    // Predicated region
    $region46: #{fwd.1} parent=1 // pred_check
      _
    $region47: #{fwd.1} parent=1 // pred_check_branch
      %148 = sbr.rel (0) target = $region49
    $region48: #{fwd.1} parent=1 // pred_region
      %s150 = ssub.s32 256, 256
      %151 = vsyncadd [#allocation21], %s150
      %s153 = sshll.u32 [#allocation20], 4
      %s154 = int_to_ptr.vmem [resolvable:$true] %s153
      %156 = dma.hbm_to_vmem [thread:$0]  %s11, 256, %s154, [#allocation21]
    $region49: #{fwd.1} parent=1 // pred_fallthru
      _
    // Predicated region
    $region50: #{fwd.1} parent=1 // pred_check
      _
    $region51: #{fwd.1} parent=1 // pred_check_branch
      %158 = sbr.rel (0) target = $region53
    $region52: #{fwd.1} parent=1 // pred_region
      _
    $region53: #{fwd.1} parent=1 // pred_fallthru
      _
    // Predicated region
    $region54: #{fwd.1} parent=1 // pred_check
      _
    $region55: #{fwd.1} parent=1 // pred_check_branch
      %160 = sbr.rel (0) target = $region57
    $region56: #{fwd.1} parent=1 // pred_region
      %s162 = ssub.s32 2048, 2048
      %163 = vsyncadd [#allocation21], %s162
      %s164 = sshll.u32 [#allocation22], 4
      %s165 = int_to_ptr.vmem [resolvable:$true] %s164
      %170 = dma.hbm_to_vmem [thread:$0]  %s13, 2048, %s165, [#allocation21], 256, 256, 16
    $region57: #{fwd.1} parent=1 // pred_fallthru
      _
    // Predicated region
    $region58: #{fwd.1} parent=1 // pred_check
      _
    $region59: #{fwd.1} parent=1 // pred_check_branch
      %172 = sbr.rel (0) target = $region61
    $region60: #{fwd.1} parent=1 // pred_region
      %s174 = ssub.s32 32, 32
      %175 = vsyncadd [#allocation24], %s174
      %s177 = sshll.u32 [#allocation23], 4
      %s178 = int_to_ptr.vmem [resolvable:$true] %s177
      %180 = dma.hbm_to_vmem [thread:$0]  %s14, 32, %s178, [#allocation24]
    $region61: #{fwd.1} parent=1 // pred_fallthru
      _
    // Predicated region
    $region62: #{fwd.1} parent=1 // pred_check
      _
    $region63: #{fwd.1} parent=1 // pred_check_branch
      %182 = sbr.rel (0) target = $region65
    $region64: #{fwd.1} parent=1 // pred_region
      %s184 = ssub.s32 2048, 2048
      %185 = vsyncadd [#allocation24], %s184
      %s186 = sshll.u32 [#allocation25], 4
      %s187 = int_to_ptr.vmem [resolvable:$true] %s186
      %192 = dma.hbm_to_vmem [thread:$0]  %s15, 2048, %s187, [#allocation24], 256, 256, 16
    $region65: #{fwd.1} parent=1 // pred_fallthru
      _
    // Predicated region
    $region66: #{fwd.1} parent=1 // pred_check
      _
    $region67: #{fwd.1} parent=1 // pred_check_branch
      %194 = sbr.rel (0) target = $region69
    $region68: #{fwd.1} parent=1 // pred_region
      %s196 = ssub.s32 2048, 2048
      %197 = vsyncadd [#allocation27], %s196
      %s198 = sshll.u32 [#allocation26], 4
      %s199 = int_to_ptr.vmem [resolvable:$true] %s198
      %204 = dma.hbm_to_vmem [thread:$0]  %s16, 2048, %s199, [#allocation27], 256, 256, 16
    $region69: #{fwd.1} parent=1 // pred_fallthru
      _
    // Predicated region
    $region70: #{fwd.1} parent=1 // pred_check
      _
    $region71: #{fwd.1} parent=1 // pred_check_branch
      %206 = sbr.rel (0) target = $region73
    $region72: #{fwd.1} parent=1 // pred_region
      _
    $region73: #{fwd.1} parent=1 // pred_fallthru
      _
    // Predicated region
    $region74: #{fwd.1} parent=1 // pred_check
      _
    $region75: #{fwd.1} parent=1 // pred_check_branch
      %208 = sbr.rel (0) target = $region77
    $region76: #{fwd.1} parent=1 // pred_region
      _
    $region77: #{fwd.1} parent=1 // pred_fallthru
      _
    // Predicated region
    $region78: #{fwd.1} parent=1 // pred_check
      _
    $region79: #{fwd.1} parent=1 // pred_check_branch
      %210 = sbr.rel (0) target = $region81
    $region80: #{fwd.1} parent=1 // pred_region
      %s212 = ssub.s32 5120, 5120
      %213 = vsyncadd [#allocation27], %s212
      %s214 = sshll.u32 [#allocation28], 4
      %s215 = int_to_ptr.vmem [resolvable:$true] %s214
      %220 = dma.hbm_to_vmem [thread:$0]  %s19, 5120, %s215, [#allocation27], 128, 128, 8
    $region81: #{fwd.1} parent=1 // pred_fallthru
      _
    // Predicated region
    $region82: #{fwd.1} parent=1 // pred_check
      _
    $region83: #{fwd.1} parent=1 // pred_check_branch
      %222 = sbr.rel (0) target = $region85
    $region84: #{fwd.1} parent=1 // pred_region
      _
    $region85: #{fwd.1} parent=1 // pred_fallthru
      _
    // Predicated region
    $region86: #{fwd.1} parent=1 // pred_check
      _
    $region87: #{fwd.1} parent=1 // pred_check_branch
      %224 = sbr.rel (0) target = $region89
    $region88: #{fwd.1} parent=1 // pred_region
      %s226 = ssub.s32 1024, 1024
      %227 = vsyncadd [#allocation30], %s226
      %s228 = sshll.u32 [#allocation29], 4
      %s229 = int_to_ptr.vmem [resolvable:$true] %s228
      %234 = dma.hbm_to_vmem [thread:$0]  %s21, 1024, %s229, [#allocation30], 128, 128, 8
    $region89: #{fwd.1} parent=1 // pred_fallthru
      _
    // Predicated region
    $region90: #{fwd.1} parent=1 // pred_check
      _
    $region91: #{fwd.1} parent=1 // pred_check_branch
      %236 = sbr.rel (0) target = $region93
    $region92: #{fwd.1} parent=1 // pred_region
      _
    $region93: #{fwd.1} parent=1 // pred_fallthru
      _
    // Predicated region
    $region94: #{fwd.1} parent=1 // pred_check
      _
    $region95: #{fwd.1} parent=1 // pred_check_branch
      %238 = sbr.rel (0) target = $region97
    $region96: #{fwd.1} parent=1 // pred_region
      %s240 = ssub.s32 1024, 1024
      %241 = vsyncadd [#allocation30], %s240
      %s242 = sshll.u32 [#allocation31], 4
      %s243 = int_to_ptr.vmem [resolvable:$true] %s242
      %248 = dma.hbm_to_vmem [thread:$0]  %s23, 1024, %s243, [#allocation30], 128, 128, 8
    $region97: #{fwd.1} parent=1 // pred_fallthru
      _
    // Predicated region
    $region98: #{fwd.1} parent=1 // pred_check
      _
    $region99: #{fwd.1} parent=1 // pred_check_branch
      %250 = sbr.rel (0) target = $region101
    $region100: #{fwd.1} parent=1 // pred_region
      _
    $region101: #{fwd.1} parent=1 // pred_fallthru
      _
    // Predicated region
    $region102: #{fwd.1} parent=1 // pred_check
      _
    $region103: #{fwd.1} parent=1 // pred_check_branch
      %252 = sbr.rel (0) target = $region105
    $region104: #{fwd.1} parent=1 // pred_region
      _
    $region105: #{fwd.1} parent=1 // pred_fallthru
      _
    // Predicated region
    $region106: #{fwd.1} parent=1 // pred_check
      _
    $region107: #{fwd.1} parent=1 // pred_check_branch
      %254 = sbr.rel (0) target = $region109
    $region108: #{fwd.1} parent=1 // pred_region
      _
    $region109: #{fwd.1} parent=1 // pred_fallthru
      _
    // Predicated region
    $region110: #{fwd.1} parent=1 // pred_check
      _
    $region111: #{fwd.1} parent=1 // pred_check_branch
      %256 = sbr.rel (0) target = $region113
    $region112: #{fwd.1} parent=1 // pred_region
      %257 = dma.done [#allocation7], 896
    $region113: #{fwd.1} parent=1 // pred_fallthru
      _
    // Predicated region
    $region114: #{fwd.1} parent=1 // pred_check
      _
    $region115: #{fwd.1} parent=1 // pred_check_branch
      %259 = sbr.rel (0) target = $region117
    $region116: #{fwd.1} parent=1 // pred_region
      %260 = dma.done [#allocation9], 256
    $region117: #{fwd.1} parent=1 // pred_fallthru
      _
    // Predicated region
    $region118: #{fwd.1} parent=1 // pred_check
      _
    $region119: #{fwd.1} parent=1 // pred_check_branch
      %262 = sbr.rel (0) target = $region121
    $region120: #{fwd.1} parent=1 // pred_region
      %263 = dma.done [#allocation9], 512
    $region121: #{fwd.1} parent=1 // pred_fallthru
      _
    // Predicated region
    $region122: #{fwd.1} parent=1 // pred_check
      _
    $region123: #{fwd.1} parent=1 // pred_check_branch
      %265 = sbr.rel (0) target = $region125
    $region124: #{fwd.1} parent=1 // pred_region
      %266 = dma.done [#allocation12], 16
    $region125: #{fwd.1} parent=1 // pred_fallthru
      _
    // Predicated region
    $region126: #{fwd.1} parent=1 // pred_check
      _
    $region127: #{fwd.1} parent=1 // pred_check_branch
      %268 = sbr.rel (0) target = $region129
    $region128: #{fwd.1} parent=1 // pred_region
      %269 = dma.done [#allocation12], 16
    $region129: #{fwd.1} parent=1 // pred_fallthru
      _
    // Predicated region
    $region130: #{fwd.1} parent=1 // pred_check
      _
    $region131: #{fwd.1} parent=1 // pred_check_branch
      %271 = sbr.rel (0) target = $region133
    $region132: #{fwd.1} parent=1 // pred_region
      %272 = dma.done [#allocation15], 512
    $region133: #{fwd.1} parent=1 // pred_fallthru
      _
    // Predicated region
    $region134: #{fwd.1} parent=1 // pred_check
      _
    $region135: #{fwd.1} parent=1 // pred_check_branch
      %274 = sbr.rel (0) target = $region137
    $region136: #{fwd.1} parent=1 // pred_region
      %275 = dma.done [#allocation15], 512
    $region137: #{fwd.1} parent=1 // pred_fallthru
      _
    // Predicated region
    $region138: #{fwd.1} parent=1 // pred_check
      _
    $region139: #{fwd.1} parent=1 // pred_check_branch
      %277 = sbr.rel (0) target = $region141
    $region140: #{fwd.1} parent=1 // pred_region
      %278 = dma.done [#allocation18], 16
    $region141: #{fwd.1} parent=1 // pred_fallthru
      _
    // Predicated region
    $region142: #{fwd.1} parent=1 // pred_check
      _
    $region143: #{fwd.1} parent=1 // pred_check_branch
      %280 = sbr.rel (0) target = $region145
    $region144: #{fwd.1} parent=1 // pred_region
      %281 = dma.done [#allocation18], 16
    $region145: #{fwd.1} parent=1 // pred_fallthru
      _
    // Predicated region
    $region146: #{fwd.1} parent=1 // pred_check
      _
    $region147: #{fwd.1} parent=1 // pred_check_branch
      %283 = sbr.rel (0) target = $region149
    $region148: #{fwd.1} parent=1 // pred_region
      %284 = dma.done [#allocation21], 256
    $region149: #{fwd.1} parent=1 // pred_fallthru
      _
    // Predicated region
    $region150: #{fwd.1} parent=1 // pred_check
      _
    $region151: #{fwd.1} parent=1 // pred_check_branch
      %286 = sbr.rel (0) target = $region153
    $region152: #{fwd.1} parent=1 // pred_region
      %287 = dma.done [#allocation21], 2048
    $region153: #{fwd.1} parent=1 // pred_fallthru
      _
    // Predicated region
    $region154: #{fwd.1} parent=1 // pred_check
      _
    $region155: #{fwd.1} parent=1 // pred_check_branch
      %289 = sbr.rel (0) target = $region157
    $region156: #{fwd.1} parent=1 // pred_region
      %290 = dma.done [#allocation24], 32
    $region157: #{fwd.1} parent=1 // pred_fallthru
      _
    // Predicated region
    $region158: #{fwd.1} parent=1 // pred_check
      _
    $region159: #{fwd.1} parent=1 // pred_check_branch
      %292 = sbr.rel (0) target = $region161
    $region160: #{fwd.1} parent=1 // pred_region
      %293 = dma.done [#allocation24], 2048
    $region161: #{fwd.1} parent=1 // pred_fallthru
      _
    // Predicated region
    $region162: #{fwd.1} parent=1 // pred_check
      _
    $region163: #{fwd.1} parent=1 // pred_check_branch
      %295 = sbr.rel (0) target = $region165
    $region164: #{fwd.1} parent=1 // pred_region
      %296 = dma.done [#allocation27], 2048
    $region165: #{fwd.1} parent=1 // pred_fallthru
      _
    // Predicated region
    $region166: #{fwd.1} parent=1 // pred_check
      _
    $region167: #{fwd.1} parent=1 // pred_check_branch
      %298 = sbr.rel (0) target = $region169
    $region168: #{fwd.1} parent=1 // pred_region
      %299 = dma.done [#allocation27], 5120
    $region169: #{fwd.1} parent=1 // pred_fallthru
      _
    // Predicated region
    $region170: #{fwd.1} parent=1 // pred_check
      _
    $region171: #{fwd.1} parent=1 // pred_check_branch
      %301 = sbr.rel (0) target = $region173
    $region172: #{fwd.1} parent=1 // pred_region
      %302 = dma.done [#allocation30], 1024
    $region173: #{fwd.1} parent=1 // pred_fallthru
      _
    // Predicated region
    $region174: #{fwd.1} parent=1 // pred_check
      _
    $region175: #{fwd.1} parent=1 // pred_check_branch
      %304 = sbr.rel (0) target = $region177
    $region176: #{fwd.1} parent=1 // pred_region
      %305 = dma.done [#allocation30], 1024
    $region177: #{fwd.1} parent=1 // pred_fallthru
      _
    %v306 = vld [vmem:[#allocation6] sm:$0xff]
    %v307 = vld [vmem:[#allocation6 + $0x8] sm:$0xff]
    %v308 = vld [vmem:[#allocation6 + $0x10] sm:$0xff]
    %v309 = vld [vmem:[#allocation6 + $0x18] sm:$0xff]
    %v310 = vld [vmem:[#allocation6 + $0x20] sm:$0xff]
    %v311 = vld [vmem:[#allocation6 + $0x28] sm:$0xff]
    %v312 = vld [vmem:[#allocation6 + $0x30] sm:$0x3]
    %v313 = vld [vmem:[#allocation8] sm:$0xff]
    %v314 = vld [vmem:[#allocation8 + $0x8] sm:$0xff]
    %v315 = vld [vmem:[#allocation10] sm:$0xff]
    %v316 = vld [vmem:[#allocation10 + $0x8] sm:$0xff]
    %v317 = vld [vmem:[#allocation10 + $0x10] sm:$0xff]
    %v318 = vld [vmem:[#allocation10 + $0x18] sm:$0xff]
    %v319 = vld [vmem:[#allocation11] sm:$0x1]
    %v320 = vld [vmem:[#allocation13] sm:$0x1]
    %v321 = vld [vmem:[#allocation14] sm:$0xff]
    %v322 = vld [vmem:[#allocation14 + $0x8] sm:$0xff]
    %v323 = vld [vmem:[#allocation14 + $0x10] sm:$0xff]
    %v324 = vld [vmem:[#allocation14 + $0x18] sm:$0xff]
    %v325 = vld [vmem:[#allocation16] sm:$0xff]
    %v326 = vld [vmem:[#allocation16 + $0x8] sm:$0xff]
    %v327 = vld [vmem:[#allocation16 + $0x10] sm:$0xff]
    %v328 = vld [vmem:[#allocation16 + $0x18] sm:$0xff]
    %v329 = vld [vmem:[#allocation17] sm:$0x1]
    %v330 = vld [vmem:[#allocation19] sm:$0x1]
    %v331 = vld [vmem:[#allocation20] sm:$0xff]
    %v332 = vld [vmem:[#allocation20 + $0x8] sm:$0xff]
    %v333 = vld [vmem:[%s12] sm:$0xff]
    %v334 = vld [vmem:[%s12 + $0x8] sm:$0xff]
    %v335 = vld [vmem:[#allocation22] sm:$0xff]
    %v336 = vld [vmem:[#allocation22 + $0x8] sm:$0xff]
    %v337 = vld [vmem:[#allocation22 + $0x10] sm:$0xff]
    %v338 = vld [vmem:[#allocation22 + $0x18] sm:$0xff]
    %v339 = vld [vmem:[#allocation22 + $0x20] sm:$0xff]
    %v340 = vld [vmem:[#allocation22 + $0x28] sm:$0xff]
    %v341 = vld [vmem:[#allocation22 + $0x30] sm:$0xff]
    %v342 = vld [vmem:[#allocation22 + $0x38] sm:$0xff]
    %v343 = vld [vmem:[#allocation22 + $0x40] sm:$0xff]
    %v344 = vld [vmem:[#allocation22 + $0x48] sm:$0xff]
    %v345 = vld [vmem:[#allocation22 + $0x50] sm:$0xff]
    %v346 = vld [vmem:[#allocation22 + $0x58] sm:$0xff]
    %v347 = vld [vmem:[#allocation22 + $0x60] sm:$0xff]
    %v348 = vld [vmem:[#allocation22 + $0x68] sm:$0xff]
    %v349 = vld [vmem:[#allocation22 + $0x70] sm:$0xff]
    %v350 = vld [vmem:[#allocation22 + $0x78] sm:$0xff]
    %v351 = vld [vmem:[#allocation23] sm:$0x3]
    %v352 = vld [vmem:[#allocation25] sm:$0xff]
    %v353 = vld [vmem:[#allocation25 + $0x8] sm:$0xff]
    %v354 = vld [vmem:[#allocation25 + $0x10] sm:$0xff]
    %v355 = vld [vmem:[#allocation25 + $0x18] sm:$0xff]
    %v356 = vld [vmem:[#allocation25 + $0x20] sm:$0xff]
    %v357 = vld [vmem:[#allocation25 + $0x28] sm:$0xff]
    %v358 = vld [vmem:[#allocation25 + $0x30] sm:$0xff]
    %v359 = vld [vmem:[#allocation25 + $0x38] sm:$0xff]
    %v360 = vld [vmem:[#allocation25 + $0x40] sm:$0xff]
    %v361 = vld [vmem:[#allocation25 + $0x48] sm:$0xff]
    %v362 = vld [vmem:[#allocation25 + $0x50] sm:$0xff]
    %v363 = vld [vmem:[#allocation25 + $0x58] sm:$0xff]
    %v364 = vld [vmem:[#allocation25 + $0x60] sm:$0xff]
    %v365 = vld [vmem:[#allocation25 + $0x68] sm:$0xff]
    %v366 = vld [vmem:[#allocation25 + $0x70] sm:$0xff]
    %v367 = vld [vmem:[#allocation25 + $0x78] sm:$0xff]
    %v368 = vld [vmem:[#allocation26] sm:$0xff]
    %v369 = vld [vmem:[#allocation26 + $0x8] sm:$0xff]
    %v370 = vld [vmem:[#allocation26 + $0x10] sm:$0xff]
    %v371 = vld [vmem:[#allocation26 + $0x18] sm:$0xff]
    %v372 = vld [vmem:[#allocation26 + $0x20] sm:$0xff]
    %v373 = vld [vmem:[#allocation26 + $0x28] sm:$0xff]
    %v374 = vld [vmem:[#allocation26 + $0x30] sm:$0xff]
    %v375 = vld [vmem:[#allocation26 + $0x38] sm:$0xff]
    %v376 = vld [vmem:[#allocation26 + $0x40] sm:$0xff]
    %v377 = vld [vmem:[#allocation26 + $0x48] sm:$0xff]
    %v378 = vld [vmem:[#allocation26 + $0x50] sm:$0xff]
    %v379 = vld [vmem:[#allocation26 + $0x58] sm:$0xff]
    %v380 = vld [vmem:[#allocation26 + $0x60] sm:$0xff]
    %v381 = vld [vmem:[#allocation26 + $0x68] sm:$0xff]
    %v382 = vld [vmem:[#allocation26 + $0x70] sm:$0xff]
    %v383 = vld [vmem:[#allocation26 + $0x78] sm:$0xff]
    %v384 = vld [vmem:[%s17] sm:$0xff]
    %v385 = vld [vmem:[%s17 + $0x8] sm:$0xff]
    %v386 = vld [vmem:[%s17 + $0x10] sm:$0xff]
    %v387 = vld [vmem:[%s17 + $0x18] sm:$0xff]
    %v388 = vld [vmem:[%s17 + $0x20] sm:$0xff]
    %v389 = vld [vmem:[%s17 + $0x28] sm:$0xff]
    %v390 = vld [vmem:[%s17 + $0x30] sm:$0xff]
    %v391 = vld [vmem:[%s17 + $0x38] sm:$0xff]
    %v392 = vld [vmem:[%s17 + $0x40] sm:$0xff]
    %v393 = vld [vmem:[%s17 + $0x48] sm:$0xff]
    %v394 = vld [vmem:[%s17 + $0x50] sm:$0xff]
    %v395 = vld [vmem:[%s17 + $0x58] sm:$0xff]
    %v396 = vld [vmem:[%s17 + $0x60] sm:$0xff]
    %v397 = vld [vmem:[%s17 + $0x68] sm:$0xff]
    %v398 = vld [vmem:[%s17 + $0x70] sm:$0xff]
    %v399 = vld [vmem:[%s17 + $0x78] sm:$0xff]
    %v400 = vld [vmem:[%s18] sm:$0x3]
    %v401 = vld [vmem:[#allocation28] sm:$0xff]
    %v402 = vld [vmem:[#allocation28 + $0x8] sm:$0xff]
    %v403 = vld [vmem:[#allocation28 + $0x10] sm:$0xff]
    %v404 = vld [vmem:[#allocation28 + $0x18] sm:$0xff]
    %v405 = vld [vmem:[#allocation28 + $0x20] sm:$0xff]
    %v406 = vld [vmem:[#allocation28 + $0x28] sm:$0xff]
    %v407 = vld [vmem:[#allocation28 + $0x30] sm:$0xff]
    %v408 = vld [vmem:[#allocation28 + $0x38] sm:$0xff]
    %v409 = vld [vmem:[#allocation28 + $0x40] sm:$0xff]
    %v410 = vld [vmem:[#allocation28 + $0x48] sm:$0xff]
    %v411 = vld [vmem:[#allocation28 + $0x50] sm:$0xff]
    %v412 = vld [vmem:[#allocation28 + $0x58] sm:$0xff]
    %v413 = vld [vmem:[#allocation28 + $0x60] sm:$0xff]
    %v414 = vld [vmem:[#allocation28 + $0x68] sm:$0xff]
    %v415 = vld [vmem:[#allocation28 + $0x70] sm:$0xff]
    %v416 = vld [vmem:[#allocation28 + $0x78] sm:$0xff]
    %v417 = vld [vmem:[#allocation28 + $0x80] sm:$0xff]
    %v418 = vld [vmem:[#allocation28 + $0x88] sm:$0xff]
    %v419 = vld [vmem:[#allocation28 + $0x90] sm:$0xff]
    %v420 = vld [vmem:[#allocation28 + $0x98] sm:$0xff]
    %v421 = vld [vmem:[#allocation28 + $0xa0] sm:$0xff]
    %v422 = vld [vmem:[#allocation28 + $0xa8] sm:$0xff]
    %v423 = vld [vmem:[#allocation28 + $0xb0] sm:$0xff]
    %v424 = vld [vmem:[#allocation28 + $0xb8] sm:$0xff]
    %v425 = vld [vmem:[#allocation28 + $0xc0] sm:$0xff]
    %v426 = vld [vmem:[#allocation28 + $0xc8] sm:$0xff]
    %v427 = vld [vmem:[#allocation28 + $0xd0] sm:$0xff]
    %v428 = vld [vmem:[#allocation28 + $0xd8] sm:$0xff]
    %v429 = vld [vmem:[#allocation28 + $0xe0] sm:$0xff]
    %v430 = vld [vmem:[#allocation28 + $0xe8] sm:$0xff]
    %v431 = vld [vmem:[#allocation28 + $0xf0] sm:$0xff]
    %v432 = vld [vmem:[#allocation28 + $0xf8] sm:$0xff]
    %v433 = vld [vmem:[#allocation28 + $0x100] sm:$0xff]
    %v434 = vld [vmem:[#allocation28 + $0x108] sm:$0xff]
    %v435 = vld [vmem:[#allocation28 + $0x110] sm:$0xff]
    %v436 = vld [vmem:[#allocation28 + $0x118] sm:$0xff]
    %v437 = vld [vmem:[#allocation28 + $0x120] sm:$0xff]
    %v438 = vld [vmem:[#allocation28 + $0x128] sm:$0xff]
    %v439 = vld [vmem:[#allocation28 + $0x130] sm:$0xff]
    %v440 = vld [vmem:[#allocation28 + $0x138] sm:$0xff]
    %v441 = vld [vmem:[%s20] sm:$0x1]
    %v442 = vld [vmem:[#allocation29] sm:$0xff]
    %v443 = vld [vmem:[#allocation29 + $0x8] sm:$0xff]
    %v444 = vld [vmem:[#allocation29 + $0x10] sm:$0xff]
    %v445 = vld [vmem:[#allocation29 + $0x18] sm:$0xff]
    %v446 = vld [vmem:[#allocation29 + $0x20] sm:$0xff]
    %v447 = vld [vmem:[#allocation29 + $0x28] sm:$0xff]
    %v448 = vld [vmem:[#allocation29 + $0x30] sm:$0xff]
    %v449 = vld [vmem:[#allocation29 + $0x38] sm:$0xff]
    %v450 = vld [vmem:[%s22] sm:$0x1]
    %v451 = vld [vmem:[#allocation31] sm:$0xff]
    %v452 = vld [vmem:[#allocation31 + $0x8] sm:$0xff]
    %v453 = vld [vmem:[#allocation31 + $0x10] sm:$0xff]
    %v454 = vld [vmem:[#allocation31 + $0x18] sm:$0xff]
    %v455 = vld [vmem:[#allocation31 + $0x20] sm:$0xff]
    %v456 = vld [vmem:[#allocation31 + $0x28] sm:$0xff]
    %v457 = vld [vmem:[#allocation31 + $0x30] sm:$0xff]
    %v458 = vld [vmem:[#allocation31 + $0x38] sm:$0xff]
    %v459 = vld [vmem:[%s24] sm:$0x1]
    %v460 = vld [vmem:[%s25] sm:$0xff]
    %v461 = vld [vmem:[%s25 + $0x8] sm:$0xff]
    %v462 = vld [vmem:[%s25 + $0x10] sm:$0xff]
    %v463 = vld [vmem:[%s25 + $0x18] sm:$0xff]
    %v464 = vld [vmem:[#allocation5] sm:$0x1]
    %v465 = vld [vmem:[%s0] sm:$0xff]
    %v466 = vld [vmem:[%s0 + $0x8] sm:$0xff]
    %v467 = vld [vmem:[%s0 + $0x10] sm:$0xff]
    %v468 = vld [vmem:[%s0 + $0x18] sm:$0xff]
    %v469 = vld [vmem:[%s0 + $0x20] sm:$0xff]
    %v470 = vld [vmem:[%s0 + $0x28] sm:$0xff]
    %v471 = vld [vmem:[%s0 + $0x30] sm:$0xff]
    %v472 = vld [vmem:[%s0 + $0x38] sm:$0xff]
    %v473 = vlaneseq
    %v474 = vand.u32 %v473, 127
    %475 = vset.pattern.permute.xlu0 0
    %476 = vperm.xlu0 %475, %v465
    %v477 = vpop.permute.xlu0 %476
    %478 = vset.pattern.permute.xlu0 0
    %479 = vperm.xlu0 %478, %v466
    %v480 = vpop.permute.xlu0 %479
    %481 = vset.pattern.permute.xlu0 0
    %482 = vperm.xlu0 %481, %v467
    %v483 = vpop.permute.xlu0 %482
    %484 = vset.pattern.permute.xlu0 0
    %485 = vperm.xlu0 %484, %v468
    %v486 = vpop.permute.xlu0 %485
    %487 = vset.pattern.permute.xlu0 0
    %488 = vperm.xlu0 %487, %v469
    %v489 = vpop.permute.xlu0 %488
    %490 = vset.pattern.permute.xlu0 0
    %491 = vperm.xlu0 %490, %v470
    %v492 = vpop.permute.xlu0 %491
    %493 = vset.pattern.permute.xlu0 0
    %494 = vperm.xlu0 %493, %v471
    %v495 = vpop.permute.xlu0 %494
    %496 = vset.pattern.permute.xlu0 0
    %497 = vperm.xlu0 %496, %v472
    %v498 = vpop.permute.xlu0 %497
    %vm499 = vcmp.eq.s32.totalorder %v474, %v477
    %vm500 = vcmp.eq.s32.totalorder %v474, %v480
    %vm501 = vcmp.eq.s32.totalorder %v474, %v483
    %vm502 = vcmp.eq.s32.totalorder %v474, %v486
    %vm503 = vcmp.eq.s32.totalorder %v474, %v489
    %vm504 = vcmp.eq.s32.totalorder %v474, %v492
    %vm505 = vcmp.eq.s32.totalorder %v474, %v495
    %vm506 = vcmp.eq.s32.totalorder %v474, %v498
    %v507 = vsel %vm499, 1.0, 0.0
    %v508 = vsel %vm500, 1.0, 0.0
    %v509 = vsel %vm501, 1.0, 0.0
    %v510 = vsel %vm502, 1.0, 0.0
    %v511 = vsel %vm503, 1.0, 0.0
    %v512 = vsel %vm504, 1.0, 0.0
    %v513 = vsel %vm505, 1.0, 0.0
    %v514 = vsel %vm506, 1.0, 0.0
    %vm515 = vcmask 408576
    %v517 = vsel %vm515, %v507, 0
    %v520 = vsel %vm515, %v508, 0
    %v523 = vsel %vm515, %v509, 0
    %v526 = vsel %vm515, %v510, 0
    %v529 = vsel %vm515, %v511, 0
    %v532 = vsel %vm515, %v512, 0
    %v535 = vsel %vm515, %v513, 0
    %v538 = vsel %vm515, %v514, 0
    %vm540 = vcmask 1041408
    %v542 = vsel %vm540, %v312, 0
    %544 = vmatprep.subr.mxu0 0.0
    %545 = vmatpush1.msra.mxu0 0.0
    %546 = vmatprep.subr.mxu0 0.0
    %547 = vmatpush1.msra.mxu0 0.0
    %548 = vmatprep.subr.mxu0 0.0
    %549 = vmatpush1.msra.mxu0 0.0
    %550 = vmatprep.subr.mxu0 0.0
    %551 = vmatpush1.msra.mxu0 0.0
    %552 = vmatprep.subr.mxu0 0.0
    %553 = vmatpush1.msra.mxu0 0.0
    %554 = vmatprep.subr.mxu0 0.0
    %555 = vmatpush1.msra.mxu0 0.0
    %556 = vmatprep.subr.mxu0 0.0
    %557 = vmatpush1.msra.mxu0 0.0
    %558 = vmatprep.subr.mxu0 0.0
    %559 = vmatpush1.msra.mxu0 0.0
    %560 = vmatprep.subr.mxu0 0.0
    %561 = vmatpush1.msra.mxu0 0.0
    %562 = vmatprep.subr.mxu0 0.0
    %563 = vmatpush1.msra.mxu0 %v542
    %564 = vmatprep.subr.mxu0 0.0
    %565 = vmatpush1.msra.mxu0 %v311
    %566 = vmatprep.subr.mxu0 0.0
    %567 = vmatpush1.msra.mxu0 %v310
    %568 = vmatprep.subr.mxu0 0.0
    %569 = vmatpush1.msra.mxu0 %v309
    %570 = vmatprep.subr.mxu0 0.0
    %571 = vmatpush1.msra.mxu0 %v308
    %572 = vmatprep.subr.mxu0 0.0
    %573 = vmatpush1.msra.mxu0 %v307
    %574 = vmatprep.subr.mxu0 0.0
    %575 = vmatpush1.msra.mxu0 %v306
    %576 = vmatprep.subr.mxu0 0.0
    %577 = vmatpush2.msra.mxu0 0.0
    %578 = vmatprep.subr.mxu0 0.0
    %579 = vmatpush2.msra.mxu0 0.0
    %580 = vmatprep.subr.mxu0 0.0
    %581 = vmatpush2.msra.mxu0 0.0
    %582 = vmatprep.subr.mxu0 0.0
    %583 = vmatpush2.msra.mxu0 0.0
    %584 = vmatprep.subr.mxu0 0.0
    %585 = vmatpush2.msra.mxu0 0.0
    %586 = vmatprep.subr.mxu0 0.0
    %587 = vmatpush2.msra.mxu0 0.0
    %588 = vmatprep.subr.mxu0 0.0
    %589 = vmatpush2.msra.mxu0 0.0
    %590 = vmatprep.subr.mxu0 0.0
    %591 = vmatpush2.msra.mxu0 0.0
    %592 = vmatprep.subr.mxu0 0.0
    %593 = vmatpush2.msra.mxu0 0.0
    %594 = vmatprep.subr.mxu0 0.0
    %595 = vmatpush2.msra.mxu0 0.0
    %596 = vmatprep.subr.mxu0 0.0
    %597 = vmatpush2.msra.mxu0 0.0
    %598 = vmatprep.subr.mxu0 0.0
    %599 = vmatpush2.msra.mxu0 0.0
    %600 = vmatprep.subr.mxu0 0.0
    %601 = vmatpush2.msra.mxu0 0.0
    %602 = vmatprep.subr.mxu0 0.0
    %603 = vmatpush2.msra.mxu0 0.0
    %604 = vmatprep.subr.mxu0 0.0
    %605 = vmatpush2.msra.mxu0 0.0
    %606 = vmatprep.subr.mxu0 0.0
    %607 = vmatpush2.msra.mxu0 0.0
    %608 = vmatprep.mubr.f32.mxu0 0.0
    %609 = vmatmul.mubr.f32.gmra.mxu0 %v517
    %v610 = vpop.f32.mrf.mxu0
    %v611 = vadd.f32 0.0, %v610
    %v612 = vpop.f32.mrf.mxu0
    %613 = vmatprep.mubr.f32.mxu0 0.0
    %614 = vmatmul.mubr.f32.gmra.mxu0 %v520
    %v615 = vpop.f32.mrf.mxu0
    %v616 = vadd.f32 0.0, %v615
    %v617 = vpop.f32.mrf.mxu0
    %618 = vmatprep.mubr.f32.mxu0 0.0
    %619 = vmatmul.mubr.f32.gmra.mxu0 %v523
    %v620 = vpop.f32.mrf.mxu0
    %v621 = vadd.f32 0.0, %v620
    %v622 = vpop.f32.mrf.mxu0
    %623 = vmatprep.mubr.f32.mxu0 0.0
    %624 = vmatmul.mubr.f32.gmra.mxu0 %v526
    %v625 = vpop.f32.mrf.mxu0
    %v626 = vadd.f32 0.0, %v625
    %v627 = vpop.f32.mrf.mxu0
    %628 = vmatprep.mubr.f32.mxu0 0.0
    %629 = vmatmul.mubr.f32.gmra.mxu0 %v529
    %v630 = vpop.f32.mrf.mxu0
    %v631 = vadd.f32 0.0, %v630
    %v632 = vpop.f32.mrf.mxu0
    %633 = vmatprep.mubr.f32.mxu0 0.0
    %634 = vmatmul.mubr.f32.gmra.mxu0 %v532
    %v635 = vpop.f32.mrf.mxu0
    %v636 = vadd.f32 0.0, %v635
    %v637 = vpop.f32.mrf.mxu0
    %638 = vmatprep.mubr.f32.mxu0 0.0
    %639 = vmatmul.mubr.f32.gmra.mxu0 %v535
    %v640 = vpop.f32.mrf.mxu0
    %v641 = vadd.f32 0.0, %v640
    %v642 = vpop.f32.mrf.mxu0
    %643 = vmatprep.mubr.f32.mxu0 0.0
    %644 = vmatmul.mubr.f32.gmra.mxu0 %v538
    %v645 = vpop.f32.mrf.mxu0
    %v646 = vadd.f32 0.0, %v645
    %v647 = vpop.f32.mrf.mxu0
    %648 = vdwg.mxu0
    %v650 = vlaneseq
    %v651 = vshrl.u32 %v650, 7
    %v652 = vsub.s32 0, %v651
    %v653 = vrot.slane %v319, %v652
    %vm655 = vcmask 130048
    %v657 = vsel %vm655, %v611, 0
    %v660 = vsel %vm655, %v616, 0
    %v663 = vsel %vm655, %v621, 0
    %v666 = vsel %vm655, %v626, 0
    %v669 = vsel %vm655, %v631, 0
    %v672 = vsel %vm655, %v636, 0
    %v675 = vsel %vm655, %v641, 0
    %v678 = vsel %vm655, %v646, 0
    %680 = vmatprep.subr.mxu0 0.0
    %681 = vmatpush1.msra.mxu0 0.0
    %682 = vmatprep.subr.mxu0 0.0
    %683 = vmatpush1.msra.mxu0 0.0
    %684 = vmatprep.subr.mxu0 0.0
    %685 = vmatpush1.msra.mxu0 0.0
    %686 = vmatprep.subr.mxu0 0.0
    %687 = vmatpush1.msra.mxu0 0.0
    %688 = vmatprep.subr.mxu0 0.0
    %689 = vmatpush1.msra.mxu0 0.0
    %690 = vmatprep.subr.mxu0 0.0
    %691 = vmatpush1.msra.mxu0 0.0
    %692 = vmatprep.subr.mxu0 0.0
    %693 = vmatpush1.msra.mxu0 0.0
    %694 = vmatprep.subr.mxu0 0.0
    %695 = vmatpush1.msra.mxu0 0.0
    %696 = vmatprep.subr.mxu0 0.0
    %697 = vmatpush1.msra.mxu0 0.0
    %698 = vmatprep.subr.mxu0 0.0
    %699 = vmatpush1.msra.mxu0 0.0
    %700 = vmatprep.subr.mxu0 0.0
    %701 = vmatpush1.msra.mxu0 0.0
    %702 = vmatprep.subr.mxu0 0.0
    %703 = vmatpush1.msra.mxu0 0.0
    %704 = vmatprep.subr.mxu0 0.0
    %705 = vmatpush1.msra.mxu0 0.0
    %706 = vmatprep.subr.mxu0 0.0
    %707 = vmatpush1.msra.mxu0 0.0
    %708 = vmatprep.subr.mxu0 0.0
    %709 = vmatpush1.msra.mxu0 %v314
    %710 = vmatprep.subr.mxu0 0.0
    %711 = vmatpush1.msra.mxu0 %v313
    %712 = vmatprep.subr.mxu0 0.0
    %713 = vmatpush2.msra.mxu0 0.0
    %714 = vmatprep.subr.mxu0 0.0
    %715 = vmatpush2.msra.mxu0 0.0
    %716 = vmatprep.subr.mxu0 0.0
    %717 = vmatpush2.msra.mxu0 0.0
    %718 = vmatprep.subr.mxu0 0.0
    %719 = vmatpush2.msra.mxu0 0.0
    %720 = vmatprep.subr.mxu0 0.0
    %721 = vmatpush2.msra.mxu0 0.0
    %722 = vmatprep.subr.mxu0 0.0
    %723 = vmatpush2.msra.mxu0 0.0
    %724 = vmatprep.subr.mxu0 0.0
    %725 = vmatpush2.msra.mxu0 0.0
    %726 = vmatprep.subr.mxu0 0.0
    %727 = vmatpush2.msra.mxu0 0.0
    %728 = vmatprep.subr.mxu0 0.0
    %729 = vmatpush2.msra.mxu0 0.0
    %730 = vmatprep.subr.mxu0 0.0
    %731 = vmatpush2.msra.mxu0 0.0
    %732 = vmatprep.subr.mxu0 0.0
    %733 = vmatpush2.msra.mxu0 0.0
    %734 = vmatprep.subr.mxu0 0.0
    %735 = vmatpush2.msra.mxu0 0.0
    %736 = vmatprep.subr.mxu0 0.0
    %737 = vmatpush2.msra.mxu0 0.0
    %738 = vmatprep.subr.mxu0 0.0
    %739 = vmatpush2.msra.mxu0 0.0
    %740 = vmatprep.subr.mxu0 0.0
    %741 = vmatpush2.msra.mxu0 0.0
    %742 = vmatprep.subr.mxu0 0.0
    %743 = vmatpush2.msra.mxu0 0.0
    %744 = vmatprep.mubr.f32.mxu0 0.0
    %745 = vmatmul.mubr.f32.gmra.mxu0 %v657
    %v746 = vpop.f32.mrf.mxu0
    %v747 = vadd.f32 %v653, %v746
    %v748 = vpop.f32.mrf.mxu0
    %749 = vmatprep.mubr.f32.mxu0 0.0
    %750 = vmatmul.mubr.f32.gmra.mxu0 %v660
    %v751 = vpop.f32.mrf.mxu0
    %v752 = vadd.f32 %v653, %v751
    %v753 = vpop.f32.mrf.mxu0
    %754 = vmatprep.mubr.f32.mxu0 0.0
    %755 = vmatmul.mubr.f32.gmra.mxu0 %v663
    %v756 = vpop.f32.mrf.mxu0
    %v757 = vadd.f32 %v653, %v756
    %v758 = vpop.f32.mrf.mxu0
    %759 = vmatprep.mubr.f32.mxu0 0.0
    %760 = vmatmul.mubr.f32.gmra.mxu0 %v666
    %v761 = vpop.f32.mrf.mxu0
    %v762 = vadd.f32 %v653, %v761
    %v763 = vpop.f32.mrf.mxu0
    %764 = vmatprep.mubr.f32.mxu0 0.0
    %765 = vmatmul.mubr.f32.gmra.mxu0 %v669
    %v766 = vpop.f32.mrf.mxu0
    %v767 = vadd.f32 %v653, %v766
    %v768 = vpop.f32.mrf.mxu0
    %769 = vmatprep.mubr.f32.mxu0 0.0
    %770 = vmatmul.mubr.f32.gmra.mxu0 %v672
    %v771 = vpop.f32.mrf.mxu0
    %v772 = vadd.f32 %v653, %v771
    %v773 = vpop.f32.mrf.mxu0
    %774 = vmatprep.mubr.f32.mxu0 0.0
    %775 = vmatmul.mubr.f32.gmra.mxu0 %v675
    %v776 = vpop.f32.mrf.mxu0
    %v777 = vadd.f32 %v653, %v776
    %v778 = vpop.f32.mrf.mxu0
    %779 = vmatprep.mubr.f32.mxu0 0.0
    %780 = vmatmul.mubr.f32.gmra.mxu0 %v678
    %v781 = vpop.f32.mrf.mxu0
    %v782 = vadd.f32 %v653, %v781
    %v783 = vpop.f32.mrf.mxu0
    %784 = vdwg.mxu0
    %vm785 = vcmask 261120
    %v787 = vsel %vm785, 0.0, 0
    %789 = vmatprep.subr.mxu0 0.0
    %790 = vmatpush1.msra.mxu0 0.0
    %791 = vmatprep.subr.mxu0 0.0
    %792 = vmatpush1.msra.mxu0 0.0
    %793 = vmatprep.subr.mxu0 0.0
    %794 = vmatpush1.msra.mxu0 0.0
    %795 = vmatprep.subr.mxu0 0.0
    %796 = vmatpush1.msra.mxu0 0.0
    %797 = vmatprep.subr.mxu0 0.0
    %798 = vmatpush1.msra.mxu0 0.0
    %799 = vmatprep.subr.mxu0 0.0
    %800 = vmatpush1.msra.mxu0 0.0
    %801 = vmatprep.subr.mxu0 0.0
    %802 = vmatpush1.msra.mxu0 0.0
    %803 = vmatprep.subr.mxu0 0.0
    %804 = vmatpush1.msra.mxu0 0.0
    %805 = vmatprep.subr.mxu0 0.0
    %806 = vmatpush1.msra.mxu0 0.0
    %807 = vmatprep.subr.mxu0 0.0
    %808 = vmatpush1.msra.mxu0 0.0
    %809 = vmatprep.subr.mxu0 0.0
    %810 = vmatpush1.msra.mxu0 0.0
    %811 = vmatprep.subr.mxu0 0.0
    %812 = vmatpush1.msra.mxu0 0.0
    %813 = vmatprep.subr.mxu0 0.0
    %814 = vmatpush1.msra.mxu0 %v318
    %815 = vmatprep.subr.mxu0 0.0
    %816 = vmatpush1.msra.mxu0 %v317
    %817 = vmatprep.subr.mxu0 0.0
    %818 = vmatpush1.msra.mxu0 %v316
    %819 = vmatprep.subr.mxu0 0.0
    %820 = vmatpush1.msra.mxu0 %v315
    %821 = vmatprep.subr.mxu0 0.0
    %822 = vmatpush2.msra.mxu0 0.0
    %823 = vmatprep.subr.mxu0 0.0
    %824 = vmatpush2.msra.mxu0 0.0
    %825 = vmatprep.subr.mxu0 0.0
    %826 = vmatpush2.msra.mxu0 0.0
    %827 = vmatprep.subr.mxu0 0.0
    %828 = vmatpush2.msra.mxu0 0.0
    %829 = vmatprep.subr.mxu0 0.0
    %830 = vmatpush2.msra.mxu0 0.0
    %831 = vmatprep.subr.mxu0 0.0
    %832 = vmatpush2.msra.mxu0 0.0
    %833 = vmatprep.subr.mxu0 0.0
    %834 = vmatpush2.msra.mxu0 0.0
    %835 = vmatprep.subr.mxu0 0.0
    %836 = vmatpush2.msra.mxu0 0.0
    %837 = vmatprep.subr.mxu0 0.0
    %838 = vmatpush2.msra.mxu0 0.0
    %839 = vmatprep.subr.mxu0 0.0
    %840 = vmatpush2.msra.mxu0 0.0
    %841 = vmatprep.subr.mxu0 0.0
    %842 = vmatpush2.msra.mxu0 0.0
    %843 = vmatprep.subr.mxu0 0.0
    %844 = vmatpush2.msra.mxu0 0.0
    %845 = vmatprep.subr.mxu0 0.0
    %846 = vmatpush2.msra.mxu0 0.0
    %847 = vmatprep.subr.mxu0 0.0
    %848 = vmatpush2.msra.mxu0 0.0
    %849 = vmatprep.subr.mxu0 0.0
    %850 = vmatpush2.msra.mxu0 0.0
    %851 = vmatprep.subr.mxu0 0.0
    %852 = vmatpush2.msra.mxu0 0.0
    %853 = vmatprep.mubr.f32.mxu0 0.0
    %854 = vmatmul.mubr.f32.gmra.mxu0 %v787
    %v855 = vpop.f32.mrf.mxu0
    %v856 = vadd.f32 0.0, %v855
    %v857 = vpop.f32.mrf.mxu0
    %858 = vdwg.mxu0
    %v859 = vadd.f32 %v747, %v856
    %v860 = vxor.u32 %v859, 2147483648
    %v861 = vmul.f32 %v860, 1.442695
    %v862 = vpow.pop %v861
    %v863 = vadd.f32 %v862, 1.0
    %v864 = vrcp.pop %v863
    %v865 = vmul.f32 1.0, %v864
    %v867 = vlaneseq
    %v868 = vshrl.u32 %v867, 7
    %v869 = vsub.s32 0, %v868
    %v870 = vrot.slane %v320, %v869
    %871 = vrot.lane.b32.xlu0 %v870, 64
    %v872 = vpop.permute.xlu0 %871
    %v874 = vadd.f32 %v856, %v872
    %876 = vrot.lane.b32.xlu0 %v874, 64
    %v877 = vpop.permute.xlu0 %876
    %v879 = vmul.f32 %v865, %v877
    %881 = vrot.lane.b32.xlu0 %v879, 64
    %v882 = vpop.permute.xlu0 %881
    %v884 = vadd.f32 %v747, %v882
    %v885 = vtanh.pop %v884
    %v886 = vsub.f32 1.0, %v865
    %888 = vrot.lane.b32.xlu0 %v885, 96
    %v889 = vpop.permute.xlu0 %888
    %v891 = vmul.f32 %v886, %v889
    %v892 = vmul.f32 %v865, 0.0
    %v893 = vadd.f32 %v891, %v892
    %895 = vrot.lane.b32.xlu0 %v893, 96
    %v896 = vpop.permute.xlu0 %895
    %898 = vst.msk [vmem:[#allocation2] sm:$0xff] %vm785, %v896
    %v899 = vsel %vm785, %v896, 0
    %901 = vmatprep.subr.mxu0 0.0
    %902 = vmatpush1.msra.mxu0 0.0
    %903 = vmatprep.subr.mxu0 0.0
    %904 = vmatpush1.msra.mxu0 0.0
    %905 = vmatprep.subr.mxu0 0.0
    %906 = vmatpush1.msra.mxu0 0.0
    %907 = vmatprep.subr.mxu0 0.0
    %908 = vmatpush1.msra.mxu0 0.0
    %909 = vmatprep.subr.mxu0 0.0
    %910 = vmatpush1.msra.mxu0 0.0
    %911 = vmatprep.subr.mxu0 0.0
    %912 = vmatpush1.msra.mxu0 0.0
    %913 = vmatprep.subr.mxu0 0.0
    %914 = vmatpush1.msra.mxu0 0.0
    %915 = vmatprep.subr.mxu0 0.0
    %916 = vmatpush1.msra.mxu0 0.0
    %917 = vmatprep.subr.mxu0 0.0
    %918 = vmatpush1.msra.mxu0 0.0
    %919 = vmatprep.subr.mxu0 0.0
    %920 = vmatpush1.msra.mxu0 0.0
    %921 = vmatprep.subr.mxu0 0.0
    %922 = vmatpush1.msra.mxu0 0.0
    %923 = vmatprep.subr.mxu0 0.0
    %924 = vmatpush1.msra.mxu0 0.0
    %925 = vmatprep.subr.mxu0 0.0
    %926 = vmatpush1.msra.mxu0 %v318
    %927 = vmatprep.subr.mxu0 0.0
    %928 = vmatpush1.msra.mxu0 %v317
    %929 = vmatprep.subr.mxu0 0.0
    %930 = vmatpush1.msra.mxu0 %v316
    %931 = vmatprep.subr.mxu0 0.0
    %932 = vmatpush1.msra.mxu0 %v315
    %933 = vmatprep.subr.mxu0 0.0
    %934 = vmatpush2.msra.mxu0 0.0
    %935 = vmatprep.subr.mxu0 0.0
    %936 = vmatpush2.msra.mxu0 0.0
    %937 = vmatprep.subr.mxu0 0.0
    %938 = vmatpush2.msra.mxu0 0.0
    %939 = vmatprep.subr.mxu0 0.0
    %940 = vmatpush2.msra.mxu0 0.0
    %941 = vmatprep.subr.mxu0 0.0
    %942 = vmatpush2.msra.mxu0 0.0
    %943 = vmatprep.subr.mxu0 0.0
    %944 = vmatpush2.msra.mxu0 0.0
    %945 = vmatprep.subr.mxu0 0.0
    %946 = vmatpush2.msra.mxu0 0.0
    %947 = vmatprep.subr.mxu0 0.0
    %948 = vmatpush2.msra.mxu0 0.0
    %949 = vmatprep.subr.mxu0 0.0
    %950 = vmatpush2.msra.mxu0 0.0
    %951 = vmatprep.subr.mxu0 0.0
    %952 = vmatpush2.msra.mxu0 0.0
    %953 = vmatprep.subr.mxu0 0.0
    %954 = vmatpush2.msra.mxu0 0.0
    %955 = vmatprep.subr.mxu0 0.0
    %956 = vmatpush2.msra.mxu0 0.0
    %957 = vmatprep.subr.mxu0 0.0
    %958 = vmatpush2.msra.mxu0 0.0
    %959 = vmatprep.subr.mxu0 0.0
    %960 = vmatpush2.msra.mxu0 0.0
    %961 = vmatprep.subr.mxu0 0.0
    %962 = vmatpush2.msra.mxu0 0.0
    %963 = vmatprep.subr.mxu0 0.0
    %964 = vmatpush2.msra.mxu0 0.0
    %965 = vmatprep.mubr.f32.mxu0 0.0
    %966 = vmatmul.mubr.f32.gmra.mxu0 %v899
    %v967 = vpop.f32.mrf.mxu0
    %v968 = vadd.f32 0.0, %v967
    %v969 = vpop.f32.mrf.mxu0
    %970 = vdwg.mxu0
    %v971 = vadd.f32 %v752, %v968
    %v972 = vxor.u32 %v971, 2147483648
    %v973 = vmul.f32 %v972, 1.442695
    %v974 = vpow.pop %v973
    %v975 = vadd.f32 %v974, 1.0
    %v976 = vrcp.pop %v975
    %v977 = vmul.f32 1.0, %v976
    %v978 = vadd.f32 %v968, %v872
    %980 = vrot.lane.b32.xlu0 %v978, 64
    %v981 = vpop.permute.xlu0 %980
    %v983 = vmul.f32 %v977, %v981
    %985 = vrot.lane.b32.xlu0 %v983, 64
    %v986 = vpop.permute.xlu0 %985
    %v988 = vadd.f32 %v752, %v986
    %v989 = vtanh.pop %v988
    %v990 = vsub.f32 1.0, %v977
    %992 = vrot.lane.b32.xlu0 %v989, 96
    %v993 = vpop.permute.xlu0 %992
    %v995 = vmul.f32 %v990, %v993
    %v996 = vmul.f32 %v977, %v893
    %v997 = vadd.f32 %v995, %v996
    %999 = vrot.lane.b32.xlu0 %v997, 96
    %v1000 = vpop.permute.xlu0 %999
    %1002 = vst.msk [vmem:[#allocation2 + $0x8] sm:$0xff] %vm785, %v1000
    %v1003 = vsel %vm785, %v1000, 0
    %1005 = vmatprep.subr.mxu0 0.0
    %1006 = vmatpush1.msra.mxu0 0.0
    %1007 = vmatprep.subr.mxu0 0.0
    %1008 = vmatpush1.msra.mxu0 0.0
    %1009 = vmatprep.subr.mxu0 0.0
    %1010 = vmatpush1.msra.mxu0 0.0
    %1011 = vmatprep.subr.mxu0 0.0
    %1012 = vmatpush1.msra.mxu0 0.0
    %1013 = vmatprep.subr.mxu0 0.0
    %1014 = vmatpush1.msra.mxu0 0.0
    %1015 = vmatprep.subr.mxu0 0.0
    %1016 = vmatpush1.msra.mxu0 0.0
    %1017 = vmatprep.subr.mxu0 0.0
    %1018 = vmatpush1.msra.mxu0 0.0
    %1019 = vmatprep.subr.mxu0 0.0
    %1020 = vmatpush1.msra.mxu0 0.0
    %1021 = vmatprep.subr.mxu0 0.0
    %1022 = vmatpush1.msra.mxu0 0.0
    %1023 = vmatprep.subr.mxu0 0.0
    %1024 = vmatpush1.msra.mxu0 0.0
    %1025 = vmatprep.subr.mxu0 0.0
    %1026 = vmatpush1.msra.mxu0 0.0
    %1027 = vmatprep.subr.mxu0 0.0
    %1028 = vmatpush1.msra.mxu0 0.0
    %1029 = vmatprep.subr.mxu0 0.0
    %1030 = vmatpush1.msra.mxu0 %v318
    %1031 = vmatprep.subr.mxu0 0.0
    %1032 = vmatpush1.msra.mxu0 %v317
    %1033 = vmatprep.subr.mxu0 0.0
    %1034 = vmatpush1.msra.mxu0 %v316
    %1035 = vmatprep.subr.mxu0 0.0
    %1036 = vmatpush1.msra.mxu0 %v315
    %1037 = vmatprep.subr.mxu0 0.0
    %1038 = vmatpush2.msra.mxu0 0.0
    %1039 = vmatprep.subr.mxu0 0.0
    %1040 = vmatpush2.msra.mxu0 0.0
    %1041 = vmatprep.subr.mxu0 0.0
    %1042 = vmatpush2.msra.mxu0 0.0
    %1043 = vmatprep.subr.mxu0 0.0
    %1044 = vmatpush2.msra.mxu0 0.0
    %1045 = vmatprep.subr.mxu0 0.0
    %1046 = vmatpush2.msra.mxu0 0.0
    %1047 = vmatprep.subr.mxu0 0.0
    %1048 = vmatpush2.msra.mxu0 0.0
    %1049 = vmatprep.subr.mxu0 0.0
    %1050 = vmatpush2.msra.mxu0 0.0
    %1051 = vmatprep.subr.mxu0 0.0
    %1052 = vmatpush2.msra.mxu0 0.0
    %1053 = vmatprep.subr.mxu0 0.0
    %1054 = vmatpush2.msra.mxu0 0.0
    %1055 = vmatprep.subr.mxu0 0.0
    %1056 = vmatpush2.msra.mxu0 0.0
    %1057 = vmatprep.subr.mxu0 0.0
    %1058 = vmatpush2.msra.mxu0 0.0
    %1059 = vmatprep.subr.mxu0 0.0
    %1060 = vmatpush2.msra.mxu0 0.0
    %1061 = vmatprep.subr.mxu0 0.0
    %1062 = vmatpush2.msra.mxu0 0.0
    %1063 = vmatprep.subr.mxu0 0.0
    %1064 = vmatpush2.msra.mxu0 0.0
    %1065 = vmatprep.subr.mxu0 0.0
    %1066 = vmatpush2.msra.mxu0 0.0
    %1067 = vmatprep.subr.mxu0 0.0
    %1068 = vmatpush2.msra.mxu0 0.0
    %1069 = vmatprep.mubr.f32.mxu0 0.0
    %1070 = vmatmul.mubr.f32.gmra.mxu0 %v1003
    %v1071 = vpop.f32.mrf.mxu0
    %v1072 = vadd.f32 0.0, %v1071
    %v1073 = vpop.f32.mrf.mxu0
    %1074 = vdwg.mxu0
    %v1075 = vadd.f32 %v757, %v1072
    %v1076 = vxor.u32 %v1075, 2147483648
    %v1077 = vmul.f32 %v1076, 1.442695
    %v1078 = vpow.pop %v1077
    %v1079 = vadd.f32 %v1078, 1.0
    %v1080 = vrcp.pop %v1079
    %v1081 = vmul.f32 1.0, %v1080
    %v1082 = vadd.f32 %v1072, %v872
    %1084 = vrot.lane.b32.xlu0 %v1082, 64
    %v1085 = vpop.permute.xlu0 %1084
    %v1087 = vmul.f32 %v1081, %v1085
    %1089 = vrot.lane.b32.xlu0 %v1087, 64
    %v1090 = vpop.permute.xlu0 %1089
    %v1092 = vadd.f32 %v757, %v1090
    %v1093 = vtanh.pop %v1092
    %v1094 = vsub.f32 1.0, %v1081
    %1096 = vrot.lane.b32.xlu0 %v1093, 96
    %v1097 = vpop.permute.xlu0 %1096
    %v1099 = vmul.f32 %v1094, %v1097
    %v1100 = vmul.f32 %v1081, %v997
    %v1101 = vadd.f32 %v1099, %v1100
    %1103 = vrot.lane.b32.xlu0 %v1101, 96
    %v1104 = vpop.permute.xlu0 %1103
    %1106 = vst.msk [vmem:[#allocation2 + $0x10] sm:$0xff] %vm785, %v1104
    %v1107 = vsel %vm785, %v1104, 0
    %1109 = vmatprep.subr.mxu0 0.0
    %1110 = vmatpush1.msra.mxu0 0.0
    %1111 = vmatprep.subr.mxu0 0.0
    %1112 = vmatpush1.msra.mxu0 0.0
    %1113 = vmatprep.subr.mxu0 0.0
    %1114 = vmatpush1.msra.mxu0 0.0
    %1115 = vmatprep.subr.mxu0 0.0
    %1116 = vmatpush1.msra.mxu0 0.0
    %1117 = vmatprep.subr.mxu0 0.0
    %1118 = vmatpush1.msra.mxu0 0.0
    %1119 = vmatprep.subr.mxu0 0.0
    %1120 = vmatpush1.msra.mxu0 0.0
    %1121 = vmatprep.subr.mxu0 0.0
    %1122 = vmatpush1.msra.mxu0 0.0
    %1123 = vmatprep.subr.mxu0 0.0
    %1124 = vmatpush1.msra.mxu0 0.0
    %1125 = vmatprep.subr.mxu0 0.0
    %1126 = vmatpush1.msra.mxu0 0.0
    %1127 = vmatprep.subr.mxu0 0.0
    %1128 = vmatpush1.msra.mxu0 0.0
    %1129 = vmatprep.subr.mxu0 0.0
    %1130 = vmatpush1.msra.mxu0 0.0
    %1131 = vmatprep.subr.mxu0 0.0
    %1132 = vmatpush1.msra.mxu0 0.0
    %1133 = vmatprep.subr.mxu0 0.0
    %1134 = vmatpush1.msra.mxu0 %v318
    %1135 = vmatprep.subr.mxu0 0.0
    %1136 = vmatpush1.msra.mxu0 %v317
    %1137 = vmatprep.subr.mxu0 0.0
    %1138 = vmatpush1.msra.mxu0 %v316
    %1139 = vmatprep.subr.mxu0 0.0
    %1140 = vmatpush1.msra.mxu0 %v315
    %1141 = vmatprep.subr.mxu0 0.0
    %1142 = vmatpush2.msra.mxu0 0.0
    %1143 = vmatprep.subr.mxu0 0.0
    %1144 = vmatpush2.msra.mxu0 0.0
    %1145 = vmatprep.subr.mxu0 0.0
    %1146 = vmatpush2.msra.mxu0 0.0
    %1147 = vmatprep.subr.mxu0 0.0
    %1148 = vmatpush2.msra.mxu0 0.0
    %1149 = vmatprep.subr.mxu0 0.0
    %1150 = vmatpush2.msra.mxu0 0.0
    %1151 = vmatprep.subr.mxu0 0.0
    %1152 = vmatpush2.msra.mxu0 0.0
    %1153 = vmatprep.subr.mxu0 0.0
    %1154 = vmatpush2.msra.mxu0 0.0
    %1155 = vmatprep.subr.mxu0 0.0
    %1156 = vmatpush2.msra.mxu0 0.0
    %1157 = vmatprep.subr.mxu0 0.0
    %1158 = vmatpush2.msra.mxu0 0.0
    %1159 = vmatprep.subr.mxu0 0.0
    %1160 = vmatpush2.msra.mxu0 0.0
    %1161 = vmatprep.subr.mxu0 0.0
    %1162 = vmatpush2.msra.mxu0 0.0
    %1163 = vmatprep.subr.mxu0 0.0
    %1164 = vmatpush2.msra.mxu0 0.0
    %1165 = vmatprep.subr.mxu0 0.0
    %1166 = vmatpush2.msra.mxu0 0.0
    %1167 = vmatprep.subr.mxu0 0.0
    %1168 = vmatpush2.msra.mxu0 0.0
    %1169 = vmatprep.subr.mxu0 0.0
    %1170 = vmatpush2.msra.mxu0 0.0
    %1171 = vmatprep.subr.mxu0 0.0
    %1172 = vmatpush2.msra.mxu0 0.0
    %1173 = vmatprep.mubr.f32.mxu0 0.0
    %1174 = vmatmul.mubr.f32.gmra.mxu0 %v1107
    %v1175 = vpop.f32.mrf.mxu0
    %v1176 = vadd.f32 0.0, %v1175
    %v1177 = vpop.f32.mrf.mxu0
    %1178 = vdwg.mxu0
    %v1179 = vadd.f32 %v762, %v1176
    %v1180 = vxor.u32 %v1179, 2147483648
    %v1181 = vmul.f32 %v1180, 1.442695
    %v1182 = vpow.pop %v1181
    %v1183 = vadd.f32 %v1182, 1.0
    %v1184 = vrcp.pop %v1183
    %v1185 = vmul.f32 1.0, %v1184
    %v1186 = vadd.f32 %v1176, %v872
    %1188 = vrot.lane.b32.xlu0 %v1186, 64
    %v1189 = vpop.permute.xlu0 %1188
    %v1191 = vmul.f32 %v1185, %v1189
    %1193 = vrot.lane.b32.xlu0 %v1191, 64
    %v1194 = vpop.permute.xlu0 %1193
    %v1196 = vadd.f32 %v762, %v1194
    %v1197 = vtanh.pop %v1196
    %v1198 = vsub.f32 1.0, %v1185
    %1200 = vrot.lane.b32.xlu0 %v1197, 96
    %v1201 = vpop.permute.xlu0 %1200
    %v1203 = vmul.f32 %v1198, %v1201
    %v1204 = vmul.f32 %v1185, %v1101
    %v1205 = vadd.f32 %v1203, %v1204
    %1207 = vrot.lane.b32.xlu0 %v1205, 96
    %v1208 = vpop.permute.xlu0 %1207
    %1210 = vst.msk [vmem:[#allocation2 + $0x18] sm:$0xff] %vm785, %v1208
    %v1211 = vsel %vm785, %v1208, 0
    %1213 = vmatprep.subr.mxu0 0.0
    %1214 = vmatpush1.msra.mxu0 0.0
    %1215 = vmatprep.subr.mxu0 0.0
    %1216 = vmatpush1.msra.mxu0 0.0
    %1217 = vmatprep.subr.mxu0 0.0
    %1218 = vmatpush1.msra.mxu0 0.0
    %1219 = vmatprep.subr.mxu0 0.0
    %1220 = vmatpush1.msra.mxu0 0.0
    %1221 = vmatprep.subr.mxu0 0.0
    %1222 = vmatpush1.msra.mxu0 0.0
    %1223 = vmatprep.subr.mxu0 0.0
    %1224 = vmatpush1.msra.mxu0 0.0
    %1225 = vmatprep.subr.mxu0 0.0
    %1226 = vmatpush1.msra.mxu0 0.0
    %1227 = vmatprep.subr.mxu0 0.0
    %1228 = vmatpush1.msra.mxu0 0.0
    %1229 = vmatprep.subr.mxu0 0.0
    %1230 = vmatpush1.msra.mxu0 0.0
    %1231 = vmatprep.subr.mxu0 0.0
    %1232 = vmatpush1.msra.mxu0 0.0
    %1233 = vmatprep.subr.mxu0 0.0
    %1234 = vmatpush1.msra.mxu0 0.0
    %1235 = vmatprep.subr.mxu0 0.0
    %1236 = vmatpush1.msra.mxu0 0.0
    %1237 = vmatprep.subr.mxu0 0.0
    %1238 = vmatpush1.msra.mxu0 %v318
    %1239 = vmatprep.subr.mxu0 0.0
    %1240 = vmatpush1.msra.mxu0 %v317
    %1241 = vmatprep.subr.mxu0 0.0
    %1242 = vmatpush1.msra.mxu0 %v316
    %1243 = vmatprep.subr.mxu0 0.0
    %1244 = vmatpush1.msra.mxu0 %v315
    %1245 = vmatprep.subr.mxu0 0.0
    %1246 = vmatpush2.msra.mxu0 0.0
    %1247 = vmatprep.subr.mxu0 0.0
    %1248 = vmatpush2.msra.mxu0 0.0
    %1249 = vmatprep.subr.mxu0 0.0
    %1250 = vmatpush2.msra.mxu0 0.0
    %1251 = vmatprep.subr.mxu0 0.0
    %1252 = vmatpush2.msra.mxu0 0.0
    %1253 = vmatprep.subr.mxu0 0.0
    %1254 = vmatpush2.msra.mxu0 0.0
    %1255 = vmatprep.subr.mxu0 0.0
    %1256 = vmatpush2.msra.mxu0 0.0
    %1257 = vmatprep.subr.mxu0 0.0
    %1258 = vmatpush2.msra.mxu0 0.0
    %1259 = vmatprep.subr.mxu0 0.0
    %1260 = vmatpush2.msra.mxu0 0.0
    %1261 = vmatprep.subr.mxu0 0.0
    %1262 = vmatpush2.msra.mxu0 0.0
    %1263 = vmatprep.subr.mxu0 0.0
    %1264 = vmatpush2.msra.mxu0 0.0
    %1265 = vmatprep.subr.mxu0 0.0
    %1266 = vmatpush2.msra.mxu0 0.0
    %1267 = vmatprep.subr.mxu0 0.0
    %1268 = vmatpush2.msra.mxu0 0.0
    %1269 = vmatprep.subr.mxu0 0.0
    %1270 = vmatpush2.msra.mxu0 0.0
    %1271 = vmatprep.subr.mxu0 0.0
    %1272 = vmatpush2.msra.mxu0 0.0
    %1273 = vmatprep.subr.mxu0 0.0
    %1274 = vmatpush2.msra.mxu0 0.0
    %1275 = vmatprep.subr.mxu0 0.0
    %1276 = vmatpush2.msra.mxu0 0.0
    %1277 = vmatprep.mubr.f32.mxu0 0.0
    %1278 = vmatmul.mubr.f32.gmra.mxu0 %v1211
    %v1279 = vpop.f32.mrf.mxu0
    %v1280 = vadd.f32 0.0, %v1279
    %v1281 = vpop.f32.mrf.mxu0
    %1282 = vdwg.mxu0
    %v1283 = vadd.f32 %v767, %v1280
    %v1284 = vxor.u32 %v1283, 2147483648
    %v1285 = vmul.f32 %v1284, 1.442695
    %v1286 = vpow.pop %v1285
    %v1287 = vadd.f32 %v1286, 1.0
    %v1288 = vrcp.pop %v1287
    %v1289 = vmul.f32 1.0, %v1288
    %v1290 = vadd.f32 %v1280, %v872
    %1292 = vrot.lane.b32.xlu0 %v1290, 64
    %v1293 = vpop.permute.xlu0 %1292
    %v1295 = vmul.f32 %v1289, %v1293
    %1297 = vrot.lane.b32.xlu0 %v1295, 64
    %v1298 = vpop.permute.xlu0 %1297
    %v1300 = vadd.f32 %v767, %v1298
    %v1301 = vtanh.pop %v1300
    %v1302 = vsub.f32 1.0, %v1289
    %1304 = vrot.lane.b32.xlu0 %v1301, 96
    %v1305 = vpop.permute.xlu0 %1304
    %v1307 = vmul.f32 %v1302, %v1305
    %v1308 = vmul.f32 %v1289, %v1205
    %v1309 = vadd.f32 %v1307, %v1308
    %1311 = vrot.lane.b32.xlu0 %v1309, 96
    %v1312 = vpop.permute.xlu0 %1311
    %1314 = vst.msk [vmem:[#allocation2 + $0x20] sm:$0xff] %vm785, %v1312
    %v1315 = vsel %vm785, %v1312, 0
    %1317 = vmatprep.subr.mxu0 0.0
    %1318 = vmatpush1.msra.mxu0 0.0
    %1319 = vmatprep.subr.mxu0 0.0
    %1320 = vmatpush1.msra.mxu0 0.0
    %1321 = vmatprep.subr.mxu0 0.0
    %1322 = vmatpush1.msra.mxu0 0.0
    %1323 = vmatprep.subr.mxu0 0.0
    %1324 = vmatpush1.msra.mxu0 0.0
    %1325 = vmatprep.subr.mxu0 0.0
    %1326 = vmatpush1.msra.mxu0 0.0
    %1327 = vmatprep.subr.mxu0 0.0
    %1328 = vmatpush1.msra.mxu0 0.0
    %1329 = vmatprep.subr.mxu0 0.0
    %1330 = vmatpush1.msra.mxu0 0.0
    %1331 = vmatprep.subr.mxu0 0.0
    %1332 = vmatpush1.msra.mxu0 0.0
    %1333 = vmatprep.subr.mxu0 0.0
    %1334 = vmatpush1.msra.mxu0 0.0
    %1335 = vmatprep.subr.mxu0 0.0
    %1336 = vmatpush1.msra.mxu0 0.0
    %1337 = vmatprep.subr.mxu0 0.0
    %1338 = vmatpush1.msra.mxu0 0.0
    %1339 = vmatprep.subr.mxu0 0.0
    %1340 = vmatpush1.msra.mxu0 0.0
    %1341 = vmatprep.subr.mxu0 0.0
    %1342 = vmatpush1.msra.mxu0 %v318
    %1343 = vmatprep.subr.mxu0 0.0
    %1344 = vmatpush1.msra.mxu0 %v317
    %1345 = vmatprep.subr.mxu0 0.0
    %1346 = vmatpush1.msra.mxu0 %v316
    %1347 = vmatprep.subr.mxu0 0.0
    %1348 = vmatpush1.msra.mxu0 %v315
    %1349 = vmatprep.subr.mxu0 0.0
    %1350 = vmatpush2.msra.mxu0 0.0
    %1351 = vmatprep.subr.mxu0 0.0
    %1352 = vmatpush2.msra.mxu0 0.0
    %1353 = vmatprep.subr.mxu0 0.0
    %1354 = vmatpush2.msra.mxu0 0.0
    %1355 = vmatprep.subr.mxu0 0.0
    %1356 = vmatpush2.msra.mxu0 0.0
    %1357 = vmatprep.subr.mxu0 0.0
    %1358 = vmatpush2.msra.mxu0 0.0
    %1359 = vmatprep.subr.mxu0 0.0
    %1360 = vmatpush2.msra.mxu0 0.0
    %1361 = vmatprep.subr.mxu0 0.0
    %1362 = vmatpush2.msra.mxu0 0.0
    %1363 = vmatprep.subr.mxu0 0.0
    %1364 = vmatpush2.msra.mxu0 0.0
    %1365 = vmatprep.subr.mxu0 0.0
    %1366 = vmatpush2.msra.mxu0 0.0
    %1367 = vmatprep.subr.mxu0 0.0
    %1368 = vmatpush2.msra.mxu0 0.0
    %1369 = vmatprep.subr.mxu0 0.0
    %1370 = vmatpush2.msra.mxu0 0.0
    %1371 = vmatprep.subr.mxu0 0.0
    %1372 = vmatpush2.msra.mxu0 0.0
    %1373 = vmatprep.subr.mxu0 0.0
    %1374 = vmatpush2.msra.mxu0 0.0
    %1375 = vmatprep.subr.mxu0 0.0
    %1376 = vmatpush2.msra.mxu0 0.0
    %1377 = vmatprep.subr.mxu0 0.0
    %1378 = vmatpush2.msra.mxu0 0.0
    %1379 = vmatprep.subr.mxu0 0.0
    %1380 = vmatpush2.msra.mxu0 0.0
    %1381 = vmatprep.mubr.f32.mxu0 0.0
    %1382 = vmatmul.mubr.f32.gmra.mxu0 %v1315
    %v1383 = vpop.f32.mrf.mxu0
    %v1384 = vadd.f32 0.0, %v1383
    %v1385 = vpop.f32.mrf.mxu0
    %1386 = vdwg.mxu0
    %v1387 = vadd.f32 %v772, %v1384
    %v1388 = vxor.u32 %v1387, 2147483648
    %v1389 = vmul.f32 %v1388, 1.442695
    %v1390 = vpow.pop %v1389
    %v1391 = vadd.f32 %v1390, 1.0
    %v1392 = vrcp.pop %v1391
    %v1393 = vmul.f32 1.0, %v1392
    %v1394 = vadd.f32 %v1384, %v872
    %1396 = vrot.lane.b32.xlu0 %v1394, 64
    %v1397 = vpop.permute.xlu0 %1396
    %v1399 = vmul.f32 %v1393, %v1397
    %1401 = vrot.lane.b32.xlu0 %v1399, 64
    %v1402 = vpop.permute.xlu0 %1401
    %v1404 = vadd.f32 %v772, %v1402
    %v1405 = vtanh.pop %v1404
    %v1406 = vsub.f32 1.0, %v1393
    %1408 = vrot.lane.b32.xlu0 %v1405, 96
    %v1409 = vpop.permute.xlu0 %1408
    %v1411 = vmul.f32 %v1406, %v1409
    %v1412 = vmul.f32 %v1393, %v1309
    %v1413 = vadd.f32 %v1411, %v1412
    %1415 = vrot.lane.b32.xlu0 %v1413, 96
    %v1416 = vpop.permute.xlu0 %1415
    %1418 = vst.msk [vmem:[#allocation2 + $0x28] sm:$0xff] %vm785, %v1416
    %v1419 = vsel %vm785, %v1416, 0
    %1421 = vmatprep.subr.mxu0 0.0
    %1422 = vmatpush1.msra.mxu0 0.0
    %1423 = vmatprep.subr.mxu0 0.0
    %1424 = vmatpush1.msra.mxu0 0.0
    %1425 = vmatprep.subr.mxu0 0.0
    %1426 = vmatpush1.msra.mxu0 0.0
    %1427 = vmatprep.subr.mxu0 0.0
    %1428 = vmatpush1.msra.mxu0 0.0
    %1429 = vmatprep.subr.mxu0 0.0
    %1430 = vmatpush1.msra.mxu0 0.0
    %1431 = vmatprep.subr.mxu0 0.0
    %1432 = vmatpush1.msra.mxu0 0.0
    %1433 = vmatprep.subr.mxu0 0.0
    %1434 = vmatpush1.msra.mxu0 0.0
    %1435 = vmatprep.subr.mxu0 0.0
    %1436 = vmatpush1.msra.mxu0 0.0
    %1437 = vmatprep.subr.mxu0 0.0
    %1438 = vmatpush1.msra.mxu0 0.0
    %1439 = vmatprep.subr.mxu0 0.0
    %1440 = vmatpush1.msra.mxu0 0.0
    %1441 = vmatprep.subr.mxu0 0.0
    %1442 = vmatpush1.msra.mxu0 0.0
    %1443 = vmatprep.subr.mxu0 0.0
    %1444 = vmatpush1.msra.mxu0 0.0
    %1445 = vmatprep.subr.mxu0 0.0
    %1446 = vmatpush1.msra.mxu0 %v318
    %1447 = vmatprep.subr.mxu0 0.0
    %1448 = vmatpush1.msra.mxu0 %v317
    %1449 = vmatprep.subr.mxu0 0.0
    %1450 = vmatpush1.msra.mxu0 %v316
    %1451 = vmatprep.subr.mxu0 0.0
    %1452 = vmatpush1.msra.mxu0 %v315
    %1453 = vmatprep.subr.mxu0 0.0
    %1454 = vmatpush2.msra.mxu0 0.0
    %1455 = vmatprep.subr.mxu0 0.0
    %1456 = vmatpush2.msra.mxu0 0.0
    %1457 = vmatprep.subr.mxu0 0.0
    %1458 = vmatpush2.msra.mxu0 0.0
    %1459 = vmatprep.subr.mxu0 0.0
    %1460 = vmatpush2.msra.mxu0 0.0
    %1461 = vmatprep.subr.mxu0 0.0
    %1462 = vmatpush2.msra.mxu0 0.0
    %1463 = vmatprep.subr.mxu0 0.0
    %1464 = vmatpush2.msra.mxu0 0.0
    %1465 = vmatprep.subr.mxu0 0.0
    %1466 = vmatpush2.msra.mxu0 0.0
    %1467 = vmatprep.subr.mxu0 0.0
    %1468 = vmatpush2.msra.mxu0 0.0
    %1469 = vmatprep.subr.mxu0 0.0
    %1470 = vmatpush2.msra.mxu0 0.0
    %1471 = vmatprep.subr.mxu0 0.0
    %1472 = vmatpush2.msra.mxu0 0.0
    %1473 = vmatprep.subr.mxu0 0.0
    %1474 = vmatpush2.msra.mxu0 0.0
    %1475 = vmatprep.subr.mxu0 0.0
    %1476 = vmatpush2.msra.mxu0 0.0
    %1477 = vmatprep.subr.mxu0 0.0
    %1478 = vmatpush2.msra.mxu0 0.0
    %1479 = vmatprep.subr.mxu0 0.0
    %1480 = vmatpush2.msra.mxu0 0.0
    %1481 = vmatprep.subr.mxu0 0.0
    %1482 = vmatpush2.msra.mxu0 0.0
    %1483 = vmatprep.subr.mxu0 0.0
    %1484 = vmatpush2.msra.mxu0 0.0
    %1485 = vmatprep.mubr.f32.mxu0 0.0
    %1486 = vmatmul.mubr.f32.gmra.mxu0 %v1419
    %v1487 = vpop.f32.mrf.mxu0
    %v1488 = vadd.f32 0.0, %v1487
    %v1489 = vpop.f32.mrf.mxu0
    %1490 = vdwg.mxu0
    %v1491 = vadd.f32 %v777, %v1488
    %v1492 = vxor.u32 %v1491, 2147483648
    %v1493 = vmul.f32 %v1492, 1.442695
    %v1494 = vpow.pop %v1493
    %v1495 = vadd.f32 %v1494, 1.0
    %v1496 = vrcp.pop %v1495
    %v1497 = vmul.f32 1.0, %v1496
    %v1498 = vadd.f32 %v1488, %v872
    %1500 = vrot.lane.b32.xlu0 %v1498, 64
    %v1501 = vpop.permute.xlu0 %1500
    %v1503 = vmul.f32 %v1497, %v1501
    %1505 = vrot.lane.b32.xlu0 %v1503, 64
    %v1506 = vpop.permute.xlu0 %1505
    %v1508 = vadd.f32 %v777, %v1506
    %v1509 = vtanh.pop %v1508
    %v1510 = vsub.f32 1.0, %v1497
    %1512 = vrot.lane.b32.xlu0 %v1509, 96
    %v1513 = vpop.permute.xlu0 %1512
    %v1515 = vmul.f32 %v1510, %v1513
    %v1516 = vmul.f32 %v1497, %v1413
    %v1517 = vadd.f32 %v1515, %v1516
    %1519 = vrot.lane.b32.xlu0 %v1517, 96
    %v1520 = vpop.permute.xlu0 %1519
    %1522 = vst.msk [vmem:[#allocation2 + $0x30] sm:$0xff] %vm785, %v1520
    %v1523 = vsel %vm785, %v1520, 0
    %1525 = vmatprep.subr.mxu0 0.0
    %1526 = vmatpush1.msra.mxu0 0.0
    %1527 = vmatprep.subr.mxu0 0.0
    %1528 = vmatpush1.msra.mxu0 0.0
    %1529 = vmatprep.subr.mxu0 0.0
    %1530 = vmatpush1.msra.mxu0 0.0
    %1531 = vmatprep.subr.mxu0 0.0
    %1532 = vmatpush1.msra.mxu0 0.0
    %1533 = vmatprep.subr.mxu0 0.0
    %1534 = vmatpush1.msra.mxu0 0.0
    %1535 = vmatprep.subr.mxu0 0.0
    %1536 = vmatpush1.msra.mxu0 0.0
    %1537 = vmatprep.subr.mxu0 0.0
    %1538 = vmatpush1.msra.mxu0 0.0
    %1539 = vmatprep.subr.mxu0 0.0
    %1540 = vmatpush1.msra.mxu0 0.0
    %1541 = vmatprep.subr.mxu0 0.0
    %1542 = vmatpush1.msra.mxu0 0.0
    %1543 = vmatprep.subr.mxu0 0.0
    %1544 = vmatpush1.msra.mxu0 0.0
    %1545 = vmatprep.subr.mxu0 0.0
    %1546 = vmatpush1.msra.mxu0 0.0
    %1547 = vmatprep.subr.mxu0 0.0
    %1548 = vmatpush1.msra.mxu0 0.0
    %1549 = vmatprep.subr.mxu0 0.0
    %1550 = vmatpush1.msra.mxu0 %v318
    %1551 = vmatprep.subr.mxu0 0.0
    %1552 = vmatpush1.msra.mxu0 %v317
    %1553 = vmatprep.subr.mxu0 0.0
    %1554 = vmatpush1.msra.mxu0 %v316
    %1555 = vmatprep.subr.mxu0 0.0
    %1556 = vmatpush1.msra.mxu0 %v315
    %1557 = vmatprep.subr.mxu0 0.0
    %1558 = vmatpush2.msra.mxu0 0.0
    %1559 = vmatprep.subr.mxu0 0.0
    %1560 = vmatpush2.msra.mxu0 0.0
    %1561 = vmatprep.subr.mxu0 0.0
    %1562 = vmatpush2.msra.mxu0 0.0
    %1563 = vmatprep.subr.mxu0 0.0
    %1564 = vmatpush2.msra.mxu0 0.0
    %1565 = vmatprep.subr.mxu0 0.0
    %1566 = vmatpush2.msra.mxu0 0.0
    %1567 = vmatprep.subr.mxu0 0.0
    %1568 = vmatpush2.msra.mxu0 0.0
    %1569 = vmatprep.subr.mxu0 0.0
    %1570 = vmatpush2.msra.mxu0 0.0
    %1571 = vmatprep.subr.mxu0 0.0
    %1572 = vmatpush2.msra.mxu0 0.0
    %1573 = vmatprep.subr.mxu0 0.0
    %1574 = vmatpush2.msra.mxu0 0.0
    %1575 = vmatprep.subr.mxu0 0.0
    %1576 = vmatpush2.msra.mxu0 0.0
    %1577 = vmatprep.subr.mxu0 0.0
    %1578 = vmatpush2.msra.mxu0 0.0
    %1579 = vmatprep.subr.mxu0 0.0
    %1580 = vmatpush2.msra.mxu0 0.0
    %1581 = vmatprep.subr.mxu0 0.0
    %1582 = vmatpush2.msra.mxu0 0.0
    %1583 = vmatprep.subr.mxu0 0.0
    %1584 = vmatpush2.msra.mxu0 0.0
    %1585 = vmatprep.subr.mxu0 0.0
    %1586 = vmatpush2.msra.mxu0 0.0
    %1587 = vmatprep.subr.mxu0 0.0
    %1588 = vmatpush2.msra.mxu0 0.0
    %1589 = vmatprep.mubr.f32.mxu0 0.0
    %1590 = vmatmul.mubr.f32.gmra.mxu0 %v1523
    %v1591 = vpop.f32.mrf.mxu0
    %v1592 = vadd.f32 0.0, %v1591
    %v1593 = vpop.f32.mrf.mxu0
    %1594 = vdwg.mxu0
    %v1595 = vadd.f32 %v782, %v1592
    %v1596 = vxor.u32 %v1595, 2147483648
    %v1597 = vmul.f32 %v1596, 1.442695
    %v1598 = vpow.pop %v1597
    %v1599 = vadd.f32 %v1598, 1.0
    %v1600 = vrcp.pop %v1599
    %v1601 = vmul.f32 1.0, %v1600
    %v1602 = vadd.f32 %v1592, %v872
    %1604 = vrot.lane.b32.xlu0 %v1602, 64
    %v1605 = vpop.permute.xlu0 %1604
    %v1607 = vmul.f32 %v1601, %v1605
    %1609 = vrot.lane.b32.xlu0 %v1607, 64
    %v1610 = vpop.permute.xlu0 %1609
    %v1612 = vadd.f32 %v782, %v1610
    %v1613 = vtanh.pop %v1612
    %v1614 = vsub.f32 1.0, %v1601
    %1616 = vrot.lane.b32.xlu0 %v1613, 96
    %v1617 = vpop.permute.xlu0 %1616
    %v1619 = vmul.f32 %v1614, %v1617
    %v1620 = vmul.f32 %v1601, %v1517
    %v1621 = vadd.f32 %v1619, %v1620
    %1623 = vrot.lane.b32.xlu0 %v1621, 96
    %v1624 = vpop.permute.xlu0 %1623
    %1626 = vst.msk [vmem:[#allocation2 + $0x38] sm:$0xff] %vm785, %v1624
    %v1627 = vld [vmem:[#allocation2] sm:$0xff]
    %v1628 = vld [vmem:[#allocation2 + $0x8] sm:$0xff]
    %v1629 = vld [vmem:[#allocation2 + $0x10] sm:$0xff]
    %v1630 = vld [vmem:[#allocation2 + $0x18] sm:$0xff]
    %v1631 = vld [vmem:[#allocation2 + $0x20] sm:$0xff]
    %v1632 = vld [vmem:[#allocation2 + $0x28] sm:$0xff]
    %v1633 = vld [vmem:[#allocation2 + $0x30] sm:$0xff]
    %v1634 = vld [vmem:[#allocation2 + $0x38] sm:$0xff]
    %v1636 = vlaneseq
    %v1637 = vshrl.u32 %v1636, 7
    %v1638 = vsub.s32 0, %v1637
    %v1639 = vrot.slane %v329, %v1638
    %v1642 = vsel %vm785, %v1627, 0
    %v1645 = vsel %vm785, %v1628, 0
    %v1648 = vsel %vm785, %v1629, 0
    %v1651 = vsel %vm785, %v1630, 0
    %v1654 = vsel %vm785, %v1631, 0
    %v1657 = vsel %vm785, %v1632, 0
    %v1660 = vsel %vm785, %v1633, 0
    %v1663 = vsel %vm785, %v1634, 0
    %1665 = vmatprep.subr.mxu0 0.0
    %1666 = vmatpush1.msra.mxu0 0.0
    %1667 = vmatprep.subr.mxu0 0.0
    %1668 = vmatpush1.msra.mxu0 0.0
    %1669 = vmatprep.subr.mxu0 0.0
    %1670 = vmatpush1.msra.mxu0 0.0
    %1671 = vmatprep.subr.mxu0 0.0
    %1672 = vmatpush1.msra.mxu0 0.0
    %1673 = vmatprep.subr.mxu0 0.0
    %1674 = vmatpush1.msra.mxu0 0.0
    %1675 = vmatprep.subr.mxu0 0.0
    %1676 = vmatpush1.msra.mxu0 0.0
    %1677 = vmatprep.subr.mxu0 0.0
    %1678 = vmatpush1.msra.mxu0 0.0
    %1679 = vmatprep.subr.mxu0 0.0
    %1680 = vmatpush1.msra.mxu0 0.0
    %1681 = vmatprep.subr.mxu0 0.0
    %1682 = vmatpush1.msra.mxu0 0.0
    %1683 = vmatprep.subr.mxu0 0.0
    %1684 = vmatpush1.msra.mxu0 0.0
    %1685 = vmatprep.subr.mxu0 0.0
    %1686 = vmatpush1.msra.mxu0 0.0
    %1687 = vmatprep.subr.mxu0 0.0
    %1688 = vmatpush1.msra.mxu0 0.0
    %1689 = vmatprep.subr.mxu0 0.0
    %1690 = vmatpush1.msra.mxu0 %v324
    %1691 = vmatprep.subr.mxu0 0.0
    %1692 = vmatpush1.msra.mxu0 %v323
    %1693 = vmatprep.subr.mxu0 0.0
    %1694 = vmatpush1.msra.mxu0 %v322
    %1695 = vmatprep.subr.mxu0 0.0
    %1696 = vmatpush1.msra.mxu0 %v321
    %1697 = vmatprep.subr.mxu0 0.0
    %1698 = vmatpush2.msra.mxu0 0.0
    %1699 = vmatprep.subr.mxu0 0.0
    %1700 = vmatpush2.msra.mxu0 0.0
    %1701 = vmatprep.subr.mxu0 0.0
    %1702 = vmatpush2.msra.mxu0 0.0
    %1703 = vmatprep.subr.mxu0 0.0
    %1704 = vmatpush2.msra.mxu0 0.0
    %1705 = vmatprep.subr.mxu0 0.0
    %1706 = vmatpush2.msra.mxu0 0.0
    %1707 = vmatprep.subr.mxu0 0.0
    %1708 = vmatpush2.msra.mxu0 0.0
    %1709 = vmatprep.subr.mxu0 0.0
    %1710 = vmatpush2.msra.mxu0 0.0
    %1711 = vmatprep.subr.mxu0 0.0
    %1712 = vmatpush2.msra.mxu0 0.0
    %1713 = vmatprep.subr.mxu0 0.0
    %1714 = vmatpush2.msra.mxu0 0.0
    %1715 = vmatprep.subr.mxu0 0.0
    %1716 = vmatpush2.msra.mxu0 0.0
    %1717 = vmatprep.subr.mxu0 0.0
    %1718 = vmatpush2.msra.mxu0 0.0
    %1719 = vmatprep.subr.mxu0 0.0
    %1720 = vmatpush2.msra.mxu0 0.0
    %1721 = vmatprep.subr.mxu0 0.0
    %1722 = vmatpush2.msra.mxu0 0.0
    %1723 = vmatprep.subr.mxu0 0.0
    %1724 = vmatpush2.msra.mxu0 0.0
    %1725 = vmatprep.subr.mxu0 0.0
    %1726 = vmatpush2.msra.mxu0 0.0
    %1727 = vmatprep.subr.mxu0 0.0
    %1728 = vmatpush2.msra.mxu0 0.0
    %1729 = vmatprep.mubr.f32.mxu0 0.0
    %1730 = vmatmul.mubr.f32.gmra.mxu0 %v1642
    %v1731 = vpop.f32.mrf.mxu0
    %v1732 = vadd.f32 %v1639, %v1731
    %v1733 = vpop.f32.mrf.mxu0
    %1734 = vmatprep.mubr.f32.mxu0 0.0
    %1735 = vmatmul.mubr.f32.gmra.mxu0 %v1645
    %v1736 = vpop.f32.mrf.mxu0
    %v1737 = vadd.f32 %v1639, %v1736
    %v1738 = vpop.f32.mrf.mxu0
    %1739 = vmatprep.mubr.f32.mxu0 0.0
    %1740 = vmatmul.mubr.f32.gmra.mxu0 %v1648
    %v1741 = vpop.f32.mrf.mxu0
    %v1742 = vadd.f32 %v1639, %v1741
    %v1743 = vpop.f32.mrf.mxu0
    %1744 = vmatprep.mubr.f32.mxu0 0.0
    %1745 = vmatmul.mubr.f32.gmra.mxu0 %v1651
    %v1746 = vpop.f32.mrf.mxu0
    %v1747 = vadd.f32 %v1639, %v1746
    %v1748 = vpop.f32.mrf.mxu0
    %1749 = vmatprep.mubr.f32.mxu0 0.0
    %1750 = vmatmul.mubr.f32.gmra.mxu0 %v1654
    %v1751 = vpop.f32.mrf.mxu0
    %v1752 = vadd.f32 %v1639, %v1751
    %v1753 = vpop.f32.mrf.mxu0
    %1754 = vmatprep.mubr.f32.mxu0 0.0
    %1755 = vmatmul.mubr.f32.gmra.mxu0 %v1657
    %v1756 = vpop.f32.mrf.mxu0
    %v1757 = vadd.f32 %v1639, %v1756
    %v1758 = vpop.f32.mrf.mxu0
    %1759 = vmatprep.mubr.f32.mxu0 0.0
    %1760 = vmatmul.mubr.f32.gmra.mxu0 %v1660
    %v1761 = vpop.f32.mrf.mxu0
    %v1762 = vadd.f32 %v1639, %v1761
    %v1763 = vpop.f32.mrf.mxu0
    %1764 = vmatprep.mubr.f32.mxu0 0.0
    %1765 = vmatmul.mubr.f32.gmra.mxu0 %v1663
    %v1766 = vpop.f32.mrf.mxu0
    %v1767 = vadd.f32 %v1639, %v1766
    %v1768 = vpop.f32.mrf.mxu0
    %1769 = vdwg.mxu0
    %1770 = vmatprep.subr.mxu0 0.0
    %1771 = vmatpush1.msra.mxu0 0.0
    %1772 = vmatprep.subr.mxu0 0.0
    %1773 = vmatpush1.msra.mxu0 0.0
    %1774 = vmatprep.subr.mxu0 0.0
    %1775 = vmatpush1.msra.mxu0 0.0
    %1776 = vmatprep.subr.mxu0 0.0
    %1777 = vmatpush1.msra.mxu0 0.0
    %1778 = vmatprep.subr.mxu0 0.0
    %1779 = vmatpush1.msra.mxu0 0.0
    %1780 = vmatprep.subr.mxu0 0.0
    %1781 = vmatpush1.msra.mxu0 0.0
    %1782 = vmatprep.subr.mxu0 0.0
    %1783 = vmatpush1.msra.mxu0 0.0
    %1784 = vmatprep.subr.mxu0 0.0
    %1785 = vmatpush1.msra.mxu0 0.0
    %1786 = vmatprep.subr.mxu0 0.0
    %1787 = vmatpush1.msra.mxu0 0.0
    %1788 = vmatprep.subr.mxu0 0.0
    %1789 = vmatpush1.msra.mxu0 0.0
    %1790 = vmatprep.subr.mxu0 0.0
    %1791 = vmatpush1.msra.mxu0 0.0
    %1792 = vmatprep.subr.mxu0 0.0
    %1793 = vmatpush1.msra.mxu0 0.0
    %1794 = vmatprep.subr.mxu0 0.0
    %1795 = vmatpush1.msra.mxu0 %v328
    %1796 = vmatprep.subr.mxu0 0.0
    %1797 = vmatpush1.msra.mxu0 %v327
    %1798 = vmatprep.subr.mxu0 0.0
    %1799 = vmatpush1.msra.mxu0 %v326
    %1800 = vmatprep.subr.mxu0 0.0
    %1801 = vmatpush1.msra.mxu0 %v325
    %1802 = vmatprep.subr.mxu0 0.0
    %1803 = vmatpush2.msra.mxu0 0.0
    %1804 = vmatprep.subr.mxu0 0.0
    %1805 = vmatpush2.msra.mxu0 0.0
    %1806 = vmatprep.subr.mxu0 0.0
    %1807 = vmatpush2.msra.mxu0 0.0
    %1808 = vmatprep.subr.mxu0 0.0
    %1809 = vmatpush2.msra.mxu0 0.0
    %1810 = vmatprep.subr.mxu0 0.0
    %1811 = vmatpush2.msra.mxu0 0.0
    %1812 = vmatprep.subr.mxu0 0.0
    %1813 = vmatpush2.msra.mxu0 0.0
    %1814 = vmatprep.subr.mxu0 0.0
    %1815 = vmatpush2.msra.mxu0 0.0
    %1816 = vmatprep.subr.mxu0 0.0
    %1817 = vmatpush2.msra.mxu0 0.0
    %1818 = vmatprep.subr.mxu0 0.0
    %1819 = vmatpush2.msra.mxu0 0.0
    %1820 = vmatprep.subr.mxu0 0.0
    %1821 = vmatpush2.msra.mxu0 0.0
    %1822 = vmatprep.subr.mxu0 0.0
    %1823 = vmatpush2.msra.mxu0 0.0
    %1824 = vmatprep.subr.mxu0 0.0
    %1825 = vmatpush2.msra.mxu0 0.0
    %1826 = vmatprep.subr.mxu0 0.0
    %1827 = vmatpush2.msra.mxu0 0.0
    %1828 = vmatprep.subr.mxu0 0.0
    %1829 = vmatpush2.msra.mxu0 0.0
    %1830 = vmatprep.subr.mxu0 0.0
    %1831 = vmatpush2.msra.mxu0 0.0
    %1832 = vmatprep.subr.mxu0 0.0
    %1833 = vmatpush2.msra.mxu0 0.0
    %1834 = vmatprep.mubr.f32.mxu0 0.0
    %1835 = vmatmul.mubr.f32.gmra.mxu0 %v787
    %v1836 = vpop.f32.mrf.mxu0
    %v1837 = vadd.f32 0.0, %v1836
    %v1838 = vpop.f32.mrf.mxu0
    %1839 = vdwg.mxu0
    %v1840 = vadd.f32 %v1732, %v1837
    %v1841 = vxor.u32 %v1840, 2147483648
    %v1842 = vmul.f32 %v1841, 1.442695
    %v1843 = vpow.pop %v1842
    %v1844 = vadd.f32 %v1843, 1.0
    %v1845 = vrcp.pop %v1844
    %v1846 = vmul.f32 1.0, %v1845
    %v1848 = vlaneseq
    %v1849 = vshrl.u32 %v1848, 7
    %v1850 = vsub.s32 0, %v1849
    %v1851 = vrot.slane %v330, %v1850
    %1852 = vrot.lane.b32.xlu0 %v1851, 64
    %v1853 = vpop.permute.xlu0 %1852
    %v1855 = vadd.f32 %v1837, %v1853
    %1857 = vrot.lane.b32.xlu0 %v1855, 64
    %v1858 = vpop.permute.xlu0 %1857
    %v1860 = vmul.f32 %v1846, %v1858
    %1862 = vrot.lane.b32.xlu0 %v1860, 64
    %v1863 = vpop.permute.xlu0 %1862
    %v1865 = vadd.f32 %v1732, %v1863
    %v1866 = vtanh.pop %v1865
    %v1867 = vsub.f32 1.0, %v1846
    %1869 = vrot.lane.b32.xlu0 %v1866, 96
    %v1870 = vpop.permute.xlu0 %1869
    %v1872 = vmul.f32 %v1867, %v1870
    %v1873 = vmul.f32 %v1846, 0.0
    %v1874 = vadd.f32 %v1872, %v1873
    %1876 = vrot.lane.b32.xlu0 %v1874, 96
    %v1877 = vpop.permute.xlu0 %1876
    %v1878 = vsel %vm785, %v1877, 0
    %1880 = vmatprep.subr.mxu0 0.0
    %1881 = vmatpush1.msra.mxu0 0.0
    %1882 = vmatprep.subr.mxu0 0.0
    %1883 = vmatpush1.msra.mxu0 0.0
    %1884 = vmatprep.subr.mxu0 0.0
    %1885 = vmatpush1.msra.mxu0 0.0
    %1886 = vmatprep.subr.mxu0 0.0
    %1887 = vmatpush1.msra.mxu0 0.0
    %1888 = vmatprep.subr.mxu0 0.0
    %1889 = vmatpush1.msra.mxu0 0.0
    %1890 = vmatprep.subr.mxu0 0.0
    %1891 = vmatpush1.msra.mxu0 0.0
    %1892 = vmatprep.subr.mxu0 0.0
    %1893 = vmatpush1.msra.mxu0 0.0
    %1894 = vmatprep.subr.mxu0 0.0
    %1895 = vmatpush1.msra.mxu0 0.0
    %1896 = vmatprep.subr.mxu0 0.0
    %1897 = vmatpush1.msra.mxu0 0.0
    %1898 = vmatprep.subr.mxu0 0.0
    %1899 = vmatpush1.msra.mxu0 0.0
    %1900 = vmatprep.subr.mxu0 0.0
    %1901 = vmatpush1.msra.mxu0 0.0
    %1902 = vmatprep.subr.mxu0 0.0
    %1903 = vmatpush1.msra.mxu0 0.0
    %1904 = vmatprep.subr.mxu0 0.0
    %1905 = vmatpush1.msra.mxu0 %v328
    %1906 = vmatprep.subr.mxu0 0.0
    %1907 = vmatpush1.msra.mxu0 %v327
    %1908 = vmatprep.subr.mxu0 0.0
    %1909 = vmatpush1.msra.mxu0 %v326
    %1910 = vmatprep.subr.mxu0 0.0
    %1911 = vmatpush1.msra.mxu0 %v325
    %1912 = vmatprep.subr.mxu0 0.0
    %1913 = vmatpush2.msra.mxu0 0.0
    %1914 = vmatprep.subr.mxu0 0.0
    %1915 = vmatpush2.msra.mxu0 0.0
    %1916 = vmatprep.subr.mxu0 0.0
    %1917 = vmatpush2.msra.mxu0 0.0
    %1918 = vmatprep.subr.mxu0 0.0
    %1919 = vmatpush2.msra.mxu0 0.0
    %1920 = vmatprep.subr.mxu0 0.0
    %1921 = vmatpush2.msra.mxu0 0.0
    %1922 = vmatprep.subr.mxu0 0.0
    %1923 = vmatpush2.msra.mxu0 0.0
    %1924 = vmatprep.subr.mxu0 0.0
    %1925 = vmatpush2.msra.mxu0 0.0
    %1926 = vmatprep.subr.mxu0 0.0
    %1927 = vmatpush2.msra.mxu0 0.0
    %1928 = vmatprep.subr.mxu0 0.0
    %1929 = vmatpush2.msra.mxu0 0.0
    %1930 = vmatprep.subr.mxu0 0.0
    %1931 = vmatpush2.msra.mxu0 0.0
    %1932 = vmatprep.subr.mxu0 0.0
    %1933 = vmatpush2.msra.mxu0 0.0
    %1934 = vmatprep.subr.mxu0 0.0
    %1935 = vmatpush2.msra.mxu0 0.0
    %1936 = vmatprep.subr.mxu0 0.0
    %1937 = vmatpush2.msra.mxu0 0.0
    %1938 = vmatprep.subr.mxu0 0.0
    %1939 = vmatpush2.msra.mxu0 0.0
    %1940 = vmatprep.subr.mxu0 0.0
    %1941 = vmatpush2.msra.mxu0 0.0
    %1942 = vmatprep.subr.mxu0 0.0
    %1943 = vmatpush2.msra.mxu0 0.0
    %1944 = vmatprep.mubr.f32.mxu0 0.0
    %1945 = vmatmul.mubr.f32.gmra.mxu0 %v1878
    %v1946 = vpop.f32.mrf.mxu0
    %v1947 = vadd.f32 0.0, %v1946
    %v1948 = vpop.f32.mrf.mxu0
    %1949 = vdwg.mxu0
    %v1950 = vadd.f32 %v1737, %v1947
    %v1951 = vxor.u32 %v1950, 2147483648
    %v1952 = vmul.f32 %v1951, 1.442695
    %v1953 = vpow.pop %v1952
    %v1954 = vadd.f32 %v1953, 1.0
    %v1955 = vrcp.pop %v1954
    %v1956 = vmul.f32 1.0, %v1955
    %v1957 = vadd.f32 %v1947, %v1853
    %1959 = vrot.lane.b32.xlu0 %v1957, 64
    %v1960 = vpop.permute.xlu0 %1959
    %v1962 = vmul.f32 %v1956, %v1960
    %1964 = vrot.lane.b32.xlu0 %v1962, 64
    %v1965 = vpop.permute.xlu0 %1964
    %v1967 = vadd.f32 %v1737, %v1965
    %v1968 = vtanh.pop %v1967
    %v1969 = vsub.f32 1.0, %v1956
    %1971 = vrot.lane.b32.xlu0 %v1968, 96
    %v1972 = vpop.permute.xlu0 %1971
    %v1974 = vmul.f32 %v1969, %v1972
    %v1975 = vmul.f32 %v1956, %v1874
    %v1976 = vadd.f32 %v1974, %v1975
    %1978 = vrot.lane.b32.xlu0 %v1976, 96
    %v1979 = vpop.permute.xlu0 %1978
    %v1980 = vsel %vm785, %v1979, 0
    %1982 = vmatprep.subr.mxu0 0.0
    %1983 = vmatpush1.msra.mxu0 0.0
    %1984 = vmatprep.subr.mxu0 0.0
    %1985 = vmatpush1.msra.mxu0 0.0
    %1986 = vmatprep.subr.mxu0 0.0
    %1987 = vmatpush1.msra.mxu0 0.0
    %1988 = vmatprep.subr.mxu0 0.0
    %1989 = vmatpush1.msra.mxu0 0.0
    %1990 = vmatprep.subr.mxu0 0.0
    %1991 = vmatpush1.msra.mxu0 0.0
    %1992 = vmatprep.subr.mxu0 0.0
    %1993 = vmatpush1.msra.mxu0 0.0
    %1994 = vmatprep.subr.mxu0 0.0
    %1995 = vmatpush1.msra.mxu0 0.0
    %1996 = vmatprep.subr.mxu0 0.0
    %1997 = vmatpush1.msra.mxu0 0.0
    %1998 = vmatprep.subr.mxu0 0.0
    %1999 = vmatpush1.msra.mxu0 0.0
    %2000 = vmatprep.subr.mxu0 0.0
    %2001 = vmatpush1.msra.mxu0 0.0
    %2002 = vmatprep.subr.mxu0 0.0
    %2003 = vmatpush1.msra.mxu0 0.0
    %2004 = vmatprep.subr.mxu0 0.0
    %2005 = vmatpush1.msra.mxu0 0.0
    %2006 = vmatprep.subr.mxu0 0.0
    %2007 = vmatpush1.msra.mxu0 %v328
    %2008 = vmatprep.subr.mxu0 0.0
    %2009 = vmatpush1.msra.mxu0 %v327
    %2010 = vmatprep.subr.mxu0 0.0
    %2011 = vmatpush1.msra.mxu0 %v326
    %2012 = vmatprep.subr.mxu0 0.0
    %2013 = vmatpush1.msra.mxu0 %v325
    %2014 = vmatprep.subr.mxu0 0.0
    %2015 = vmatpush2.msra.mxu0 0.0
    %2016 = vmatprep.subr.mxu0 0.0
    %2017 = vmatpush2.msra.mxu0 0.0
    %2018 = vmatprep.subr.mxu0 0.0
    %2019 = vmatpush2.msra.mxu0 0.0
    %2020 = vmatprep.subr.mxu0 0.0
    %2021 = vmatpush2.msra.mxu0 0.0
    %2022 = vmatprep.subr.mxu0 0.0
    %2023 = vmatpush2.msra.mxu0 0.0
    %2024 = vmatprep.subr.mxu0 0.0
    %2025 = vmatpush2.msra.mxu0 0.0
    %2026 = vmatprep.subr.mxu0 0.0
    %2027 = vmatpush2.msra.mxu0 0.0
    %2028 = vmatprep.subr.mxu0 0.0
    %2029 = vmatpush2.msra.mxu0 0.0
    %2030 = vmatprep.subr.mxu0 0.0
    %2031 = vmatpush2.msra.mxu0 0.0
    %2032 = vmatprep.subr.mxu0 0.0
    %2033 = vmatpush2.msra.mxu0 0.0
    %2034 = vmatprep.subr.mxu0 0.0
    %2035 = vmatpush2.msra.mxu0 0.0
    %2036 = vmatprep.subr.mxu0 0.0
    %2037 = vmatpush2.msra.mxu0 0.0
    %2038 = vmatprep.subr.mxu0 0.0
    %2039 = vmatpush2.msra.mxu0 0.0
    %2040 = vmatprep.subr.mxu0 0.0
    %2041 = vmatpush2.msra.mxu0 0.0
    %2042 = vmatprep.subr.mxu0 0.0
    %2043 = vmatpush2.msra.mxu0 0.0
    %2044 = vmatprep.subr.mxu0 0.0
    %2045 = vmatpush2.msra.mxu0 0.0
    %2046 = vmatprep.mubr.f32.mxu0 0.0
    %2047 = vmatmul.mubr.f32.gmra.mxu0 %v1980
    %v2048 = vpop.f32.mrf.mxu0
    %v2049 = vadd.f32 0.0, %v2048
    %v2050 = vpop.f32.mrf.mxu0
    %2051 = vdwg.mxu0
    %v2052 = vadd.f32 %v1742, %v2049
    %v2053 = vxor.u32 %v2052, 2147483648
    %v2054 = vmul.f32 %v2053, 1.442695
    %v2055 = vpow.pop %v2054
    %v2056 = vadd.f32 %v2055, 1.0
    %v2057 = vrcp.pop %v2056
    %v2058 = vmul.f32 1.0, %v2057
    %v2059 = vadd.f32 %v2049, %v1853
    %2061 = vrot.lane.b32.xlu0 %v2059, 64
    %v2062 = vpop.permute.xlu0 %2061
    %v2064 = vmul.f32 %v2058, %v2062
    %2066 = vrot.lane.b32.xlu0 %v2064, 64
    %v2067 = vpop.permute.xlu0 %2066
    %v2069 = vadd.f32 %v1742, %v2067
    %v2070 = vtanh.pop %v2069
    %v2071 = vsub.f32 1.0, %v2058
    %2073 = vrot.lane.b32.xlu0 %v2070, 96
    %v2074 = vpop.permute.xlu0 %2073
    %v2076 = vmul.f32 %v2071, %v2074
    %v2077 = vmul.f32 %v2058, %v1976
    %v2078 = vadd.f32 %v2076, %v2077
    %2080 = vrot.lane.b32.xlu0 %v2078, 96
    %v2081 = vpop.permute.xlu0 %2080
    %v2082 = vsel %vm785, %v2081, 0
    %2084 = vmatprep.subr.mxu0 0.0
    %2085 = vmatpush1.msra.mxu0 0.0
    %2086 = vmatprep.subr.mxu0 0.0
    %2087 = vmatpush1.msra.mxu0 0.0
    %2088 = vmatprep.subr.mxu0 0.0
    %2089 = vmatpush1.msra.mxu0 0.0
    %2090 = vmatprep.subr.mxu0 0.0
    %2091 = vmatpush1.msra.mxu0 0.0
    %2092 = vmatprep.subr.mxu0 0.0
    %2093 = vmatpush1.msra.mxu0 0.0
    %2094 = vmatprep.subr.mxu0 0.0
    %2095 = vmatpush1.msra.mxu0 0.0
    %2096 = vmatprep.subr.mxu0 0.0
    %2097 = vmatpush1.msra.mxu0 0.0
    %2098 = vmatprep.subr.mxu0 0.0
    %2099 = vmatpush1.msra.mxu0 0.0
    %2100 = vmatprep.subr.mxu0 0.0
    %2101 = vmatpush1.msra.mxu0 0.0
    %2102 = vmatprep.subr.mxu0 0.0
    %2103 = vmatpush1.msra.mxu0 0.0
    %2104 = vmatprep.subr.mxu0 0.0
    %2105 = vmatpush1.msra.mxu0 0.0
    %2106 = vmatprep.subr.mxu0 0.0
    %2107 = vmatpush1.msra.mxu0 0.0
    %2108 = vmatprep.subr.mxu0 0.0
    %2109 = vmatpush1.msra.mxu0 %v328
    %2110 = vmatprep.subr.mxu0 0.0
    %2111 = vmatpush1.msra.mxu0 %v327
    %2112 = vmatprep.subr.mxu0 0.0
    %2113 = vmatpush1.msra.mxu0 %v326
    %2114 = vmatprep.subr.mxu0 0.0
    %2115 = vmatpush1.msra.mxu0 %v325
    %2116 = vmatprep.subr.mxu0 0.0
    %2117 = vmatpush2.msra.mxu0 0.0
    %2118 = vmatprep.subr.mxu0 0.0
    %2119 = vmatpush2.msra.mxu0 0.0
    %2120 = vmatprep.subr.mxu0 0.0
    %2121 = vmatpush2.msra.mxu0 0.0
    %2122 = vmatprep.subr.mxu0 0.0
    %2123 = vmatpush2.msra.mxu0 0.0
    %2124 = vmatprep.subr.mxu0 0.0
    %2125 = vmatpush2.msra.mxu0 0.0
    %2126 = vmatprep.subr.mxu0 0.0
    %2127 = vmatpush2.msra.mxu0 0.0
    %2128 = vmatprep.subr.mxu0 0.0
    %2129 = vmatpush2.msra.mxu0 0.0
    %2130 = vmatprep.subr.mxu0 0.0
    %2131 = vmatpush2.msra.mxu0 0.0
    %2132 = vmatprep.subr.mxu0 0.0
    %2133 = vmatpush2.msra.mxu0 0.0
    %2134 = vmatprep.subr.mxu0 0.0
    %2135 = vmatpush2.msra.mxu0 0.0
    %2136 = vmatprep.subr.mxu0 0.0
    %2137 = vmatpush2.msra.mxu0 0.0
    %2138 = vmatprep.subr.mxu0 0.0
    %2139 = vmatpush2.msra.mxu0 0.0
    %2140 = vmatprep.subr.mxu0 0.0
    %2141 = vmatpush2.msra.mxu0 0.0
    %2142 = vmatprep.subr.mxu0 0.0
    %2143 = vmatpush2.msra.mxu0 0.0
    %2144 = vmatprep.subr.mxu0 0.0
    %2145 = vmatpush2.msra.mxu0 0.0
    %2146 = vmatprep.subr.mxu0 0.0
    %2147 = vmatpush2.msra.mxu0 0.0
    %2148 = vmatprep.mubr.f32.mxu0 0.0
    %2149 = vmatmul.mubr.f32.gmra.mxu0 %v2082
    %v2150 = vpop.f32.mrf.mxu0
    %v2151 = vadd.f32 0.0, %v2150
    %v2152 = vpop.f32.mrf.mxu0
    %2153 = vdwg.mxu0
    %v2154 = vadd.f32 %v1747, %v2151
    %v2155 = vxor.u32 %v2154, 2147483648
    %v2156 = vmul.f32 %v2155, 1.442695
    %v2157 = vpow.pop %v2156
    %v2158 = vadd.f32 %v2157, 1.0
    %v2159 = vrcp.pop %v2158
    %v2160 = vmul.f32 1.0, %v2159
    %v2161 = vadd.f32 %v2151, %v1853
    %2163 = vrot.lane.b32.xlu0 %v2161, 64
    %v2164 = vpop.permute.xlu0 %2163
    %v2166 = vmul.f32 %v2160, %v2164
    %2168 = vrot.lane.b32.xlu0 %v2166, 64
    %v2169 = vpop.permute.xlu0 %2168
    %v2171 = vadd.f32 %v1747, %v2169
    %v2172 = vtanh.pop %v2171
    %v2173 = vsub.f32 1.0, %v2160
    %2175 = vrot.lane.b32.xlu0 %v2172, 96
    %v2176 = vpop.permute.xlu0 %2175
    %v2178 = vmul.f32 %v2173, %v2176
    %v2179 = vmul.f32 %v2160, %v2078
    %v2180 = vadd.f32 %v2178, %v2179
    %2182 = vrot.lane.b32.xlu0 %v2180, 96
    %v2183 = vpop.permute.xlu0 %2182
    %v2184 = vsel %vm785, %v2183, 0
    %2186 = vmatprep.subr.mxu0 0.0
    %2187 = vmatpush1.msra.mxu0 0.0
    %2188 = vmatprep.subr.mxu0 0.0
    %2189 = vmatpush1.msra.mxu0 0.0
    %2190 = vmatprep.subr.mxu0 0.0
    %2191 = vmatpush1.msra.mxu0 0.0
    %2192 = vmatprep.subr.mxu0 0.0
    %2193 = vmatpush1.msra.mxu0 0.0
    %2194 = vmatprep.subr.mxu0 0.0
    %2195 = vmatpush1.msra.mxu0 0.0
    %2196 = vmatprep.subr.mxu0 0.0
    %2197 = vmatpush1.msra.mxu0 0.0
    %2198 = vmatprep.subr.mxu0 0.0
    %2199 = vmatpush1.msra.mxu0 0.0
    %2200 = vmatprep.subr.mxu0 0.0
    %2201 = vmatpush1.msra.mxu0 0.0
    %2202 = vmatprep.subr.mxu0 0.0
    %2203 = vmatpush1.msra.mxu0 0.0
    %2204 = vmatprep.subr.mxu0 0.0
    %2205 = vmatpush1.msra.mxu0 0.0
    %2206 = vmatprep.subr.mxu0 0.0
    %2207 = vmatpush1.msra.mxu0 0.0
    %2208 = vmatprep.subr.mxu0 0.0
    %2209 = vmatpush1.msra.mxu0 0.0
    %2210 = vmatprep.subr.mxu0 0.0
    %2211 = vmatpush1.msra.mxu0 %v328
    %2212 = vmatprep.subr.mxu0 0.0
    %2213 = vmatpush1.msra.mxu0 %v327
    %2214 = vmatprep.subr.mxu0 0.0
    %2215 = vmatpush1.msra.mxu0 %v326
    %2216 = vmatprep.subr.mxu0 0.0
    %2217 = vmatpush1.msra.mxu0 %v325
    %2218 = vmatprep.subr.mxu0 0.0
    %2219 = vmatpush2.msra.mxu0 0.0
    %2220 = vmatprep.subr.mxu0 0.0
    %2221 = vmatpush2.msra.mxu0 0.0
    %2222 = vmatprep.subr.mxu0 0.0
    %2223 = vmatpush2.msra.mxu0 0.0
    %2224 = vmatprep.subr.mxu0 0.0
    %2225 = vmatpush2.msra.mxu0 0.0
    %2226 = vmatprep.subr.mxu0 0.0
    %2227 = vmatpush2.msra.mxu0 0.0
    %2228 = vmatprep.subr.mxu0 0.0
    %2229 = vmatpush2.msra.mxu0 0.0
    %2230 = vmatprep.subr.mxu0 0.0
    %2231 = vmatpush2.msra.mxu0 0.0
    %2232 = vmatprep.subr.mxu0 0.0
    %2233 = vmatpush2.msra.mxu0 0.0
    %2234 = vmatprep.subr.mxu0 0.0
    %2235 = vmatpush2.msra.mxu0 0.0
    %2236 = vmatprep.subr.mxu0 0.0
    %2237 = vmatpush2.msra.mxu0 0.0
    %2238 = vmatprep.subr.mxu0 0.0
    %2239 = vmatpush2.msra.mxu0 0.0
    %2240 = vmatprep.subr.mxu0 0.0
    %2241 = vmatpush2.msra.mxu0 0.0
    %2242 = vmatprep.subr.mxu0 0.0
    %2243 = vmatpush2.msra.mxu0 0.0
    %2244 = vmatprep.subr.mxu0 0.0
    %2245 = vmatpush2.msra.mxu0 0.0
    %2246 = vmatprep.subr.mxu0 0.0
    %2247 = vmatpush2.msra.mxu0 0.0
    %2248 = vmatprep.subr.mxu0 0.0
    %2249 = vmatpush2.msra.mxu0 0.0
    %2250 = vmatprep.mubr.f32.mxu0 0.0
    %2251 = vmatmul.mubr.f32.gmra.mxu0 %v2184
    %v2252 = vpop.f32.mrf.mxu0
    %v2253 = vadd.f32 0.0, %v2252
    %v2254 = vpop.f32.mrf.mxu0
    %2255 = vdwg.mxu0
    %v2256 = vadd.f32 %v1752, %v2253
    %v2257 = vxor.u32 %v2256, 2147483648
    %v2258 = vmul.f32 %v2257, 1.442695
    %v2259 = vpow.pop %v2258
    %v2260 = vadd.f32 %v2259, 1.0
    %v2261 = vrcp.pop %v2260
    %v2262 = vmul.f32 1.0, %v2261
    %v2263 = vadd.f32 %v2253, %v1853
    %2265 = vrot.lane.b32.xlu0 %v2263, 64
    %v2266 = vpop.permute.xlu0 %2265
    %v2268 = vmul.f32 %v2262, %v2266
    %2270 = vrot.lane.b32.xlu0 %v2268, 64
    %v2271 = vpop.permute.xlu0 %2270
    %v2273 = vadd.f32 %v1752, %v2271
    %v2274 = vtanh.pop %v2273
    %v2275 = vsub.f32 1.0, %v2262
    %2277 = vrot.lane.b32.xlu0 %v2274, 96
    %v2278 = vpop.permute.xlu0 %2277
    %v2280 = vmul.f32 %v2275, %v2278
    %v2281 = vmul.f32 %v2262, %v2180
    %v2282 = vadd.f32 %v2280, %v2281
    %2284 = vrot.lane.b32.xlu0 %v2282, 96
    %v2285 = vpop.permute.xlu0 %2284
    %v2286 = vsel %vm785, %v2285, 0
    %2288 = vmatprep.subr.mxu0 0.0
    %2289 = vmatpush1.msra.mxu0 0.0
    %2290 = vmatprep.subr.mxu0 0.0
    %2291 = vmatpush1.msra.mxu0 0.0
    %2292 = vmatprep.subr.mxu0 0.0
    %2293 = vmatpush1.msra.mxu0 0.0
    %2294 = vmatprep.subr.mxu0 0.0
    %2295 = vmatpush1.msra.mxu0 0.0
    %2296 = vmatprep.subr.mxu0 0.0
    %2297 = vmatpush1.msra.mxu0 0.0
    %2298 = vmatprep.subr.mxu0 0.0
    %2299 = vmatpush1.msra.mxu0 0.0
    %2300 = vmatprep.subr.mxu0 0.0
    %2301 = vmatpush1.msra.mxu0 0.0
    %2302 = vmatprep.subr.mxu0 0.0
    %2303 = vmatpush1.msra.mxu0 0.0
    %2304 = vmatprep.subr.mxu0 0.0
    %2305 = vmatpush1.msra.mxu0 0.0
    %2306 = vmatprep.subr.mxu0 0.0
    %2307 = vmatpush1.msra.mxu0 0.0
    %2308 = vmatprep.subr.mxu0 0.0
    %2309 = vmatpush1.msra.mxu0 0.0
    %2310 = vmatprep.subr.mxu0 0.0
    %2311 = vmatpush1.msra.mxu0 0.0
    %2312 = vmatprep.subr.mxu0 0.0
    %2313 = vmatpush1.msra.mxu0 %v328
    %2314 = vmatprep.subr.mxu0 0.0
    %2315 = vmatpush1.msra.mxu0 %v327
    %2316 = vmatprep.subr.mxu0 0.0
    %2317 = vmatpush1.msra.mxu0 %v326
    %2318 = vmatprep.subr.mxu0 0.0
    %2319 = vmatpush1.msra.mxu0 %v325
    %2320 = vmatprep.subr.mxu0 0.0
    %2321 = vmatpush2.msra.mxu0 0.0
    %2322 = vmatprep.subr.mxu0 0.0
    %2323 = vmatpush2.msra.mxu0 0.0
    %2324 = vmatprep.subr.mxu0 0.0
    %2325 = vmatpush2.msra.mxu0 0.0
    %2326 = vmatprep.subr.mxu0 0.0
    %2327 = vmatpush2.msra.mxu0 0.0
    %2328 = vmatprep.subr.mxu0 0.0
    %2329 = vmatpush2.msra.mxu0 0.0
    %2330 = vmatprep.subr.mxu0 0.0
    %2331 = vmatpush2.msra.mxu0 0.0
    %2332 = vmatprep.subr.mxu0 0.0
    %2333 = vmatpush2.msra.mxu0 0.0
    %2334 = vmatprep.subr.mxu0 0.0
    %2335 = vmatpush2.msra.mxu0 0.0
    %2336 = vmatprep.subr.mxu0 0.0
    %2337 = vmatpush2.msra.mxu0 0.0
    %2338 = vmatprep.subr.mxu0 0.0
    %2339 = vmatpush2.msra.mxu0 0.0
    %2340 = vmatprep.subr.mxu0 0.0
    %2341 = vmatpush2.msra.mxu0 0.0
    %2342 = vmatprep.subr.mxu0 0.0
    %2343 = vmatpush2.msra.mxu0 0.0
    %2344 = vmatprep.subr.mxu0 0.0
    %2345 = vmatpush2.msra.mxu0 0.0
    %2346 = vmatprep.subr.mxu0 0.0
    %2347 = vmatpush2.msra.mxu0 0.0
    %2348 = vmatprep.subr.mxu0 0.0
    %2349 = vmatpush2.msra.mxu0 0.0
    %2350 = vmatprep.subr.mxu0 0.0
    %2351 = vmatpush2.msra.mxu0 0.0
    %2352 = vmatprep.mubr.f32.mxu0 0.0
    %2353 = vmatmul.mubr.f32.gmra.mxu0 %v2286
    %v2354 = vpop.f32.mrf.mxu0
    %v2355 = vadd.f32 0.0, %v2354
    %v2356 = vpop.f32.mrf.mxu0
    %2357 = vdwg.mxu0
    %v2358 = vadd.f32 %v1757, %v2355
    %v2359 = vxor.u32 %v2358, 2147483648
    %v2360 = vmul.f32 %v2359, 1.442695
    %v2361 = vpow.pop %v2360
    %v2362 = vadd.f32 %v2361, 1.0
    %v2363 = vrcp.pop %v2362
    %v2364 = vmul.f32 1.0, %v2363
    %v2365 = vadd.f32 %v2355, %v1853
    %2367 = vrot.lane.b32.xlu0 %v2365, 64
    %v2368 = vpop.permute.xlu0 %2367
    %v2370 = vmul.f32 %v2364, %v2368
    %2372 = vrot.lane.b32.xlu0 %v2370, 64
    %v2373 = vpop.permute.xlu0 %2372
    %v2375 = vadd.f32 %v1757, %v2373
    %v2376 = vtanh.pop %v2375
    %v2377 = vsub.f32 1.0, %v2364
    %2379 = vrot.lane.b32.xlu0 %v2376, 96
    %v2380 = vpop.permute.xlu0 %2379
    %v2382 = vmul.f32 %v2377, %v2380
    %v2383 = vmul.f32 %v2364, %v2282
    %v2384 = vadd.f32 %v2382, %v2383
    %2386 = vrot.lane.b32.xlu0 %v2384, 96
    %v2387 = vpop.permute.xlu0 %2386
    %v2388 = vsel %vm785, %v2387, 0
    %2390 = vmatprep.subr.mxu0 0.0
    %2391 = vmatpush1.msra.mxu0 0.0
    %2392 = vmatprep.subr.mxu0 0.0
    %2393 = vmatpush1.msra.mxu0 0.0
    %2394 = vmatprep.subr.mxu0 0.0
    %2395 = vmatpush1.msra.mxu0 0.0
    %2396 = vmatprep.subr.mxu0 0.0
    %2397 = vmatpush1.msra.mxu0 0.0
    %2398 = vmatprep.subr.mxu0 0.0
    %2399 = vmatpush1.msra.mxu0 0.0
    %2400 = vmatprep.subr.mxu0 0.0
    %2401 = vmatpush1.msra.mxu0 0.0
    %2402 = vmatprep.subr.mxu0 0.0
    %2403 = vmatpush1.msra.mxu0 0.0
    %2404 = vmatprep.subr.mxu0 0.0
    %2405 = vmatpush1.msra.mxu0 0.0
    %2406 = vmatprep.subr.mxu0 0.0
    %2407 = vmatpush1.msra.mxu0 0.0
    %2408 = vmatprep.subr.mxu0 0.0
    %2409 = vmatpush1.msra.mxu0 0.0
    %2410 = vmatprep.subr.mxu0 0.0
    %2411 = vmatpush1.msra.mxu0 0.0
    %2412 = vmatprep.subr.mxu0 0.0
    %2413 = vmatpush1.msra.mxu0 0.0
    %2414 = vmatprep.subr.mxu0 0.0
    %2415 = vmatpush1.msra.mxu0 %v328
    %2416 = vmatprep.subr.mxu0 0.0
    %2417 = vmatpush1.msra.mxu0 %v327
    %2418 = vmatprep.subr.mxu0 0.0
    %2419 = vmatpush1.msra.mxu0 %v326
    %2420 = vmatprep.subr.mxu0 0.0
    %2421 = vmatpush1.msra.mxu0 %v325
    %2422 = vmatprep.subr.mxu0 0.0
    %2423 = vmatpush2.msra.mxu0 0.0
    %2424 = vmatprep.subr.mxu0 0.0
    %2425 = vmatpush2.msra.mxu0 0.0
    %2426 = vmatprep.subr.mxu0 0.0
    %2427 = vmatpush2.msra.mxu0 0.0
    %2428 = vmatprep.subr.mxu0 0.0
    %2429 = vmatpush2.msra.mxu0 0.0
    %2430 = vmatprep.subr.mxu0 0.0
    %2431 = vmatpush2.msra.mxu0 0.0
    %2432 = vmatprep.subr.mxu0 0.0
    %2433 = vmatpush2.msra.mxu0 0.0
    %2434 = vmatprep.subr.mxu0 0.0
    %2435 = vmatpush2.msra.mxu0 0.0
    %2436 = vmatprep.subr.mxu0 0.0
    %2437 = vmatpush2.msra.mxu0 0.0
    %2438 = vmatprep.subr.mxu0 0.0
    %2439 = vmatpush2.msra.mxu0 0.0
    %2440 = vmatprep.subr.mxu0 0.0
    %2441 = vmatpush2.msra.mxu0 0.0
    %2442 = vmatprep.subr.mxu0 0.0
    %2443 = vmatpush2.msra.mxu0 0.0
    %2444 = vmatprep.subr.mxu0 0.0
    %2445 = vmatpush2.msra.mxu0 0.0
    %2446 = vmatprep.subr.mxu0 0.0
    %2447 = vmatpush2.msra.mxu0 0.0
    %2448 = vmatprep.subr.mxu0 0.0
    %2449 = vmatpush2.msra.mxu0 0.0
    %2450 = vmatprep.subr.mxu0 0.0
    %2451 = vmatpush2.msra.mxu0 0.0
    %2452 = vmatprep.subr.mxu0 0.0
    %2453 = vmatpush2.msra.mxu0 0.0
    %2454 = vmatprep.mubr.f32.mxu0 0.0
    %2455 = vmatmul.mubr.f32.gmra.mxu0 %v2388
    %v2456 = vpop.f32.mrf.mxu0
    %v2457 = vadd.f32 0.0, %v2456
    %v2458 = vpop.f32.mrf.mxu0
    %2459 = vdwg.mxu0
    %v2460 = vadd.f32 %v1762, %v2457
    %v2461 = vxor.u32 %v2460, 2147483648
    %v2462 = vmul.f32 %v2461, 1.442695
    %v2463 = vpow.pop %v2462
    %v2464 = vadd.f32 %v2463, 1.0
    %v2465 = vrcp.pop %v2464
    %v2466 = vmul.f32 1.0, %v2465
    %v2467 = vadd.f32 %v2457, %v1853
    %2469 = vrot.lane.b32.xlu0 %v2467, 64
    %v2470 = vpop.permute.xlu0 %2469
    %v2472 = vmul.f32 %v2466, %v2470
    %2474 = vrot.lane.b32.xlu0 %v2472, 64
    %v2475 = vpop.permute.xlu0 %2474
    %v2477 = vadd.f32 %v1762, %v2475
    %v2478 = vtanh.pop %v2477
    %v2479 = vsub.f32 1.0, %v2466
    %2481 = vrot.lane.b32.xlu0 %v2478, 96
    %v2482 = vpop.permute.xlu0 %2481
    %v2484 = vmul.f32 %v2479, %v2482
    %v2485 = vmul.f32 %v2466, %v2384
    %v2486 = vadd.f32 %v2484, %v2485
    %2488 = vrot.lane.b32.xlu0 %v2486, 96
    %v2489 = vpop.permute.xlu0 %2488
    %v2490 = vsel %vm785, %v2489, 0
    %2492 = vmatprep.subr.mxu0 0.0
    %2493 = vmatpush1.msra.mxu0 0.0
    %2494 = vmatprep.subr.mxu0 0.0
    %2495 = vmatpush1.msra.mxu0 0.0
    %2496 = vmatprep.subr.mxu0 0.0
    %2497 = vmatpush1.msra.mxu0 0.0
    %2498 = vmatprep.subr.mxu0 0.0
    %2499 = vmatpush1.msra.mxu0 0.0
    %2500 = vmatprep.subr.mxu0 0.0
    %2501 = vmatpush1.msra.mxu0 0.0
    %2502 = vmatprep.subr.mxu0 0.0
    %2503 = vmatpush1.msra.mxu0 0.0
    %2504 = vmatprep.subr.mxu0 0.0
    %2505 = vmatpush1.msra.mxu0 0.0
    %2506 = vmatprep.subr.mxu0 0.0
    %2507 = vmatpush1.msra.mxu0 0.0
    %2508 = vmatprep.subr.mxu0 0.0
    %2509 = vmatpush1.msra.mxu0 0.0
    %2510 = vmatprep.subr.mxu0 0.0
    %2511 = vmatpush1.msra.mxu0 0.0
    %2512 = vmatprep.subr.mxu0 0.0
    %2513 = vmatpush1.msra.mxu0 0.0
    %2514 = vmatprep.subr.mxu0 0.0
    %2515 = vmatpush1.msra.mxu0 0.0
    %2516 = vmatprep.subr.mxu0 0.0
    %2517 = vmatpush1.msra.mxu0 %v328
    %2518 = vmatprep.subr.mxu0 0.0
    %2519 = vmatpush1.msra.mxu0 %v327
    %2520 = vmatprep.subr.mxu0 0.0
    %2521 = vmatpush1.msra.mxu0 %v326
    %2522 = vmatprep.subr.mxu0 0.0
    %2523 = vmatpush1.msra.mxu0 %v325
    %2524 = vmatprep.subr.mxu0 0.0
    %2525 = vmatpush2.msra.mxu0 0.0
    %2526 = vmatprep.subr.mxu0 0.0
    %2527 = vmatpush2.msra.mxu0 0.0
    %2528 = vmatprep.subr.mxu0 0.0
    %2529 = vmatpush2.msra.mxu0 0.0
    %2530 = vmatprep.subr.mxu0 0.0
    %2531 = vmatpush2.msra.mxu0 0.0
    %2532 = vmatprep.subr.mxu0 0.0
    %2533 = vmatpush2.msra.mxu0 0.0
    %2534 = vmatprep.subr.mxu0 0.0
    %2535 = vmatpush2.msra.mxu0 0.0
    %2536 = vmatprep.subr.mxu0 0.0
    %2537 = vmatpush2.msra.mxu0 0.0
    %2538 = vmatprep.subr.mxu0 0.0
    %2539 = vmatpush2.msra.mxu0 0.0
    %2540 = vmatprep.subr.mxu0 0.0
    %2541 = vmatpush2.msra.mxu0 0.0
    %2542 = vmatprep.subr.mxu0 0.0
    %2543 = vmatpush2.msra.mxu0 0.0
    %2544 = vmatprep.subr.mxu0 0.0
    %2545 = vmatpush2.msra.mxu0 0.0
    %2546 = vmatprep.subr.mxu0 0.0
    %2547 = vmatpush2.msra.mxu0 0.0
    %2548 = vmatprep.subr.mxu0 0.0
    %2549 = vmatpush2.msra.mxu0 0.0
    %2550 = vmatprep.subr.mxu0 0.0
    %2551 = vmatpush2.msra.mxu0 0.0
    %2552 = vmatprep.subr.mxu0 0.0
    %2553 = vmatpush2.msra.mxu0 0.0
    %2554 = vmatprep.subr.mxu0 0.0
    %2555 = vmatpush2.msra.mxu0 0.0
    %2556 = vmatprep.mubr.f32.mxu0 0.0
    %2557 = vmatmul.mubr.f32.gmra.mxu0 %v2490
    %v2558 = vpop.f32.mrf.mxu0
    %v2559 = vadd.f32 0.0, %v2558
    %v2560 = vpop.f32.mrf.mxu0
    %2561 = vdwg.mxu0
    %v2562 = vadd.f32 %v1767, %v2559
    %v2563 = vxor.u32 %v2562, 2147483648
    %v2564 = vmul.f32 %v2563, 1.442695
    %v2565 = vpow.pop %v2564
    %v2566 = vadd.f32 %v2565, 1.0
    %v2567 = vrcp.pop %v2566
    %v2568 = vmul.f32 1.0, %v2567
    %v2569 = vadd.f32 %v2559, %v1853
    %2571 = vrot.lane.b32.xlu0 %v2569, 64
    %v2572 = vpop.permute.xlu0 %2571
    %v2574 = vmul.f32 %v2568, %v2572
    %2576 = vrot.lane.b32.xlu0 %v2574, 64
    %v2577 = vpop.permute.xlu0 %2576
    %v2579 = vadd.f32 %v1767, %v2577
    %v2580 = vtanh.pop %v2579
    %v2581 = vsub.f32 1.0, %v2568
    %2583 = vrot.lane.b32.xlu0 %v2580, 96
    %v2584 = vpop.permute.xlu0 %2583
    %v2586 = vmul.f32 %v2581, %v2584
    %v2587 = vmul.f32 %v2568, %v2486
    %v2588 = vadd.f32 %v2586, %v2587
    %v2589 = vld [vmem:[%s2] sm:$0xff]
    %v2590 = vld [vmem:[%s2 + $0x8] sm:$0xff]
    %v2591 = vld [vmem:[%s2 + $0x10] sm:$0xff]
    %v2592 = vld [vmem:[%s2 + $0x18] sm:$0xff]
    %v2593 = vld [vmem:[%s2 + $0x20] sm:$0xff]
    %v2595 = vlaneseq
    %v2596 = vshrl.u32 %v2595, 7
    %v2597 = vsub.s32 0, %v2596
    %v2598 = vrot.slane %v351, %v2597
    %v2599 = vlaneseq
    %v2600 = vshrl.u32 %v2599, 7
    %v2601 = vsub.s32 1, %v2600
    %v2602 = vrot.slane %v351, %v2601
    %vm2605 = vcmask 64512
    %v2607 = vsel %vm2605, %v2589, 0
    %v2610 = vsel %vm2605, %v2590, 0
    %v2613 = vsel %vm2605, %v2591, 0
    %v2616 = vsel %vm2605, %v2592, 0
    %v2619 = vsel %vm2605, %v2593, 0
    %2621 = vmatprep.subr.mxu0 0.0
    %2622 = vmatpush1.msra.mxu0 0.0
    %2623 = vmatprep.subr.mxu0 0.0
    %2624 = vmatpush1.msra.mxu0 0.0
    %2625 = vmatprep.subr.mxu0 0.0
    %2626 = vmatpush1.msra.mxu0 0.0
    %2627 = vmatprep.subr.mxu0 0.0
    %2628 = vmatpush1.msra.mxu0 0.0
    %2629 = vmatprep.subr.mxu0 0.0
    %2630 = vmatpush1.msra.mxu0 0.0
    %2631 = vmatprep.subr.mxu0 0.0
    %2632 = vmatpush1.msra.mxu0 0.0
    %2633 = vmatprep.subr.mxu0 0.0
    %2634 = vmatpush1.msra.mxu0 0.0
    %2635 = vmatprep.subr.mxu0 0.0
    %2636 = vmatpush1.msra.mxu0 0.0
    %2637 = vmatprep.subr.mxu0 0.0
    %2638 = vmatpush1.msra.mxu0 0.0
    %2639 = vmatprep.subr.mxu0 0.0
    %2640 = vmatpush1.msra.mxu0 0.0
    %2641 = vmatprep.subr.mxu0 0.0
    %2642 = vmatpush1.msra.mxu0 0.0
    %2643 = vmatprep.subr.mxu0 0.0
    %2644 = vmatpush1.msra.mxu0 0.0
    %2645 = vmatprep.subr.mxu0 0.0
    %2646 = vmatpush1.msra.mxu0 0.0
    %2647 = vmatprep.subr.mxu0 0.0
    %2648 = vmatpush1.msra.mxu0 0.0
    %2649 = vmatprep.subr.mxu0 0.0
    %2650 = vmatpush1.msra.mxu0 0.0
    %2651 = vmatprep.subr.mxu0 %v332
    %2652 = vmatpush1.msra.mxu0 %v331
    %2653 = vmatprep.subr.mxu0 0.0
    %2654 = vmatpush2.msra.mxu0 0.0
    %2655 = vmatprep.subr.mxu0 0.0
    %2656 = vmatpush2.msra.mxu0 0.0
    %2657 = vmatprep.subr.mxu0 0.0
    %2658 = vmatpush2.msra.mxu0 0.0
    %2659 = vmatprep.subr.mxu0 0.0
    %2660 = vmatpush2.msra.mxu0 0.0
    %2661 = vmatprep.subr.mxu0 0.0
    %2662 = vmatpush2.msra.mxu0 0.0
    %2663 = vmatprep.subr.mxu0 0.0
    %2664 = vmatpush2.msra.mxu0 0.0
    %2665 = vmatprep.subr.mxu0 0.0
    %2666 = vmatpush2.msra.mxu0 0.0
    %2667 = vmatprep.subr.mxu0 0.0
    %2668 = vmatpush2.msra.mxu0 0.0
    %2669 = vmatprep.subr.mxu0 0.0
    %2670 = vmatpush2.msra.mxu0 0.0
    %2671 = vmatprep.subr.mxu0 0.0
    %2672 = vmatpush2.msra.mxu0 0.0
    %2673 = vmatprep.subr.mxu0 0.0
    %2674 = vmatpush2.msra.mxu0 0.0
    %2675 = vmatprep.subr.mxu0 0.0
    %2676 = vmatpush2.msra.mxu0 0.0
    %2677 = vmatprep.subr.mxu0 0.0
    %2678 = vmatpush2.msra.mxu0 0.0
    %2679 = vmatprep.subr.mxu0 0.0
    %2680 = vmatpush2.msra.mxu0 0.0
    %2681 = vmatprep.subr.mxu0 0.0
    %2682 = vmatpush2.msra.mxu0 0.0
    %2683 = vmatprep.subr.mxu0 0.0
    %2684 = vmatpush2.msra.mxu0 0.0
    %2685 = vmatprep.mubr.f32.mxu0 0.0
    %2686 = vmatmul.mubr.f32.gmra.mxu0 %v2607
    %v2687 = vpop.f32.mrf.mxu0
    %v2688 = vadd.f32 %v2598, %v2687
    %v2689 = vpop.f32.mrf.mxu0
    %v2690 = vadd.f32 %v2602, %v2689
    %2691 = vmatprep.mubr.f32.mxu0 0.0
    %2692 = vmatmul.mubr.f32.gmra.mxu0 %v2610
    %v2693 = vpop.f32.mrf.mxu0
    %v2694 = vadd.f32 %v2598, %v2693
    %v2695 = vpop.f32.mrf.mxu0
    %v2696 = vadd.f32 %v2602, %v2695
    %2697 = vmatprep.mubr.f32.mxu0 0.0
    %2698 = vmatmul.mubr.f32.gmra.mxu0 %v2613
    %v2699 = vpop.f32.mrf.mxu0
    %v2700 = vadd.f32 %v2598, %v2699
    %v2701 = vpop.f32.mrf.mxu0
    %v2702 = vadd.f32 %v2602, %v2701
    %2703 = vmatprep.mubr.f32.mxu0 0.0
    %2704 = vmatmul.mubr.f32.gmra.mxu0 %v2616
    %v2705 = vpop.f32.mrf.mxu0
    %v2706 = vadd.f32 %v2598, %v2705
    %v2707 = vpop.f32.mrf.mxu0
    %v2708 = vadd.f32 %v2602, %v2707
    %2709 = vmatprep.mubr.f32.mxu0 0.0
    %2710 = vmatmul.mubr.f32.gmra.mxu0 %v2619
    %v2711 = vpop.f32.mrf.mxu0
    %v2712 = vadd.f32 %v2598, %v2711
    %v2713 = vpop.f32.mrf.mxu0
    %v2714 = vadd.f32 %v2602, %v2713
    %2715 = vdwg.mxu0
    %2716 = vmatprep.subr.mxu0 0.0
    %2717 = vmatpush1.msra.mxu0 0.0
    %2718 = vmatprep.subr.mxu0 0.0
    %2719 = vmatpush1.msra.mxu0 0.0
    %2720 = vmatprep.subr.mxu0 0.0
    %2721 = vmatpush1.msra.mxu0 0.0
    %2722 = vmatprep.subr.mxu0 0.0
    %2723 = vmatpush1.msra.mxu0 0.0
    %2724 = vmatprep.subr.mxu0 0.0
    %2725 = vmatpush1.msra.mxu0 0.0
    %2726 = vmatprep.subr.mxu0 0.0
    %2727 = vmatpush1.msra.mxu0 0.0
    %2728 = vmatprep.subr.mxu0 0.0
    %2729 = vmatpush1.msra.mxu0 0.0
    %2730 = vmatprep.subr.mxu0 0.0
    %2731 = vmatpush1.msra.mxu0 0.0
    %2732 = vmatprep.subr.mxu0 0.0
    %2733 = vmatpush1.msra.mxu0 0.0
    %2734 = vmatprep.subr.mxu0 0.0
    %2735 = vmatpush1.msra.mxu0 0.0
    %2736 = vmatprep.subr.mxu0 0.0
    %2737 = vmatpush1.msra.mxu0 0.0
    %2738 = vmatprep.subr.mxu0 0.0
    %2739 = vmatpush1.msra.mxu0 0.0
    %2740 = vmatprep.subr.mxu0 0.0
    %2741 = vmatpush1.msra.mxu0 0.0
    %2742 = vmatprep.subr.mxu0 0.0
    %2743 = vmatpush1.msra.mxu0 0.0
    %2744 = vmatprep.subr.mxu0 0.0
    %2745 = vmatpush1.msra.mxu0 0.0
    %2746 = vmatprep.subr.mxu0 %v334
    %2747 = vmatpush1.msra.mxu0 %v333
    %2748 = vmatprep.subr.mxu0 0.0
    %2749 = vmatpush2.msra.mxu0 0.0
    %2750 = vmatprep.subr.mxu0 0.0
    %2751 = vmatpush2.msra.mxu0 0.0
    %2752 = vmatprep.subr.mxu0 0.0
    %2753 = vmatpush2.msra.mxu0 0.0
    %2754 = vmatprep.subr.mxu0 0.0
    %2755 = vmatpush2.msra.mxu0 0.0
    %2756 = vmatprep.subr.mxu0 0.0
    %2757 = vmatpush2.msra.mxu0 0.0
    %2758 = vmatprep.subr.mxu0 0.0
    %2759 = vmatpush2.msra.mxu0 0.0
    %2760 = vmatprep.subr.mxu0 0.0
    %2761 = vmatpush2.msra.mxu0 0.0
    %2762 = vmatprep.subr.mxu0 0.0
    %2763 = vmatpush2.msra.mxu0 0.0
    %2764 = vmatprep.subr.mxu0 0.0
    %2765 = vmatpush2.msra.mxu0 0.0
    %2766 = vmatprep.subr.mxu0 0.0
    %2767 = vmatpush2.msra.mxu0 0.0
    %2768 = vmatprep.subr.mxu0 0.0
    %2769 = vmatpush2.msra.mxu0 0.0
    %2770 = vmatprep.subr.mxu0 0.0
    %2771 = vmatpush2.msra.mxu0 0.0
    %2772 = vmatprep.subr.mxu0 0.0
    %2773 = vmatpush2.msra.mxu0 0.0
    %2774 = vmatprep.subr.mxu0 0.0
    %2775 = vmatpush2.msra.mxu0 0.0
    %2776 = vmatprep.subr.mxu0 0.0
    %2777 = vmatpush2.msra.mxu0 0.0
    %2778 = vmatprep.subr.mxu0 0.0
    %2779 = vmatpush2.msra.mxu0 0.0
    %2780 = vmatprep.mubr.f32.mxu0 0.0
    %2781 = vmatmul.mubr.f32.gmra.mxu0 %v2607
    %v2782 = vpop.f32.mrf.mxu0
    %v2783 = vadd.f32 0.0, %v2782
    %v2784 = vpop.f32.mrf.mxu0
    %v2785 = vadd.f32 0.0, %v2784
    %2786 = vmatprep.mubr.f32.mxu0 0.0
    %2787 = vmatmul.mubr.f32.gmra.mxu0 %v2610
    %v2788 = vpop.f32.mrf.mxu0
    %v2789 = vadd.f32 0.0, %v2788
    %v2790 = vpop.f32.mrf.mxu0
    %v2791 = vadd.f32 0.0, %v2790
    %2792 = vmatprep.mubr.f32.mxu0 0.0
    %2793 = vmatmul.mubr.f32.gmra.mxu0 %v2613
    %v2794 = vpop.f32.mrf.mxu0
    %v2795 = vadd.f32 0.0, %v2794
    %v2796 = vpop.f32.mrf.mxu0
    %v2797 = vadd.f32 0.0, %v2796
    %2798 = vmatprep.mubr.f32.mxu0 0.0
    %2799 = vmatmul.mubr.f32.gmra.mxu0 %v2616
    %v2800 = vpop.f32.mrf.mxu0
    %v2801 = vadd.f32 0.0, %v2800
    %v2802 = vpop.f32.mrf.mxu0
    %v2803 = vadd.f32 0.0, %v2802
    %2804 = vmatprep.mubr.f32.mxu0 0.0
    %2805 = vmatmul.mubr.f32.gmra.mxu0 %v2619
    %v2806 = vpop.f32.mrf.mxu0
    %v2807 = vadd.f32 0.0, %v2806
    %v2808 = vpop.f32.mrf.mxu0
    %v2809 = vadd.f32 0.0, %v2808
    %2810 = vdwg.mxu0
    %v2811 = vadd.f32 %v2688, %v2807
    %v2812 = vadd.f32 %v2690, %v2809
    %vm2813 = vcmask 523264
    %v2814 = vsel %vm2813, 0.0, 0
    %2816 = vmatprep.subr.mxu0 0.0
    %2817 = vmatpush1.msra.mxu0 0.0
    %2818 = vmatprep.subr.mxu0 0.0
    %2819 = vmatpush1.msra.mxu0 0.0
    %2820 = vmatprep.subr.mxu0 0.0
    %2821 = vmatpush1.msra.mxu0 0.0
    %2822 = vmatprep.subr.mxu0 0.0
    %2823 = vmatpush1.msra.mxu0 0.0
    %2824 = vmatprep.subr.mxu0 0.0
    %2825 = vmatpush1.msra.mxu0 0.0
    %2826 = vmatprep.subr.mxu0 0.0
    %2827 = vmatpush1.msra.mxu0 0.0
    %2828 = vmatprep.subr.mxu0 0.0
    %2829 = vmatpush1.msra.mxu0 0.0
    %2830 = vmatprep.subr.mxu0 0.0
    %2831 = vmatpush1.msra.mxu0 0.0
    %2832 = vmatprep.subr.mxu0 %v350
    %2833 = vmatpush1.msra.mxu0 %v349
    %2834 = vmatprep.subr.mxu0 %v348
    %2835 = vmatpush1.msra.mxu0 %v347
    %2836 = vmatprep.subr.mxu0 %v346
    %2837 = vmatpush1.msra.mxu0 %v345
    %2838 = vmatprep.subr.mxu0 %v344
    %2839 = vmatpush1.msra.mxu0 %v343
    %2840 = vmatprep.subr.mxu0 %v342
    %2841 = vmatpush1.msra.mxu0 %v341
    %2842 = vmatprep.subr.mxu0 %v340
    %2843 = vmatpush1.msra.mxu0 %v339
    %2844 = vmatprep.subr.mxu0 %v338
    %2845 = vmatpush1.msra.mxu0 %v337
    %2846 = vmatprep.subr.mxu0 %v336
    %2847 = vmatpush1.msra.mxu0 %v335
    %2848 = vmatprep.subr.mxu0 0.0
    %2849 = vmatpush2.msra.mxu0 0.0
    %2850 = vmatprep.subr.mxu0 0.0
    %2851 = vmatpush2.msra.mxu0 0.0
    %2852 = vmatprep.subr.mxu0 0.0
    %2853 = vmatpush2.msra.mxu0 0.0
    %2854 = vmatprep.subr.mxu0 0.0
    %2855 = vmatpush2.msra.mxu0 0.0
    %2856 = vmatprep.subr.mxu0 0.0
    %2857 = vmatpush2.msra.mxu0 0.0
    %2858 = vmatprep.subr.mxu0 0.0
    %2859 = vmatpush2.msra.mxu0 0.0
    %2860 = vmatprep.subr.mxu0 0.0
    %2861 = vmatpush2.msra.mxu0 0.0
    %2862 = vmatprep.subr.mxu0 0.0
    %2863 = vmatpush2.msra.mxu0 0.0
    %2864 = vmatprep.subr.mxu0 0.0
    %2865 = vmatpush2.msra.mxu0 0.0
    %2866 = vmatprep.subr.mxu0 0.0
    %2867 = vmatpush2.msra.mxu0 0.0
    %2868 = vmatprep.subr.mxu0 0.0
    %2869 = vmatpush2.msra.mxu0 0.0
    %2870 = vmatprep.subr.mxu0 0.0
    %2871 = vmatpush2.msra.mxu0 0.0
    %2872 = vmatprep.subr.mxu0 0.0
    %2873 = vmatpush2.msra.mxu0 0.0
    %2874 = vmatprep.subr.mxu0 0.0
    %2875 = vmatpush2.msra.mxu0 0.0
    %2876 = vmatprep.subr.mxu0 0.0
    %2877 = vmatpush2.msra.mxu0 0.0
    %2878 = vmatprep.subr.mxu0 0.0
    %2879 = vmatpush2.msra.mxu0 0.0
    %2880 = vmatprep.mubr.f32.mxu0 0.0
    %2881 = vmatmul.mubr.f32.gmra.mxu0 %v2814
    %v2882 = vpop.f32.mrf.mxu0
    %v2883 = vadd.f32 0.0, %v2882
    %v2884 = vpop.f32.mrf.mxu0
    %v2885 = vadd.f32 0.0, %v2884
    %2886 = vdwg.mxu0
    %v2887 = vadd.f32 %v2811, %v2883
    %v2888 = vadd.f32 %v2812, %v2885
    %v2889 = vxor.u32 %v2887, 2147483648
    %v2890 = vmul.f32 %v2889, 1.442695
    %v2891 = vpow.pop %v2890
    %v2892 = vadd.f32 %v2891, 1.0
    %v2893 = vrcp.pop %v2892
    %v2894 = vmul.f32 1.0, %v2893
    %v2895 = vtanh.pop %v2888
    %v2896 = vxor.u32 %v2888, 2147483648
    %v2897 = vmul.f32 %v2896, 1.442695
    %v2898 = vpow.pop %v2897
    %v2899 = vadd.f32 %v2898, 1.0
    %v2900 = vrcp.pop %v2899
    %v2901 = vmul.f32 1.0, %v2900
    %v2902 = vmul.f32 %v2894, 0.0
    %v2903 = vmul.f32 %v2894, %v2895
    %2905 = vrot.lane.b32.xlu0 %v2903, 64
    %v2906 = vpop.permute.xlu0 %2905
    %v2908 = vadd.f32 %v2902, %v2906
    %v2909 = vtanh.pop %v2908
    %v2910 = vmul.f32 %v2901, %v2909
    %2912 = vrot.lane.b32.xlu0 %v2910, 64
    %v2913 = vpop.permute.xlu0 %2912
    %2915 = vst.msk [vmem:[#allocation3] sm:$0xff] %vm785, %v2913
    %2916 = vrot.lane.b32.xlu0 %v2910, 32
    %v2917 = vpop.permute.xlu0 %2916
    %2919 = vst.msk [vmem:[#allocation4 + $0x20] sm:$0xff] %vm785, %v2917
    %v2920 = vadd.f32 %v2694, %v2801
    %v2921 = vadd.f32 %v2696, %v2803
    %v2922 = vsel %vm2813, %v2913, 0
    %2924 = vmatprep.subr.mxu0 0.0
    %2925 = vmatpush1.msra.mxu0 0.0
    %2926 = vmatprep.subr.mxu0 0.0
    %2927 = vmatpush1.msra.mxu0 0.0
    %2928 = vmatprep.subr.mxu0 0.0
    %2929 = vmatpush1.msra.mxu0 0.0
    %2930 = vmatprep.subr.mxu0 0.0
    %2931 = vmatpush1.msra.mxu0 0.0
    %2932 = vmatprep.subr.mxu0 0.0
    %2933 = vmatpush1.msra.mxu0 0.0
    %2934 = vmatprep.subr.mxu0 0.0
    %2935 = vmatpush1.msra.mxu0 0.0
    %2936 = vmatprep.subr.mxu0 0.0
    %2937 = vmatpush1.msra.mxu0 0.0
    %2938 = vmatprep.subr.mxu0 0.0
    %2939 = vmatpush1.msra.mxu0 0.0
    %2940 = vmatprep.subr.mxu0 %v350
    %2941 = vmatpush1.msra.mxu0 %v349
    %2942 = vmatprep.subr.mxu0 %v348
    %2943 = vmatpush1.msra.mxu0 %v347
    %2944 = vmatprep.subr.mxu0 %v346
    %2945 = vmatpush1.msra.mxu0 %v345
    %2946 = vmatprep.subr.mxu0 %v344
    %2947 = vmatpush1.msra.mxu0 %v343
    %2948 = vmatprep.subr.mxu0 %v342
    %2949 = vmatpush1.msra.mxu0 %v341
    %2950 = vmatprep.subr.mxu0 %v340
    %2951 = vmatpush1.msra.mxu0 %v339
    %2952 = vmatprep.subr.mxu0 %v338
    %2953 = vmatpush1.msra.mxu0 %v337
    %2954 = vmatprep.subr.mxu0 %v336
    %2955 = vmatpush1.msra.mxu0 %v335
    %2956 = vmatprep.subr.mxu0 0.0
    %2957 = vmatpush2.msra.mxu0 0.0
    %2958 = vmatprep.subr.mxu0 0.0
    %2959 = vmatpush2.msra.mxu0 0.0
    %2960 = vmatprep.subr.mxu0 0.0
    %2961 = vmatpush2.msra.mxu0 0.0
    %2962 = vmatprep.subr.mxu0 0.0
    %2963 = vmatpush2.msra.mxu0 0.0
    %2964 = vmatprep.subr.mxu0 0.0
    %2965 = vmatpush2.msra.mxu0 0.0
    %2966 = vmatprep.subr.mxu0 0.0
    %2967 = vmatpush2.msra.mxu0 0.0
    %2968 = vmatprep.subr.mxu0 0.0
    %2969 = vmatpush2.msra.mxu0 0.0
    %2970 = vmatprep.subr.mxu0 0.0
    %2971 = vmatpush2.msra.mxu0 0.0
    %2972 = vmatprep.subr.mxu0 0.0
    %2973 = vmatpush2.msra.mxu0 0.0
    %2974 = vmatprep.subr.mxu0 0.0
    %2975 = vmatpush2.msra.mxu0 0.0
    %2976 = vmatprep.subr.mxu0 0.0
    %2977 = vmatpush2.msra.mxu0 0.0
    %2978 = vmatprep.subr.mxu0 0.0
    %2979 = vmatpush2.msra.mxu0 0.0
    %2980 = vmatprep.subr.mxu0 0.0
    %2981 = vmatpush2.msra.mxu0 0.0
    %2982 = vmatprep.subr.mxu0 0.0
    %2983 = vmatpush2.msra.mxu0 0.0
    %2984 = vmatprep.subr.mxu0 0.0
    %2985 = vmatpush2.msra.mxu0 0.0
    %2986 = vmatprep.subr.mxu0 0.0
    %2987 = vmatpush2.msra.mxu0 0.0
    %2988 = vmatprep.mubr.f32.mxu0 0.0
    %2989 = vmatmul.mubr.f32.gmra.mxu0 %v2922
    %v2990 = vpop.f32.mrf.mxu0
    %v2991 = vadd.f32 0.0, %v2990
    %v2992 = vpop.f32.mrf.mxu0
    %v2993 = vadd.f32 0.0, %v2992
    %2994 = vdwg.mxu0
    %v2995 = vadd.f32 %v2920, %v2991
    %v2996 = vadd.f32 %v2921, %v2993
    %v2997 = vxor.u32 %v2995, 2147483648
    %v2998 = vmul.f32 %v2997, 1.442695
    %v2999 = vpow.pop %v2998
    %v3000 = vadd.f32 %v2999, 1.0
    %v3001 = vrcp.pop %v3000
    %v3002 = vmul.f32 1.0, %v3001
    %v3003 = vtanh.pop %v2996
    %v3004 = vxor.u32 %v2996, 2147483648
    %v3005 = vmul.f32 %v3004, 1.442695
    %v3006 = vpow.pop %v3005
    %v3007 = vadd.f32 %v3006, 1.0
    %v3008 = vrcp.pop %v3007
    %v3009 = vmul.f32 1.0, %v3008
    %v3010 = vmul.f32 %v3002, %v2908
    %v3011 = vmul.f32 %v3002, %v3003
    %3013 = vrot.lane.b32.xlu0 %v3011, 64
    %v3014 = vpop.permute.xlu0 %3013
    %v3016 = vadd.f32 %v3010, %v3014
    %v3017 = vtanh.pop %v3016
    %v3018 = vmul.f32 %v3009, %v3017
    %3020 = vrot.lane.b32.xlu0 %v3018, 64
    %v3021 = vpop.permute.xlu0 %3020
    %3023 = vst.msk [vmem:[#allocation3 + $0x8] sm:$0xff] %vm785, %v3021
    %3024 = vrot.lane.b32.xlu0 %v3018, 32
    %v3025 = vpop.permute.xlu0 %3024
    %3027 = vst.msk [vmem:[#allocation4 + $0x18] sm:$0xff] %vm785, %v3025
    %v3028 = vadd.f32 %v2700, %v2795
    %v3029 = vadd.f32 %v2702, %v2797
    %v3030 = vsel %vm2813, %v3021, 0
    %3032 = vmatprep.subr.mxu0 0.0
    %3033 = vmatpush1.msra.mxu0 0.0
    %3034 = vmatprep.subr.mxu0 0.0
    %3035 = vmatpush1.msra.mxu0 0.0
    %3036 = vmatprep.subr.mxu0 0.0
    %3037 = vmatpush1.msra.mxu0 0.0
    %3038 = vmatprep.subr.mxu0 0.0
    %3039 = vmatpush1.msra.mxu0 0.0
    %3040 = vmatprep.subr.mxu0 0.0
    %3041 = vmatpush1.msra.mxu0 0.0
    %3042 = vmatprep.subr.mxu0 0.0
    %3043 = vmatpush1.msra.mxu0 0.0
    %3044 = vmatprep.subr.mxu0 0.0
    %3045 = vmatpush1.msra.mxu0 0.0
    %3046 = vmatprep.subr.mxu0 0.0
    %3047 = vmatpush1.msra.mxu0 0.0
    %3048 = vmatprep.subr.mxu0 %v350
    %3049 = vmatpush1.msra.mxu0 %v349
    %3050 = vmatprep.subr.mxu0 %v348
    %3051 = vmatpush1.msra.mxu0 %v347
    %3052 = vmatprep.subr.mxu0 %v346
    %3053 = vmatpush1.msra.mxu0 %v345
    %3054 = vmatprep.subr.mxu0 %v344
    %3055 = vmatpush1.msra.mxu0 %v343
    %3056 = vmatprep.subr.mxu0 %v342
    %3057 = vmatpush1.msra.mxu0 %v341
    %3058 = vmatprep.subr.mxu0 %v340
    %3059 = vmatpush1.msra.mxu0 %v339
    %3060 = vmatprep.subr.mxu0 %v338
    %3061 = vmatpush1.msra.mxu0 %v337
    %3062 = vmatprep.subr.mxu0 %v336
    %3063 = vmatpush1.msra.mxu0 %v335
    %3064 = vmatprep.subr.mxu0 0.0
    %3065 = vmatpush2.msra.mxu0 0.0
    %3066 = vmatprep.subr.mxu0 0.0
    %3067 = vmatpush2.msra.mxu0 0.0
    %3068 = vmatprep.subr.mxu0 0.0
    %3069 = vmatpush2.msra.mxu0 0.0
    %3070 = vmatprep.subr.mxu0 0.0
    %3071 = vmatpush2.msra.mxu0 0.0
    %3072 = vmatprep.subr.mxu0 0.0
    %3073 = vmatpush2.msra.mxu0 0.0
    %3074 = vmatprep.subr.mxu0 0.0
    %3075 = vmatpush2.msra.mxu0 0.0
    %3076 = vmatprep.subr.mxu0 0.0
    %3077 = vmatpush2.msra.mxu0 0.0
    %3078 = vmatprep.subr.mxu0 0.0
    %3079 = vmatpush2.msra.mxu0 0.0
    %3080 = vmatprep.subr.mxu0 0.0
    %3081 = vmatpush2.msra.mxu0 0.0
    %3082 = vmatprep.subr.mxu0 0.0
    %3083 = vmatpush2.msra.mxu0 0.0
    %3084 = vmatprep.subr.mxu0 0.0
    %3085 = vmatpush2.msra.mxu0 0.0
    %3086 = vmatprep.subr.mxu0 0.0
    %3087 = vmatpush2.msra.mxu0 0.0
    %3088 = vmatprep.subr.mxu0 0.0
    %3089 = vmatpush2.msra.mxu0 0.0
    %3090 = vmatprep.subr.mxu0 0.0
    %3091 = vmatpush2.msra.mxu0 0.0
    %3092 = vmatprep.subr.mxu0 0.0
    %3093 = vmatpush2.msra.mxu0 0.0
    %3094 = vmatprep.subr.mxu0 0.0
    %3095 = vmatpush2.msra.mxu0 0.0
    %3096 = vmatprep.mubr.f32.mxu0 0.0
    %3097 = vmatmul.mubr.f32.gmra.mxu0 %v3030
    %v3098 = vpop.f32.mrf.mxu0
    %v3099 = vadd.f32 0.0, %v3098
    %v3100 = vpop.f32.mrf.mxu0
    %v3101 = vadd.f32 0.0, %v3100
    %3102 = vdwg.mxu0
    %v3103 = vadd.f32 %v3028, %v3099
    %v3104 = vadd.f32 %v3029, %v3101
    %v3105 = vxor.u32 %v3103, 2147483648
    %v3106 = vmul.f32 %v3105, 1.442695
    %v3107 = vpow.pop %v3106
    %v3108 = vadd.f32 %v3107, 1.0
    %v3109 = vrcp.pop %v3108
    %v3110 = vmul.f32 1.0, %v3109
    %v3111 = vtanh.pop %v3104
    %v3112 = vxor.u32 %v3104, 2147483648
    %v3113 = vmul.f32 %v3112, 1.442695
    %v3114 = vpow.pop %v3113
    %v3115 = vadd.f32 %v3114, 1.0
    %v3116 = vrcp.pop %v3115
    %v3117 = vmul.f32 1.0, %v3116
    %v3118 = vmul.f32 %v3110, %v3016
    %v3119 = vmul.f32 %v3110, %v3111
    %3121 = vrot.lane.b32.xlu0 %v3119, 64
    %v3122 = vpop.permute.xlu0 %3121
    %v3124 = vadd.f32 %v3118, %v3122
    %v3125 = vtanh.pop %v3124
    %v3126 = vmul.f32 %v3117, %v3125
    %3128 = vrot.lane.b32.xlu0 %v3126, 64
    %v3129 = vpop.permute.xlu0 %3128
    %3131 = vst.msk [vmem:[#allocation3 + $0x10] sm:$0xff] %vm785, %v3129
    %3132 = vrot.lane.b32.xlu0 %v3126, 32
    %v3133 = vpop.permute.xlu0 %3132
    %3135 = vst.msk [vmem:[#allocation4 + $0x10] sm:$0xff] %vm785, %v3133
    %v3136 = vadd.f32 %v2706, %v2789
    %v3137 = vadd.f32 %v2708, %v2791
    %v3138 = vsel %vm2813, %v3129, 0
    %3140 = vmatprep.subr.mxu0 0.0
    %3141 = vmatpush1.msra.mxu0 0.0
    %3142 = vmatprep.subr.mxu0 0.0
    %3143 = vmatpush1.msra.mxu0 0.0
    %3144 = vmatprep.subr.mxu0 0.0
    %3145 = vmatpush1.msra.mxu0 0.0
    %3146 = vmatprep.subr.mxu0 0.0
    %3147 = vmatpush1.msra.mxu0 0.0
    %3148 = vmatprep.subr.mxu0 0.0
    %3149 = vmatpush1.msra.mxu0 0.0
    %3150 = vmatprep.subr.mxu0 0.0
    %3151 = vmatpush1.msra.mxu0 0.0
    %3152 = vmatprep.subr.mxu0 0.0
    %3153 = vmatpush1.msra.mxu0 0.0
    %3154 = vmatprep.subr.mxu0 0.0
    %3155 = vmatpush1.msra.mxu0 0.0
    %3156 = vmatprep.subr.mxu0 %v350
    %3157 = vmatpush1.msra.mxu0 %v349
    %3158 = vmatprep.subr.mxu0 %v348
    %3159 = vmatpush1.msra.mxu0 %v347
    %3160 = vmatprep.subr.mxu0 %v346
    %3161 = vmatpush1.msra.mxu0 %v345
    %3162 = vmatprep.subr.mxu0 %v344
    %3163 = vmatpush1.msra.mxu0 %v343
    %3164 = vmatprep.subr.mxu0 %v342
    %3165 = vmatpush1.msra.mxu0 %v341
    %3166 = vmatprep.subr.mxu0 %v340
    %3167 = vmatpush1.msra.mxu0 %v339
    %3168 = vmatprep.subr.mxu0 %v338
    %3169 = vmatpush1.msra.mxu0 %v337
    %3170 = vmatprep.subr.mxu0 %v336
    %3171 = vmatpush1.msra.mxu0 %v335
    %3172 = vmatprep.subr.mxu0 0.0
    %3173 = vmatpush2.msra.mxu0 0.0
    %3174 = vmatprep.subr.mxu0 0.0
    %3175 = vmatpush2.msra.mxu0 0.0
    %3176 = vmatprep.subr.mxu0 0.0
    %3177 = vmatpush2.msra.mxu0 0.0
    %3178 = vmatprep.subr.mxu0 0.0
    %3179 = vmatpush2.msra.mxu0 0.0
    %3180 = vmatprep.subr.mxu0 0.0
    %3181 = vmatpush2.msra.mxu0 0.0
    %3182 = vmatprep.subr.mxu0 0.0
    %3183 = vmatpush2.msra.mxu0 0.0
    %3184 = vmatprep.subr.mxu0 0.0
    %3185 = vmatpush2.msra.mxu0 0.0
    %3186 = vmatprep.subr.mxu0 0.0
    %3187 = vmatpush2.msra.mxu0 0.0
    %3188 = vmatprep.subr.mxu0 0.0
    %3189 = vmatpush2.msra.mxu0 0.0
    %3190 = vmatprep.subr.mxu0 0.0
    %3191 = vmatpush2.msra.mxu0 0.0
    %3192 = vmatprep.subr.mxu0 0.0
    %3193 = vmatpush2.msra.mxu0 0.0
    %3194 = vmatprep.subr.mxu0 0.0
    %3195 = vmatpush2.msra.mxu0 0.0
    %3196 = vmatprep.subr.mxu0 0.0
    %3197 = vmatpush2.msra.mxu0 0.0
    %3198 = vmatprep.subr.mxu0 0.0
    %3199 = vmatpush2.msra.mxu0 0.0
    %3200 = vmatprep.subr.mxu0 0.0
    %3201 = vmatpush2.msra.mxu0 0.0
    %3202 = vmatprep.subr.mxu0 0.0
    %3203 = vmatpush2.msra.mxu0 0.0
    %3204 = vmatprep.mubr.f32.mxu0 0.0
    %3205 = vmatmul.mubr.f32.gmra.mxu0 %v3138
    %v3206 = vpop.f32.mrf.mxu0
    %v3207 = vadd.f32 0.0, %v3206
    %v3208 = vpop.f32.mrf.mxu0
    %v3209 = vadd.f32 0.0, %v3208
    %3210 = vdwg.mxu0
    %v3211 = vadd.f32 %v3136, %v3207
    %v3212 = vadd.f32 %v3137, %v3209
    %v3213 = vxor.u32 %v3211, 2147483648
    %v3214 = vmul.f32 %v3213, 1.442695
    %v3215 = vpow.pop %v3214
    %v3216 = vadd.f32 %v3215, 1.0
    %v3217 = vrcp.pop %v3216
    %v3218 = vmul.f32 1.0, %v3217
    %v3219 = vtanh.pop %v3212
    %v3220 = vxor.u32 %v3212, 2147483648
    %v3221 = vmul.f32 %v3220, 1.442695
    %v3222 = vpow.pop %v3221
    %v3223 = vadd.f32 %v3222, 1.0
    %v3224 = vrcp.pop %v3223
    %v3225 = vmul.f32 1.0, %v3224
    %v3226 = vmul.f32 %v3218, %v3124
    %v3227 = vmul.f32 %v3218, %v3219
    %3229 = vrot.lane.b32.xlu0 %v3227, 64
    %v3230 = vpop.permute.xlu0 %3229
    %v3232 = vadd.f32 %v3226, %v3230
    %v3233 = vtanh.pop %v3232
    %v3234 = vmul.f32 %v3225, %v3233
    %3236 = vrot.lane.b32.xlu0 %v3234, 64
    %v3237 = vpop.permute.xlu0 %3236
    %3239 = vst.msk [vmem:[#allocation3 + $0x18] sm:$0xff] %vm785, %v3237
    %3240 = vrot.lane.b32.xlu0 %v3234, 32
    %v3241 = vpop.permute.xlu0 %3240
    %3243 = vst.msk [vmem:[#allocation4 + $0x8] sm:$0xff] %vm785, %v3241
    %v3244 = vadd.f32 %v2712, %v2783
    %v3245 = vadd.f32 %v2714, %v2785
    %v3246 = vsel %vm2813, %v3237, 0
    %3248 = vmatprep.subr.mxu0 0.0
    %3249 = vmatpush1.msra.mxu0 0.0
    %3250 = vmatprep.subr.mxu0 0.0
    %3251 = vmatpush1.msra.mxu0 0.0
    %3252 = vmatprep.subr.mxu0 0.0
    %3253 = vmatpush1.msra.mxu0 0.0
    %3254 = vmatprep.subr.mxu0 0.0
    %3255 = vmatpush1.msra.mxu0 0.0
    %3256 = vmatprep.subr.mxu0 0.0
    %3257 = vmatpush1.msra.mxu0 0.0
    %3258 = vmatprep.subr.mxu0 0.0
    %3259 = vmatpush1.msra.mxu0 0.0
    %3260 = vmatprep.subr.mxu0 0.0
    %3261 = vmatpush1.msra.mxu0 0.0
    %3262 = vmatprep.subr.mxu0 0.0
    %3263 = vmatpush1.msra.mxu0 0.0
    %3264 = vmatprep.subr.mxu0 %v350
    %3265 = vmatpush1.msra.mxu0 %v349
    %3266 = vmatprep.subr.mxu0 %v348
    %3267 = vmatpush1.msra.mxu0 %v347
    %3268 = vmatprep.subr.mxu0 %v346
    %3269 = vmatpush1.msra.mxu0 %v345
    %3270 = vmatprep.subr.mxu0 %v344
    %3271 = vmatpush1.msra.mxu0 %v343
    %3272 = vmatprep.subr.mxu0 %v342
    %3273 = vmatpush1.msra.mxu0 %v341
    %3274 = vmatprep.subr.mxu0 %v340
    %3275 = vmatpush1.msra.mxu0 %v339
    %3276 = vmatprep.subr.mxu0 %v338
    %3277 = vmatpush1.msra.mxu0 %v337
    %3278 = vmatprep.subr.mxu0 %v336
    %3279 = vmatpush1.msra.mxu0 %v335
    %3280 = vmatprep.subr.mxu0 0.0
    %3281 = vmatpush2.msra.mxu0 0.0
    %3282 = vmatprep.subr.mxu0 0.0
    %3283 = vmatpush2.msra.mxu0 0.0
    %3284 = vmatprep.subr.mxu0 0.0
    %3285 = vmatpush2.msra.mxu0 0.0
    %3286 = vmatprep.subr.mxu0 0.0
    %3287 = vmatpush2.msra.mxu0 0.0
    %3288 = vmatprep.subr.mxu0 0.0
    %3289 = vmatpush2.msra.mxu0 0.0
    %3290 = vmatprep.subr.mxu0 0.0
    %3291 = vmatpush2.msra.mxu0 0.0
    %3292 = vmatprep.subr.mxu0 0.0
    %3293 = vmatpush2.msra.mxu0 0.0
    %3294 = vmatprep.subr.mxu0 0.0
    %3295 = vmatpush2.msra.mxu0 0.0
    %3296 = vmatprep.subr.mxu0 0.0
    %3297 = vmatpush2.msra.mxu0 0.0
    %3298 = vmatprep.subr.mxu0 0.0
    %3299 = vmatpush2.msra.mxu0 0.0
    %3300 = vmatprep.subr.mxu0 0.0
    %3301 = vmatpush2.msra.mxu0 0.0
    %3302 = vmatprep.subr.mxu0 0.0
    %3303 = vmatpush2.msra.mxu0 0.0
    %3304 = vmatprep.subr.mxu0 0.0
    %3305 = vmatpush2.msra.mxu0 0.0
    %3306 = vmatprep.subr.mxu0 0.0
    %3307 = vmatpush2.msra.mxu0 0.0
    %3308 = vmatprep.subr.mxu0 0.0
    %3309 = vmatpush2.msra.mxu0 0.0
    %3310 = vmatprep.subr.mxu0 0.0
    %3311 = vmatpush2.msra.mxu0 0.0
    %3312 = vmatprep.mubr.f32.mxu0 0.0
    %3313 = vmatmul.mubr.f32.gmra.mxu0 %v3246
    %v3314 = vpop.f32.mrf.mxu0
    %v3315 = vadd.f32 0.0, %v3314
    %v3316 = vpop.f32.mrf.mxu0
    %v3317 = vadd.f32 0.0, %v3316
    %3318 = vdwg.mxu0
    %v3319 = vadd.f32 %v3244, %v3315
    %v3320 = vadd.f32 %v3245, %v3317
    %v3321 = vxor.u32 %v3319, 2147483648
    %v3322 = vmul.f32 %v3321, 1.442695
    %v3323 = vpow.pop %v3322
    %v3324 = vadd.f32 %v3323, 1.0
    %v3325 = vrcp.pop %v3324
    %v3326 = vmul.f32 1.0, %v3325
    %v3327 = vtanh.pop %v3320
    %v3328 = vxor.u32 %v3320, 2147483648
    %v3329 = vmul.f32 %v3328, 1.442695
    %v3330 = vpow.pop %v3329
    %v3331 = vadd.f32 %v3330, 1.0
    %v3332 = vrcp.pop %v3331
    %v3333 = vmul.f32 1.0, %v3332
    %v3334 = vmul.f32 %v3326, %v3232
    %v3335 = vmul.f32 %v3326, %v3327
    %3337 = vrot.lane.b32.xlu0 %v3335, 64
    %v3338 = vpop.permute.xlu0 %3337
    %v3340 = vadd.f32 %v3334, %v3338
    %v3341 = vtanh.pop %v3340
    %v3342 = vmul.f32 %v3333, %v3341
    %3344 = vrot.lane.b32.xlu0 %v3342, 64
    %v3345 = vpop.permute.xlu0 %3344
    %3347 = vst.msk [vmem:[#allocation3 + $0x20] sm:$0xff] %vm785, %v3345
    %3348 = vrot.lane.b32.xlu0 %v3342, 32
    %v3349 = vpop.permute.xlu0 %3348
    %3351 = vst.msk [vmem:[#allocation4] sm:$0xff] %vm785, %v3349
    %v3352 = vld [vmem:[#allocation3] sm:$0xff]
    %v3353 = vld [vmem:[#allocation3 + $0x8] sm:$0xff]
    %v3354 = vld [vmem:[#allocation3 + $0x10] sm:$0xff]
    %v3355 = vld [vmem:[#allocation3 + $0x18] sm:$0xff]
    %v3356 = vld [vmem:[#allocation3 + $0x20] sm:$0xff]
    %v3357 = vld [vmem:[#allocation4] sm:$0xff]
    %v3358 = vld [vmem:[#allocation4 + $0x8] sm:$0xff]
    %v3359 = vld [vmem:[#allocation4 + $0x10] sm:$0xff]
    %v3360 = vld [vmem:[#allocation4 + $0x18] sm:$0xff]
    %v3361 = vld [vmem:[#allocation4 + $0x20] sm:$0xff]
    %v3363 = vsel %vm785, %v3357, 0
    %v3366 = vsel %vm785, %v3358, 0
    %v3369 = vsel %vm785, %v3359, 0
    %v3372 = vsel %vm785, %v3360, 0
    %v3375 = vsel %vm785, %v3361, 0
    %3377 = vmatprep.subr.mxu0 0.0
    %3378 = vmatpush1.msra.mxu0 0.0
    %3379 = vmatprep.subr.mxu0 0.0
    %3380 = vmatpush1.msra.mxu0 0.0
    %3381 = vmatprep.subr.mxu0 0.0
    %3382 = vmatpush1.msra.mxu0 0.0
    %3383 = vmatprep.subr.mxu0 0.0
    %3384 = vmatpush1.msra.mxu0 0.0
    %3385 = vmatprep.subr.mxu0 0.0
    %3386 = vmatpush1.msra.mxu0 0.0
    %3387 = vmatprep.subr.mxu0 0.0
    %3388 = vmatpush1.msra.mxu0 0.0
    %3389 = vmatprep.subr.mxu0 0.0
    %3390 = vmatpush1.msra.mxu0 0.0
    %3391 = vmatprep.subr.mxu0 0.0
    %3392 = vmatpush1.msra.mxu0 0.0
    %3393 = vmatprep.subr.mxu0 0.0
    %3394 = vmatpush1.msra.mxu0 0.0
    %3395 = vmatprep.subr.mxu0 0.0
    %3396 = vmatpush1.msra.mxu0 0.0
    %3397 = vmatprep.subr.mxu0 0.0
    %3398 = vmatpush1.msra.mxu0 0.0
    %3399 = vmatprep.subr.mxu0 0.0
    %3400 = vmatpush1.msra.mxu0 0.0
    %3401 = vmatprep.subr.mxu0 %v367
    %3402 = vmatpush1.msra.mxu0 %v366
    %3403 = vmatprep.subr.mxu0 %v365
    %3404 = vmatpush1.msra.mxu0 %v364
    %3405 = vmatprep.subr.mxu0 %v363
    %3406 = vmatpush1.msra.mxu0 %v362
    %3407 = vmatprep.subr.mxu0 %v361
    %3408 = vmatpush1.msra.mxu0 %v360
    %3409 = vmatprep.subr.mxu0 0.0
    %3410 = vmatpush2.msra.mxu0 0.0
    %3411 = vmatprep.subr.mxu0 0.0
    %3412 = vmatpush2.msra.mxu0 0.0
    %3413 = vmatprep.subr.mxu0 0.0
    %3414 = vmatpush2.msra.mxu0 0.0
    %3415 = vmatprep.subr.mxu0 0.0
    %3416 = vmatpush2.msra.mxu0 0.0
    %3417 = vmatprep.subr.mxu0 0.0
    %3418 = vmatpush2.msra.mxu0 0.0
    %3419 = vmatprep.subr.mxu0 0.0
    %3420 = vmatpush2.msra.mxu0 0.0
    %3421 = vmatprep.subr.mxu0 0.0
    %3422 = vmatpush2.msra.mxu0 0.0
    %3423 = vmatprep.subr.mxu0 0.0
    %3424 = vmatpush2.msra.mxu0 0.0
    %3425 = vmatprep.subr.mxu0 0.0
    %3426 = vmatpush2.msra.mxu0 0.0
    %3427 = vmatprep.subr.mxu0 0.0
    %3428 = vmatpush2.msra.mxu0 0.0
    %3429 = vmatprep.subr.mxu0 0.0
    %3430 = vmatpush2.msra.mxu0 0.0
    %3431 = vmatprep.subr.mxu0 0.0
    %3432 = vmatpush2.msra.mxu0 0.0
    %3433 = vmatprep.subr.mxu0 0.0
    %3434 = vmatpush2.msra.mxu0 0.0
    %3435 = vmatprep.subr.mxu0 0.0
    %3436 = vmatpush2.msra.mxu0 0.0
    %3437 = vmatprep.subr.mxu0 0.0
    %3438 = vmatpush2.msra.mxu0 0.0
    %3439 = vmatprep.subr.mxu0 0.0
    %3440 = vmatpush2.msra.mxu0 0.0
    %3441 = vmatprep.mubr.f32.mxu0 0.0
    %3442 = vmatmul.mubr.f32.gmra.mxu0 %v3363
    %v3443 = vpop.f32.mrf.mxu0
    %v3444 = vadd.f32 0.0, %v3443
    %v3445 = vpop.f32.mrf.mxu0
    %v3446 = vadd.f32 0.0, %v3445
    %3447 = vmatprep.mubr.f32.mxu0 0.0
    %3448 = vmatmul.mubr.f32.gmra.mxu0 %v3366
    %v3449 = vpop.f32.mrf.mxu0
    %v3450 = vadd.f32 0.0, %v3449
    %v3451 = vpop.f32.mrf.mxu0
    %v3452 = vadd.f32 0.0, %v3451
    %3453 = vmatprep.mubr.f32.mxu0 0.0
    %3454 = vmatmul.mubr.f32.gmra.mxu0 %v3369
    %v3455 = vpop.f32.mrf.mxu0
    %v3456 = vadd.f32 0.0, %v3455
    %v3457 = vpop.f32.mrf.mxu0
    %v3458 = vadd.f32 0.0, %v3457
    %3459 = vmatprep.mubr.f32.mxu0 0.0
    %3460 = vmatmul.mubr.f32.gmra.mxu0 %v3372
    %v3461 = vpop.f32.mrf.mxu0
    %v3462 = vadd.f32 0.0, %v3461
    %v3463 = vpop.f32.mrf.mxu0
    %v3464 = vadd.f32 0.0, %v3463
    %3465 = vmatprep.mubr.f32.mxu0 0.0
    %3466 = vmatmul.mubr.f32.gmra.mxu0 %v3375
    %v3467 = vpop.f32.mrf.mxu0
    %v3468 = vadd.f32 0.0, %v3467
    %v3469 = vpop.f32.mrf.mxu0
    %v3470 = vadd.f32 0.0, %v3469
    %3471 = vdwg.mxu0
    %v3473 = vsel %vm785, %v3352, 0
    %v3476 = vsel %vm785, %v3353, 0
    %v3479 = vsel %vm785, %v3354, 0
    %v3482 = vsel %vm785, %v3355, 0
    %v3485 = vsel %vm785, %v3356, 0
    %3487 = vmatprep.subr.mxu0 0.0
    %3488 = vmatpush1.msra.mxu0 0.0
    %3489 = vmatprep.subr.mxu0 0.0
    %3490 = vmatpush1.msra.mxu0 0.0
    %3491 = vmatprep.subr.mxu0 0.0
    %3492 = vmatpush1.msra.mxu0 0.0
    %3493 = vmatprep.subr.mxu0 0.0
    %3494 = vmatpush1.msra.mxu0 0.0
    %3495 = vmatprep.subr.mxu0 0.0
    %3496 = vmatpush1.msra.mxu0 0.0
    %3497 = vmatprep.subr.mxu0 0.0
    %3498 = vmatpush1.msra.mxu0 0.0
    %3499 = vmatprep.subr.mxu0 0.0
    %3500 = vmatpush1.msra.mxu0 0.0
    %3501 = vmatprep.subr.mxu0 0.0
    %3502 = vmatpush1.msra.mxu0 0.0
    %3503 = vmatprep.subr.mxu0 0.0
    %3504 = vmatpush1.msra.mxu0 0.0
    %3505 = vmatprep.subr.mxu0 0.0
    %3506 = vmatpush1.msra.mxu0 0.0
    %3507 = vmatprep.subr.mxu0 0.0
    %3508 = vmatpush1.msra.mxu0 0.0
    %3509 = vmatprep.subr.mxu0 0.0
    %3510 = vmatpush1.msra.mxu0 0.0
    %3511 = vmatprep.subr.mxu0 %v359
    %3512 = vmatpush1.msra.mxu0 %v358
    %3513 = vmatprep.subr.mxu0 %v357
    %3514 = vmatpush1.msra.mxu0 %v356
    %3515 = vmatprep.subr.mxu0 %v355
    %3516 = vmatpush1.msra.mxu0 %v354
    %3517 = vmatprep.subr.mxu0 %v353
    %3518 = vmatpush1.msra.mxu0 %v352
    %3519 = vmatprep.subr.mxu0 0.0
    %3520 = vmatpush2.msra.mxu0 0.0
    %3521 = vmatprep.subr.mxu0 0.0
    %3522 = vmatpush2.msra.mxu0 0.0
    %3523 = vmatprep.subr.mxu0 0.0
    %3524 = vmatpush2.msra.mxu0 0.0
    %3525 = vmatprep.subr.mxu0 0.0
    %3526 = vmatpush2.msra.mxu0 0.0
    %3527 = vmatprep.subr.mxu0 0.0
    %3528 = vmatpush2.msra.mxu0 0.0
    %3529 = vmatprep.subr.mxu0 0.0
    %3530 = vmatpush2.msra.mxu0 0.0
    %3531 = vmatprep.subr.mxu0 0.0
    %3532 = vmatpush2.msra.mxu0 0.0
    %3533 = vmatprep.subr.mxu0 0.0
    %3534 = vmatpush2.msra.mxu0 0.0
    %3535 = vmatprep.subr.mxu0 0.0
    %3536 = vmatpush2.msra.mxu0 0.0
    %3537 = vmatprep.subr.mxu0 0.0
    %3538 = vmatpush2.msra.mxu0 0.0
    %3539 = vmatprep.subr.mxu0 0.0
    %3540 = vmatpush2.msra.mxu0 0.0
    %3541 = vmatprep.subr.mxu0 0.0
    %3542 = vmatpush2.msra.mxu0 0.0
    %3543 = vmatprep.subr.mxu0 0.0
    %3544 = vmatpush2.msra.mxu0 0.0
    %3545 = vmatprep.subr.mxu0 0.0
    %3546 = vmatpush2.msra.mxu0 0.0
    %3547 = vmatprep.subr.mxu0 0.0
    %3548 = vmatpush2.msra.mxu0 0.0
    %3549 = vmatprep.subr.mxu0 0.0
    %3550 = vmatpush2.msra.mxu0 0.0
    %3551 = vmatprep.mubr.f32.mxu0 0.0
    %3552 = vmatmul.mubr.f32.gmra.mxu0 %v3473
    %v3553 = vpop.f32.mrf.mxu0
    %v3554 = vadd.f32 %v3444, %v3553
    %v3555 = vpop.f32.mrf.mxu0
    %v3556 = vadd.f32 %v3446, %v3555
    %3557 = vmatprep.mubr.f32.mxu0 0.0
    %3558 = vmatmul.mubr.f32.gmra.mxu0 %v3476
    %v3559 = vpop.f32.mrf.mxu0
    %v3560 = vadd.f32 %v3450, %v3559
    %v3561 = vpop.f32.mrf.mxu0
    %v3562 = vadd.f32 %v3452, %v3561
    %3563 = vmatprep.mubr.f32.mxu0 0.0
    %3564 = vmatmul.mubr.f32.gmra.mxu0 %v3479
    %v3565 = vpop.f32.mrf.mxu0
    %v3566 = vadd.f32 %v3456, %v3565
    %v3567 = vpop.f32.mrf.mxu0
    %v3568 = vadd.f32 %v3458, %v3567
    %3569 = vmatprep.mubr.f32.mxu0 0.0
    %3570 = vmatmul.mubr.f32.gmra.mxu0 %v3482
    %v3571 = vpop.f32.mrf.mxu0
    %v3572 = vadd.f32 %v3462, %v3571
    %v3573 = vpop.f32.mrf.mxu0
    %v3574 = vadd.f32 %v3464, %v3573
    %3575 = vmatprep.mubr.f32.mxu0 0.0
    %3576 = vmatmul.mubr.f32.gmra.mxu0 %v3485
    %v3577 = vpop.f32.mrf.mxu0
    %v3578 = vadd.f32 %v3468, %v3577
    %v3579 = vpop.f32.mrf.mxu0
    %v3580 = vadd.f32 %v3470, %v3579
    %3581 = vdwg.mxu0
    %v3583 = vlaneseq
    %v3584 = vshrl.u32 %v3583, 7
    %v3585 = vsub.s32 0, %v3584
    %v3586 = vrot.slane %v400, %v3585
    %v3587 = vlaneseq
    %v3588 = vshrl.u32 %v3587, 7
    %v3589 = vsub.s32 1, %v3588
    %v3590 = vrot.slane %v400, %v3589
    %v3593 = vadd.f32 %v3554, %v3586
    %v3594 = vadd.f32 %v3556, %v3590
    %v3595 = vadd.f32 %v3560, %v3586
    %v3596 = vadd.f32 %v3562, %v3590
    %v3597 = vadd.f32 %v3566, %v3586
    %v3598 = vadd.f32 %v3568, %v3590
    %v3599 = vadd.f32 %v3572, %v3586
    %v3600 = vadd.f32 %v3574, %v3590
    %v3601 = vadd.f32 %v3578, %v3586
    %v3602 = vadd.f32 %v3580, %v3590
    %3603 = vmatprep.subr.mxu0 0.0
    %3604 = vmatpush1.msra.mxu0 0.0
    %3605 = vmatprep.subr.mxu0 0.0
    %3606 = vmatpush1.msra.mxu0 0.0
    %3607 = vmatprep.subr.mxu0 0.0
    %3608 = vmatpush1.msra.mxu0 0.0
    %3609 = vmatprep.subr.mxu0 0.0
    %3610 = vmatpush1.msra.mxu0 0.0
    %3611 = vmatprep.subr.mxu0 0.0
    %3612 = vmatpush1.msra.mxu0 0.0
    %3613 = vmatprep.subr.mxu0 0.0
    %3614 = vmatpush1.msra.mxu0 0.0
    %3615 = vmatprep.subr.mxu0 0.0
    %3616 = vmatpush1.msra.mxu0 0.0
    %3617 = vmatprep.subr.mxu0 0.0
    %3618 = vmatpush1.msra.mxu0 0.0
    %3619 = vmatprep.subr.mxu0 0.0
    %3620 = vmatpush1.msra.mxu0 0.0
    %3621 = vmatprep.subr.mxu0 0.0
    %3622 = vmatpush1.msra.mxu0 0.0
    %3623 = vmatprep.subr.mxu0 0.0
    %3624 = vmatpush1.msra.mxu0 0.0
    %3625 = vmatprep.subr.mxu0 0.0
    %3626 = vmatpush1.msra.mxu0 0.0
    %3627 = vmatprep.subr.mxu0 %v383
    %3628 = vmatpush1.msra.mxu0 %v382
    %3629 = vmatprep.subr.mxu0 %v381
    %3630 = vmatpush1.msra.mxu0 %v380
    %3631 = vmatprep.subr.mxu0 %v379
    %3632 = vmatpush1.msra.mxu0 %v378
    %3633 = vmatprep.subr.mxu0 %v377
    %3634 = vmatpush1.msra.mxu0 %v376
    %3635 = vmatprep.subr.mxu0 0.0
    %3636 = vmatpush2.msra.mxu0 0.0
    %3637 = vmatprep.subr.mxu0 0.0
    %3638 = vmatpush2.msra.mxu0 0.0
    %3639 = vmatprep.subr.mxu0 0.0
    %3640 = vmatpush2.msra.mxu0 0.0
    %3641 = vmatprep.subr.mxu0 0.0
    %3642 = vmatpush2.msra.mxu0 0.0
    %3643 = vmatprep.subr.mxu0 0.0
    %3644 = vmatpush2.msra.mxu0 0.0
    %3645 = vmatprep.subr.mxu0 0.0
    %3646 = vmatpush2.msra.mxu0 0.0
    %3647 = vmatprep.subr.mxu0 0.0
    %3648 = vmatpush2.msra.mxu0 0.0
    %3649 = vmatprep.subr.mxu0 0.0
    %3650 = vmatpush2.msra.mxu0 0.0
    %3651 = vmatprep.subr.mxu0 0.0
    %3652 = vmatpush2.msra.mxu0 0.0
    %3653 = vmatprep.subr.mxu0 0.0
    %3654 = vmatpush2.msra.mxu0 0.0
    %3655 = vmatprep.subr.mxu0 0.0
    %3656 = vmatpush2.msra.mxu0 0.0
    %3657 = vmatprep.subr.mxu0 0.0
    %3658 = vmatpush2.msra.mxu0 0.0
    %3659 = vmatprep.subr.mxu0 0.0
    %3660 = vmatpush2.msra.mxu0 0.0
    %3661 = vmatprep.subr.mxu0 0.0
    %3662 = vmatpush2.msra.mxu0 0.0
    %3663 = vmatprep.subr.mxu0 0.0
    %3664 = vmatpush2.msra.mxu0 0.0
    %3665 = vmatprep.subr.mxu0 0.0
    %3666 = vmatpush2.msra.mxu0 0.0
    %3667 = vmatprep.mubr.f32.mxu0 0.0
    %3668 = vmatmul.mubr.f32.gmra.mxu0 %v3363
    %v3669 = vpop.f32.mrf.mxu0
    %v3670 = vadd.f32 0.0, %v3669
    %v3671 = vpop.f32.mrf.mxu0
    %v3672 = vadd.f32 0.0, %v3671
    %3673 = vmatprep.mubr.f32.mxu0 0.0
    %3674 = vmatmul.mubr.f32.gmra.mxu0 %v3366
    %v3675 = vpop.f32.mrf.mxu0
    %v3676 = vadd.f32 0.0, %v3675
    %v3677 = vpop.f32.mrf.mxu0
    %v3678 = vadd.f32 0.0, %v3677
    %3679 = vmatprep.mubr.f32.mxu0 0.0
    %3680 = vmatmul.mubr.f32.gmra.mxu0 %v3369
    %v3681 = vpop.f32.mrf.mxu0
    %v3682 = vadd.f32 0.0, %v3681
    %v3683 = vpop.f32.mrf.mxu0
    %v3684 = vadd.f32 0.0, %v3683
    %3685 = vmatprep.mubr.f32.mxu0 0.0
    %3686 = vmatmul.mubr.f32.gmra.mxu0 %v3372
    %v3687 = vpop.f32.mrf.mxu0
    %v3688 = vadd.f32 0.0, %v3687
    %v3689 = vpop.f32.mrf.mxu0
    %v3690 = vadd.f32 0.0, %v3689
    %3691 = vmatprep.mubr.f32.mxu0 0.0
    %3692 = vmatmul.mubr.f32.gmra.mxu0 %v3375
    %v3693 = vpop.f32.mrf.mxu0
    %v3694 = vadd.f32 0.0, %v3693
    %v3695 = vpop.f32.mrf.mxu0
    %v3696 = vadd.f32 0.0, %v3695
    %3697 = vdwg.mxu0
    %3698 = vmatprep.subr.mxu0 0.0
    %3699 = vmatpush1.msra.mxu0 0.0
    %3700 = vmatprep.subr.mxu0 0.0
    %3701 = vmatpush1.msra.mxu0 0.0
    %3702 = vmatprep.subr.mxu0 0.0
    %3703 = vmatpush1.msra.mxu0 0.0
    %3704 = vmatprep.subr.mxu0 0.0
    %3705 = vmatpush1.msra.mxu0 0.0
    %3706 = vmatprep.subr.mxu0 0.0
    %3707 = vmatpush1.msra.mxu0 0.0
    %3708 = vmatprep.subr.mxu0 0.0
    %3709 = vmatpush1.msra.mxu0 0.0
    %3710 = vmatprep.subr.mxu0 0.0
    %3711 = vmatpush1.msra.mxu0 0.0
    %3712 = vmatprep.subr.mxu0 0.0
    %3713 = vmatpush1.msra.mxu0 0.0
    %3714 = vmatprep.subr.mxu0 0.0
    %3715 = vmatpush1.msra.mxu0 0.0
    %3716 = vmatprep.subr.mxu0 0.0
    %3717 = vmatpush1.msra.mxu0 0.0
    %3718 = vmatprep.subr.mxu0 0.0
    %3719 = vmatpush1.msra.mxu0 0.0
    %3720 = vmatprep.subr.mxu0 0.0
    %3721 = vmatpush1.msra.mxu0 0.0
    %3722 = vmatprep.subr.mxu0 %v375
    %3723 = vmatpush1.msra.mxu0 %v374
    %3724 = vmatprep.subr.mxu0 %v373
    %3725 = vmatpush1.msra.mxu0 %v372
    %3726 = vmatprep.subr.mxu0 %v371
    %3727 = vmatpush1.msra.mxu0 %v370
    %3728 = vmatprep.subr.mxu0 %v369
    %3729 = vmatpush1.msra.mxu0 %v368
    %3730 = vmatprep.subr.mxu0 0.0
    %3731 = vmatpush2.msra.mxu0 0.0
    %3732 = vmatprep.subr.mxu0 0.0
    %3733 = vmatpush2.msra.mxu0 0.0
    %3734 = vmatprep.subr.mxu0 0.0
    %3735 = vmatpush2.msra.mxu0 0.0
    %3736 = vmatprep.subr.mxu0 0.0
    %3737 = vmatpush2.msra.mxu0 0.0
    %3738 = vmatprep.subr.mxu0 0.0
    %3739 = vmatpush2.msra.mxu0 0.0
    %3740 = vmatprep.subr.mxu0 0.0
    %3741 = vmatpush2.msra.mxu0 0.0
    %3742 = vmatprep.subr.mxu0 0.0
    %3743 = vmatpush2.msra.mxu0 0.0
    %3744 = vmatprep.subr.mxu0 0.0
    %3745 = vmatpush2.msra.mxu0 0.0
    %3746 = vmatprep.subr.mxu0 0.0
    %3747 = vmatpush2.msra.mxu0 0.0
    %3748 = vmatprep.subr.mxu0 0.0
    %3749 = vmatpush2.msra.mxu0 0.0
    %3750 = vmatprep.subr.mxu0 0.0
    %3751 = vmatpush2.msra.mxu0 0.0
    %3752 = vmatprep.subr.mxu0 0.0
    %3753 = vmatpush2.msra.mxu0 0.0
    %3754 = vmatprep.subr.mxu0 0.0
    %3755 = vmatpush2.msra.mxu0 0.0
    %3756 = vmatprep.subr.mxu0 0.0
    %3757 = vmatpush2.msra.mxu0 0.0
    %3758 = vmatprep.subr.mxu0 0.0
    %3759 = vmatpush2.msra.mxu0 0.0
    %3760 = vmatprep.subr.mxu0 0.0
    %3761 = vmatpush2.msra.mxu0 0.0
    %3762 = vmatprep.mubr.f32.mxu0 0.0
    %3763 = vmatmul.mubr.f32.gmra.mxu0 %v3473
    %v3764 = vpop.f32.mrf.mxu0
    %v3765 = vadd.f32 %v3670, %v3764
    %v3766 = vpop.f32.mrf.mxu0
    %v3767 = vadd.f32 %v3672, %v3766
    %3768 = vmatprep.mubr.f32.mxu0 0.0
    %3769 = vmatmul.mubr.f32.gmra.mxu0 %v3476
    %v3770 = vpop.f32.mrf.mxu0
    %v3771 = vadd.f32 %v3676, %v3770
    %v3772 = vpop.f32.mrf.mxu0
    %v3773 = vadd.f32 %v3678, %v3772
    %3774 = vmatprep.mubr.f32.mxu0 0.0
    %3775 = vmatmul.mubr.f32.gmra.mxu0 %v3479
    %v3776 = vpop.f32.mrf.mxu0
    %v3777 = vadd.f32 %v3682, %v3776
    %v3778 = vpop.f32.mrf.mxu0
    %v3779 = vadd.f32 %v3684, %v3778
    %3780 = vmatprep.mubr.f32.mxu0 0.0
    %3781 = vmatmul.mubr.f32.gmra.mxu0 %v3482
    %v3782 = vpop.f32.mrf.mxu0
    %v3783 = vadd.f32 %v3688, %v3782
    %v3784 = vpop.f32.mrf.mxu0
    %v3785 = vadd.f32 %v3690, %v3784
    %3786 = vmatprep.mubr.f32.mxu0 0.0
    %3787 = vmatmul.mubr.f32.gmra.mxu0 %v3485
    %v3788 = vpop.f32.mrf.mxu0
    %v3789 = vadd.f32 %v3694, %v3788
    %v3790 = vpop.f32.mrf.mxu0
    %v3791 = vadd.f32 %v3696, %v3790
    %3792 = vdwg.mxu0
    %v3793 = vadd.f32 %v3593, %v3789
    %v3794 = vadd.f32 %v3594, %v3791
    %3795 = vmatprep.subr.mxu0 0.0
    %3796 = vmatpush1.msra.mxu0 0.0
    %3797 = vmatprep.subr.mxu0 0.0
    %3798 = vmatpush1.msra.mxu0 0.0
    %3799 = vmatprep.subr.mxu0 0.0
    %3800 = vmatpush1.msra.mxu0 0.0
    %3801 = vmatprep.subr.mxu0 0.0
    %3802 = vmatpush1.msra.mxu0 0.0
    %3803 = vmatprep.subr.mxu0 0.0
    %3804 = vmatpush1.msra.mxu0 0.0
    %3805 = vmatprep.subr.mxu0 0.0
    %3806 = vmatpush1.msra.mxu0 0.0
    %3807 = vmatprep.subr.mxu0 0.0
    %3808 = vmatpush1.msra.mxu0 0.0
    %3809 = vmatprep.subr.mxu0 0.0
    %3810 = vmatpush1.msra.mxu0 0.0
    %3811 = vmatprep.subr.mxu0 %v399
    %3812 = vmatpush1.msra.mxu0 %v398
    %3813 = vmatprep.subr.mxu0 %v397
    %3814 = vmatpush1.msra.mxu0 %v396
    %3815 = vmatprep.subr.mxu0 %v395
    %3816 = vmatpush1.msra.mxu0 %v394
    %3817 = vmatprep.subr.mxu0 %v393
    %3818 = vmatpush1.msra.mxu0 %v392
    %3819 = vmatprep.subr.mxu0 %v391
    %3820 = vmatpush1.msra.mxu0 %v390
    %3821 = vmatprep.subr.mxu0 %v389
    %3822 = vmatpush1.msra.mxu0 %v388
    %3823 = vmatprep.subr.mxu0 %v387
    %3824 = vmatpush1.msra.mxu0 %v386
    %3825 = vmatprep.subr.mxu0 %v385
    %3826 = vmatpush1.msra.mxu0 %v384
    %3827 = vmatprep.subr.mxu0 0.0
    %3828 = vmatpush2.msra.mxu0 0.0
    %3829 = vmatprep.subr.mxu0 0.0
    %3830 = vmatpush2.msra.mxu0 0.0
    %3831 = vmatprep.subr.mxu0 0.0
    %3832 = vmatpush2.msra.mxu0 0.0
    %3833 = vmatprep.subr.mxu0 0.0
    %3834 = vmatpush2.msra.mxu0 0.0
    %3835 = vmatprep.subr.mxu0 0.0
    %3836 = vmatpush2.msra.mxu0 0.0
    %3837 = vmatprep.subr.mxu0 0.0
    %3838 = vmatpush2.msra.mxu0 0.0
    %3839 = vmatprep.subr.mxu0 0.0
    %3840 = vmatpush2.msra.mxu0 0.0
    %3841 = vmatprep.subr.mxu0 0.0
    %3842 = vmatpush2.msra.mxu0 0.0
    %3843 = vmatprep.subr.mxu0 0.0
    %3844 = vmatpush2.msra.mxu0 0.0
    %3845 = vmatprep.subr.mxu0 0.0
    %3846 = vmatpush2.msra.mxu0 0.0
    %3847 = vmatprep.subr.mxu0 0.0
    %3848 = vmatpush2.msra.mxu0 0.0
    %3849 = vmatprep.subr.mxu0 0.0
    %3850 = vmatpush2.msra.mxu0 0.0
    %3851 = vmatprep.subr.mxu0 0.0
    %3852 = vmatpush2.msra.mxu0 0.0
    %3853 = vmatprep.subr.mxu0 0.0
    %3854 = vmatpush2.msra.mxu0 0.0
    %3855 = vmatprep.subr.mxu0 0.0
    %3856 = vmatpush2.msra.mxu0 0.0
    %3857 = vmatprep.subr.mxu0 0.0
    %3858 = vmatpush2.msra.mxu0 0.0
    %3859 = vmatprep.mubr.f32.mxu0 0.0
    %3860 = vmatmul.mubr.f32.gmra.mxu0 %v2814
    %v3861 = vpop.f32.mrf.mxu0
    %v3862 = vadd.f32 0.0, %v3861
    %v3863 = vpop.f32.mrf.mxu0
    %v3864 = vadd.f32 0.0, %v3863
    %3865 = vdwg.mxu0
    %v3866 = vadd.f32 %v3793, %v3862
    %v3867 = vadd.f32 %v3794, %v3864
    %v3868 = vxor.u32 %v3866, 2147483648
    %v3869 = vmul.f32 %v3868, 1.442695
    %v3870 = vpow.pop %v3869
    %v3871 = vadd.f32 %v3870, 1.0
    %v3872 = vrcp.pop %v3871
    %v3873 = vmul.f32 1.0, %v3872
    %v3874 = vtanh.pop %v3867
    %v3875 = vxor.u32 %v3867, 2147483648
    %v3876 = vmul.f32 %v3875, 1.442695
    %v3877 = vpow.pop %v3876
    %v3878 = vadd.f32 %v3877, 1.0
    %v3879 = vrcp.pop %v3878
    %v3880 = vmul.f32 1.0, %v3879
    %v3881 = vmul.f32 %v3873, 0.0
    %v3882 = vmul.f32 %v3873, %v3874
    %3884 = vrot.lane.b32.xlu0 %v3882, 64
    %v3885 = vpop.permute.xlu0 %3884
    %v3887 = vadd.f32 %v3881, %v3885
    %v3888 = vtanh.pop %v3887
    %v3889 = vmul.f32 %v3880, %v3888
    %v3890 = vadd.f32 %v3595, %v3783
    %v3891 = vadd.f32 %v3596, %v3785
    %3893 = vrot.lane.b32.xlu0 %v3889, 64
    %v3894 = vpop.permute.xlu0 %3893
    %v3895 = vsel %vm2813, %v3894, 0
    %3897 = vmatprep.subr.mxu0 0.0
    %3898 = vmatpush1.msra.mxu0 0.0
    %3899 = vmatprep.subr.mxu0 0.0
    %3900 = vmatpush1.msra.mxu0 0.0
    %3901 = vmatprep.subr.mxu0 0.0
    %3902 = vmatpush1.msra.mxu0 0.0
    %3903 = vmatprep.subr.mxu0 0.0
    %3904 = vmatpush1.msra.mxu0 0.0
    %3905 = vmatprep.subr.mxu0 0.0
    %3906 = vmatpush1.msra.mxu0 0.0
    %3907 = vmatprep.subr.mxu0 0.0
    %3908 = vmatpush1.msra.mxu0 0.0
    %3909 = vmatprep.subr.mxu0 0.0
    %3910 = vmatpush1.msra.mxu0 0.0
    %3911 = vmatprep.subr.mxu0 0.0
    %3912 = vmatpush1.msra.mxu0 0.0
    %3913 = vmatprep.subr.mxu0 %v399
    %3914 = vmatpush1.msra.mxu0 %v398
    %3915 = vmatprep.subr.mxu0 %v397
    %3916 = vmatpush1.msra.mxu0 %v396
    %3917 = vmatprep.subr.mxu0 %v395
    %3918 = vmatpush1.msra.mxu0 %v394
    %3919 = vmatprep.subr.mxu0 %v393
    %3920 = vmatpush1.msra.mxu0 %v392
    %3921 = vmatprep.subr.mxu0 %v391
    %3922 = vmatpush1.msra.mxu0 %v390
    %3923 = vmatprep.subr.mxu0 %v389
    %3924 = vmatpush1.msra.mxu0 %v388
    %3925 = vmatprep.subr.mxu0 %v387
    %3926 = vmatpush1.msra.mxu0 %v386
    %3927 = vmatprep.subr.mxu0 %v385
    %3928 = vmatpush1.msra.mxu0 %v384
    %3929 = vmatprep.subr.mxu0 0.0
    %3930 = vmatpush2.msra.mxu0 0.0
    %3931 = vmatprep.subr.mxu0 0.0
    %3932 = vmatpush2.msra.mxu0 0.0
    %3933 = vmatprep.subr.mxu0 0.0
    %3934 = vmatpush2.msra.mxu0 0.0
    %3935 = vmatprep.subr.mxu0 0.0
    %3936 = vmatpush2.msra.mxu0 0.0
    %3937 = vmatprep.subr.mxu0 0.0
    %3938 = vmatpush2.msra.mxu0 0.0
    %3939 = vmatprep.subr.mxu0 0.0
    %3940 = vmatpush2.msra.mxu0 0.0
    %3941 = vmatprep.subr.mxu0 0.0
    %3942 = vmatpush2.msra.mxu0 0.0
    %3943 = vmatprep.subr.mxu0 0.0
    %3944 = vmatpush2.msra.mxu0 0.0
    %3945 = vmatprep.subr.mxu0 0.0
    %3946 = vmatpush2.msra.mxu0 0.0
    %3947 = vmatprep.subr.mxu0 0.0
    %3948 = vmatpush2.msra.mxu0 0.0
    %3949 = vmatprep.subr.mxu0 0.0
    %3950 = vmatpush2.msra.mxu0 0.0
    %3951 = vmatprep.subr.mxu0 0.0
    %3952 = vmatpush2.msra.mxu0 0.0
    %3953 = vmatprep.subr.mxu0 0.0
    %3954 = vmatpush2.msra.mxu0 0.0
    %3955 = vmatprep.subr.mxu0 0.0
    %3956 = vmatpush2.msra.mxu0 0.0
    %3957 = vmatprep.subr.mxu0 0.0
    %3958 = vmatpush2.msra.mxu0 0.0
    %3959 = vmatprep.subr.mxu0 0.0
    %3960 = vmatpush2.msra.mxu0 0.0
    %3961 = vmatprep.mubr.f32.mxu0 0.0
    %3962 = vmatmul.mubr.f32.gmra.mxu0 %v3895
    %v3963 = vpop.f32.mrf.mxu0
    %v3964 = vadd.f32 0.0, %v3963
    %v3965 = vpop.f32.mrf.mxu0
    %v3966 = vadd.f32 0.0, %v3965
    %3967 = vdwg.mxu0
    %v3968 = vadd.f32 %v3890, %v3964
    %v3969 = vadd.f32 %v3891, %v3966
    %v3970 = vxor.u32 %v3968, 2147483648
    %v3971 = vmul.f32 %v3970, 1.442695
    %v3972 = vpow.pop %v3971
    %v3973 = vadd.f32 %v3972, 1.0
    %v3974 = vrcp.pop %v3973
    %v3975 = vmul.f32 1.0, %v3974
    %v3976 = vtanh.pop %v3969
    %v3977 = vxor.u32 %v3969, 2147483648
    %v3978 = vmul.f32 %v3977, 1.442695
    %v3979 = vpow.pop %v3978
    %v3980 = vadd.f32 %v3979, 1.0
    %v3981 = vrcp.pop %v3980
    %v3982 = vmul.f32 1.0, %v3981
    %v3983 = vmul.f32 %v3975, %v3887
    %v3984 = vmul.f32 %v3975, %v3976
    %3986 = vrot.lane.b32.xlu0 %v3984, 64
    %v3987 = vpop.permute.xlu0 %3986
    %v3989 = vadd.f32 %v3983, %v3987
    %v3990 = vtanh.pop %v3989
    %v3991 = vmul.f32 %v3982, %v3990
    %v3992 = vadd.f32 %v3597, %v3777
    %v3993 = vadd.f32 %v3598, %v3779
    %3995 = vrot.lane.b32.xlu0 %v3991, 64
    %v3996 = vpop.permute.xlu0 %3995
    %v3997 = vsel %vm2813, %v3996, 0
    %3999 = vmatprep.subr.mxu0 0.0
    %4000 = vmatpush1.msra.mxu0 0.0
    %4001 = vmatprep.subr.mxu0 0.0
    %4002 = vmatpush1.msra.mxu0 0.0
    %4003 = vmatprep.subr.mxu0 0.0
    %4004 = vmatpush1.msra.mxu0 0.0
    %4005 = vmatprep.subr.mxu0 0.0
    %4006 = vmatpush1.msra.mxu0 0.0
    %4007 = vmatprep.subr.mxu0 0.0
    %4008 = vmatpush1.msra.mxu0 0.0
    %4009 = vmatprep.subr.mxu0 0.0
    %4010 = vmatpush1.msra.mxu0 0.0
    %4011 = vmatprep.subr.mxu0 0.0
    %4012 = vmatpush1.msra.mxu0 0.0
    %4013 = vmatprep.subr.mxu0 0.0
    %4014 = vmatpush1.msra.mxu0 0.0
    %4015 = vmatprep.subr.mxu0 %v399
    %4016 = vmatpush1.msra.mxu0 %v398
    %4017 = vmatprep.subr.mxu0 %v397
    %4018 = vmatpush1.msra.mxu0 %v396
    %4019 = vmatprep.subr.mxu0 %v395
    %4020 = vmatpush1.msra.mxu0 %v394
    %4021 = vmatprep.subr.mxu0 %v393
    %4022 = vmatpush1.msra.mxu0 %v392
    %4023 = vmatprep.subr.mxu0 %v391
    %4024 = vmatpush1.msra.mxu0 %v390
    %4025 = vmatprep.subr.mxu0 %v389
    %4026 = vmatpush1.msra.mxu0 %v388
    %4027 = vmatprep.subr.mxu0 %v387
    %4028 = vmatpush1.msra.mxu0 %v386
    %4029 = vmatprep.subr.mxu0 %v385
    %4030 = vmatpush1.msra.mxu0 %v384
    %4031 = vmatprep.subr.mxu0 0.0
    %4032 = vmatpush2.msra.mxu0 0.0
    %4033 = vmatprep.subr.mxu0 0.0
    %4034 = vmatpush2.msra.mxu0 0.0
    %4035 = vmatprep.subr.mxu0 0.0
    %4036 = vmatpush2.msra.mxu0 0.0
    %4037 = vmatprep.subr.mxu0 0.0
    %4038 = vmatpush2.msra.mxu0 0.0
    %4039 = vmatprep.subr.mxu0 0.0
    %4040 = vmatpush2.msra.mxu0 0.0
    %4041 = vmatprep.subr.mxu0 0.0
    %4042 = vmatpush2.msra.mxu0 0.0
    %4043 = vmatprep.subr.mxu0 0.0
    %4044 = vmatpush2.msra.mxu0 0.0
    %4045 = vmatprep.subr.mxu0 0.0
    %4046 = vmatpush2.msra.mxu0 0.0
    %4047 = vmatprep.subr.mxu0 0.0
    %4048 = vmatpush2.msra.mxu0 0.0
    %4049 = vmatprep.subr.mxu0 0.0
    %4050 = vmatpush2.msra.mxu0 0.0
    %4051 = vmatprep.subr.mxu0 0.0
    %4052 = vmatpush2.msra.mxu0 0.0
    %4053 = vmatprep.subr.mxu0 0.0
    %4054 = vmatpush2.msra.mxu0 0.0
    %4055 = vmatprep.subr.mxu0 0.0
    %4056 = vmatpush2.msra.mxu0 0.0
    %4057 = vmatprep.subr.mxu0 0.0
    %4058 = vmatpush2.msra.mxu0 0.0
    %4059 = vmatprep.subr.mxu0 0.0
    %4060 = vmatpush2.msra.mxu0 0.0
    %4061 = vmatprep.subr.mxu0 0.0
    %4062 = vmatpush2.msra.mxu0 0.0
    %4063 = vmatprep.mubr.f32.mxu0 0.0
    %4064 = vmatmul.mubr.f32.gmra.mxu0 %v3997
    %v4065 = vpop.f32.mrf.mxu0
    %v4066 = vadd.f32 0.0, %v4065
    %v4067 = vpop.f32.mrf.mxu0
    %v4068 = vadd.f32 0.0, %v4067
    %4069 = vdwg.mxu0
    %v4070 = vadd.f32 %v3992, %v4066
    %v4071 = vadd.f32 %v3993, %v4068
    %v4072 = vxor.u32 %v4070, 2147483648
    %v4073 = vmul.f32 %v4072, 1.442695
    %v4074 = vpow.pop %v4073
    %v4075 = vadd.f32 %v4074, 1.0
    %v4076 = vrcp.pop %v4075
    %v4077 = vmul.f32 1.0, %v4076
    %v4078 = vtanh.pop %v4071
    %v4079 = vxor.u32 %v4071, 2147483648
    %v4080 = vmul.f32 %v4079, 1.442695
    %v4081 = vpow.pop %v4080
    %v4082 = vadd.f32 %v4081, 1.0
    %v4083 = vrcp.pop %v4082
    %v4084 = vmul.f32 1.0, %v4083
    %v4085 = vmul.f32 %v4077, %v3989
    %v4086 = vmul.f32 %v4077, %v4078
    %4088 = vrot.lane.b32.xlu0 %v4086, 64
    %v4089 = vpop.permute.xlu0 %4088
    %v4091 = vadd.f32 %v4085, %v4089
    %v4092 = vtanh.pop %v4091
    %v4093 = vmul.f32 %v4084, %v4092
    %v4094 = vadd.f32 %v3599, %v3771
    %v4095 = vadd.f32 %v3600, %v3773
    %4097 = vrot.lane.b32.xlu0 %v4093, 64
    %v4098 = vpop.permute.xlu0 %4097
    %v4099 = vsel %vm2813, %v4098, 0
    %4101 = vmatprep.subr.mxu0 0.0
    %4102 = vmatpush1.msra.mxu0 0.0
    %4103 = vmatprep.subr.mxu0 0.0
    %4104 = vmatpush1.msra.mxu0 0.0
    %4105 = vmatprep.subr.mxu0 0.0
    %4106 = vmatpush1.msra.mxu0 0.0
    %4107 = vmatprep.subr.mxu0 0.0
    %4108 = vmatpush1.msra.mxu0 0.0
    %4109 = vmatprep.subr.mxu0 0.0
    %4110 = vmatpush1.msra.mxu0 0.0
    %4111 = vmatprep.subr.mxu0 0.0
    %4112 = vmatpush1.msra.mxu0 0.0
    %4113 = vmatprep.subr.mxu0 0.0
    %4114 = vmatpush1.msra.mxu0 0.0
    %4115 = vmatprep.subr.mxu0 0.0
    %4116 = vmatpush1.msra.mxu0 0.0
    %4117 = vmatprep.subr.mxu0 %v399
    %4118 = vmatpush1.msra.mxu0 %v398
    %4119 = vmatprep.subr.mxu0 %v397
    %4120 = vmatpush1.msra.mxu0 %v396
    %4121 = vmatprep.subr.mxu0 %v395
    %4122 = vmatpush1.msra.mxu0 %v394
    %4123 = vmatprep.subr.mxu0 %v393
    %4124 = vmatpush1.msra.mxu0 %v392
    %4125 = vmatprep.subr.mxu0 %v391
    %4126 = vmatpush1.msra.mxu0 %v390
    %4127 = vmatprep.subr.mxu0 %v389
    %4128 = vmatpush1.msra.mxu0 %v388
    %4129 = vmatprep.subr.mxu0 %v387
    %4130 = vmatpush1.msra.mxu0 %v386
    %4131 = vmatprep.subr.mxu0 %v385
    %4132 = vmatpush1.msra.mxu0 %v384
    %4133 = vmatprep.subr.mxu0 0.0
    %4134 = vmatpush2.msra.mxu0 0.0
    %4135 = vmatprep.subr.mxu0 0.0
    %4136 = vmatpush2.msra.mxu0 0.0
    %4137 = vmatprep.subr.mxu0 0.0
    %4138 = vmatpush2.msra.mxu0 0.0
    %4139 = vmatprep.subr.mxu0 0.0
    %4140 = vmatpush2.msra.mxu0 0.0
    %4141 = vmatprep.subr.mxu0 0.0
    %4142 = vmatpush2.msra.mxu0 0.0
    %4143 = vmatprep.subr.mxu0 0.0
    %4144 = vmatpush2.msra.mxu0 0.0
    %4145 = vmatprep.subr.mxu0 0.0
    %4146 = vmatpush2.msra.mxu0 0.0
    %4147 = vmatprep.subr.mxu0 0.0
    %4148 = vmatpush2.msra.mxu0 0.0
    %4149 = vmatprep.subr.mxu0 0.0
    %4150 = vmatpush2.msra.mxu0 0.0
    %4151 = vmatprep.subr.mxu0 0.0
    %4152 = vmatpush2.msra.mxu0 0.0
    %4153 = vmatprep.subr.mxu0 0.0
    %4154 = vmatpush2.msra.mxu0 0.0
    %4155 = vmatprep.subr.mxu0 0.0
    %4156 = vmatpush2.msra.mxu0 0.0
    %4157 = vmatprep.subr.mxu0 0.0
    %4158 = vmatpush2.msra.mxu0 0.0
    %4159 = vmatprep.subr.mxu0 0.0
    %4160 = vmatpush2.msra.mxu0 0.0
    %4161 = vmatprep.subr.mxu0 0.0
    %4162 = vmatpush2.msra.mxu0 0.0
    %4163 = vmatprep.subr.mxu0 0.0
    %4164 = vmatpush2.msra.mxu0 0.0
    %4165 = vmatprep.mubr.f32.mxu0 0.0
    %4166 = vmatmul.mubr.f32.gmra.mxu0 %v4099
    %v4167 = vpop.f32.mrf.mxu0
    %v4168 = vadd.f32 0.0, %v4167
    %v4169 = vpop.f32.mrf.mxu0
    %v4170 = vadd.f32 0.0, %v4169
    %4171 = vdwg.mxu0
    %v4172 = vadd.f32 %v4094, %v4168
    %v4173 = vadd.f32 %v4095, %v4170
    %v4174 = vxor.u32 %v4172, 2147483648
    %v4175 = vmul.f32 %v4174, 1.442695
    %v4176 = vpow.pop %v4175
    %v4177 = vadd.f32 %v4176, 1.0
    %v4178 = vrcp.pop %v4177
    %v4179 = vmul.f32 1.0, %v4178
    %v4180 = vtanh.pop %v4173
    %v4181 = vxor.u32 %v4173, 2147483648
    %v4182 = vmul.f32 %v4181, 1.442695
    %v4183 = vpow.pop %v4182
    %v4184 = vadd.f32 %v4183, 1.0
    %v4185 = vrcp.pop %v4184
    %v4186 = vmul.f32 1.0, %v4185
    %v4187 = vmul.f32 %v4179, %v4091
    %v4188 = vmul.f32 %v4179, %v4180
    %4190 = vrot.lane.b32.xlu0 %v4188, 64
    %v4191 = vpop.permute.xlu0 %4190
    %v4193 = vadd.f32 %v4187, %v4191
    %v4194 = vtanh.pop %v4193
    %v4195 = vmul.f32 %v4186, %v4194
    %v4196 = vadd.f32 %v3601, %v3765
    %v4197 = vadd.f32 %v3602, %v3767
    %4199 = vrot.lane.b32.xlu0 %v4195, 64
    %v4200 = vpop.permute.xlu0 %4199
    %v4201 = vsel %vm2813, %v4200, 0
    %4203 = vmatprep.subr.mxu0 0.0
    %4204 = vmatpush1.msra.mxu0 0.0
    %4205 = vmatprep.subr.mxu0 0.0
    %4206 = vmatpush1.msra.mxu0 0.0
    %4207 = vmatprep.subr.mxu0 0.0
    %4208 = vmatpush1.msra.mxu0 0.0
    %4209 = vmatprep.subr.mxu0 0.0
    %4210 = vmatpush1.msra.mxu0 0.0
    %4211 = vmatprep.subr.mxu0 0.0
    %4212 = vmatpush1.msra.mxu0 0.0
    %4213 = vmatprep.subr.mxu0 0.0
    %4214 = vmatpush1.msra.mxu0 0.0
    %4215 = vmatprep.subr.mxu0 0.0
    %4216 = vmatpush1.msra.mxu0 0.0
    %4217 = vmatprep.subr.mxu0 0.0
    %4218 = vmatpush1.msra.mxu0 0.0
    %4219 = vmatprep.subr.mxu0 %v399
    %4220 = vmatpush1.msra.mxu0 %v398
    %4221 = vmatprep.subr.mxu0 %v397
    %4222 = vmatpush1.msra.mxu0 %v396
    %4223 = vmatprep.subr.mxu0 %v395
    %4224 = vmatpush1.msra.mxu0 %v394
    %4225 = vmatprep.subr.mxu0 %v393
    %4226 = vmatpush1.msra.mxu0 %v392
    %4227 = vmatprep.subr.mxu0 %v391
    %4228 = vmatpush1.msra.mxu0 %v390
    %4229 = vmatprep.subr.mxu0 %v389
    %4230 = vmatpush1.msra.mxu0 %v388
    %4231 = vmatprep.subr.mxu0 %v387
    %4232 = vmatpush1.msra.mxu0 %v386
    %4233 = vmatprep.subr.mxu0 %v385
    %4234 = vmatpush1.msra.mxu0 %v384
    %4235 = vmatprep.subr.mxu0 0.0
    %4236 = vmatpush2.msra.mxu0 0.0
    %4237 = vmatprep.subr.mxu0 0.0
    %4238 = vmatpush2.msra.mxu0 0.0
    %4239 = vmatprep.subr.mxu0 0.0
    %4240 = vmatpush2.msra.mxu0 0.0
    %4241 = vmatprep.subr.mxu0 0.0
    %4242 = vmatpush2.msra.mxu0 0.0
    %4243 = vmatprep.subr.mxu0 0.0
    %4244 = vmatpush2.msra.mxu0 0.0
    %4245 = vmatprep.subr.mxu0 0.0
    %4246 = vmatpush2.msra.mxu0 0.0
    %4247 = vmatprep.subr.mxu0 0.0
    %4248 = vmatpush2.msra.mxu0 0.0
    %4249 = vmatprep.subr.mxu0 0.0
    %4250 = vmatpush2.msra.mxu0 0.0
    %4251 = vmatprep.subr.mxu0 0.0
    %4252 = vmatpush2.msra.mxu0 0.0
    %4253 = vmatprep.subr.mxu0 0.0
    %4254 = vmatpush2.msra.mxu0 0.0
    %4255 = vmatprep.subr.mxu0 0.0
    %4256 = vmatpush2.msra.mxu0 0.0
    %4257 = vmatprep.subr.mxu0 0.0
    %4258 = vmatpush2.msra.mxu0 0.0
    %4259 = vmatprep.subr.mxu0 0.0
    %4260 = vmatpush2.msra.mxu0 0.0
    %4261 = vmatprep.subr.mxu0 0.0
    %4262 = vmatpush2.msra.mxu0 0.0
    %4263 = vmatprep.subr.mxu0 0.0
    %4264 = vmatpush2.msra.mxu0 0.0
    %4265 = vmatprep.subr.mxu0 0.0
    %4266 = vmatpush2.msra.mxu0 0.0
    %4267 = vmatprep.mubr.f32.mxu0 0.0
    %4268 = vmatmul.mubr.f32.gmra.mxu0 %v4201
    %v4269 = vpop.f32.mrf.mxu0
    %v4270 = vadd.f32 0.0, %v4269
    %v4271 = vpop.f32.mrf.mxu0
    %v4272 = vadd.f32 0.0, %v4271
    %4273 = vdwg.mxu0
    %v4274 = vadd.f32 %v4196, %v4270
    %v4275 = vadd.f32 %v4197, %v4272
    %v4276 = vxor.u32 %v4274, 2147483648
    %v4277 = vmul.f32 %v4276, 1.442695
    %v4278 = vpow.pop %v4277
    %v4279 = vadd.f32 %v4278, 1.0
    %v4280 = vrcp.pop %v4279
    %v4281 = vmul.f32 1.0, %v4280
    %v4282 = vtanh.pop %v4275
    %v4283 = vxor.u32 %v4275, 2147483648
    %v4284 = vmul.f32 %v4283, 1.442695
    %v4285 = vpow.pop %v4284
    %v4286 = vadd.f32 %v4285, 1.0
    %v4287 = vrcp.pop %v4286
    %v4288 = vmul.f32 1.0, %v4287
    %v4289 = vmul.f32 %v4281, %v4193
    %v4290 = vmul.f32 %v4281, %v4282
    %4292 = vrot.lane.b32.xlu0 %v4290, 64
    %v4293 = vpop.permute.xlu0 %4292
    %v4295 = vadd.f32 %v4289, %v4293
    %v4296 = vtanh.pop %v4295
    %v4297 = vmul.f32 %v4288, %v4296
    %v4299 = vlaneseq
    %v4300 = vshrl.u32 %v4299, 7
    %v4301 = vsub.s32 0, %v4300
    %v4302 = vrot.slane %v441, %v4301
    %v4304 = vadd.f32 %v4302, 0.0
    %v4305 = vsel %vm785, %v3894, 0
    %4307 = vmatprep.subr.mxu0 0.0
    %4308 = vmatpush1.msra.mxu0 0.0
    %4309 = vmatprep.subr.mxu0 0.0
    %4310 = vmatpush1.msra.mxu0 0.0
    %4311 = vmatprep.subr.mxu0 0.0
    %4312 = vmatpush1.msra.mxu0 0.0
    %4313 = vmatprep.subr.mxu0 0.0
    %4314 = vmatpush1.msra.mxu0 0.0
    %4315 = vmatprep.subr.mxu0 0.0
    %4316 = vmatpush1.msra.mxu0 0.0
    %4317 = vmatprep.subr.mxu0 0.0
    %4318 = vmatpush1.msra.mxu0 0.0
    %4319 = vmatprep.subr.mxu0 0.0
    %4320 = vmatpush1.msra.mxu0 0.0
    %4321 = vmatprep.subr.mxu0 0.0
    %4322 = vmatpush1.msra.mxu0 0.0
    %4323 = vmatprep.subr.mxu0 0.0
    %4324 = vmatpush1.msra.mxu0 0.0
    %4325 = vmatprep.subr.mxu0 0.0
    %4326 = vmatpush1.msra.mxu0 0.0
    %4327 = vmatprep.subr.mxu0 0.0
    %4328 = vmatpush1.msra.mxu0 0.0
    %4329 = vmatprep.subr.mxu0 0.0
    %4330 = vmatpush1.msra.mxu0 0.0
    %4331 = vmatprep.subr.mxu0 0.0
    %4332 = vmatpush1.msra.mxu0 %v404
    %4333 = vmatprep.subr.mxu0 0.0
    %4334 = vmatpush1.msra.mxu0 %v403
    %4335 = vmatprep.subr.mxu0 0.0
    %4336 = vmatpush1.msra.mxu0 %v402
    %4337 = vmatprep.subr.mxu0 0.0
    %4338 = vmatpush1.msra.mxu0 %v401
    %4339 = vmatprep.subr.mxu0 0.0
    %4340 = vmatpush2.msra.mxu0 0.0
    %4341 = vmatprep.subr.mxu0 0.0
    %4342 = vmatpush2.msra.mxu0 0.0
    %4343 = vmatprep.subr.mxu0 0.0
    %4344 = vmatpush2.msra.mxu0 0.0
    %4345 = vmatprep.subr.mxu0 0.0
    %4346 = vmatpush2.msra.mxu0 0.0
    %4347 = vmatprep.subr.mxu0 0.0
    %4348 = vmatpush2.msra.mxu0 0.0
    %4349 = vmatprep.subr.mxu0 0.0
    %4350 = vmatpush2.msra.mxu0 0.0
    %4351 = vmatprep.subr.mxu0 0.0
    %4352 = vmatpush2.msra.mxu0 0.0
    %4353 = vmatprep.subr.mxu0 0.0
    %4354 = vmatpush2.msra.mxu0 0.0
    %4355 = vmatprep.subr.mxu0 0.0
    %4356 = vmatpush2.msra.mxu0 0.0
    %4357 = vmatprep.subr.mxu0 0.0
    %4358 = vmatpush2.msra.mxu0 0.0
    %4359 = vmatprep.subr.mxu0 0.0
    %4360 = vmatpush2.msra.mxu0 0.0
    %4361 = vmatprep.subr.mxu0 0.0
    %4362 = vmatpush2.msra.mxu0 0.0
    %4363 = vmatprep.subr.mxu0 0.0
    %4364 = vmatpush2.msra.mxu0 0.0
    %4365 = vmatprep.subr.mxu0 0.0
    %4366 = vmatpush2.msra.mxu0 0.0
    %4367 = vmatprep.subr.mxu0 0.0
    %4368 = vmatpush2.msra.mxu0 0.0
    %4369 = vmatprep.subr.mxu0 0.0
    %4370 = vmatpush2.msra.mxu0 0.0
    %4371 = vmatprep.mubr.f32.mxu0 0.0
    %4372 = vmatmul.mubr.f32.gmra.mxu0 %v4305
    %v4373 = vpop.f32.mrf.mxu0
    %v4374 = vadd.f32 0.0, %v4373
    %v4375 = vpop.f32.mrf.mxu0
    %4376 = vdwg.mxu0
    %v4377 = vadd.f32 %v4304, %v4374
    %4379 = vrot.lane.b32.xlu0 %v4297, 32
    %v4380 = vpop.permute.xlu0 %4379
    %v4381 = vsel %vm785, %v4380, 0
    %4383 = vmatprep.subr.mxu0 0.0
    %4384 = vmatpush1.msra.mxu0 0.0
    %4385 = vmatprep.subr.mxu0 0.0
    %4386 = vmatpush1.msra.mxu0 0.0
    %4387 = vmatprep.subr.mxu0 0.0
    %4388 = vmatpush1.msra.mxu0 0.0
    %4389 = vmatprep.subr.mxu0 0.0
    %4390 = vmatpush1.msra.mxu0 0.0
    %4391 = vmatprep.subr.mxu0 0.0
    %4392 = vmatpush1.msra.mxu0 0.0
    %4393 = vmatprep.subr.mxu0 0.0
    %4394 = vmatpush1.msra.mxu0 0.0
    %4395 = vmatprep.subr.mxu0 0.0
    %4396 = vmatpush1.msra.mxu0 0.0
    %4397 = vmatprep.subr.mxu0 0.0
    %4398 = vmatpush1.msra.mxu0 0.0
    %4399 = vmatprep.subr.mxu0 0.0
    %4400 = vmatpush1.msra.mxu0 0.0
    %4401 = vmatprep.subr.mxu0 0.0
    %4402 = vmatpush1.msra.mxu0 0.0
    %4403 = vmatprep.subr.mxu0 0.0
    %4404 = vmatpush1.msra.mxu0 0.0
    %4405 = vmatprep.subr.mxu0 0.0
    %4406 = vmatpush1.msra.mxu0 0.0
    %4407 = vmatprep.subr.mxu0 0.0
    %4408 = vmatpush1.msra.mxu0 %v408
    %4409 = vmatprep.subr.mxu0 0.0
    %4410 = vmatpush1.msra.mxu0 %v407
    %4411 = vmatprep.subr.mxu0 0.0
    %4412 = vmatpush1.msra.mxu0 %v406
    %4413 = vmatprep.subr.mxu0 0.0
    %4414 = vmatpush1.msra.mxu0 %v405
    %4415 = vmatprep.subr.mxu0 0.0
    %4416 = vmatpush2.msra.mxu0 0.0
    %4417 = vmatprep.subr.mxu0 0.0
    %4418 = vmatpush2.msra.mxu0 0.0
    %4419 = vmatprep.subr.mxu0 0.0
    %4420 = vmatpush2.msra.mxu0 0.0
    %4421 = vmatprep.subr.mxu0 0.0
    %4422 = vmatpush2.msra.mxu0 0.0
    %4423 = vmatprep.subr.mxu0 0.0
    %4424 = vmatpush2.msra.mxu0 0.0
    %4425 = vmatprep.subr.mxu0 0.0
    %4426 = vmatpush2.msra.mxu0 0.0
    %4427 = vmatprep.subr.mxu0 0.0
    %4428 = vmatpush2.msra.mxu0 0.0
    %4429 = vmatprep.subr.mxu0 0.0
    %4430 = vmatpush2.msra.mxu0 0.0
    %4431 = vmatprep.subr.mxu0 0.0
    %4432 = vmatpush2.msra.mxu0 0.0
    %4433 = vmatprep.subr.mxu0 0.0
    %4434 = vmatpush2.msra.mxu0 0.0
    %4435 = vmatprep.subr.mxu0 0.0
    %4436 = vmatpush2.msra.mxu0 0.0
    %4437 = vmatprep.subr.mxu0 0.0
    %4438 = vmatpush2.msra.mxu0 0.0
    %4439 = vmatprep.subr.mxu0 0.0
    %4440 = vmatpush2.msra.mxu0 0.0
    %4441 = vmatprep.subr.mxu0 0.0
    %4442 = vmatpush2.msra.mxu0 0.0
    %4443 = vmatprep.subr.mxu0 0.0
    %4444 = vmatpush2.msra.mxu0 0.0
    %4445 = vmatprep.subr.mxu0 0.0
    %4446 = vmatpush2.msra.mxu0 0.0
    %4447 = vmatprep.mubr.f32.mxu0 0.0
    %4448 = vmatmul.mubr.f32.gmra.mxu0 %v4381
    %v4449 = vpop.f32.mrf.mxu0
    %v4450 = vadd.f32 0.0, %v4449
    %v4451 = vpop.f32.mrf.mxu0
    %4452 = vdwg.mxu0
    %v4453 = vadd.f32 %v4377, %v4450
    %v4454 = vsel %vm785, %v3996, 0
    %4456 = vmatprep.subr.mxu0 0.0
    %4457 = vmatpush1.msra.mxu0 0.0
    %4458 = vmatprep.subr.mxu0 0.0
    %4459 = vmatpush1.msra.mxu0 0.0
    %4460 = vmatprep.subr.mxu0 0.0
    %4461 = vmatpush1.msra.mxu0 0.0
    %4462 = vmatprep.subr.mxu0 0.0
    %4463 = vmatpush1.msra.mxu0 0.0
    %4464 = vmatprep.subr.mxu0 0.0
    %4465 = vmatpush1.msra.mxu0 0.0
    %4466 = vmatprep.subr.mxu0 0.0
    %4467 = vmatpush1.msra.mxu0 0.0
    %4468 = vmatprep.subr.mxu0 0.0
    %4469 = vmatpush1.msra.mxu0 0.0
    %4470 = vmatprep.subr.mxu0 0.0
    %4471 = vmatpush1.msra.mxu0 0.0
    %4472 = vmatprep.subr.mxu0 0.0
    %4473 = vmatpush1.msra.mxu0 0.0
    %4474 = vmatprep.subr.mxu0 0.0
    %4475 = vmatpush1.msra.mxu0 0.0
    %4476 = vmatprep.subr.mxu0 0.0
    %4477 = vmatpush1.msra.mxu0 0.0
    %4478 = vmatprep.subr.mxu0 0.0
    %4479 = vmatpush1.msra.mxu0 0.0
    %4480 = vmatprep.subr.mxu0 0.0
    %4481 = vmatpush1.msra.mxu0 %v412
    %4482 = vmatprep.subr.mxu0 0.0
    %4483 = vmatpush1.msra.mxu0 %v411
    %4484 = vmatprep.subr.mxu0 0.0
    %4485 = vmatpush1.msra.mxu0 %v410
    %4486 = vmatprep.subr.mxu0 0.0
    %4487 = vmatpush1.msra.mxu0 %v409
    %4488 = vmatprep.subr.mxu0 0.0
    %4489 = vmatpush2.msra.mxu0 0.0
    %4490 = vmatprep.subr.mxu0 0.0
    %4491 = vmatpush2.msra.mxu0 0.0
    %4492 = vmatprep.subr.mxu0 0.0
    %4493 = vmatpush2.msra.mxu0 0.0
    %4494 = vmatprep.subr.mxu0 0.0
    %4495 = vmatpush2.msra.mxu0 0.0
    %4496 = vmatprep.subr.mxu0 0.0
    %4497 = vmatpush2.msra.mxu0 0.0
    %4498 = vmatprep.subr.mxu0 0.0
    %4499 = vmatpush2.msra.mxu0 0.0
    %4500 = vmatprep.subr.mxu0 0.0
    %4501 = vmatpush2.msra.mxu0 0.0
    %4502 = vmatprep.subr.mxu0 0.0
    %4503 = vmatpush2.msra.mxu0 0.0
    %4504 = vmatprep.subr.mxu0 0.0
    %4505 = vmatpush2.msra.mxu0 0.0
    %4506 = vmatprep.subr.mxu0 0.0
    %4507 = vmatpush2.msra.mxu0 0.0
    %4508 = vmatprep.subr.mxu0 0.0
    %4509 = vmatpush2.msra.mxu0 0.0
    %4510 = vmatprep.subr.mxu0 0.0
    %4511 = vmatpush2.msra.mxu0 0.0
    %4512 = vmatprep.subr.mxu0 0.0
    %4513 = vmatpush2.msra.mxu0 0.0
    %4514 = vmatprep.subr.mxu0 0.0
    %4515 = vmatpush2.msra.mxu0 0.0
    %4516 = vmatprep.subr.mxu0 0.0
    %4517 = vmatpush2.msra.mxu0 0.0
    %4518 = vmatprep.subr.mxu0 0.0
    %4519 = vmatpush2.msra.mxu0 0.0
    %4520 = vmatprep.mubr.f32.mxu0 0.0
    %4521 = vmatmul.mubr.f32.gmra.mxu0 %v4454
    %v4522 = vpop.f32.mrf.mxu0
    %v4523 = vadd.f32 0.0, %v4522
    %v4524 = vpop.f32.mrf.mxu0
    %4525 = vdwg.mxu0
    %v4526 = vadd.f32 %v4453, %v4523
    %4527 = vrot.lane.b32.xlu0 %v4195, 32
    %v4528 = vpop.permute.xlu0 %4527
    %v4529 = vsel %vm785, %v4528, 0
    %4531 = vmatprep.subr.mxu0 0.0
    %4532 = vmatpush1.msra.mxu0 0.0
    %4533 = vmatprep.subr.mxu0 0.0
    %4534 = vmatpush1.msra.mxu0 0.0
    %4535 = vmatprep.subr.mxu0 0.0
    %4536 = vmatpush1.msra.mxu0 0.0
    %4537 = vmatprep.subr.mxu0 0.0
    %4538 = vmatpush1.msra.mxu0 0.0
    %4539 = vmatprep.subr.mxu0 0.0
    %4540 = vmatpush1.msra.mxu0 0.0
    %4541 = vmatprep.subr.mxu0 0.0
    %4542 = vmatpush1.msra.mxu0 0.0
    %4543 = vmatprep.subr.mxu0 0.0
    %4544 = vmatpush1.msra.mxu0 0.0
    %4545 = vmatprep.subr.mxu0 0.0
    %4546 = vmatpush1.msra.mxu0 0.0
    %4547 = vmatprep.subr.mxu0 0.0
    %4548 = vmatpush1.msra.mxu0 0.0
    %4549 = vmatprep.subr.mxu0 0.0
    %4550 = vmatpush1.msra.mxu0 0.0
    %4551 = vmatprep.subr.mxu0 0.0
    %4552 = vmatpush1.msra.mxu0 0.0
    %4553 = vmatprep.subr.mxu0 0.0
    %4554 = vmatpush1.msra.mxu0 0.0
    %4555 = vmatprep.subr.mxu0 0.0
    %4556 = vmatpush1.msra.mxu0 %v416
    %4557 = vmatprep.subr.mxu0 0.0
    %4558 = vmatpush1.msra.mxu0 %v415
    %4559 = vmatprep.subr.mxu0 0.0
    %4560 = vmatpush1.msra.mxu0 %v414
    %4561 = vmatprep.subr.mxu0 0.0
    %4562 = vmatpush1.msra.mxu0 %v413
    %4563 = vmatprep.subr.mxu0 0.0
    %4564 = vmatpush2.msra.mxu0 0.0
    %4565 = vmatprep.subr.mxu0 0.0
    %4566 = vmatpush2.msra.mxu0 0.0
    %4567 = vmatprep.subr.mxu0 0.0
    %4568 = vmatpush2.msra.mxu0 0.0
    %4569 = vmatprep.subr.mxu0 0.0
    %4570 = vmatpush2.msra.mxu0 0.0
    %4571 = vmatprep.subr.mxu0 0.0
    %4572 = vmatpush2.msra.mxu0 0.0
    %4573 = vmatprep.subr.mxu0 0.0
    %4574 = vmatpush2.msra.mxu0 0.0
    %4575 = vmatprep.subr.mxu0 0.0
    %4576 = vmatpush2.msra.mxu0 0.0
    %4577 = vmatprep.subr.mxu0 0.0
    %4578 = vmatpush2.msra.mxu0 0.0
    %4579 = vmatprep.subr.mxu0 0.0
    %4580 = vmatpush2.msra.mxu0 0.0
    %4581 = vmatprep.subr.mxu0 0.0
    %4582 = vmatpush2.msra.mxu0 0.0
    %4583 = vmatprep.subr.mxu0 0.0
    %4584 = vmatpush2.msra.mxu0 0.0
    %4585 = vmatprep.subr.mxu0 0.0
    %4586 = vmatpush2.msra.mxu0 0.0
    %4587 = vmatprep.subr.mxu0 0.0
    %4588 = vmatpush2.msra.mxu0 0.0
    %4589 = vmatprep.subr.mxu0 0.0
    %4590 = vmatpush2.msra.mxu0 0.0
    %4591 = vmatprep.subr.mxu0 0.0
    %4592 = vmatpush2.msra.mxu0 0.0
    %4593 = vmatprep.subr.mxu0 0.0
    %4594 = vmatpush2.msra.mxu0 0.0
    %4595 = vmatprep.mubr.f32.mxu0 0.0
    %4596 = vmatmul.mubr.f32.gmra.mxu0 %v4529
    %v4597 = vpop.f32.mrf.mxu0
    %v4598 = vadd.f32 0.0, %v4597
    %v4599 = vpop.f32.mrf.mxu0
    %4600 = vdwg.mxu0
    %v4601 = vadd.f32 %v4526, %v4598
    %v4602 = vsel %vm785, %v4098, 0
    %4604 = vmatprep.subr.mxu0 0.0
    %4605 = vmatpush1.msra.mxu0 0.0
    %4606 = vmatprep.subr.mxu0 0.0
    %4607 = vmatpush1.msra.mxu0 0.0
    %4608 = vmatprep.subr.mxu0 0.0
    %4609 = vmatpush1.msra.mxu0 0.0
    %4610 = vmatprep.subr.mxu0 0.0
    %4611 = vmatpush1.msra.mxu0 0.0
    %4612 = vmatprep.subr.mxu0 0.0
    %4613 = vmatpush1.msra.mxu0 0.0
    %4614 = vmatprep.subr.mxu0 0.0
    %4615 = vmatpush1.msra.mxu0 0.0
    %4616 = vmatprep.subr.mxu0 0.0
    %4617 = vmatpush1.msra.mxu0 0.0
    %4618 = vmatprep.subr.mxu0 0.0
    %4619 = vmatpush1.msra.mxu0 0.0
    %4620 = vmatprep.subr.mxu0 0.0
    %4621 = vmatpush1.msra.mxu0 0.0
    %4622 = vmatprep.subr.mxu0 0.0
    %4623 = vmatpush1.msra.mxu0 0.0
    %4624 = vmatprep.subr.mxu0 0.0
    %4625 = vmatpush1.msra.mxu0 0.0
    %4626 = vmatprep.subr.mxu0 0.0
    %4627 = vmatpush1.msra.mxu0 0.0
    %4628 = vmatprep.subr.mxu0 0.0
    %4629 = vmatpush1.msra.mxu0 %v420
    %4630 = vmatprep.subr.mxu0 0.0
    %4631 = vmatpush1.msra.mxu0 %v419
    %4632 = vmatprep.subr.mxu0 0.0
    %4633 = vmatpush1.msra.mxu0 %v418
    %4634 = vmatprep.subr.mxu0 0.0
    %4635 = vmatpush1.msra.mxu0 %v417
    %4636 = vmatprep.subr.mxu0 0.0
    %4637 = vmatpush2.msra.mxu0 0.0
    %4638 = vmatprep.subr.mxu0 0.0
    %4639 = vmatpush2.msra.mxu0 0.0
    %4640 = vmatprep.subr.mxu0 0.0
    %4641 = vmatpush2.msra.mxu0 0.0
    %4642 = vmatprep.subr.mxu0 0.0
    %4643 = vmatpush2.msra.mxu0 0.0
    %4644 = vmatprep.subr.mxu0 0.0
    %4645 = vmatpush2.msra.mxu0 0.0
    %4646 = vmatprep.subr.mxu0 0.0
    %4647 = vmatpush2.msra.mxu0 0.0
    %4648 = vmatprep.subr.mxu0 0.0
    %4649 = vmatpush2.msra.mxu0 0.0
    %4650 = vmatprep.subr.mxu0 0.0
    %4651 = vmatpush2.msra.mxu0 0.0
    %4652 = vmatprep.subr.mxu0 0.0
    %4653 = vmatpush2.msra.mxu0 0.0
    %4654 = vmatprep.subr.mxu0 0.0
    %4655 = vmatpush2.msra.mxu0 0.0
    %4656 = vmatprep.subr.mxu0 0.0
    %4657 = vmatpush2.msra.mxu0 0.0
    %4658 = vmatprep.subr.mxu0 0.0
    %4659 = vmatpush2.msra.mxu0 0.0
    %4660 = vmatprep.subr.mxu0 0.0
    %4661 = vmatpush2.msra.mxu0 0.0
    %4662 = vmatprep.subr.mxu0 0.0
    %4663 = vmatpush2.msra.mxu0 0.0
    %4664 = vmatprep.subr.mxu0 0.0
    %4665 = vmatpush2.msra.mxu0 0.0
    %4666 = vmatprep.subr.mxu0 0.0
    %4667 = vmatpush2.msra.mxu0 0.0
    %4668 = vmatprep.mubr.f32.mxu0 0.0
    %4669 = vmatmul.mubr.f32.gmra.mxu0 %v4602
    %v4670 = vpop.f32.mrf.mxu0
    %v4671 = vadd.f32 0.0, %v4670
    %v4672 = vpop.f32.mrf.mxu0
    %4673 = vdwg.mxu0
    %v4674 = vadd.f32 %v4601, %v4671
    %4675 = vrot.lane.b32.xlu0 %v4093, 32
    %v4676 = vpop.permute.xlu0 %4675
    %v4677 = vsel %vm785, %v4676, 0
    %4679 = vmatprep.subr.mxu0 0.0
    %4680 = vmatpush1.msra.mxu0 0.0
    %4681 = vmatprep.subr.mxu0 0.0
    %4682 = vmatpush1.msra.mxu0 0.0
    %4683 = vmatprep.subr.mxu0 0.0
    %4684 = vmatpush1.msra.mxu0 0.0
    %4685 = vmatprep.subr.mxu0 0.0
    %4686 = vmatpush1.msra.mxu0 0.0
    %4687 = vmatprep.subr.mxu0 0.0
    %4688 = vmatpush1.msra.mxu0 0.0
    %4689 = vmatprep.subr.mxu0 0.0
    %4690 = vmatpush1.msra.mxu0 0.0
    %4691 = vmatprep.subr.mxu0 0.0
    %4692 = vmatpush1.msra.mxu0 0.0
    %4693 = vmatprep.subr.mxu0 0.0
    %4694 = vmatpush1.msra.mxu0 0.0
    %4695 = vmatprep.subr.mxu0 0.0
    %4696 = vmatpush1.msra.mxu0 0.0
    %4697 = vmatprep.subr.mxu0 0.0
    %4698 = vmatpush1.msra.mxu0 0.0
    %4699 = vmatprep.subr.mxu0 0.0
    %4700 = vmatpush1.msra.mxu0 0.0
    %4701 = vmatprep.subr.mxu0 0.0
    %4702 = vmatpush1.msra.mxu0 0.0
    %4703 = vmatprep.subr.mxu0 0.0
    %4704 = vmatpush1.msra.mxu0 %v424
    %4705 = vmatprep.subr.mxu0 0.0
    %4706 = vmatpush1.msra.mxu0 %v423
    %4707 = vmatprep.subr.mxu0 0.0
    %4708 = vmatpush1.msra.mxu0 %v422
    %4709 = vmatprep.subr.mxu0 0.0
    %4710 = vmatpush1.msra.mxu0 %v421
    %4711 = vmatprep.subr.mxu0 0.0
    %4712 = vmatpush2.msra.mxu0 0.0
    %4713 = vmatprep.subr.mxu0 0.0
    %4714 = vmatpush2.msra.mxu0 0.0
    %4715 = vmatprep.subr.mxu0 0.0
    %4716 = vmatpush2.msra.mxu0 0.0
    %4717 = vmatprep.subr.mxu0 0.0
    %4718 = vmatpush2.msra.mxu0 0.0
    %4719 = vmatprep.subr.mxu0 0.0
    %4720 = vmatpush2.msra.mxu0 0.0
    %4721 = vmatprep.subr.mxu0 0.0
    %4722 = vmatpush2.msra.mxu0 0.0
    %4723 = vmatprep.subr.mxu0 0.0
    %4724 = vmatpush2.msra.mxu0 0.0
    %4725 = vmatprep.subr.mxu0 0.0
    %4726 = vmatpush2.msra.mxu0 0.0
    %4727 = vmatprep.subr.mxu0 0.0
    %4728 = vmatpush2.msra.mxu0 0.0
    %4729 = vmatprep.subr.mxu0 0.0
    %4730 = vmatpush2.msra.mxu0 0.0
    %4731 = vmatprep.subr.mxu0 0.0
    %4732 = vmatpush2.msra.mxu0 0.0
    %4733 = vmatprep.subr.mxu0 0.0
    %4734 = vmatpush2.msra.mxu0 0.0
    %4735 = vmatprep.subr.mxu0 0.0
    %4736 = vmatpush2.msra.mxu0 0.0
    %4737 = vmatprep.subr.mxu0 0.0
    %4738 = vmatpush2.msra.mxu0 0.0
    %4739 = vmatprep.subr.mxu0 0.0
    %4740 = vmatpush2.msra.mxu0 0.0
    %4741 = vmatprep.subr.mxu0 0.0
    %4742 = vmatpush2.msra.mxu0 0.0
    %4743 = vmatprep.mubr.f32.mxu0 0.0
    %4744 = vmatmul.mubr.f32.gmra.mxu0 %v4677
    %v4745 = vpop.f32.mrf.mxu0
    %v4746 = vadd.f32 0.0, %v4745
    %v4747 = vpop.f32.mrf.mxu0
    %4748 = vdwg.mxu0
    %v4749 = vadd.f32 %v4674, %v4746
    %v4750 = vsel %vm785, %v4200, 0
    %4752 = vmatprep.subr.mxu0 0.0
    %4753 = vmatpush1.msra.mxu0 0.0
    %4754 = vmatprep.subr.mxu0 0.0
    %4755 = vmatpush1.msra.mxu0 0.0
    %4756 = vmatprep.subr.mxu0 0.0
    %4757 = vmatpush1.msra.mxu0 0.0
    %4758 = vmatprep.subr.mxu0 0.0
    %4759 = vmatpush1.msra.mxu0 0.0
    %4760 = vmatprep.subr.mxu0 0.0
    %4761 = vmatpush1.msra.mxu0 0.0
    %4762 = vmatprep.subr.mxu0 0.0
    %4763 = vmatpush1.msra.mxu0 0.0
    %4764 = vmatprep.subr.mxu0 0.0
    %4765 = vmatpush1.msra.mxu0 0.0
    %4766 = vmatprep.subr.mxu0 0.0
    %4767 = vmatpush1.msra.mxu0 0.0
    %4768 = vmatprep.subr.mxu0 0.0
    %4769 = vmatpush1.msra.mxu0 0.0
    %4770 = vmatprep.subr.mxu0 0.0
    %4771 = vmatpush1.msra.mxu0 0.0
    %4772 = vmatprep.subr.mxu0 0.0
    %4773 = vmatpush1.msra.mxu0 0.0
    %4774 = vmatprep.subr.mxu0 0.0
    %4775 = vmatpush1.msra.mxu0 0.0
    %4776 = vmatprep.subr.mxu0 0.0
    %4777 = vmatpush1.msra.mxu0 %v428
    %4778 = vmatprep.subr.mxu0 0.0
    %4779 = vmatpush1.msra.mxu0 %v427
    %4780 = vmatprep.subr.mxu0 0.0
    %4781 = vmatpush1.msra.mxu0 %v426
    %4782 = vmatprep.subr.mxu0 0.0
    %4783 = vmatpush1.msra.mxu0 %v425
    %4784 = vmatprep.subr.mxu0 0.0
    %4785 = vmatpush2.msra.mxu0 0.0
    %4786 = vmatprep.subr.mxu0 0.0
    %4787 = vmatpush2.msra.mxu0 0.0
    %4788 = vmatprep.subr.mxu0 0.0
    %4789 = vmatpush2.msra.mxu0 0.0
    %4790 = vmatprep.subr.mxu0 0.0
    %4791 = vmatpush2.msra.mxu0 0.0
    %4792 = vmatprep.subr.mxu0 0.0
    %4793 = vmatpush2.msra.mxu0 0.0
    %4794 = vmatprep.subr.mxu0 0.0
    %4795 = vmatpush2.msra.mxu0 0.0
    %4796 = vmatprep.subr.mxu0 0.0
    %4797 = vmatpush2.msra.mxu0 0.0
    %4798 = vmatprep.subr.mxu0 0.0
    %4799 = vmatpush2.msra.mxu0 0.0
    %4800 = vmatprep.subr.mxu0 0.0
    %4801 = vmatpush2.msra.mxu0 0.0
    %4802 = vmatprep.subr.mxu0 0.0
    %4803 = vmatpush2.msra.mxu0 0.0
    %4804 = vmatprep.subr.mxu0 0.0
    %4805 = vmatpush2.msra.mxu0 0.0
    %4806 = vmatprep.subr.mxu0 0.0
    %4807 = vmatpush2.msra.mxu0 0.0
    %4808 = vmatprep.subr.mxu0 0.0
    %4809 = vmatpush2.msra.mxu0 0.0
    %4810 = vmatprep.subr.mxu0 0.0
    %4811 = vmatpush2.msra.mxu0 0.0
    %4812 = vmatprep.subr.mxu0 0.0
    %4813 = vmatpush2.msra.mxu0 0.0
    %4814 = vmatprep.subr.mxu0 0.0
    %4815 = vmatpush2.msra.mxu0 0.0
    %4816 = vmatprep.mubr.f32.mxu0 0.0
    %4817 = vmatmul.mubr.f32.gmra.mxu0 %v4750
    %v4818 = vpop.f32.mrf.mxu0
    %v4819 = vadd.f32 0.0, %v4818
    %v4820 = vpop.f32.mrf.mxu0
    %4821 = vdwg.mxu0
    %v4822 = vadd.f32 %v4749, %v4819
    %4823 = vrot.lane.b32.xlu0 %v3991, 32
    %v4824 = vpop.permute.xlu0 %4823
    %v4825 = vsel %vm785, %v4824, 0
    %4827 = vmatprep.subr.mxu0 0.0
    %4828 = vmatpush1.msra.mxu0 0.0
    %4829 = vmatprep.subr.mxu0 0.0
    %4830 = vmatpush1.msra.mxu0 0.0
    %4831 = vmatprep.subr.mxu0 0.0
    %4832 = vmatpush1.msra.mxu0 0.0
    %4833 = vmatprep.subr.mxu0 0.0
    %4834 = vmatpush1.msra.mxu0 0.0
    %4835 = vmatprep.subr.mxu0 0.0
    %4836 = vmatpush1.msra.mxu0 0.0
    %4837 = vmatprep.subr.mxu0 0.0
    %4838 = vmatpush1.msra.mxu0 0.0
    %4839 = vmatprep.subr.mxu0 0.0
    %4840 = vmatpush1.msra.mxu0 0.0
    %4841 = vmatprep.subr.mxu0 0.0
    %4842 = vmatpush1.msra.mxu0 0.0
    %4843 = vmatprep.subr.mxu0 0.0
    %4844 = vmatpush1.msra.mxu0 0.0
    %4845 = vmatprep.subr.mxu0 0.0
    %4846 = vmatpush1.msra.mxu0 0.0
    %4847 = vmatprep.subr.mxu0 0.0
    %4848 = vmatpush1.msra.mxu0 0.0
    %4849 = vmatprep.subr.mxu0 0.0
    %4850 = vmatpush1.msra.mxu0 0.0
    %4851 = vmatprep.subr.mxu0 0.0
    %4852 = vmatpush1.msra.mxu0 %v432
    %4853 = vmatprep.subr.mxu0 0.0
    %4854 = vmatpush1.msra.mxu0 %v431
    %4855 = vmatprep.subr.mxu0 0.0
    %4856 = vmatpush1.msra.mxu0 %v430
    %4857 = vmatprep.subr.mxu0 0.0
    %4858 = vmatpush1.msra.mxu0 %v429
    %4859 = vmatprep.subr.mxu0 0.0
    %4860 = vmatpush2.msra.mxu0 0.0
    %4861 = vmatprep.subr.mxu0 0.0
    %4862 = vmatpush2.msra.mxu0 0.0
    %4863 = vmatprep.subr.mxu0 0.0
    %4864 = vmatpush2.msra.mxu0 0.0
    %4865 = vmatprep.subr.mxu0 0.0
    %4866 = vmatpush2.msra.mxu0 0.0
    %4867 = vmatprep.subr.mxu0 0.0
    %4868 = vmatpush2.msra.mxu0 0.0
    %4869 = vmatprep.subr.mxu0 0.0
    %4870 = vmatpush2.msra.mxu0 0.0
    %4871 = vmatprep.subr.mxu0 0.0
    %4872 = vmatpush2.msra.mxu0 0.0
    %4873 = vmatprep.subr.mxu0 0.0
    %4874 = vmatpush2.msra.mxu0 0.0
    %4875 = vmatprep.subr.mxu0 0.0
    %4876 = vmatpush2.msra.mxu0 0.0
    %4877 = vmatprep.subr.mxu0 0.0
    %4878 = vmatpush2.msra.mxu0 0.0
    %4879 = vmatprep.subr.mxu0 0.0
    %4880 = vmatpush2.msra.mxu0 0.0
    %4881 = vmatprep.subr.mxu0 0.0
    %4882 = vmatpush2.msra.mxu0 0.0
    %4883 = vmatprep.subr.mxu0 0.0
    %4884 = vmatpush2.msra.mxu0 0.0
    %4885 = vmatprep.subr.mxu0 0.0
    %4886 = vmatpush2.msra.mxu0 0.0
    %4887 = vmatprep.subr.mxu0 0.0
    %4888 = vmatpush2.msra.mxu0 0.0
    %4889 = vmatprep.subr.mxu0 0.0
    %4890 = vmatpush2.msra.mxu0 0.0
    %4891 = vmatprep.mubr.f32.mxu0 0.0
    %4892 = vmatmul.mubr.f32.gmra.mxu0 %v4825
    %v4893 = vpop.f32.mrf.mxu0
    %v4894 = vadd.f32 0.0, %v4893
    %v4895 = vpop.f32.mrf.mxu0
    %4896 = vdwg.mxu0
    %v4897 = vadd.f32 %v4822, %v4894
    %4898 = vrot.lane.b32.xlu0 %v4297, 64
    %v4899 = vpop.permute.xlu0 %4898
    %v4900 = vsel %vm785, %v4899, 0
    %4902 = vmatprep.subr.mxu0 0.0
    %4903 = vmatpush1.msra.mxu0 0.0
    %4904 = vmatprep.subr.mxu0 0.0
    %4905 = vmatpush1.msra.mxu0 0.0
    %4906 = vmatprep.subr.mxu0 0.0
    %4907 = vmatpush1.msra.mxu0 0.0
    %4908 = vmatprep.subr.mxu0 0.0
    %4909 = vmatpush1.msra.mxu0 0.0
    %4910 = vmatprep.subr.mxu0 0.0
    %4911 = vmatpush1.msra.mxu0 0.0
    %4912 = vmatprep.subr.mxu0 0.0
    %4913 = vmatpush1.msra.mxu0 0.0
    %4914 = vmatprep.subr.mxu0 0.0
    %4915 = vmatpush1.msra.mxu0 0.0
    %4916 = vmatprep.subr.mxu0 0.0
    %4917 = vmatpush1.msra.mxu0 0.0
    %4918 = vmatprep.subr.mxu0 0.0
    %4919 = vmatpush1.msra.mxu0 0.0
    %4920 = vmatprep.subr.mxu0 0.0
    %4921 = vmatpush1.msra.mxu0 0.0
    %4922 = vmatprep.subr.mxu0 0.0
    %4923 = vmatpush1.msra.mxu0 0.0
    %4924 = vmatprep.subr.mxu0 0.0
    %4925 = vmatpush1.msra.mxu0 0.0
    %4926 = vmatprep.subr.mxu0 0.0
    %4927 = vmatpush1.msra.mxu0 %v436
    %4928 = vmatprep.subr.mxu0 0.0
    %4929 = vmatpush1.msra.mxu0 %v435
    %4930 = vmatprep.subr.mxu0 0.0
    %4931 = vmatpush1.msra.mxu0 %v434
    %4932 = vmatprep.subr.mxu0 0.0
    %4933 = vmatpush1.msra.mxu0 %v433
    %4934 = vmatprep.subr.mxu0 0.0
    %4935 = vmatpush2.msra.mxu0 0.0
    %4936 = vmatprep.subr.mxu0 0.0
    %4937 = vmatpush2.msra.mxu0 0.0
    %4938 = vmatprep.subr.mxu0 0.0
    %4939 = vmatpush2.msra.mxu0 0.0
    %4940 = vmatprep.subr.mxu0 0.0
    %4941 = vmatpush2.msra.mxu0 0.0
    %4942 = vmatprep.subr.mxu0 0.0
    %4943 = vmatpush2.msra.mxu0 0.0
    %4944 = vmatprep.subr.mxu0 0.0
    %4945 = vmatpush2.msra.mxu0 0.0
    %4946 = vmatprep.subr.mxu0 0.0
    %4947 = vmatpush2.msra.mxu0 0.0
    %4948 = vmatprep.subr.mxu0 0.0
    %4949 = vmatpush2.msra.mxu0 0.0
    %4950 = vmatprep.subr.mxu0 0.0
    %4951 = vmatpush2.msra.mxu0 0.0
    %4952 = vmatprep.subr.mxu0 0.0
    %4953 = vmatpush2.msra.mxu0 0.0
    %4954 = vmatprep.subr.mxu0 0.0
    %4955 = vmatpush2.msra.mxu0 0.0
    %4956 = vmatprep.subr.mxu0 0.0
    %4957 = vmatpush2.msra.mxu0 0.0
    %4958 = vmatprep.subr.mxu0 0.0
    %4959 = vmatpush2.msra.mxu0 0.0
    %4960 = vmatprep.subr.mxu0 0.0
    %4961 = vmatpush2.msra.mxu0 0.0
    %4962 = vmatprep.subr.mxu0 0.0
    %4963 = vmatpush2.msra.mxu0 0.0
    %4964 = vmatprep.subr.mxu0 0.0
    %4965 = vmatpush2.msra.mxu0 0.0
    %4966 = vmatprep.mubr.f32.mxu0 0.0
    %4967 = vmatmul.mubr.f32.gmra.mxu0 %v4900
    %v4968 = vpop.f32.mrf.mxu0
    %v4969 = vadd.f32 0.0, %v4968
    %v4970 = vpop.f32.mrf.mxu0
    %4971 = vdwg.mxu0
    %v4972 = vadd.f32 %v4897, %v4969
    %4973 = vrot.lane.b32.xlu0 %v3889, 32
    %v4974 = vpop.permute.xlu0 %4973
    %v4975 = vsel %vm785, %v4974, 0
    %4977 = vmatprep.subr.mxu0 0.0
    %4978 = vmatpush1.msra.mxu0 0.0
    %4979 = vmatprep.subr.mxu0 0.0
    %4980 = vmatpush1.msra.mxu0 0.0
    %4981 = vmatprep.subr.mxu0 0.0
    %4982 = vmatpush1.msra.mxu0 0.0
    %4983 = vmatprep.subr.mxu0 0.0
    %4984 = vmatpush1.msra.mxu0 0.0
    %4985 = vmatprep.subr.mxu0 0.0
    %4986 = vmatpush1.msra.mxu0 0.0
    %4987 = vmatprep.subr.mxu0 0.0
    %4988 = vmatpush1.msra.mxu0 0.0
    %4989 = vmatprep.subr.mxu0 0.0
    %4990 = vmatpush1.msra.mxu0 0.0
    %4991 = vmatprep.subr.mxu0 0.0
    %4992 = vmatpush1.msra.mxu0 0.0
    %4993 = vmatprep.subr.mxu0 0.0
    %4994 = vmatpush1.msra.mxu0 0.0
    %4995 = vmatprep.subr.mxu0 0.0
    %4996 = vmatpush1.msra.mxu0 0.0
    %4997 = vmatprep.subr.mxu0 0.0
    %4998 = vmatpush1.msra.mxu0 0.0
    %4999 = vmatprep.subr.mxu0 0.0
    %5000 = vmatpush1.msra.mxu0 0.0
    %5001 = vmatprep.subr.mxu0 0.0
    %5002 = vmatpush1.msra.mxu0 %v440
    %5003 = vmatprep.subr.mxu0 0.0
    %5004 = vmatpush1.msra.mxu0 %v439
    %5005 = vmatprep.subr.mxu0 0.0
    %5006 = vmatpush1.msra.mxu0 %v438
    %5007 = vmatprep.subr.mxu0 0.0
    %5008 = vmatpush1.msra.mxu0 %v437
    %5009 = vmatprep.subr.mxu0 0.0
    %5010 = vmatpush2.msra.mxu0 0.0
    %5011 = vmatprep.subr.mxu0 0.0
    %5012 = vmatpush2.msra.mxu0 0.0
    %5013 = vmatprep.subr.mxu0 0.0
    %5014 = vmatpush2.msra.mxu0 0.0
    %5015 = vmatprep.subr.mxu0 0.0
    %5016 = vmatpush2.msra.mxu0 0.0
    %5017 = vmatprep.subr.mxu0 0.0
    %5018 = vmatpush2.msra.mxu0 0.0
    %5019 = vmatprep.subr.mxu0 0.0
    %5020 = vmatpush2.msra.mxu0 0.0
    %5021 = vmatprep.subr.mxu0 0.0
    %5022 = vmatpush2.msra.mxu0 0.0
    %5023 = vmatprep.subr.mxu0 0.0
    %5024 = vmatpush2.msra.mxu0 0.0
    %5025 = vmatprep.subr.mxu0 0.0
    %5026 = vmatpush2.msra.mxu0 0.0
    %5027 = vmatprep.subr.mxu0 0.0
    %5028 = vmatpush2.msra.mxu0 0.0
    %5029 = vmatprep.subr.mxu0 0.0
    %5030 = vmatpush2.msra.mxu0 0.0
    %5031 = vmatprep.subr.mxu0 0.0
    %5032 = vmatpush2.msra.mxu0 0.0
    %5033 = vmatprep.subr.mxu0 0.0
    %5034 = vmatpush2.msra.mxu0 0.0
    %5035 = vmatprep.subr.mxu0 0.0
    %5036 = vmatpush2.msra.mxu0 0.0
    %5037 = vmatprep.subr.mxu0 0.0
    %5038 = vmatpush2.msra.mxu0 0.0
    %5039 = vmatprep.subr.mxu0 0.0
    %5040 = vmatpush2.msra.mxu0 0.0
    %5041 = vmatprep.mubr.f32.mxu0 0.0
    %5042 = vmatmul.mubr.f32.gmra.mxu0 %v4975
    %v5043 = vpop.f32.mrf.mxu0
    %v5044 = vadd.f32 0.0, %v5043
    %v5045 = vpop.f32.mrf.mxu0
    %5046 = vdwg.mxu0
    %v5047 = vadd.f32 %v4972, %v5044
    %v5049 = vsel %vm785, %v5047, 0
    %5051 = vmatprep.subr.mxu0 0.0
    %5052 = vmatpush1.msra.mxu0 0.0
    %5053 = vmatprep.subr.mxu0 0.0
    %5054 = vmatpush1.msra.mxu0 0.0
    %5055 = vmatprep.subr.mxu0 0.0
    %5056 = vmatpush1.msra.mxu0 0.0
    %5057 = vmatprep.subr.mxu0 0.0
    %5058 = vmatpush1.msra.mxu0 0.0
    %5059 = vmatprep.subr.mxu0 0.0
    %5060 = vmatpush1.msra.mxu0 0.0
    %5061 = vmatprep.subr.mxu0 0.0
    %5062 = vmatpush1.msra.mxu0 0.0
    %5063 = vmatprep.subr.mxu0 0.0
    %5064 = vmatpush1.msra.mxu0 0.0
    %5065 = vmatprep.subr.mxu0 0.0
    %5066 = vmatpush1.msra.mxu0 0.0
    %5067 = vmatprep.subr.mxu0 0.0
    %5068 = vmatpush1.msra.mxu0 0.0
    %5069 = vmatprep.subr.mxu0 0.0
    %5070 = vmatpush1.msra.mxu0 0.0
    %5071 = vmatprep.subr.mxu0 0.0
    %5072 = vmatpush1.msra.mxu0 0.0
    %5073 = vmatprep.subr.mxu0 0.0
    %5074 = vmatpush1.msra.mxu0 0.0
    %5075 = vmatprep.subr.mxu0 0.0
    %5076 = vmatpush1.msra.mxu0 %v449
    %5077 = vmatprep.subr.mxu0 0.0
    %5078 = vmatpush1.msra.mxu0 %v448
    %5079 = vmatprep.subr.mxu0 0.0
    %5080 = vmatpush1.msra.mxu0 %v447
    %5081 = vmatprep.subr.mxu0 0.0
    %5082 = vmatpush1.msra.mxu0 %v446
    %5083 = vmatprep.subr.mxu0 0.0
    %5084 = vmatpush2.msra.mxu0 0.0
    %5085 = vmatprep.subr.mxu0 0.0
    %5086 = vmatpush2.msra.mxu0 0.0
    %5087 = vmatprep.subr.mxu0 0.0
    %5088 = vmatpush2.msra.mxu0 0.0
    %5089 = vmatprep.subr.mxu0 0.0
    %5090 = vmatpush2.msra.mxu0 0.0
    %5091 = vmatprep.subr.mxu0 0.0
    %5092 = vmatpush2.msra.mxu0 0.0
    %5093 = vmatprep.subr.mxu0 0.0
    %5094 = vmatpush2.msra.mxu0 0.0
    %5095 = vmatprep.subr.mxu0 0.0
    %5096 = vmatpush2.msra.mxu0 0.0
    %5097 = vmatprep.subr.mxu0 0.0
    %5098 = vmatpush2.msra.mxu0 0.0
    %5099 = vmatprep.subr.mxu0 0.0
    %5100 = vmatpush2.msra.mxu0 0.0
    %5101 = vmatprep.subr.mxu0 0.0
    %5102 = vmatpush2.msra.mxu0 0.0
    %5103 = vmatprep.subr.mxu0 0.0
    %5104 = vmatpush2.msra.mxu0 0.0
    %5105 = vmatprep.subr.mxu0 0.0
    %5106 = vmatpush2.msra.mxu0 0.0
    %5107 = vmatprep.subr.mxu0 0.0
    %5108 = vmatpush2.msra.mxu0 0.0
    %5109 = vmatprep.subr.mxu0 0.0
    %5110 = vmatpush2.msra.mxu0 0.0
    %5111 = vmatprep.subr.mxu0 0.0
    %5112 = vmatpush2.msra.mxu0 0.0
    %5113 = vmatprep.subr.mxu0 0.0
    %5114 = vmatpush2.msra.mxu0 0.0
    %5115 = vmatprep.mubr.f32.mxu0 0.0
    %5116 = vmatmul.mubr.f32.gmra.mxu0 %v5049
    %v5117 = vpop.f32.mrf.mxu0
    %v5118 = vadd.f32 0.0, %v5117
    %v5119 = vpop.f32.mrf.mxu0
    %5120 = vdwg.mxu0
    %5122 = vrot.lane.b32.xlu0 %v2588, 96
    %v5123 = vpop.permute.xlu0 %5122
    %v5124 = vsel %vm785, %v5123, 0
    %5126 = vmatprep.subr.mxu0 0.0
    %5127 = vmatpush1.msra.mxu0 0.0
    %5128 = vmatprep.subr.mxu0 0.0
    %5129 = vmatpush1.msra.mxu0 0.0
    %5130 = vmatprep.subr.mxu0 0.0
    %5131 = vmatpush1.msra.mxu0 0.0
    %5132 = vmatprep.subr.mxu0 0.0
    %5133 = vmatpush1.msra.mxu0 0.0
    %5134 = vmatprep.subr.mxu0 0.0
    %5135 = vmatpush1.msra.mxu0 0.0
    %5136 = vmatprep.subr.mxu0 0.0
    %5137 = vmatpush1.msra.mxu0 0.0
    %5138 = vmatprep.subr.mxu0 0.0
    %5139 = vmatpush1.msra.mxu0 0.0
    %5140 = vmatprep.subr.mxu0 0.0
    %5141 = vmatpush1.msra.mxu0 0.0
    %5142 = vmatprep.subr.mxu0 0.0
    %5143 = vmatpush1.msra.mxu0 0.0
    %5144 = vmatprep.subr.mxu0 0.0
    %5145 = vmatpush1.msra.mxu0 0.0
    %5146 = vmatprep.subr.mxu0 0.0
    %5147 = vmatpush1.msra.mxu0 0.0
    %5148 = vmatprep.subr.mxu0 0.0
    %5149 = vmatpush1.msra.mxu0 0.0
    %5150 = vmatprep.subr.mxu0 0.0
    %5151 = vmatpush1.msra.mxu0 %v445
    %5152 = vmatprep.subr.mxu0 0.0
    %5153 = vmatpush1.msra.mxu0 %v444
    %5154 = vmatprep.subr.mxu0 0.0
    %5155 = vmatpush1.msra.mxu0 %v443
    %5156 = vmatprep.subr.mxu0 0.0
    %5157 = vmatpush1.msra.mxu0 %v442
    %5158 = vmatprep.subr.mxu0 0.0
    %5159 = vmatpush2.msra.mxu0 0.0
    %5160 = vmatprep.subr.mxu0 0.0
    %5161 = vmatpush2.msra.mxu0 0.0
    %5162 = vmatprep.subr.mxu0 0.0
    %5163 = vmatpush2.msra.mxu0 0.0
    %5164 = vmatprep.subr.mxu0 0.0
    %5165 = vmatpush2.msra.mxu0 0.0
    %5166 = vmatprep.subr.mxu0 0.0
    %5167 = vmatpush2.msra.mxu0 0.0
    %5168 = vmatprep.subr.mxu0 0.0
    %5169 = vmatpush2.msra.mxu0 0.0
    %5170 = vmatprep.subr.mxu0 0.0
    %5171 = vmatpush2.msra.mxu0 0.0
    %5172 = vmatprep.subr.mxu0 0.0
    %5173 = vmatpush2.msra.mxu0 0.0
    %5174 = vmatprep.subr.mxu0 0.0
    %5175 = vmatpush2.msra.mxu0 0.0
    %5176 = vmatprep.subr.mxu0 0.0
    %5177 = vmatpush2.msra.mxu0 0.0
    %5178 = vmatprep.subr.mxu0 0.0
    %5179 = vmatpush2.msra.mxu0 0.0
    %5180 = vmatprep.subr.mxu0 0.0
    %5181 = vmatpush2.msra.mxu0 0.0
    %5182 = vmatprep.subr.mxu0 0.0
    %5183 = vmatpush2.msra.mxu0 0.0
    %5184 = vmatprep.subr.mxu0 0.0
    %5185 = vmatpush2.msra.mxu0 0.0
    %5186 = vmatprep.subr.mxu0 0.0
    %5187 = vmatpush2.msra.mxu0 0.0
    %5188 = vmatprep.subr.mxu0 0.0
    %5189 = vmatpush2.msra.mxu0 0.0
    %5190 = vmatprep.mubr.f32.mxu0 0.0
    %5191 = vmatmul.mubr.f32.gmra.mxu0 %v5124
    %v5192 = vpop.f32.mrf.mxu0
    %v5193 = vadd.f32 %v5118, %v5192
    %v5194 = vpop.f32.mrf.mxu0
    %5195 = vdwg.mxu0
    %v5197 = vlaneseq
    %v5198 = vshrl.u32 %v5197, 7
    %v5199 = vsub.s32 0, %v5198
    %v5200 = vrot.slane %v450, %v5199
    %v5202 = vadd.f32 %v5193, %v5200
    %v5203 = vtanh.pop %v5202
    %v5205 = vlaneseq
    %v5206 = vshrl.u32 %v5205, 7
    %v5207 = vsub.s32 0, %v5206
    %v5208 = vrot.slane %v459, %v5207
    %v5211 = vsel %vm2813, %v5203, 0
    %5213 = vmatprep.subr.mxu0 0.0
    %5214 = vmatpush1.msra.mxu0 0.0
    %5215 = vmatprep.subr.mxu0 0.0
    %5216 = vmatpush1.msra.mxu0 0.0
    %5217 = vmatprep.subr.mxu0 0.0
    %5218 = vmatpush1.msra.mxu0 0.0
    %5219 = vmatprep.subr.mxu0 0.0
    %5220 = vmatpush1.msra.mxu0 0.0
    %5221 = vmatprep.subr.mxu0 0.0
    %5222 = vmatpush1.msra.mxu0 0.0
    %5223 = vmatprep.subr.mxu0 0.0
    %5224 = vmatpush1.msra.mxu0 0.0
    %5225 = vmatprep.subr.mxu0 0.0
    %5226 = vmatpush1.msra.mxu0 0.0
    %5227 = vmatprep.subr.mxu0 0.0
    %5228 = vmatpush1.msra.mxu0 0.0
    %5229 = vmatprep.subr.mxu0 0.0
    %5230 = vmatpush1.msra.mxu0 %v458
    %5231 = vmatprep.subr.mxu0 0.0
    %5232 = vmatpush1.msra.mxu0 %v457
    %5233 = vmatprep.subr.mxu0 0.0
    %5234 = vmatpush1.msra.mxu0 %v456
    %5235 = vmatprep.subr.mxu0 0.0
    %5236 = vmatpush1.msra.mxu0 %v455
    %5237 = vmatprep.subr.mxu0 0.0
    %5238 = vmatpush1.msra.mxu0 %v454
    %5239 = vmatprep.subr.mxu0 0.0
    %5240 = vmatpush1.msra.mxu0 %v453
    %5241 = vmatprep.subr.mxu0 0.0
    %5242 = vmatpush1.msra.mxu0 %v452
    %5243 = vmatprep.subr.mxu0 0.0
    %5244 = vmatpush1.msra.mxu0 %v451
    %5245 = vmatprep.subr.mxu0 0.0
    %5246 = vmatpush2.msra.mxu0 0.0
    %5247 = vmatprep.subr.mxu0 0.0
    %5248 = vmatpush2.msra.mxu0 0.0
    %5249 = vmatprep.subr.mxu0 0.0
    %5250 = vmatpush2.msra.mxu0 0.0
    %5251 = vmatprep.subr.mxu0 0.0
    %5252 = vmatpush2.msra.mxu0 0.0
    %5253 = vmatprep.subr.mxu0 0.0
    %5254 = vmatpush2.msra.mxu0 0.0
    %5255 = vmatprep.subr.mxu0 0.0
    %5256 = vmatpush2.msra.mxu0 0.0
    %5257 = vmatprep.subr.mxu0 0.0
    %5258 = vmatpush2.msra.mxu0 0.0
    %5259 = vmatprep.subr.mxu0 0.0
    %5260 = vmatpush2.msra.mxu0 0.0
    %5261 = vmatprep.subr.mxu0 0.0
    %5262 = vmatpush2.msra.mxu0 0.0
    %5263 = vmatprep.subr.mxu0 0.0
    %5264 = vmatpush2.msra.mxu0 0.0
    %5265 = vmatprep.subr.mxu0 0.0
    %5266 = vmatpush2.msra.mxu0 0.0
    %5267 = vmatprep.subr.mxu0 0.0
    %5268 = vmatpush2.msra.mxu0 0.0
    %5269 = vmatprep.subr.mxu0 0.0
    %5270 = vmatpush2.msra.mxu0 0.0
    %5271 = vmatprep.subr.mxu0 0.0
    %5272 = vmatpush2.msra.mxu0 0.0
    %5273 = vmatprep.subr.mxu0 0.0
    %5274 = vmatpush2.msra.mxu0 0.0
    %5275 = vmatprep.subr.mxu0 0.0
    %5276 = vmatpush2.msra.mxu0 0.0
    %5277 = vmatprep.mubr.f32.mxu0 0.0
    %5278 = vmatmul.mubr.f32.gmra.mxu0 %v5211
    %v5279 = vpop.f32.mrf.mxu0
    %v5280 = vadd.f32 %v5208, %v5279
    %v5281 = vpop.f32.mrf.mxu0
    %5282 = vdwg.mxu0
    %v5283 = vtanh.pop %v5280
    %v5285 = vlaneseq
    %v5286 = vshrl.u32 %v5285, 7
    %v5287 = vsub.s32 0, %v5286
    %v5288 = vrot.slane %v464, %v5287
    %v5291 = vsel %vm785, %v5283, 0
    %5293 = vmatprep.subr.mxu0 0.0
    %5294 = vmatpush1.msra.mxu0 0.0
    %5295 = vmatprep.subr.mxu0 0.0
    %5296 = vmatpush1.msra.mxu0 0.0
    %5297 = vmatprep.subr.mxu0 0.0
    %5298 = vmatpush1.msra.mxu0 0.0
    %5299 = vmatprep.subr.mxu0 0.0
    %5300 = vmatpush1.msra.mxu0 0.0
    %5301 = vmatprep.subr.mxu0 0.0
    %5302 = vmatpush1.msra.mxu0 0.0
    %5303 = vmatprep.subr.mxu0 0.0
    %5304 = vmatpush1.msra.mxu0 0.0
    %5305 = vmatprep.subr.mxu0 0.0
    %5306 = vmatpush1.msra.mxu0 0.0
    %5307 = vmatprep.subr.mxu0 0.0
    %5308 = vmatpush1.msra.mxu0 0.0
    %5309 = vmatprep.subr.mxu0 0.0
    %5310 = vmatpush1.msra.mxu0 0.0
    %5311 = vmatprep.subr.mxu0 0.0
    %5312 = vmatpush1.msra.mxu0 0.0
    %5313 = vmatprep.subr.mxu0 0.0
    %5314 = vmatpush1.msra.mxu0 0.0
    %5315 = vmatprep.subr.mxu0 0.0
    %5316 = vmatpush1.msra.mxu0 0.0
    %5317 = vmatprep.subr.mxu0 0.0
    %5318 = vmatpush1.msra.mxu0 %v463
    %5319 = vmatprep.subr.mxu0 0.0
    %5320 = vmatpush1.msra.mxu0 %v462
    %5321 = vmatprep.subr.mxu0 0.0
    %5322 = vmatpush1.msra.mxu0 %v461
    %5323 = vmatprep.subr.mxu0 0.0
    %5324 = vmatpush1.msra.mxu0 %v460
    %5325 = vmatprep.subr.mxu0 0.0
    %5326 = vmatpush2.msra.mxu0 0.0
    %5327 = vmatprep.subr.mxu0 0.0
    %5328 = vmatpush2.msra.mxu0 0.0
    %5329 = vmatprep.subr.mxu0 0.0
    %5330 = vmatpush2.msra.mxu0 0.0
    %5331 = vmatprep.subr.mxu0 0.0
    %5332 = vmatpush2.msra.mxu0 0.0
    %5333 = vmatprep.subr.mxu0 0.0
    %5334 = vmatpush2.msra.mxu0 0.0
    %5335 = vmatprep.subr.mxu0 0.0
    %5336 = vmatpush2.msra.mxu0 0.0
    %5337 = vmatprep.subr.mxu0 0.0
    %5338 = vmatpush2.msra.mxu0 0.0
    %5339 = vmatprep.subr.mxu0 0.0
    %5340 = vmatpush2.msra.mxu0 0.0
    %5341 = vmatprep.subr.mxu0 0.0
    %5342 = vmatpush2.msra.mxu0 0.0
    %5343 = vmatprep.subr.mxu0 0.0
    %5344 = vmatpush2.msra.mxu0 0.0
    %5345 = vmatprep.subr.mxu0 0.0
    %5346 = vmatpush2.msra.mxu0 0.0
    %5347 = vmatprep.subr.mxu0 0.0
    %5348 = vmatpush2.msra.mxu0 0.0
    %5349 = vmatprep.subr.mxu0 0.0
    %5350 = vmatpush2.msra.mxu0 0.0
    %5351 = vmatprep.subr.mxu0 0.0
    %5352 = vmatpush2.msra.mxu0 0.0
    %5353 = vmatprep.subr.mxu0 0.0
    %5354 = vmatpush2.msra.mxu0 0.0
    %5355 = vmatprep.subr.mxu0 0.0
    %5356 = vmatpush2.msra.mxu0 0.0
    %5357 = vmatprep.mubr.f32.mxu0 0.0
    %5358 = vmatmul.mubr.f32.gmra.mxu0 %v5291
    %v5359 = vpop.f32.mrf.mxu0
    %v5360 = vadd.f32 %v5288, %v5359
    %v5361 = vpop.f32.mrf.mxu0
    %5362 = vdwg.mxu0
    %vm5363 = vcmask 7168
    %5364 = vst.msk [vmem:[%s27] sm:$0xff] %vm5363, %v5360
    // Predicated region
    $region178: #{fwd.1} parent=1 // pred_check
      _
    $region179: #{fwd.1} parent=1 // pred_check_branch
      %5366 = sbr.rel (0) target = $region181
    $region180: #{fwd.1} parent=1 // pred_region
      _
    $region181: #{fwd.1} parent=1 // pred_fallthru
      _
    // Predicated region
    $region182: #{fwd.1} parent=1 // pred_check
      _
    $region183: #{fwd.1} parent=1 // pred_check_branch
      %5368 = sbr.rel (0) target = $region185
    $region184: #{fwd.1} parent=1 // pred_region
      _
    $region185: #{fwd.1} parent=1 // pred_fallthru
      _
    %5369 = vsyncpa [#allocation7], 1
    %5370 = vsyncpa [#allocation9], 1
    %5371 = vsyncpa [#allocation12], 1
    %5372 = vsyncpa [#allocation15], 1
    %5373 = vsyncpa [#allocation18], 1
    %5374 = vsyncpa [#allocation21], 1
    %5375 = vsyncpa [#allocation24], 1
    %5376 = vsyncpa [#allocation27], 1
    %5377 = vsyncpa [#allocation30], 1

</llo_original>
